<compile_context>
chip_gen: v7x
topology: tpu7x:2x2x1
jax: 0.10.0
libtpu: 0.0.40
codegen_flags: <defaults>
</compile_context>

<pallas_src>
import functools

import jax
import jax.numpy as jnp
import numpy as np
from jax import lax
from jax.experimental import pallas as pl
from jax.experimental.pallas import tpu as pltpu

_HIGH = jax.lax.Precision.HIGHEST   # reference only; kernel matmuls use default MXU precision
_LANES = 128                        # vreg lane width


def _round_up(x, m):
    return (x + m - 1) // m * m


def _gru_head_kernel(S, B, D, HP,
                     x_ref,
                     wih1_ref, bih1_ref, whh1f_ref, whh1b_ref, bhh1n_ref,
                     wih2_ref, bih2_ref, whh2f_ref, whh2b_ref, bhh2n_ref,
                     wlin_ref, blin_ref,
                     out_ref,
                     gi_ref, o1_ref):
    f32 = jnp.float32
    bf16 = jnp.bfloat16
    GP, GT = 3 * HP, 6 * HP            # per-direction / fused padded gate widths

    def cell(gi, gh, bhhn, h_prev):
        # PyTorch GRU cell, gate order (r, z, n); every gate block is HP=128 lanes wide
        # and starts on a vreg boundary -> all slices are aligned full-vreg ops.
        r = jax.nn.sigmoid(gi[:, 0:HP] + gh[:, 0:HP])
        z = jax.nn.sigmoid(gi[:, HP:2 * HP] + gh[:, HP:2 * HP])
        n = jnp.tanh(gi[:, 2 * HP:GP] + r * (gh[:, 2 * HP:GP] + bhhn))
        return (1.0 - z) * n + z * h_prev

    h0 = jnp.zeros((B, HP), f32)

    # ---- layer 1: fused fwd|bwd input projection, one bf16 MXU matmul for all steps ----
    x2 = x_ref[...].reshape(S * B, D)                                   # bf16, time-major rows
    gi_ref[...] = (jnp.dot(x2, wih1_ref[...], preferred_element_type=f32)
                   + bih1_ref[...]).reshape(S, B, GT)

    whh1f, whh1b = whh1f_ref[...], whh1b_ref[...]
    # hoisted: one broadcast per direction per layer (never inside the unrolled loop)
    bhh1nf = jnp.broadcast_to(bhh1n_ref[0:1, 0:HP], (B, HP))
    bhh1nb = jnp.broadcast_to(bhh1n_ref[0:1, HP:2 * HP], (B, HP))

    def step1(t, carry):
        hf, hb = carry
        tb = S - 1 - t
        ghf = jnp.dot(hf, whh1f, preferred_element_type=f32)            # (B, GP)
        ghb = jnp.dot(hb, whh1b, preferred_element_type=f32)            # (B, GP)
        hf = cell(gi_ref[t, :, 0:GP], ghf, bhh1nf, hf)
        hb = cell(gi_ref[tb, :, GP:GT], ghb, bhh1nb, hb)
        o1_ref[t, :, 0:HP] = hf                                         # in-place, vreg aligned
        o1_ref[tb, :, HP:2 * HP] = hb
        return hf, hb

    # TODO(synk): at real S (~128) use unroll=4/8 instead of a full unroll.
    _ = lax.fori_loop(0, S, step1, (h0, h0), unroll=True)

    # ---- layer 2: one fused (S*B, 2*HP) x (2*HP, GT) input projection (gi scratch reused) ----
    o1 = o1_ref[...].reshape(S * B, 2 * HP).astype(bf16)
    gi_ref[...] = (jnp.dot(o1, wih2_ref[...], preferred_element_type=f32)
                   + bih2_ref[...]).reshape(S, B, GT)

    whh2f, whh2b = whh2f_ref[...], whh2b_ref[...]
    bhh2nf = jnp.broadcast_to(bhh2n_ref[0:1, 0:HP], (B, HP))
    bhh2nb = jnp.broadcast_to(bhh2n_ref[0:1, HP:2 * HP], (B, HP))

    def step2(t, carry):
        hf, hb = carry
        tb = S - 1 - t
        ghf = jnp.dot(hf, whh2f, preferred_element_type=f32)
        ghb = jnp.dot(hb, whh2b, preferred_element_type=f32)
        hf = cell(gi_ref[t, :, 0:GP], ghf, bhh2nf, hf)
        hb = cell(gi_ref[tb, :, GP:GT], ghb, bhh2nb, hb)
        return hf, hb

    hf2, hb2 = lax.fori_loop(0, S, step2, (h0, h0), unroll=True)

    # ---- h_n last layer: cat(fwd, bwd) -> Linear -> LogSoftmax.  Single concat, done
    #      once, at a vreg boundary; padded lanes are exactly 0 and wlin rows there are 0.
    comb = jnp.concatenate([hf2, hb2], axis=1)                          # (B, 2*HP)
    logits = (jnp.dot(comb, wlin_ref[...], preferred_element_type=f32)
              + blin_ref[...])                                          # (B, C)
    m = jnp.max(logits, axis=-1, keepdims=True)
    e = jnp.exp(logits - m)
    out_ref[...] = logits - m - jnp.log(jnp.sum(e, axis=-1, keepdims=True))


def _pack_params(p):
    """Pack the per-direction GRU / Linear weights into padded, fused kernel operands.

    Every gate is padded to HP=round_up(H,128) lanes so every gate slice in the kernel
    is vreg-aligned; padded rows/cols are zero (an exact fixed point of the GRU update).
    bhh_r / bhh_z are folded into the fused input bias; bhh_n is kept separate.
    """
    H = p["whh1f"].shape[0]
    HP = _round_up(H, _LANES)
    GP, GT = 3 * HP, 6 * HP
    f32, bf16 = jnp.float32, jnp.bfloat16

    def pad_gate_cols(w):                          # (K, 3H) -> (K, GP)
        out = jnp.zeros((w.shape[0], GP), f32)
        for g in range(3):
            out = out.at[:, g * HP: g * HP + H].set(w[:, g * H:(g + 1) * H])
        return out

    def pad_row_blocks(w, nblk):                   # (nblk*H, N) -> (nblk*HP, N)
        out = jnp.zeros((nblk * HP, w.shape[1]), f32)
        for r in range(nblk):
            out = out.at[r * HP: r * HP + H].set(w[r * H:(r + 1) * H])
        return out

    def fuse_bih(bih_f, bhh_f, bih_b, bhh_b):      # -> (1, GT)
        def fold(bi, bh):                          # fold bhh_r / bhh_z into bih_r / bih_z
            folded = jnp.concatenate([bi[:, :2 * H] + bh[:, :2 * H], bi[:, 2 * H:]], axis=1)
            return pad_gate_cols(folded)
        return jnp.concatenate([fold(bih_f, bhh_f), fold(bih_b, bhh_b)], axis=1)

    def n_bias(bhh_f, bhh_b):                      # (1, 2*HP): [fwd n-bias | bwd n-bias]
        out = jnp.zeros((1, 2 * HP), f32)
        out = out.at[:, 0:H].set(bhh_f[:, 2 * H:])
        out = out.at[:, HP:HP + H].set(bhh_b[:, 2 * H:])
        return out

    wih1 = jnp.concatenate([pad_gate_cols(p["wih1f"]),
                            pad_gate_cols(p["wih1b"])], axis=1).astype(bf16)      # (D, GT)
    wih2 = jnp.concatenate([pad_row_blocks(pad_gate_cols(p["wih2f"]), 2),
                            pad_row_blocks(pad_gate_cols(p["wih2b"]), 2)],
                           axis=1).astype(bf16)                                    # (2HP, GT)
    return dict(
        HP=HP,
        wih1=wih1,
        bih1=fuse_bih(p["bih1f"], p["bhh1f"], p["bih1b"], p["bhh1b"]),
        whh1f=pad_row_blocks(pad_gate_cols(p["whh1f"]), 1),                        # (HP, GP)
        whh1b=pad_row_blocks(pad_gate_cols(p["whh1b"]), 1),
        bhh1n=n_bias(p["bhh1f"], p["bhh1b"]),
        wih2=wih2,
        bih2=fuse_bih(p["bih2f"], p["bhh2f"], p["bih2b"], p["bhh2b"]),
        whh2f=pad_row_blocks(pad_gate_cols(p["whh2f"]), 1),
        whh2b=pad_row_blocks(pad_gate_cols(p["whh2b"]), 1),
        bhh2n=n_bias(p["bhh2f"], p["bhh2b"]),
        wlin=pad_row_blocks(p["wlin"], 2),                                         # (2HP, C)
        blin=p["blin"],
    )


def gli_bert_gru_head(hidden_state, params):
    """hidden_state: [B, S, D] float32 (batch-major, like BERT last_hidden_state)."""
    B, S, D = hidden_state.shape
    C = params["wlin"].shape[1]
    fp = _pack_params(params)
    HP = fp.pop("HP")

    # bf16 halves the bytes for the only big per-example tensor.
    # TODO(synk): at real scale drop this wrapper transpose by gridding the kernel over
    #             S and folding the time-major view into the BlockSpec index_map.
    x = jnp.transpose(hidden_state.astype(jnp.bfloat16), (1, 0, 2))    # [S, B, D]

    args = (x,
            fp["wih1"], fp["bih1"], fp["whh1f"], fp["whh1b"], fp["bhh1n"],
            fp["wih2"], fp["bih2"], fp["whh2f"], fp["whh2b"], fp["bhh2n"],
            fp["wlin"], fp["blin"])

    scratch_shapes = [
        pltpu.VMEM((S, B, 6 * HP), jnp.float32),   # gi (reused by both layers)
        pltpu.VMEM((S, B, 2 * HP), jnp.float32),   # layer-1 outputs [fwd | bwd], in place
    ]

    # Derive the scoped-VMEM budget from the actual buffers (headroom for temporaries
    # and tile padding) instead of a flat cap.
    operand_bytes = sum(int(np.prod(a.shape)) * a.dtype.itemsize for a in args) + B * C * 4
    scratch_bytes = (S * B * 6 * HP + S * B * 2 * HP) * 4
    vmem_limit = int(min(max(8 * 2**20, 4 * (operand_bytes + scratch_bytes)), 96 * 2**20))

    kernel = functools.partial(_gru_head_kernel, S, B, D, HP)
    vmem = pl.BlockSpec(memory_space=pltpu.MemorySpace.VMEM)
    return pl.pallas_call(
        kernel,
        out_shape=jax.ShapeDtypeStruct((B, C), jnp.float32),
        in_specs=[vmem] * len(args),
        out_specs=vmem,
        scratch_shapes=scratch_shapes,
        compiler_params=pltpu.CompilerParams(vmem_limit_bytes=vmem_limit),
    )(*args)


def init_params(key, D, H, C):
    """Deterministic init matching the nn.GRU / nn.Linear parameter shapes
    (weights stored pre-transposed: (in_features, 3H) / (H, 3H) / (2H, C))."""
    k = float(1.0 / np.sqrt(H))
    shapes = {
        "wih1f": (D, 3 * H), "whh1f": (H, 3 * H), "bih1f": (1, 3 * H), "bhh1f": (1, 3 * H),
        "wih1b": (D, 3 * H), "whh1b": (H, 3 * H), "bih1b": (1, 3 * H), "bhh1b": (1, 3 * H),
        "wih2f": (2 * H, 3 * H), "whh2f": (H, 3 * H), "bih2f": (1, 3 * H), "bhh2f": (1, 3 * H),
        "wih2b": (2 * H, 3 * H), "whh2b": (H, 3 * H), "bih2b": (1, 3 * H), "bhh2b": (1, 3 * H),
    }
    keys = jax.random.split(key, len(shapes) + 2)
    params = {}
    for (name, shape), kk in zip(shapes.items(), keys[:len(shapes)]):
        params[name] = jax.random.uniform(kk, shape, jnp.float32, -k, k)
    kl = float(1.0 / np.sqrt(2 * H))
    params["wlin"] = jax.random.uniform(keys[-2], (2 * H, C), jnp.float32, -kl, kl)
    params["blin"] = jax.random.uniform(keys[-1], (1, C), jnp.float32, -kl, kl)
    return params


def _ref_forward(hidden_state, p):
    """Pure-JAX reference of the PyTorch head (eval mode), f32 HIGHEST matmuls."""
    B, S, _ = hidden_state.shape
    H = p["whh1f"].shape[0]

    def cell(x_t, h, wih, whh, bih, bhh):
        gi = jnp.dot(x_t, wih, precision=_HIGH) + bih
        gh = jnp.dot(h, whh, precision=_HIGH) + bhh
        r = jax.nn.sigmoid(gi[:, :H] + gh[:, :H])
        z = jax.nn.sigmoid(gi[:, H:2 * H] + gh[:, H:2 * H])
        n = jnp.tanh(gi[:, 2 * H:] + r * gh[:, 2 * H:])
        return (1.0 - z) * n + z * h

    def bidir_layer(x, wf, wb):
        hf = jnp.zeros((B, H), jnp.float32)
        hb = jnp.zeros((B, H), jnp.float32)
        outs_f = []
        outs_b = [None] * S
        for t in range(S):
            hf = cell(x[:, t], hf, *wf)
            outs_f.append(hf)
            tb = S - 1 - t
            hb = cell(x[:, tb], hb, *wb)
            outs_b[tb] = hb
        out = jnp.concatenate([jnp.stack(outs_f, 1), jnp.stack(outs_b, 1)], axis=-1)
        return out, hf, hb

    wf1 = (p["wih1f"], p["whh1f"], p["bih1f"], p["bhh1f"])
    wb1 = (p["wih1b"], p["whh1b"], p["bih1b"], p["bhh1b"])
    wf2 = (p["wih2f"], p["whh2f"], p["bih2f"], p["bhh2f"])
    wb2 = (p["wih2b"], p["whh2b"], p["bih2b"], p["bhh2b"])
    out1, _, _ = bidir_layer(hidden_state, wf1, wb1)
    _, hf2, hb2 = bidir_layer(out1, wf2, wb2)
    comb = jnp.concatenate([hf2, hb2], axis=1)
    logits = jnp.dot(comb, p["wlin"], precision=_HIGH) + p["blin"]
    return jax.nn.log_softmax(logits, axis=-1)


if __name__ == "__main__":
    # Small shapes consistent with the forward: B=2 examples, S=8 tokens,
    # D=64 stands in for the 768-dim BERT hidden state, H=GRU_head_hidden_size=32,
    # C=num_classes=4.
    B, S, D, H, C = 2, 8, 64, 32, 4
    key = jax.random.PRNGKey(0)
    k_x, k_p = jax.random.split(key)
    hidden_state = jax.random.normal(k_x, (B, S, D), jnp.float32)  # synthetic BERT output
    params = init_params(k_p, D, H, C)

    out = jax.block_until_ready(gli_bert_gru_head(hidden_state, params))
    ref = _ref_forward(hidden_state, params)

    # Kernel uses bf16 inputs/weights for the big matmuls and default MXU precision;
    # tolerance reflects bf16 accuracy vs the f32 HIGHEST reference.  Real bugs
    # (gate order, direction, padding leakage, h_n layer selection) produce O(0.1-1) errors.
    np.testing.assert_allclose(np.asarray(out), np.asarray(ref), rtol=5e-2, atol=5e-2)

    print("KERNEL_OK")
</pallas_src>

<mosaic_0001>
module attributes {stable_mosaic.version = 11 : i64} {
  func.func @_gru_head_kernel(%arg0: memref<8x2x64xbf16, #tpu.memory_space<vmem>>, %arg1: memref<64x768xbf16, #tpu.memory_space<vmem>>, %arg2: memref<1x768xf32, #tpu.memory_space<vmem>>, %arg3: memref<128x384xf32, #tpu.memory_space<vmem>>, %arg4: memref<128x384xf32, #tpu.memory_space<vmem>>, %arg5: memref<1x256xf32, #tpu.memory_space<vmem>>, %arg6: memref<256x768xbf16, #tpu.memory_space<vmem>>, %arg7: memref<1x768xf32, #tpu.memory_space<vmem>>, %arg8: memref<128x384xf32, #tpu.memory_space<vmem>>, %arg9: memref<128x384xf32, #tpu.memory_space<vmem>>, %arg10: memref<1x256xf32, #tpu.memory_space<vmem>>, %arg11: memref<256x4xf32, #tpu.memory_space<vmem>>, %arg12: memref<1x4xf32, #tpu.memory_space<vmem>>, %arg13: memref<2x4xf32, #tpu.memory_space<vmem>>, %arg14: memref<8x2x768xf32, #tpu.memory_space<vmem>>, %arg15: memref<8x2x256xf32, #tpu.memory_space<vmem>>) attributes {dimension_semantics = [], scalar_prefetch = 0 : i64, scratch_operands = 2 : i64, tpu.core_type = #tpu.core_type<tc>} {
    %cst = arith.constant 0.000000e+00 : f32
    %0 = vector.broadcast %cst : f32 to vector<2x128xf32>
    %c0 = arith.constant 0 : index
    %c0_0 = arith.constant 0 : index
    %c0_1 = arith.constant 0 : index
    %1 = vector.load %arg0[%c0, %c0_0, %c0_1] : memref<8x2x64xbf16, #tpu.memory_space<vmem>>, vector<8x2x64xbf16>
    %2 = vector.shape_cast %1 : vector<8x2x64xbf16> to vector<16x64xbf16>
    %c0_2 = arith.constant 0 : index
    %c0_3 = arith.constant 0 : index
    %3 = vector.load %arg1[%c0_2, %c0_3] : memref<64x768xbf16, #tpu.memory_space<vmem>>, vector<64x768xbf16>
    %cst_4 = arith.constant dense<0.000000e+00> : vector<16x768xf32>
    %4 = tpu.matmul %2, %3, %cst_4 {dimension_numbers = #tpu.dot_dimension_numbers<[1], [0], [0], [1], [0, 0, 1, 1], [], []>} : vector<16x64xbf16>, vector<64x768xbf16>, vector<16x768xf32> -> vector<16x768xf32>
    %c0_5 = arith.constant 0 : index
    %c0_6 = arith.constant 0 : index
    %5 = vector.load %arg2[%c0_5, %c0_6] : memref<1x768xf32, #tpu.memory_space<vmem>>, vector<1x768xf32>
    %6 = vector.broadcast %5 : vector<1x768xf32> to vector<16x768xf32>
    %7 = arith.addf %4, %6 : vector<16x768xf32>
    %8 = vector.shape_cast %7 : vector<16x768xf32> to vector<8x2x768xf32>
    %c0_7 = arith.constant 0 : index
    %c0_8 = arith.constant 0 : index
    %c0_9 = arith.constant 0 : index
    %9 = vector.load %arg14[%c0_7, %c0_8, %c0_9] : memref<8x2x768xf32, #tpu.memory_space<vmem>>, vector<8x2x768xf32>
    tpu.vector_store %arg14[%c0_7, %c0_8, %c0_9], %8 {strides = array<i32>} : memref<8x2x768xf32, #tpu.memory_space<vmem>>, vector<8x2x768xf32>,
    %c0_10 = arith.constant 0 : index
    %c0_11 = arith.constant 0 : index
    %10 = vector.load %arg3[%c0_10, %c0_11] : memref<128x384xf32, #tpu.memory_space<vmem>>, vector<128x384xf32>
    %c0_12 = arith.constant 0 : index
    %c0_13 = arith.constant 0 : index
    %11 = vector.load %arg4[%c0_12, %c0_13] : memref<128x384xf32, #tpu.memory_space<vmem>>, vector<128x384xf32>
    %c0_14 = arith.constant 0 : index
    %c0_15 = arith.constant 0 : index
    %12 = vector.load %arg5[%c0_14, %c0_15] : memref<1x256xf32, #tpu.memory_space<vmem>>, vector<1x128xf32>
    %13 = vector.shape_cast %12 : vector<1x128xf32> to vector<1x128xf32>
    %14 = vector.broadcast %13 : vector<1x128xf32> to vector<2x128xf32>
    %c0_16 = arith.constant 0 : index
    %c128 = arith.constant 128 : index
    %15 = vector.load %arg5[%c0_16, %c128] : memref<1x256xf32, #tpu.memory_space<vmem>>, vector<1x128xf32>
    %16 = vector.shape_cast %15 : vector<1x128xf32> to vector<1x128xf32>
    %17 = vector.broadcast %16 : vector<1x128xf32> to vector<2x128xf32>
    %c0_i32 = arith.constant 0 : i32
    %c7_i32 = arith.constant 7 : i32
    %18 = arith.subi %c7_i32, %c0_i32 : i32
    %cst_17 = arith.constant dense<0.000000e+00> : vector<2x384xf32>
    %19 = tpu.matmul %0, %10, %cst_17 {dimension_numbers = #tpu.dot_dimension_numbers<[1], [0], [0], [1], [0, 0, 1, 1], [], []>} : vector<2x128xf32>, vector<128x384xf32>, vector<2x384xf32> -> vector<2x384xf32>
    %cst_18 = arith.constant dense<0.000000e+00> : vector<2x384xf32>
    %20 = tpu.matmul %0, %11, %cst_18 {dimension_numbers = #tpu.dot_dimension_numbers<[1], [0], [0], [1], [0, 0, 1, 1], [], []>} : vector<2x128xf32>, vector<128x384xf32>, vector<2x384xf32> -> vector<2x384xf32>
    %21 = arith.index_cast %c0_i32 : i32 to index
    %c0_19 = arith.constant 0 : index
    %c0_20 = arith.constant 0 : index
    %22 = vector.load %arg14[%21, %c0_19, %c0_20] : memref<8x2x768xf32, #tpu.memory_space<vmem>>, vector<1x2x384xf32>
    %23 = vector.shape_cast %22 : vector<1x2x384xf32> to vector<2x384xf32>
    %24 = vector.extract_strided_slice %23 {offsets = [0, 0], sizes = [2, 128], strides = [1, 1]} : vector<2x384xf32> to vector<2x128xf32>
    %25 = vector.extract_strided_slice %19 {offsets = [0, 0], sizes = [2, 128], strides = [1, 1]} : vector<2x384xf32> to vector<2x128xf32>
    %26 = arith.addf %24, %25 : vector<2x128xf32>
    %27 = arith.negf %26 : vector<2x128xf32>
    %28 = math.exp %27 : vector<2x128xf32>
    %cst_21 = arith.constant 1.000000e+00 : f32
    %29 = vector.broadcast %cst_21 : f32 to vector<2x128xf32>
    %30 = arith.addf %29, %28 : vector<2x128xf32>
    %31 = arith.divf %29, %30 : vector<2x128xf32>
    %32 = vector.extract_strided_slice %23 {offsets = [0, 128], sizes = [2, 128], strides = [1, 1]} : vector<2x384xf32> to vector<2x128xf32>
    %33 = vector.extract_strided_slice %19 {offsets = [0, 128], sizes = [2, 128], strides = [1, 1]} : vector<2x384xf32> to vector<2x128xf32>
    %34 = arith.addf %32, %33 : vector<2x128xf32>
    %35 = arith.negf %34 : vector<2x128xf32>
    %36 = math.exp %35 : vector<2x128xf32>
    %cst_22 = arith.constant 1.000000e+00 : f32
    %37 = vector.broadcast %cst_22 : f32 to vector<2x128xf32>
    %38 = arith.addf %37, %36 : vector<2x128xf32>
    %39 = arith.divf %37, %38 : vector<2x128xf32>
    %40 = vector.extract_strided_slice %23 {offsets = [0, 256], sizes = [2, 128], strides = [1, 1]} : vector<2x384xf32> to vector<2x128xf32>
    %41 = vector.extract_strided_slice %19 {offsets = [0, 256], sizes = [2, 128], strides = [1, 1]} : vector<2x384xf32> to vector<2x128xf32>
    %42 = arith.addf %41, %14 : vector<2x128xf32>
    %43 = arith.mulf %31, %42 : vector<2x128xf32>
    %44 = arith.addf %40, %43 : vector<2x128xf32>
    %45 = math.tanh %44 : vector<2x128xf32>
    %cst_23 = arith.constant 1.000000e+00 : f32
    %46 = vector.broadcast %cst_23 : f32 to vector<2x128xf32>
    %47 = arith.subf %46, %39 : vector<2x128xf32>
    %48 = arith.mulf %47, %45 : vector<2x128xf32>
    %49 = arith.mulf %39, %0 : vector<2x128xf32>
    %50 = arith.addf %48, %49 : vector<2x128xf32>
    %51 = arith.index_cast %18 : i32 to index
    %c0_24 = arith.constant 0 : index
    %c384 = arith.constant 384 : index
    %52 = vector.load %arg14[%51, %c0_24, %c384] : memref<8x2x768xf32, #tpu.memory_space<vmem>>, vector<1x2x384xf32>
    %53 = vector.shape_cast %52 : vector<1x2x384xf32> to vector<2x384xf32>
    %54 = vector.extract_strided_slice %53 {offsets = [0, 0], sizes = [2, 128], strides = [1, 1]} : vector<2x384xf32> to vector<2x128xf32>
    %55 = vector.extract_strided_slice %20 {offsets = [0, 0], sizes = [2, 128], strides = [1, 1]} : vector<2x384xf32> to vector<2x128xf32>
    %56 = arith.addf %54, %55 : vector<2x128xf32>
    %57 = arith.negf %56 : vector<2x128xf32>
    %58 = math.exp %57 : vector<2x128xf32>
    %cst_25 = arith.constant 1.000000e+00 : f32
    %59 = vector.broadcast %cst_25 : f32 to vector<2x128xf32>
    %60 = arith.addf %59, %58 : vector<2x128xf32>
    %61 = arith.divf %59, %60 : vector<2x128xf32>
    %62 = vector.extract_strided_slice %53 {offsets = [0, 128], sizes = [2, 128], strides = [1, 1]} : vector<2x384xf32> to vector<2x128xf32>
    %63 = vector.extract_strided_slice %20 {offsets = [0, 128], sizes = [2, 128], strides = [1, 1]} : vector<2x384xf32> to vector<2x128xf32>
    %64 = arith.addf %62, %63 : vector<2x128xf32>
    %65 = arith.negf %64 : vector<2x128xf32>
    %66 = math.exp %65 : vector<2x128xf32>
    %cst_26 = arith.constant 1.000000e+00 : f32
    %67 = vector.broadcast %cst_26 : f32 to vector<2x128xf32>
    %68 = arith.addf %67, %66 : vector<2x128xf32>
    %69 = arith.divf %67, %68 : vector<2x128xf32>
    %70 = vector.extract_strided_slice %53 {offsets = [0, 256], sizes = [2, 128], strides = [1, 1]} : vector<2x384xf32> to vector<2x128xf32>
    %71 = vector.extract_strided_slice %20 {offsets = [0, 256], sizes = [2, 128], strides = [1, 1]} : vector<2x384xf32> to vector<2x128xf32>
    %72 = arith.addf %71, %17 : vector<2x128xf32>
    %73 = arith.mulf %61, %72 : vector<2x128xf32>
    %74 = arith.addf %70, %73 : vector<2x128xf32>
    %75 = math.tanh %74 : vector<2x128xf32>
    %cst_27 = arith.constant 1.000000e+00 : f32
    %76 = vector.broadcast %cst_27 : f32 to vector<2x128xf32>
    %77 = arith.subf %76, %69 : vector<2x128xf32>
    %78 = arith.mulf %77, %75 : vector<2x128xf32>
    %79 = arith.mulf %69, %0 : vector<2x128xf32>
    %80 = arith.addf %78, %79 : vector<2x128xf32>
    %81 = arith.index_cast %c0_i32 : i32 to index
    %c0_28 = arith.constant 0 : index
    %c0_29 = arith.constant 0 : index
    %82 = vector.load %arg15[%81, %c0_28, %c0_29] : memref<8x2x256xf32, #tpu.memory_space<vmem>>, vector<1x2x128xf32>
    %83 = vector.shape_cast %82 : vector<1x2x128xf32> to vector<2x128xf32>
    %84 = vector.shape_cast %50 : vector<2x128xf32> to vector<1x2x128xf32>
    tpu.vector_store %arg15[%81, %c0_28, %c0_29], %84 {strides = array<i32>} : memref<8x2x256xf32, #tpu.memory_space<vmem>>, vector<1x2x128xf32>,
    %85 = arith.index_cast %18 : i32 to index
    %c0_30 = arith.constant 0 : index
    %c128_31 = arith.constant 128 : index
    %86 = vector.load %arg15[%85, %c0_30, %c128_31] : memref<8x2x256xf32, #tpu.memory_space<vmem>>, vector<1x2x128xf32>
    %87 = vector.shape_cast %86 : vector<1x2x128xf32> to vector<2x128xf32>
    %88 = vector.shape_cast %80 : vector<2x128xf32> to vector<1x2x128xf32>
    tpu.vector_store %arg15[%85, %c0_30, %c128_31], %88 {strides = array<i32>} : memref<8x2x256xf32, #tpu.memory_space<vmem>>, vector<1x2x128xf32>,
    %c1_i32 = arith.constant 1 : i32
    %c7_i32_32 = arith.constant 7 : i32
    %89 = arith.subi %c7_i32_32, %c1_i32 : i32
    %cst_33 = arith.constant dense<0.000000e+00> : vector<2x384xf32>
    %90 = tpu.matmul %50, %10, %cst_33 {dimension_numbers = #tpu.dot_dimension_numbers<[1], [0], [0], [1], [0, 0, 1, 1], [], []>} : vector<2x128xf32>, vector<128x384xf32>, vector<2x384xf32> -> vector<2x384xf32>
    %cst_34 = arith.constant dense<0.000000e+00> : vector<2x384xf32>
    %91 = tpu.matmul %80, %11, %cst_34 {dimension_numbers = #tpu.dot_dimension_numbers<[1], [0], [0], [1], [0, 0, 1, 1], [], []>} : vector<2x128xf32>, vector<128x384xf32>, vector<2x384xf32> -> vector<2x384xf32>
    %92 = arith.index_cast %c1_i32 : i32 to index
    %c0_35 = arith.constant 0 : index
    %c0_36 = arith.constant 0 : index
    %93 = vector.load %arg14[%92, %c0_35, %c0_36] : memref<8x2x768xf32, #tpu.memory_space<vmem>>, vector<1x2x384xf32>
    %94 = vector.shape_cast %93 : vector<1x2x384xf32> to vector<2x384xf32>
    %95 = vector.extract_strided_slice %94 {offsets = [0, 0], sizes = [2, 128], strides = [1, 1]} : vector<2x384xf32> to vector<2x128xf32>
    %96 = vector.extract_strided_slice %90 {offsets = [0, 0], sizes = [2, 128], strides = [1, 1]} : vector<2x384xf32> to vector<2x128xf32>
    %97 = arith.addf %95, %96 : vector<2x128xf32>
    %98 = arith.negf %97 : vector<2x128xf32>
    %99 = math.exp %98 : vector<2x128xf32>
    %cst_37 = arith.constant 1.000000e+00 : f32
    %100 = vector.broadcast %cst_37 : f32 to vector<2x128xf32>
    %101 = arith.addf %100, %99 : vector<2x128xf32>
    %102 = arith.divf %100, %101 : vector<2x128xf32>
    %103 = vector.extract_strided_slice %94 {offsets = [0, 128], sizes = [2, 128], strides = [1, 1]} : vector<2x384xf32> to vector<2x128xf32>
    %104 = vector.extract_strided_slice %90 {offsets = [0, 128], sizes = [2, 128], strides = [1, 1]} : vector<2x384xf32> to vector<2x128xf32>
    %105 = arith.addf %103, %104 : vector<2x128xf32>
    %106 = arith.negf %105 : vector<2x128xf32>
    %107 = math.exp %106 : vector<2x128xf32>
    %cst_38 = arith.constant 1.000000e+00 : f32
    %108 = vector.broadcast %cst_38 : f32 to vector<2x128xf32>
    %109 = arith.addf %108, %107 : vector<2x128xf32>
    %110 = arith.divf %108, %109 : vector<2x128xf32>
    %111 = vector.extract_strided_slice %94 {offsets = [0, 256], sizes = [2, 128], strides = [1, 1]} : vector<2x384xf32> to vector<2x128xf32>
    %112 = vector.extract_strided_slice %90 {offsets = [0, 256], sizes = [2, 128], strides = [1, 1]} : vector<2x384xf32> to vector<2x128xf32>
    %113 = arith.addf %112, %14 : vector<2x128xf32>
    %114 = arith.mulf %102, %113 : vector<2x128xf32>
    %115 = arith.addf %111, %114 : vector<2x128xf32>
    %116 = math.tanh %115 : vector<2x128xf32>
    %cst_39 = arith.constant 1.000000e+00 : f32
    %117 = vector.broadcast %cst_39 : f32 to vector<2x128xf32>
    %118 = arith.subf %117, %110 : vector<2x128xf32>
    %119 = arith.mulf %118, %116 : vector<2x128xf32>
    %120 = arith.mulf %110, %50 : vector<2x128xf32>
    %121 = arith.addf %119, %120 : vector<2x128xf32>
    %122 = arith.index_cast %89 : i32 to index
    %c0_40 = arith.constant 0 : index
    %c384_41 = arith.constant 384 : index
    %123 = vector.load %arg14[%122, %c0_40, %c384_41] : memref<8x2x768xf32, #tpu.memory_space<vmem>>, vector<1x2x384xf32>
    %124 = vector.shape_cast %123 : vector<1x2x384xf32> to vector<2x384xf32>
    %125 = vector.extract_strided_slice %124 {offsets = [0, 0], sizes = [2, 128], strides = [1, 1]} : vector<2x384xf32> to vector<2x128xf32>
    %126 = vector.extract_strided_slice %91 {offsets = [0, 0], sizes = [2, 128], strides = [1, 1]} : vector<2x384xf32> to vector<2x128xf32>
    %127 = arith.addf %125, %126 : vector<2x128xf32>
    %128 = arith.negf %127 : vector<2x128xf32>
    %129 = math.exp %128 : vector<2x128xf32>
    %cst_42 = arith.constant 1.000000e+00 : f32
    %130 = vector.broadcast %cst_42 : f32 to vector<2x128xf32>
    %131 = arith.addf %130, %129 : vector<2x128xf32>
    %132 = arith.divf %130, %131 : vector<2x128xf32>
    %133 = vector.extract_strided_slice %124 {offsets = [0, 128], sizes = [2, 128], strides = [1, 1]} : vector<2x384xf32> to vector<2x128xf32>
    %134 = vector.extract_strided_slice %91 {offsets = [0, 128], sizes = [2, 128], strides = [1, 1]} : vector<2x384xf32> to vector<2x128xf32>
    %135 = arith.addf %133, %134 : vector<2x128xf32>
    %136 = arith.negf %135 : vector<2x128xf32>
    %137 = math.exp %136 : vector<2x128xf32>
    %cst_43 = arith.constant 1.000000e+00 : f32
    %138 = vector.broadcast %cst_43 : f32 to vector<2x128xf32>
    %139 = arith.addf %138, %137 : vector<2x128xf32>
    %140 = arith.divf %138, %139 : vector<2x128xf32>
    %141 = vector.extract_strided_slice %124 {offsets = [0, 256], sizes = [2, 128], strides = [1, 1]} : vector<2x384xf32> to vector<2x128xf32>
    %142 = vector.extract_strided_slice %91 {offsets = [0, 256], sizes = [2, 128], strides = [1, 1]} : vector<2x384xf32> to vector<2x128xf32>
    %143 = arith.addf %142, %17 : vector<2x128xf32>
    %144 = arith.mulf %132, %143 : vector<2x128xf32>
    %145 = arith.addf %141, %144 : vector<2x128xf32>
    %146 = math.tanh %145 : vector<2x128xf32>
    %cst_44 = arith.constant 1.000000e+00 : f32
    %147 = vector.broadcast %cst_44 : f32 to vector<2x128xf32>
    %148 = arith.subf %147, %140 : vector<2x128xf32>
    %149 = arith.mulf %148, %146 : vector<2x128xf32>
    %150 = arith.mulf %140, %80 : vector<2x128xf32>
    %151 = arith.addf %149, %150 : vector<2x128xf32>
    %152 = arith.index_cast %c1_i32 : i32 to index
    %c0_45 = arith.constant 0 : index
    %c0_46 = arith.constant 0 : index
    %153 = vector.load %arg15[%152, %c0_45, %c0_46] : memref<8x2x256xf32, #tpu.memory_space<vmem>>, vector<1x2x128xf32>
    %154 = vector.shape_cast %153 : vector<1x2x128xf32> to vector<2x128xf32>
    %155 = vector.shape_cast %121 : vector<2x128xf32> to vector<1x2x128xf32>
    tpu.vector_store %arg15[%152, %c0_45, %c0_46], %155 {strides = array<i32>} : memref<8x2x256xf32, #tpu.memory_space<vmem>>, vector<1x2x128xf32>,
    %156 = arith.index_cast %89 : i32 to index
    %c0_47 = arith.constant 0 : index
    %c128_48 = arith.constant 128 : index
    %157 = vector.load %arg15[%156, %c0_47, %c128_48] : memref<8x2x256xf32, #tpu.memory_space<vmem>>, vector<1x2x128xf32>
    %158 = vector.shape_cast %157 : vector<1x2x128xf32> to vector<2x128xf32>
    %159 = vector.shape_cast %151 : vector<2x128xf32> to vector<1x2x128xf32>
    tpu.vector_store %arg15[%156, %c0_47, %c128_48], %159 {strides = array<i32>} : memref<8x2x256xf32, #tpu.memory_space<vmem>>, vector<1x2x128xf32>,
    %c2_i32 = arith.constant 2 : i32
    %c7_i32_49 = arith.constant 7 : i32
    %160 = arith.subi %c7_i32_49, %c2_i32 : i32
    %cst_50 = arith.constant dense<0.000000e+00> : vector<2x384xf32>
    %161 = tpu.matmul %121, %10, %cst_50 {dimension_numbers = #tpu.dot_dimension_numbers<[1], [0], [0], [1], [0, 0, 1, 1], [], []>} : vector<2x128xf32>, vector<128x384xf32>, vector<2x384xf32> -> vector<2x384xf32>
    %cst_51 = arith.constant dense<0.000000e+00> : vector<2x384xf32>
    %162 = tpu.matmul %151, %11, %cst_51 {dimension_numbers = #tpu.dot_dimension_numbers<[1], [0], [0], [1], [0, 0, 1, 1], [], []>} : vector<2x128xf32>, vector<128x384xf32>, vector<2x384xf32> -> vector<2x384xf32>
    %163 = arith.index_cast %c2_i32 : i32 to index
    %c0_52 = arith.constant 0 : index
    %c0_53 = arith.constant 0 : index
    %164 = vector.load %arg14[%163, %c0_52, %c0_53] : memref<8x2x768xf32, #tpu.memory_space<vmem>>, vector<1x2x384xf32>
    %165 = vector.shape_cast %164 : vector<1x2x384xf32> to vector<2x384xf32>
    %166 = vector.extract_strided_slice %165 {offsets = [0, 0], sizes = [2, 128], strides = [1, 1]} : vector<2x384xf32> to vector<2x128xf32>
    %167 = vector.extract_strided_slice %161 {offsets = [0, 0], sizes = [2, 128], strides = [1, 1]} : vector<2x384xf32> to vector<2x128xf32>
    %168 = arith.addf %166, %167 : vector<2x128xf32>
    %169 = arith.negf %168 : vector<2x128xf32>
    %170 = math.exp %169 : vector<2x128xf32>
    %cst_54 = arith.constant 1.000000e+00 : f32
    %171 = vector.broadcast %cst_54 : f32 to vector<2x128xf32>
    %172 = arith.addf %171, %170 : vector<2x128xf32>
    %173 = arith.divf %171, %172 : vector<2x128xf32>
    %174 = vector.extract_strided_slice %165 {offsets = [0, 128], sizes = [2, 128], strides = [1, 1]} : vector<2x384xf32> to vector<2x128xf32>
    %175 = vector.extract_strided_slice %161 {offsets = [0, 128], sizes = [2, 128], strides = [1, 1]} : vector<2x384xf32> to vector<2x128xf32>
    %176 = arith.addf %174, %175 : vector<2x128xf32>
    %177 = arith.negf %176 : vector<2x128xf32>
    %178 = math.exp %177 : vector<2x128xf32>
    %cst_55 = arith.constant 1.000000e+00 : f32
    %179 = vector.broadcast %cst_55 : f32 to vector<2x128xf32>
    %180 = arith.addf %179, %178 : vector<2x128xf32>
    %181 = arith.divf %179, %180 : vector<2x128xf32>
    %182 = vector.extract_strided_slice %165 {offsets = [0, 256], sizes = [2, 128], strides = [1, 1]} : vector<2x384xf32> to vector<2x128xf32>
    %183 = vector.extract_strided_slice %161 {offsets = [0, 256], sizes = [2, 128], strides = [1, 1]} : vector<2x384xf32> to vector<2x128xf32>
    %184 = arith.addf %183, %14 : vector<2x128xf32>
    %185 = arith.mulf %173, %184 : vector<2x128xf32>
    %186 = arith.addf %182, %185 : vector<2x128xf32>
    %187 = math.tanh %186 : vector<2x128xf32>
    %cst_56 = arith.constant 1.000000e+00 : f32
    %188 = vector.broadcast %cst_56 : f32 to vector<2x128xf32>
    %189 = arith.subf %188, %181 : vector<2x128xf32>
    %190 = arith.mulf %189, %187 : vector<2x128xf32>
    %191 = arith.mulf %181, %121 : vector<2x128xf32>
    %192 = arith.addf %190, %191 : vector<2x128xf32>
    %193 = arith.index_cast %160 : i32 to index
    %c0_57 = arith.constant 0 : index
    %c384_58 = arith.constant 384 : index
    %194 = vector.load %arg14[%193, %c0_57, %c384_58] : memref<8x2x768xf32, #tpu.memory_space<vmem>>, vector<1x2x384xf32>
    %195 = vector.shape_cast %194 : vector<1x2x384xf32> to vector<2x384xf32>
    %196 = vector.extract_strided_slice %195 {offsets = [0, 0], sizes = [2, 128], strides = [1, 1]} : vector<2x384xf32> to vector<2x128xf32>
    %197 = vector.extract_strided_slice %162 {offsets = [0, 0], sizes = [2, 128], strides = [1, 1]} : vector<2x384xf32> to vector<2x128xf32>
    %198 = arith.addf %196, %197 : vector<2x128xf32>
    %199 = arith.negf %198 : vector<2x128xf32>
    %200 = math.exp %199 : vector<2x128xf32>
    %cst_59 = arith.constant 1.000000e+00 : f32
    %201 = vector.broadcast %cst_59 : f32 to vector<2x128xf32>
    %202 = arith.addf %201, %200 : vector<2x128xf32>
    %203 = arith.divf %201, %202 : vector<2x128xf32>
    %204 = vector.extract_strided_slice %195 {offsets = [0, 128], sizes = [2, 128], strides = [1, 1]} : vector<2x384xf32> to vector<2x128xf32>
    %205 = vector.extract_strided_slice %162 {offsets = [0, 128], sizes = [2, 128], strides = [1, 1]} : vector<2x384xf32> to vector<2x128xf32>
    %206 = arith.addf %204, %205 : vector<2x128xf32>
    %207 = arith.negf %206 : vector<2x128xf32>
    %208 = math.exp %207 : vector<2x128xf32>
    %cst_60 = arith.constant 1.000000e+00 : f32
    %209 = vector.broadcast %cst_60 : f32 to vector<2x128xf32>
    %210 = arith.addf %209, %208 : vector<2x128xf32>
    %211 = arith.divf %209, %210 : vector<2x128xf32>
    %212 = vector.extract_strided_slice %195 {offsets = [0, 256], sizes = [2, 128], strides = [1, 1]} : vector<2x384xf32> to vector<2x128xf32>
    %213 = vector.extract_strided_slice %162 {offsets = [0, 256], sizes = [2, 128], strides = [1, 1]} : vector<2x384xf32> to vector<2x128xf32>
    %214 = arith.addf %213, %17 : vector<2x128xf32>
    %215 = arith.mulf %203, %214 : vector<2x128xf32>
    %216 = arith.addf %212, %215 : vector<2x128xf32>
    %217 = math.tanh %216 : vector<2x128xf32>
    %cst_61 = arith.constant 1.000000e+00 : f32
    %218 = vector.broadcast %cst_61 : f32 to vector<2x128xf32>
    %219 = arith.subf %218, %211 : vector<2x128xf32>
    %220 = arith.mulf %219, %217 : vector<2x128xf32>
    %221 = arith.mulf %211, %151 : vector<2x128xf32>
    %222 = arith.addf %220, %221 : vector<2x128xf32>
    %223 = arith.index_cast %c2_i32 : i32 to index
    %c0_62 = arith.constant 0 : index
    %c0_63 = arith.constant 0 : index
    %224 = vector.load %arg15[%223, %c0_62, %c0_63] : memref<8x2x256xf32, #tpu.memory_space<vmem>>, vector<1x2x128xf32>
    %225 = vector.shape_cast %224 : vector<1x2x128xf32> to vector<2x128xf32>
    %226 = vector.shape_cast %192 : vector<2x128xf32> to vector<1x2x128xf32>
    tpu.vector_store %arg15[%223, %c0_62, %c0_63], %226 {strides = array<i32>} : memref<8x2x256xf32, #tpu.memory_space<vmem>>, vector<1x2x128xf32>,
    %227 = arith.index_cast %160 : i32 to index
    %c0_64 = arith.constant 0 : index
    %c128_65 = arith.constant 128 : index
    %228 = vector.load %arg15[%227, %c0_64, %c128_65] : memref<8x2x256xf32, #tpu.memory_space<vmem>>, vector<1x2x128xf32>
    %229 = vector.shape_cast %228 : vector<1x2x128xf32> to vector<2x128xf32>
    %230 = vector.shape_cast %222 : vector<2x128xf32> to vector<1x2x128xf32>
    tpu.vector_store %arg15[%227, %c0_64, %c128_65], %230 {strides = array<i32>} : memref<8x2x256xf32, #tpu.memory_space<vmem>>, vector<1x2x128xf32>,
    %c3_i32 = arith.constant 3 : i32
    %c7_i32_66 = arith.constant 7 : i32
    %231 = arith.subi %c7_i32_66, %c3_i32 : i32
    %cst_67 = arith.constant dense<0.000000e+00> : vector<2x384xf32>
    %232 = tpu.matmul %192, %10, %cst_67 {dimension_numbers = #tpu.dot_dimension_numbers<[1], [0], [0], [1], [0, 0, 1, 1], [], []>} : vector<2x128xf32>, vector<128x384xf32>, vector<2x384xf32> -> vector<2x384xf32>
    %cst_68 = arith.constant dense<0.000000e+00> : vector<2x384xf32>
    %233 = tpu.matmul %222, %11, %cst_68 {dimension_numbers = #tpu.dot_dimension_numbers<[1], [0], [0], [1], [0, 0, 1, 1], [], []>} : vector<2x128xf32>, vector<128x384xf32>, vector<2x384xf32> -> vector<2x384xf32>
    %234 = arith.index_cast %c3_i32 : i32 to index
    %c0_69 = arith.constant 0 : index
    %c0_70 = arith.constant 0 : index
    %235 = vector.load %arg14[%234, %c0_69, %c0_70] : memref<8x2x768xf32, #tpu.memory_space<vmem>>, vector<1x2x384xf32>
    %236 = vector.shape_cast %235 : vector<1x2x384xf32> to vector<2x384xf32>
    %237 = vector.extract_strided_slice %236 {offsets = [0, 0], sizes = [2, 128], strides = [1, 1]} : vector<2x384xf32> to vector<2x128xf32>
    %238 = vector.extract_strided_slice %232 {offsets = [0, 0], sizes = [2, 128], strides = [1, 1]} : vector<2x384xf32> to vector<2x128xf32>
    %239 = arith.addf %237, %238 : vector<2x128xf32>
    %240 = arith.negf %239 : vector<2x128xf32>
    %241 = math.exp %240 : vector<2x128xf32>
    %cst_71 = arith.constant 1.000000e+00 : f32
    %242 = vector.broadcast %cst_71 : f32 to vector<2x128xf32>
    %243 = arith.addf %242, %241 : vector<2x128xf32>
    %244 = arith.divf %242, %243 : vector<2x128xf32>
    %245 = vector.extract_strided_slice %236 {offsets = [0, 128], sizes = [2, 128], strides = [1, 1]} : vector<2x384xf32> to vector<2x128xf32>
    %246 = vector.extract_strided_slice %232 {offsets = [0, 128], sizes = [2, 128], strides = [1, 1]} : vector<2x384xf32> to vector<2x128xf32>
    %247 = arith.addf %245, %246 : vector<2x128xf32>
    %248 = arith.negf %247 : vector<2x128xf32>
    %249 = math.exp %248 : vector<2x128xf32>
    %cst_72 = arith.constant 1.000000e+00 : f32
    %250 = vector.broadcast %cst_72 : f32 to vector<2x128xf32>
    %251 = arith.addf %250, %249 : vector<2x128xf32>
    %252 = arith.divf %250, %251 : vector<2x128xf32>
    %253 = vector.extract_strided_slice %236 {offsets = [0, 256], sizes = [2, 128], strides = [1, 1]} : vector<2x384xf32> to vector<2x128xf32>
    %254 = vector.extract_strided_slice %232 {offsets = [0, 256], sizes = [2, 128], strides = [1, 1]} : vector<2x384xf32> to vector<2x128xf32>
    %255 = arith.addf %254, %14 : vector<2x128xf32>
    %256 = arith.mulf %244, %255 : vector<2x128xf32>
    %257 = arith.addf %253, %256 : vector<2x128xf32>
    %258 = math.tanh %257 : vector<2x128xf32>
    %cst_73 = arith.constant 1.000000e+00 : f32
    %259 = vector.broadcast %cst_73 : f32 to vector<2x128xf32>
    %260 = arith.subf %259, %252 : vector<2x128xf32>
    %261 = arith.mulf %260, %258 : vector<2x128xf32>
    %262 = arith.mulf %252, %192 : vector<2x128xf32>
    %263 = arith.addf %261, %262 : vector<2x128xf32>
    %264 = arith.index_cast %231 : i32 to index
    %c0_74 = arith.constant 0 : index
    %c384_75 = arith.constant 384 : index
    %265 = vector.load %arg14[%264, %c0_74, %c384_75] : memref<8x2x768xf32, #tpu.memory_space<vmem>>, vector<1x2x384xf32>
    %266 = vector.shape_cast %265 : vector<1x2x384xf32> to vector<2x384xf32>
    %267 = vector.extract_strided_slice %266 {offsets = [0, 0], sizes = [2, 128], strides = [1, 1]} : vector<2x384xf32> to vector<2x128xf32>
    %268 = vector.extract_strided_slice %233 {offsets = [0, 0], sizes = [2, 128], strides = [1, 1]} : vector<2x384xf32> to vector<2x128xf32>
    %269 = arith.addf %267, %268 : vector<2x128xf32>
    %270 = arith.negf %269 : vector<2x128xf32>
    %271 = math.exp %270 : vector<2x128xf32>
    %cst_76 = arith.constant 1.000000e+00 : f32
    %272 = vector.broadcast %cst_76 : f32 to vector<2x128xf32>
    %273 = arith.addf %272, %271 : vector<2x128xf32>
    %274 = arith.divf %272, %273 : vector<2x128xf32>
    %275 = vector.extract_strided_slice %266 {offsets = [0, 128], sizes = [2, 128], strides = [1, 1]} : vector<2x384xf32> to vector<2x128xf32>
    %276 = vector.extract_strided_slice %233 {offsets = [0, 128], sizes = [2, 128], strides = [1, 1]} : vector<2x384xf32> to vector<2x128xf32>
    %277 = arith.addf %275, %276 : vector<2x128xf32>
    %278 = arith.negf %277 : vector<2x128xf32>
    %279 = math.exp %278 : vector<2x128xf32>
    %cst_77 = arith.constant 1.000000e+00 : f32
    %280 = vector.broadcast %cst_77 : f32 to vector<2x128xf32>
    %281 = arith.addf %280, %279 : vector<2x128xf32>
    %282 = arith.divf %280, %281 : vector<2x128xf32>
    %283 = vector.extract_strided_slice %266 {offsets = [0, 256], sizes = [2, 128], strides = [1, 1]} : vector<2x384xf32> to vector<2x128xf32>
    %284 = vector.extract_strided_slice %233 {offsets = [0, 256], sizes = [2, 128], strides = [1, 1]} : vector<2x384xf32> to vector<2x128xf32>
    %285 = arith.addf %284, %17 : vector<2x128xf32>
    %286 = arith.mulf %274, %285 : vector<2x128xf32>
    %287 = arith.addf %283, %286 : vector<2x128xf32>
    %288 = math.tanh %287 : vector<2x128xf32>
    %cst_78 = arith.constant 1.000000e+00 : f32
    %289 = vector.broadcast %cst_78 : f32 to vector<2x128xf32>
    %290 = arith.subf %289, %282 : vector<2x128xf32>
    %291 = arith.mulf %290, %288 : vector<2x128xf32>
    %292 = arith.mulf %282, %222 : vector<2x128xf32>
    %293 = arith.addf %291, %292 : vector<2x128xf32>
    %294 = arith.index_cast %c3_i32 : i32 to index
    %c0_79 = arith.constant 0 : index
    %c0_80 = arith.constant 0 : index
    %295 = vector.load %arg15[%294, %c0_79, %c0_80] : memref<8x2x256xf32, #tpu.memory_space<vmem>>, vector<1x2x128xf32>
    %296 = vector.shape_cast %295 : vector<1x2x128xf32> to vector<2x128xf32>
    %297 = vector.shape_cast %263 : vector<2x128xf32> to vector<1x2x128xf32>
    tpu.vector_store %arg15[%294, %c0_79, %c0_80], %297 {strides = array<i32>} : memref<8x2x256xf32, #tpu.memory_space<vmem>>, vector<1x2x128xf32>,
    %298 = arith.index_cast %231 : i32 to index
    %c0_81 = arith.constant 0 : index
    %c128_82 = arith.constant 128 : index
    %299 = vector.load %arg15[%298, %c0_81, %c128_82] : memref<8x2x256xf32, #tpu.memory_space<vmem>>, vector<1x2x128xf32>
    %300 = vector.shape_cast %299 : vector<1x2x128xf32> to vector<2x128xf32>
    %301 = vector.shape_cast %293 : vector<2x128xf32> to vector<1x2x128xf32>
    tpu.vector_store %arg15[%298, %c0_81, %c128_82], %301 {strides = array<i32>} : memref<8x2x256xf32, #tpu.memory_space<vmem>>, vector<1x2x128xf32>,
    %c4_i32 = arith.constant 4 : i32
    %c7_i32_83 = arith.constant 7 : i32
    %302 = arith.subi %c7_i32_83, %c4_i32 : i32
    %cst_84 = arith.constant dense<0.000000e+00> : vector<2x384xf32>
    %303 = tpu.matmul %263, %10, %cst_84 {dimension_numbers = #tpu.dot_dimension_numbers<[1], [0], [0], [1], [0, 0, 1, 1], [], []>} : vector<2x128xf32>, vector<128x384xf32>, vector<2x384xf32> -> vector<2x384xf32>
    %cst_85 = arith.constant dense<0.000000e+00> : vector<2x384xf32>
    %304 = tpu.matmul %293, %11, %cst_85 {dimension_numbers = #tpu.dot_dimension_numbers<[1], [0], [0], [1], [0, 0, 1, 1], [], []>} : vector<2x128xf32>, vector<128x384xf32>, vector<2x384xf32> -> vector<2x384xf32>
    %305 = arith.index_cast %c4_i32 : i32 to index
    %c0_86 = arith.constant 0 : index
    %c0_87 = arith.constant 0 : index
    %306 = vector.load %arg14[%305, %c0_86, %c0_87] : memref<8x2x768xf32, #tpu.memory_space<vmem>>, vector<1x2x384xf32>
    %307 = vector.shape_cast %306 : vector<1x2x384xf32> to vector<2x384xf32>
    %308 = vector.extract_strided_slice %307 {offsets = [0, 0], sizes = [2, 128], strides = [1, 1]} : vector<2x384xf32> to vector<2x128xf32>
    %309 = vector.extract_strided_slice %303 {offsets = [0, 0], sizes = [2, 128], strides = [1, 1]} : vector<2x384xf32> to vector<2x128xf32>
    %310 = arith.addf %308, %309 : vector<2x128xf32>
    %311 = arith.negf %310 : vector<2x128xf32>
    %312 = math.exp %311 : vector<2x128xf32>
    %cst_88 = arith.constant 1.000000e+00 : f32
    %313 = vector.broadcast %cst_88 : f32 to vector<2x128xf32>
    %314 = arith.addf %313, %312 : vector<2x128xf32>
    %315 = arith.divf %313, %314 : vector<2x128xf32>
    %316 = vector.extract_strided_slice %307 {offsets = [0, 128], sizes = [2, 128], strides = [1, 1]} : vector<2x384xf32> to vector<2x128xf32>
    %317 = vector.extract_strided_slice %303 {offsets = [0, 128], sizes = [2, 128], strides = [1, 1]} : vector<2x384xf32> to vector<2x128xf32>
    %318 = arith.addf %316, %317 : vector<2x128xf32>
    %319 = arith.negf %318 : vector<2x128xf32>
    %320 = math.exp %319 : vector<2x128xf32>
    %cst_89 = arith.constant 1.000000e+00 : f32
    %321 = vector.broadcast %cst_89 : f32 to vector<2x128xf32>
    %322 = arith.addf %321, %320 : vector<2x128xf32>
    %323 = arith.divf %321, %322 : vector<2x128xf32>
    %324 = vector.extract_strided_slice %307 {offsets = [0, 256], sizes = [2, 128], strides = [1, 1]} : vector<2x384xf32> to vector<2x128xf32>
    %325 = vector.extract_strided_slice %303 {offsets = [0, 256], sizes = [2, 128], strides = [1, 1]} : vector<2x384xf32> to vector<2x128xf32>
    %326 = arith.addf %325, %14 : vector<2x128xf32>
    %327 = arith.mulf %315, %326 : vector<2x128xf32>
    %328 = arith.addf %324, %327 : vector<2x128xf32>
    %329 = math.tanh %328 : vector<2x128xf32>
    %cst_90 = arith.constant 1.000000e+00 : f32
    %330 = vector.broadcast %cst_90 : f32 to vector<2x128xf32>
    %331 = arith.subf %330, %323 : vector<2x128xf32>
    %332 = arith.mulf %331, %329 : vector<2x128xf32>
    %333 = arith.mulf %323, %263 : vector<2x128xf32>
    %334 = arith.addf %332, %333 : vector<2x128xf32>
    %335 = arith.index_cast %302 : i32 to index
    %c0_91 = arith.constant 0 : index
    %c384_92 = arith.constant 384 : index
    %336 = vector.load %arg14[%335, %c0_91, %c384_92] : memref<8x2x768xf32, #tpu.memory_space<vmem>>, vector<1x2x384xf32>
    %337 = vector.shape_cast %336 : vector<1x2x384xf32> to vector<2x384xf32>
    %338 = vector.extract_strided_slice %337 {offsets = [0, 0], sizes = [2, 128], strides = [1, 1]} : vector<2x384xf32> to vector<2x128xf32>
    %339 = vector.extract_strided_slice %304 {offsets = [0, 0], sizes = [2, 128], strides = [1, 1]} : vector<2x384xf32> to vector<2x128xf32>
    %340 = arith.addf %338, %339 : vector<2x128xf32>
    %341 = arith.negf %340 : vector<2x128xf32>
    %342 = math.exp %341 : vector<2x128xf32>
    %cst_93 = arith.constant 1.000000e+00 : f32
    %343 = vector.broadcast %cst_93 : f32 to vector<2x128xf32>
    %344 = arith.addf %343, %342 : vector<2x128xf32>
    %345 = arith.divf %343, %344 : vector<2x128xf32>
    %346 = vector.extract_strided_slice %337 {offsets = [0, 128], sizes = [2, 128], strides = [1, 1]} : vector<2x384xf32> to vector<2x128xf32>
    %347 = vector.extract_strided_slice %304 {offsets = [0, 128], sizes = [2, 128], strides = [1, 1]} : vector<2x384xf32> to vector<2x128xf32>
    %348 = arith.addf %346, %347 : vector<2x128xf32>
    %349 = arith.negf %348 : vector<2x128xf32>
    %350 = math.exp %349 : vector<2x128xf32>
    %cst_94 = arith.constant 1.000000e+00 : f32
    %351 = vector.broadcast %cst_94 : f32 to vector<2x128xf32>
    %352 = arith.addf %351, %350 : vector<2x128xf32>
    %353 = arith.divf %351, %352 : vector<2x128xf32>
    %354 = vector.extract_strided_slice %337 {offsets = [0, 256], sizes = [2, 128], strides = [1, 1]} : vector<2x384xf32> to vector<2x128xf32>
    %355 = vector.extract_strided_slice %304 {offsets = [0, 256], sizes = [2, 128], strides = [1, 1]} : vector<2x384xf32> to vector<2x128xf32>
    %356 = arith.addf %355, %17 : vector<2x128xf32>
    %357 = arith.mulf %345, %356 : vector<2x128xf32>
    %358 = arith.addf %354, %357 : vector<2x128xf32>
    %359 = math.tanh %358 : vector<2x128xf32>
    %cst_95 = arith.constant 1.000000e+00 : f32
    %360 = vector.broadcast %cst_95 : f32 to vector<2x128xf32>
    %361 = arith.subf %360, %353 : vector<2x128xf32>
    %362 = arith.mulf %361, %359 : vector<2x128xf32>
    %363 = arith.mulf %353, %293 : vector<2x128xf32>
    %364 = arith.addf %362, %363 : vector<2x128xf32>
    %365 = arith.index_cast %c4_i32 : i32 to index
    %c0_96 = arith.constant 0 : index
    %c0_97 = arith.constant 0 : index
    %366 = vector.load %arg15[%365, %c0_96, %c0_97] : memref<8x2x256xf32, #tpu.memory_space<vmem>>, vector<1x2x128xf32>
    %367 = vector.shape_cast %366 : vector<1x2x128xf32> to vector<2x128xf32>
    %368 = vector.shape_cast %334 : vector<2x128xf32> to vector<1x2x128xf32>
    tpu.vector_store %arg15[%365, %c0_96, %c0_97], %368 {strides = array<i32>} : memref<8x2x256xf32, #tpu.memory_space<vmem>>, vector<1x2x128xf32>,
    %369 = arith.index_cast %302 : i32 to index
    %c0_98 = arith.constant 0 : index
    %c128_99 = arith.constant 128 : index
    %370 = vector.load %arg15[%369, %c0_98, %c128_99] : memref<8x2x256xf32, #tpu.memory_space<vmem>>, vector<1x2x128xf32>
    %371 = vector.shape_cast %370 : vector<1x2x128xf32> to vector<2x128xf32>
    %372 = vector.shape_cast %364 : vector<2x128xf32> to vector<1x2x128xf32>
    tpu.vector_store %arg15[%369, %c0_98, %c128_99], %372 {strides = array<i32>} : memref<8x2x256xf32, #tpu.memory_space<vmem>>, vector<1x2x128xf32>,
    %c5_i32 = arith.constant 5 : i32
    %c7_i32_100 = arith.constant 7 : i32
    %373 = arith.subi %c7_i32_100, %c5_i32 : i32
    %cst_101 = arith.constant dense<0.000000e+00> : vector<2x384xf32>
    %374 = tpu.matmul %334, %10, %cst_101 {dimension_numbers = #tpu.dot_dimension_numbers<[1], [0], [0], [1], [0, 0, 1, 1], [], []>} : vector<2x128xf32>, vector<128x384xf32>, vector<2x384xf32> -> vector<2x384xf32>
    %cst_102 = arith.constant dense<0.000000e+00> : vector<2x384xf32>
    %375 = tpu.matmul %364, %11, %cst_102 {dimension_numbers = #tpu.dot_dimension_numbers<[1], [0], [0], [1], [0, 0, 1, 1], [], []>} : vector<2x128xf32>, vector<128x384xf32>, vector<2x384xf32> -> vector<2x384xf32>
    %376 = arith.index_cast %c5_i32 : i32 to index
    %c0_103 = arith.constant 0 : index
    %c0_104 = arith.constant 0 : index
    %377 = vector.load %arg14[%376, %c0_103, %c0_104] : memref<8x2x768xf32, #tpu.memory_space<vmem>>, vector<1x2x384xf32>
    %378 = vector.shape_cast %377 : vector<1x2x384xf32> to vector<2x384xf32>
    %379 = vector.extract_strided_slice %378 {offsets = [0, 0], sizes = [2, 128], strides = [1, 1]} : vector<2x384xf32> to vector<2x128xf32>
    %380 = vector.extract_strided_slice %374 {offsets = [0, 0], sizes = [2, 128], strides = [1, 1]} : vector<2x384xf32> to vector<2x128xf32>
    %381 = arith.addf %379, %380 : vector<2x128xf32>
    %382 = arith.negf %381 : vector<2x128xf32>
    %383 = math.exp %382 : vector<2x128xf32>
    %cst_105 = arith.constant 1.000000e+00 : f32
    %384 = vector.broadcast %cst_105 : f32 to vector<2x128xf32>
    %385 = arith.addf %384, %383 : vector<2x128xf32>
    %386 = arith.divf %384, %385 : vector<2x128xf32>
    %387 = vector.extract_strided_slice %378 {offsets = [0, 128], sizes = [2, 128], strides = [1, 1]} : vector<2x384xf32> to vector<2x128xf32>
    %388 = vector.extract_strided_slice %374 {offsets = [0, 128], sizes = [2, 128], strides = [1, 1]} : vector<2x384xf32> to vector<2x128xf32>
    %389 = arith.addf %387, %388 : vector<2x128xf32>
    %390 = arith.negf %389 : vector<2x128xf32>
    %391 = math.exp %390 : vector<2x128xf32>
    %cst_106 = arith.constant 1.000000e+00 : f32
    %392 = vector.broadcast %cst_106 : f32 to vector<2x128xf32>
    %393 = arith.addf %392, %391 : vector<2x128xf32>
    %394 = arith.divf %392, %393 : vector<2x128xf32>
    %395 = vector.extract_strided_slice %378 {offsets = [0, 256], sizes = [2, 128], strides = [1, 1]} : vector<2x384xf32> to vector<2x128xf32>
    %396 = vector.extract_strided_slice %374 {offsets = [0, 256], sizes = [2, 128], strides = [1, 1]} : vector<2x384xf32> to vector<2x128xf32>
    %397 = arith.addf %396, %14 : vector<2x128xf32>
    %398 = arith.mulf %386, %397 : vector<2x128xf32>
    %399 = arith.addf %395, %398 : vector<2x128xf32>
    %400 = math.tanh %399 : vector<2x128xf32>
    %cst_107 = arith.constant 1.000000e+00 : f32
    %401 = vector.broadcast %cst_107 : f32 to vector<2x128xf32>
    %402 = arith.subf %401, %394 : vector<2x128xf32>
    %403 = arith.mulf %402, %400 : vector<2x128xf32>
    %404 = arith.mulf %394, %334 : vector<2x128xf32>
    %405 = arith.addf %403, %404 : vector<2x128xf32>
    %406 = arith.index_cast %373 : i32 to index
    %c0_108 = arith.constant 0 : index
    %c384_109 = arith.constant 384 : index
    %407 = vector.load %arg14[%406, %c0_108, %c384_109] : memref<8x2x768xf32, #tpu.memory_space<vmem>>, vector<1x2x384xf32>
    %408 = vector.shape_cast %407 : vector<1x2x384xf32> to vector<2x384xf32>
    %409 = vector.extract_strided_slice %408 {offsets = [0, 0], sizes = [2, 128], strides = [1, 1]} : vector<2x384xf32> to vector<2x128xf32>
    %410 = vector.extract_strided_slice %375 {offsets = [0, 0], sizes = [2, 128], strides = [1, 1]} : vector<2x384xf32> to vector<2x128xf32>
    %411 = arith.addf %409, %410 : vector<2x128xf32>
    %412 = arith.negf %411 : vector<2x128xf32>
    %413 = math.exp %412 : vector<2x128xf32>
    %cst_110 = arith.constant 1.000000e+00 : f32
    %414 = vector.broadcast %cst_110 : f32 to vector<2x128xf32>
    %415 = arith.addf %414, %413 : vector<2x128xf32>
    %416 = arith.divf %414, %415 : vector<2x128xf32>
    %417 = vector.extract_strided_slice %408 {offsets = [0, 128], sizes = [2, 128], strides = [1, 1]} : vector<2x384xf32> to vector<2x128xf32>
    %418 = vector.extract_strided_slice %375 {offsets = [0, 128], sizes = [2, 128], strides = [1, 1]} : vector<2x384xf32> to vector<2x128xf32>
    %419 = arith.addf %417, %418 : vector<2x128xf32>
    %420 = arith.negf %419 : vector<2x128xf32>
    %421 = math.exp %420 : vector<2x128xf32>
    %cst_111 = arith.constant 1.000000e+00 : f32
    %422 = vector.broadcast %cst_111 : f32 to vector<2x128xf32>
    %423 = arith.addf %422, %421 : vector<2x128xf32>
    %424 = arith.divf %422, %423 : vector<2x128xf32>
    %425 = vector.extract_strided_slice %408 {offsets = [0, 256], sizes = [2, 128], strides = [1, 1]} : vector<2x384xf32> to vector<2x128xf32>
    %426 = vector.extract_strided_slice %375 {offsets = [0, 256], sizes = [2, 128], strides = [1, 1]} : vector<2x384xf32> to vector<2x128xf32>
    %427 = arith.addf %426, %17 : vector<2x128xf32>
    %428 = arith.mulf %416, %427 : vector<2x128xf32>
    %429 = arith.addf %425, %428 : vector<2x128xf32>
    %430 = math.tanh %429 : vector<2x128xf32>
    %cst_112 = arith.constant 1.000000e+00 : f32
    %431 = vector.broadcast %cst_112 : f32 to vector<2x128xf32>
    %432 = arith.subf %431, %424 : vector<2x128xf32>
    %433 = arith.mulf %432, %430 : vector<2x128xf32>
    %434 = arith.mulf %424, %364 : vector<2x128xf32>
    %435 = arith.addf %433, %434 : vector<2x128xf32>
    %436 = arith.index_cast %c5_i32 : i32 to index
    %c0_113 = arith.constant 0 : index
    %c0_114 = arith.constant 0 : index
    %437 = vector.load %arg15[%436, %c0_113, %c0_114] : memref<8x2x256xf32, #tpu.memory_space<vmem>>, vector<1x2x128xf32>
    %438 = vector.shape_cast %437 : vector<1x2x128xf32> to vector<2x128xf32>
    %439 = vector.shape_cast %405 : vector<2x128xf32> to vector<1x2x128xf32>
    tpu.vector_store %arg15[%436, %c0_113, %c0_114], %439 {strides = array<i32>} : memref<8x2x256xf32, #tpu.memory_space<vmem>>, vector<1x2x128xf32>,
    %440 = arith.index_cast %373 : i32 to index
    %c0_115 = arith.constant 0 : index
    %c128_116 = arith.constant 128 : index
    %441 = vector.load %arg15[%440, %c0_115, %c128_116] : memref<8x2x256xf32, #tpu.memory_space<vmem>>, vector<1x2x128xf32>
    %442 = vector.shape_cast %441 : vector<1x2x128xf32> to vector<2x128xf32>
    %443 = vector.shape_cast %435 : vector<2x128xf32> to vector<1x2x128xf32>
    tpu.vector_store %arg15[%440, %c0_115, %c128_116], %443 {strides = array<i32>} : memref<8x2x256xf32, #tpu.memory_space<vmem>>, vector<1x2x128xf32>,
    %c6_i32 = arith.constant 6 : i32
    %c7_i32_117 = arith.constant 7 : i32
    %444 = arith.subi %c7_i32_117, %c6_i32 : i32
    %cst_118 = arith.constant dense<0.000000e+00> : vector<2x384xf32>
    %445 = tpu.matmul %405, %10, %cst_118 {dimension_numbers = #tpu.dot_dimension_numbers<[1], [0], [0], [1], [0, 0, 1, 1], [], []>} : vector<2x128xf32>, vector<128x384xf32>, vector<2x384xf32> -> vector<2x384xf32>
    %cst_119 = arith.constant dense<0.000000e+00> : vector<2x384xf32>
    %446 = tpu.matmul %435, %11, %cst_119 {dimension_numbers = #tpu.dot_dimension_numbers<[1], [0], [0], [1], [0, 0, 1, 1], [], []>} : vector<2x128xf32>, vector<128x384xf32>, vector<2x384xf32> -> vector<2x384xf32>
    %447 = arith.index_cast %c6_i32 : i32 to index
    %c0_120 = arith.constant 0 : index
    %c0_121 = arith.constant 0 : index
    %448 = vector.load %arg14[%447, %c0_120, %c0_121] : memref<8x2x768xf32, #tpu.memory_space<vmem>>, vector<1x2x384xf32>
    %449 = vector.shape_cast %448 : vector<1x2x384xf32> to vector<2x384xf32>
    %450 = vector.extract_strided_slice %449 {offsets = [0, 0], sizes = [2, 128], strides = [1, 1]} : vector<2x384xf32> to vector<2x128xf32>
    %451 = vector.extract_strided_slice %445 {offsets = [0, 0], sizes = [2, 128], strides = [1, 1]} : vector<2x384xf32> to vector<2x128xf32>
    %452 = arith.addf %450, %451 : vector<2x128xf32>
    %453 = arith.negf %452 : vector<2x128xf32>
    %454 = math.exp %453 : vector<2x128xf32>
    %cst_122 = arith.constant 1.000000e+00 : f32
    %455 = vector.broadcast %cst_122 : f32 to vector<2x128xf32>
    %456 = arith.addf %455, %454 : vector<2x128xf32>
    %457 = arith.divf %455, %456 : vector<2x128xf32>
    %458 = vector.extract_strided_slice %449 {offsets = [0, 128], sizes = [2, 128], strides = [1, 1]} : vector<2x384xf32> to vector<2x128xf32>
    %459 = vector.extract_strided_slice %445 {offsets = [0, 128], sizes = [2, 128], strides = [1, 1]} : vector<2x384xf32> to vector<2x128xf32>
    %460 = arith.addf %458, %459 : vector<2x128xf32>
    %461 = arith.negf %460 : vector<2x128xf32>
    %462 = math.exp %461 : vector<2x128xf32>
    %cst_123 = arith.constant 1.000000e+00 : f32
    %463 = vector.broadcast %cst_123 : f32 to vector<2x128xf32>
    %464 = arith.addf %463, %462 : vector<2x128xf32>
    %465 = arith.divf %463, %464 : vector<2x128xf32>
    %466 = vector.extract_strided_slice %449 {offsets = [0, 256], sizes = [2, 128], strides = [1, 1]} : vector<2x384xf32> to vector<2x128xf32>
    %467 = vector.extract_strided_slice %445 {offsets = [0, 256], sizes = [2, 128], strides = [1, 1]} : vector<2x384xf32> to vector<2x128xf32>
    %468 = arith.addf %467, %14 : vector<2x128xf32>
    %469 = arith.mulf %457, %468 : vector<2x128xf32>
    %470 = arith.addf %466, %469 : vector<2x128xf32>
    %471 = math.tanh %470 : vector<2x128xf32>
    %cst_124 = arith.constant 1.000000e+00 : f32
    %472 = vector.broadcast %cst_124 : f32 to vector<2x128xf32>
    %473 = arith.subf %472, %465 : vector<2x128xf32>
    %474 = arith.mulf %473, %471 : vector<2x128xf32>
    %475 = arith.mulf %465, %405 : vector<2x128xf32>
    %476 = arith.addf %474, %475 : vector<2x128xf32>
    %477 = arith.index_cast %444 : i32 to index
    %c0_125 = arith.constant 0 : index
    %c384_126 = arith.constant 384 : index
    %478 = vector.load %arg14[%477, %c0_125, %c384_126] : memref<8x2x768xf32, #tpu.memory_space<vmem>>, vector<1x2x384xf32>
    %479 = vector.shape_cast %478 : vector<1x2x384xf32> to vector<2x384xf32>
    %480 = vector.extract_strided_slice %479 {offsets = [0, 0], sizes = [2, 128], strides = [1, 1]} : vector<2x384xf32> to vector<2x128xf32>
    %481 = vector.extract_strided_slice %446 {offsets = [0, 0], sizes = [2, 128], strides = [1, 1]} : vector<2x384xf32> to vector<2x128xf32>
    %482 = arith.addf %480, %481 : vector<2x128xf32>
    %483 = arith.negf %482 : vector<2x128xf32>
    %484 = math.exp %483 : vector<2x128xf32>
    %cst_127 = arith.constant 1.000000e+00 : f32
    %485 = vector.broadcast %cst_127 : f32 to vector<2x128xf32>
    %486 = arith.addf %485, %484 : vector<2x128xf32>
    %487 = arith.divf %485, %486 : vector<2x128xf32>
    %488 = vector.extract_strided_slice %479 {offsets = [0, 128], sizes = [2, 128], strides = [1, 1]} : vector<2x384xf32> to vector<2x128xf32>
    %489 = vector.extract_strided_slice %446 {offsets = [0, 128], sizes = [2, 128], strides = [1, 1]} : vector<2x384xf32> to vector<2x128xf32>
    %490 = arith.addf %488, %489 : vector<2x128xf32>
    %491 = arith.negf %490 : vector<2x128xf32>
    %492 = math.exp %491 : vector<2x128xf32>
    %cst_128 = arith.constant 1.000000e+00 : f32
    %493 = vector.broadcast %cst_128 : f32 to vector<2x128xf32>
    %494 = arith.addf %493, %492 : vector<2x128xf32>
    %495 = arith.divf %493, %494 : vector<2x128xf32>
    %496 = vector.extract_strided_slice %479 {offsets = [0, 256], sizes = [2, 128], strides = [1, 1]} : vector<2x384xf32> to vector<2x128xf32>
    %497 = vector.extract_strided_slice %446 {offsets = [0, 256], sizes = [2, 128], strides = [1, 1]} : vector<2x384xf32> to vector<2x128xf32>
    %498 = arith.addf %497, %17 : vector<2x128xf32>
    %499 = arith.mulf %487, %498 : vector<2x128xf32>
    %500 = arith.addf %496, %499 : vector<2x128xf32>
    %501 = math.tanh %500 : vector<2x128xf32>
    %cst_129 = arith.constant 1.000000e+00 : f32
    %502 = vector.broadcast %cst_129 : f32 to vector<2x128xf32>
    %503 = arith.subf %502, %495 : vector<2x128xf32>
    %504 = arith.mulf %503, %501 : vector<2x128xf32>
    %505 = arith.mulf %495, %435 : vector<2x128xf32>
    %506 = arith.addf %504, %505 : vector<2x128xf32>
    %507 = arith.index_cast %c6_i32 : i32 to index
    %c0_130 = arith.constant 0 : index
    %c0_131 = arith.constant 0 : index
    %508 = vector.load %arg15[%507, %c0_130, %c0_131] : memref<8x2x256xf32, #tpu.memory_space<vmem>>, vector<1x2x128xf32>
    %509 = vector.shape_cast %508 : vector<1x2x128xf32> to vector<2x128xf32>
    %510 = vector.shape_cast %476 : vector<2x128xf32> to vector<1x2x128xf32>
    tpu.vector_store %arg15[%507, %c0_130, %c0_131], %510 {strides = array<i32>} : memref<8x2x256xf32, #tpu.memory_space<vmem>>, vector<1x2x128xf32>,
    %511 = arith.index_cast %444 : i32 to index
    %c0_132 = arith.constant 0 : index
    %c128_133 = arith.constant 128 : index
    %512 = vector.load %arg15[%511, %c0_132, %c128_133] : memref<8x2x256xf32, #tpu.memory_space<vmem>>, vector<1x2x128xf32>
    %513 = vector.shape_cast %512 : vector<1x2x128xf32> to vector<2x128xf32>
    %514 = vector.shape_cast %506 : vector<2x128xf32> to vector<1x2x128xf32>
    tpu.vector_store %arg15[%511, %c0_132, %c128_133], %514 {strides = array<i32>} : memref<8x2x256xf32, #tpu.memory_space<vmem>>, vector<1x2x128xf32>,
    %c7_i32_134 = arith.constant 7 : i32
    %c7_i32_135 = arith.constant 7 : i32
    %515 = arith.subi %c7_i32_135, %c7_i32_134 : i32
    %cst_136 = arith.constant dense<0.000000e+00> : vector<2x384xf32>
    %516 = tpu.matmul %476, %10, %cst_136 {dimension_numbers = #tpu.dot_dimension_numbers<[1], [0], [0], [1], [0, 0, 1, 1], [], []>} : vector<2x128xf32>, vector<128x384xf32>, vector<2x384xf32> -> vector<2x384xf32>
    %cst_137 = arith.constant dense<0.000000e+00> : vector<2x384xf32>
    %517 = tpu.matmul %506, %11, %cst_137 {dimension_numbers = #tpu.dot_dimension_numbers<[1], [0], [0], [1], [0, 0, 1, 1], [], []>} : vector<2x128xf32>, vector<128x384xf32>, vector<2x384xf32> -> vector<2x384xf32>
    %518 = arith.index_cast %c7_i32_134 : i32 to index
    %c0_138 = arith.constant 0 : index
    %c0_139 = arith.constant 0 : index
    %519 = vector.load %arg14[%518, %c0_138, %c0_139] : memref<8x2x768xf32, #tpu.memory_space<vmem>>, vector<1x2x384xf32>
    %520 = vector.shape_cast %519 : vector<1x2x384xf32> to vector<2x384xf32>
    %521 = vector.extract_strided_slice %520 {offsets = [0, 0], sizes = [2, 128], strides = [1, 1]} : vector<2x384xf32> to vector<2x128xf32>
    %522 = vector.extract_strided_slice %516 {offsets = [0, 0], sizes = [2, 128], strides = [1, 1]} : vector<2x384xf32> to vector<2x128xf32>
    %523 = arith.addf %521, %522 : vector<2x128xf32>
    %524 = arith.negf %523 : vector<2x128xf32>
    %525 = math.exp %524 : vector<2x128xf32>
    %cst_140 = arith.constant 1.000000e+00 : f32
    %526 = vector.broadcast %cst_140 : f32 to vector<2x128xf32>
    %527 = arith.addf %526, %525 : vector<2x128xf32>
    %528 = arith.divf %526, %527 : vector<2x128xf32>
    %529 = vector.extract_strided_slice %520 {offsets = [0, 128], sizes = [2, 128], strides = [1, 1]} : vector<2x384xf32> to vector<2x128xf32>
    %530 = vector.extract_strided_slice %516 {offsets = [0, 128], sizes = [2, 128], strides = [1, 1]} : vector<2x384xf32> to vector<2x128xf32>
    %531 = arith.addf %529, %530 : vector<2x128xf32>
    %532 = arith.negf %531 : vector<2x128xf32>
    %533 = math.exp %532 : vector<2x128xf32>
    %cst_141 = arith.constant 1.000000e+00 : f32
    %534 = vector.broadcast %cst_141 : f32 to vector<2x128xf32>
    %535 = arith.addf %534, %533 : vector<2x128xf32>
    %536 = arith.divf %534, %535 : vector<2x128xf32>
    %537 = vector.extract_strided_slice %520 {offsets = [0, 256], sizes = [2, 128], strides = [1, 1]} : vector<2x384xf32> to vector<2x128xf32>
    %538 = vector.extract_strided_slice %516 {offsets = [0, 256], sizes = [2, 128], strides = [1, 1]} : vector<2x384xf32> to vector<2x128xf32>
    %539 = arith.addf %538, %14 : vector<2x128xf32>
    %540 = arith.mulf %528, %539 : vector<2x128xf32>
    %541 = arith.addf %537, %540 : vector<2x128xf32>
    %542 = math.tanh %541 : vector<2x128xf32>
    %cst_142 = arith.constant 1.000000e+00 : f32
    %543 = vector.broadcast %cst_142 : f32 to vector<2x128xf32>
    %544 = arith.subf %543, %536 : vector<2x128xf32>
    %545 = arith.mulf %544, %542 : vector<2x128xf32>
    %546 = arith.mulf %536, %476 : vector<2x128xf32>
    %547 = arith.addf %545, %546 : vector<2x128xf32>
    %548 = arith.index_cast %515 : i32 to index
    %c0_143 = arith.constant 0 : index
    %c384_144 = arith.constant 384 : index
    %549 = vector.load %arg14[%548, %c0_143, %c384_144] : memref<8x2x768xf32, #tpu.memory_space<vmem>>, vector<1x2x384xf32>
    %550 = vector.shape_cast %549 : vector<1x2x384xf32> to vector<2x384xf32>
    %551 = vector.extract_strided_slice %550 {offsets = [0, 0], sizes = [2, 128], strides = [1, 1]} : vector<2x384xf32> to vector<2x128xf32>
    %552 = vector.extract_strided_slice %517 {offsets = [0, 0], sizes = [2, 128], strides = [1, 1]} : vector<2x384xf32> to vector<2x128xf32>
    %553 = arith.addf %551, %552 : vector<2x128xf32>
    %554 = arith.negf %553 : vector<2x128xf32>
    %555 = math.exp %554 : vector<2x128xf32>
    %cst_145 = arith.constant 1.000000e+00 : f32
    %556 = vector.broadcast %cst_145 : f32 to vector<2x128xf32>
    %557 = arith.addf %556, %555 : vector<2x128xf32>
    %558 = arith.divf %556, %557 : vector<2x128xf32>
    %559 = vector.extract_strided_slice %550 {offsets = [0, 128], sizes = [2, 128], strides = [1, 1]} : vector<2x384xf32> to vector<2x128xf32>
    %560 = vector.extract_strided_slice %517 {offsets = [0, 128], sizes = [2, 128], strides = [1, 1]} : vector<2x384xf32> to vector<2x128xf32>
    %561 = arith.addf %559, %560 : vector<2x128xf32>
    %562 = arith.negf %561 : vector<2x128xf32>
    %563 = math.exp %562 : vector<2x128xf32>
    %cst_146 = arith.constant 1.000000e+00 : f32
    %564 = vector.broadcast %cst_146 : f32 to vector<2x128xf32>
    %565 = arith.addf %564, %563 : vector<2x128xf32>
    %566 = arith.divf %564, %565 : vector<2x128xf32>
    %567 = vector.extract_strided_slice %550 {offsets = [0, 256], sizes = [2, 128], strides = [1, 1]} : vector<2x384xf32> to vector<2x128xf32>
    %568 = vector.extract_strided_slice %517 {offsets = [0, 256], sizes = [2, 128], strides = [1, 1]} : vector<2x384xf32> to vector<2x128xf32>
    %569 = arith.addf %568, %17 : vector<2x128xf32>
    %570 = arith.mulf %558, %569 : vector<2x128xf32>
    %571 = arith.addf %567, %570 : vector<2x128xf32>
    %572 = math.tanh %571 : vector<2x128xf32>
    %cst_147 = arith.constant 1.000000e+00 : f32
    %573 = vector.broadcast %cst_147 : f32 to vector<2x128xf32>
    %574 = arith.subf %573, %566 : vector<2x128xf32>
    %575 = arith.mulf %574, %572 : vector<2x128xf32>
    %576 = arith.mulf %566, %506 : vector<2x128xf32>
    %577 = arith.addf %575, %576 : vector<2x128xf32>
    %578 = arith.index_cast %c7_i32_134 : i32 to index
    %c0_148 = arith.constant 0 : index
    %c0_149 = arith.constant 0 : index
    %579 = vector.load %arg15[%578, %c0_148, %c0_149] : memref<8x2x256xf32, #tpu.memory_space<vmem>>, vector<1x2x128xf32>
    %580 = vector.shape_cast %579 : vector<1x2x128xf32> to vector<2x128xf32>
    %581 = vector.shape_cast %547 : vector<2x128xf32> to vector<1x2x128xf32>
    tpu.vector_store %arg15[%578, %c0_148, %c0_149], %581 {strides = array<i32>} : memref<8x2x256xf32, #tpu.memory_space<vmem>>, vector<1x2x128xf32>,
    %582 = arith.index_cast %515 : i32 to index
    %c0_150 = arith.constant 0 : index
    %c128_151 = arith.constant 128 : index
    %583 = vector.load %arg15[%582, %c0_150, %c128_151] : memref<8x2x256xf32, #tpu.memory_space<vmem>>, vector<1x2x128xf32>
    %584 = vector.shape_cast %583 : vector<1x2x128xf32> to vector<2x128xf32>
    %585 = vector.shape_cast %577 : vector<2x128xf32> to vector<1x2x128xf32>
    tpu.vector_store %arg15[%582, %c0_150, %c128_151], %585 {strides = array<i32>} : memref<8x2x256xf32, #tpu.memory_space<vmem>>, vector<1x2x128xf32>,
    %c8_i32 = arith.constant 8 : i32
    %c0_152 = arith.constant 0 : index
    %c0_153 = arith.constant 0 : index
    %c0_154 = arith.constant 0 : index
    %586 = vector.load %arg15[%c0_152, %c0_153, %c0_154] : memref<8x2x256xf32, #tpu.memory_space<vmem>>, vector<8x2x256xf32>
    %587 = vector.shape_cast %586 : vector<8x2x256xf32> to vector<16x256xf32>
    %588 = arith.truncf %587 : vector<16x256xf32> to vector<16x256xbf16>
    %c0_155 = arith.constant 0 : index
    %c0_156 = arith.constant 0 : index
    %589 = vector.load %arg6[%c0_155, %c0_156] : memref<256x768xbf16, #tpu.memory_space<vmem>>, vector<256x768xbf16>
    %cst_157 = arith.constant dense<0.000000e+00> : vector<16x768xf32>
    %590 = tpu.matmul %588, %589, %cst_157 {dimension_numbers = #tpu.dot_dimension_numbers<[1], [0], [0], [1], [0, 0, 1, 1], [], []>} : vector<16x256xbf16>, vector<256x768xbf16>, vector<16x768xf32> -> vector<16x768xf32>
    %c0_158 = arith.constant 0 : index
    %c0_159 = arith.constant 0 : index
    %591 = vector.load %arg7[%c0_158, %c0_159] : memref<1x768xf32, #tpu.memory_space<vmem>>, vector<1x768xf32>
    %592 = vector.broadcast %591 : vector<1x768xf32> to vector<16x768xf32>
    %593 = arith.addf %590, %592 : vector<16x768xf32>
    %594 = vector.shape_cast %593 : vector<16x768xf32> to vector<8x2x768xf32>
    %c0_160 = arith.constant 0 : index
    %c0_161 = arith.constant 0 : index
    %c0_162 = arith.constant 0 : index
    %595 = vector.load %arg14[%c0_160, %c0_161, %c0_162] : memref<8x2x768xf32, #tpu.memory_space<vmem>>, vector<8x2x768xf32>
    tpu.vector_store %arg14[%c0_160, %c0_161, %c0_162], %594 {strides = array<i32>} : memref<8x2x768xf32, #tpu.memory_space<vmem>>, vector<8x2x768xf32>,
    %c0_163 = arith.constant 0 : index
    %c0_164 = arith.constant 0 : index
    %596 = vector.load %arg8[%c0_163, %c0_164] : memref<128x384xf32, #tpu.memory_space<vmem>>, vector<128x384xf32>
    %c0_165 = arith.constant 0 : index
    %c0_166 = arith.constant 0 : index
    %597 = vector.load %arg9[%c0_165, %c0_166] : memref<128x384xf32, #tpu.memory_space<vmem>>, vector<128x384xf32>
    %c0_167 = arith.constant 0 : index
    %c0_168 = arith.constant 0 : index
    %598 = vector.load %arg10[%c0_167, %c0_168] : memref<1x256xf32, #tpu.memory_space<vmem>>, vector<1x128xf32>
    %599 = vector.shape_cast %598 : vector<1x128xf32> to vector<1x128xf32>
    %600 = vector.broadcast %599 : vector<1x128xf32> to vector<2x128xf32>
    %c0_169 = arith.constant 0 : index
    %c128_170 = arith.constant 128 : index
    %601 = vector.load %arg10[%c0_169, %c128_170] : memref<1x256xf32, #tpu.memory_space<vmem>>, vector<1x128xf32>
    %602 = vector.shape_cast %601 : vector<1x128xf32> to vector<1x128xf32>
    %603 = vector.broadcast %602 : vector<1x128xf32> to vector<2x128xf32>
    %c0_i32_171 = arith.constant 0 : i32
    %c7_i32_172 = arith.constant 7 : i32
    %604 = arith.subi %c7_i32_172, %c0_i32_171 : i32
    %cst_173 = arith.constant dense<0.000000e+00> : vector<2x384xf32>
    %605 = tpu.matmul %0, %596, %cst_173 {dimension_numbers = #tpu.dot_dimension_numbers<[1], [0], [0], [1], [0, 0, 1, 1], [], []>} : vector<2x128xf32>, vector<128x384xf32>, vector<2x384xf32> -> vector<2x384xf32>
    %cst_174 = arith.constant dense<0.000000e+00> : vector<2x384xf32>
    %606 = tpu.matmul %0, %597, %cst_174 {dimension_numbers = #tpu.dot_dimension_numbers<[1], [0], [0], [1], [0, 0, 1, 1], [], []>} : vector<2x128xf32>, vector<128x384xf32>, vector<2x384xf32> -> vector<2x384xf32>
    %607 = arith.index_cast %c0_i32_171 : i32 to index
    %c0_175 = arith.constant 0 : index
    %c0_176 = arith.constant 0 : index
    %608 = vector.load %arg14[%607, %c0_175, %c0_176] : memref<8x2x768xf32, #tpu.memory_space<vmem>>, vector<1x2x384xf32>
    %609 = vector.shape_cast %608 : vector<1x2x384xf32> to vector<2x384xf32>
    %610 = vector.extract_strided_slice %609 {offsets = [0, 0], sizes = [2, 128], strides = [1, 1]} : vector<2x384xf32> to vector<2x128xf32>
    %611 = vector.extract_strided_slice %605 {offsets = [0, 0], sizes = [2, 128], strides = [1, 1]} : vector<2x384xf32> to vector<2x128xf32>
    %612 = arith.addf %610, %611 : vector<2x128xf32>
    %613 = arith.negf %612 : vector<2x128xf32>
    %614 = math.exp %613 : vector<2x128xf32>
    %cst_177 = arith.constant 1.000000e+00 : f32
    %615 = vector.broadcast %cst_177 : f32 to vector<2x128xf32>
    %616 = arith.addf %615, %614 : vector<2x128xf32>
    %617 = arith.divf %615, %616 : vector<2x128xf32>
    %618 = vector.extract_strided_slice %609 {offsets = [0, 128], sizes = [2, 128], strides = [1, 1]} : vector<2x384xf32> to vector<2x128xf32>
    %619 = vector.extract_strided_slice %605 {offsets = [0, 128], sizes = [2, 128], strides = [1, 1]} : vector<2x384xf32> to vector<2x128xf32>
    %620 = arith.addf %618, %619 : vector<2x128xf32>
    %621 = arith.negf %620 : vector<2x128xf32>
    %622 = math.exp %621 : vector<2x128xf32>
    %cst_178 = arith.constant 1.000000e+00 : f32
    %623 = vector.broadcast %cst_178 : f32 to vector<2x128xf32>
    %624 = arith.addf %623, %622 : vector<2x128xf32>
    %625 = arith.divf %623, %624 : vector<2x128xf32>
    %626 = vector.extract_strided_slice %609 {offsets = [0, 256], sizes = [2, 128], strides = [1, 1]} : vector<2x384xf32> to vector<2x128xf32>
    %627 = vector.extract_strided_slice %605 {offsets = [0, 256], sizes = [2, 128], strides = [1, 1]} : vector<2x384xf32> to vector<2x128xf32>
    %628 = arith.addf %627, %600 : vector<2x128xf32>
    %629 = arith.mulf %617, %628 : vector<2x128xf32>
    %630 = arith.addf %626, %629 : vector<2x128xf32>
    %631 = math.tanh %630 : vector<2x128xf32>
    %cst_179 = arith.constant 1.000000e+00 : f32
    %632 = vector.broadcast %cst_179 : f32 to vector<2x128xf32>
    %633 = arith.subf %632, %625 : vector<2x128xf32>
    %634 = arith.mulf %633, %631 : vector<2x128xf32>
    %635 = arith.mulf %625, %0 : vector<2x128xf32>
    %636 = arith.addf %634, %635 : vector<2x128xf32>
    %637 = arith.index_cast %604 : i32 to index
    %c0_180 = arith.constant 0 : index
    %c384_181 = arith.constant 384 : index
    %638 = vector.load %arg14[%637, %c0_180, %c384_181] : memref<8x2x768xf32, #tpu.memory_space<vmem>>, vector<1x2x384xf32>
    %639 = vector.shape_cast %638 : vector<1x2x384xf32> to vector<2x384xf32>
    %640 = vector.extract_strided_slice %639 {offsets = [0, 0], sizes = [2, 128], strides = [1, 1]} : vector<2x384xf32> to vector<2x128xf32>
    %641 = vector.extract_strided_slice %606 {offsets = [0, 0], sizes = [2, 128], strides = [1, 1]} : vector<2x384xf32> to vector<2x128xf32>
    %642 = arith.addf %640, %641 : vector<2x128xf32>
    %643 = arith.negf %642 : vector<2x128xf32>
    %644 = math.exp %643 : vector<2x128xf32>
    %cst_182 = arith.constant 1.000000e+00 : f32
    %645 = vector.broadcast %cst_182 : f32 to vector<2x128xf32>
    %646 = arith.addf %645, %644 : vector<2x128xf32>
    %647 = arith.divf %645, %646 : vector<2x128xf32>
    %648 = vector.extract_strided_slice %639 {offsets = [0, 128], sizes = [2, 128], strides = [1, 1]} : vector<2x384xf32> to vector<2x128xf32>
    %649 = vector.extract_strided_slice %606 {offsets = [0, 128], sizes = [2, 128], strides = [1, 1]} : vector<2x384xf32> to vector<2x128xf32>
    %650 = arith.addf %648, %649 : vector<2x128xf32>
    %651 = arith.negf %650 : vector<2x128xf32>
    %652 = math.exp %651 : vector<2x128xf32>
    %cst_183 = arith.constant 1.000000e+00 : f32
    %653 = vector.broadcast %cst_183 : f32 to vector<2x128xf32>
    %654 = arith.addf %653, %652 : vector<2x128xf32>
    %655 = arith.divf %653, %654 : vector<2x128xf32>
    %656 = vector.extract_strided_slice %639 {offsets = [0, 256], sizes = [2, 128], strides = [1, 1]} : vector<2x384xf32> to vector<2x128xf32>
    %657 = vector.extract_strided_slice %606 {offsets = [0, 256], sizes = [2, 128], strides = [1, 1]} : vector<2x384xf32> to vector<2x128xf32>
    %658 = arith.addf %657, %603 : vector<2x128xf32>
    %659 = arith.mulf %647, %658 : vector<2x128xf32>
    %660 = arith.addf %656, %659 : vector<2x128xf32>
    %661 = math.tanh %660 : vector<2x128xf32>
    %cst_184 = arith.constant 1.000000e+00 : f32
    %662 = vector.broadcast %cst_184 : f32 to vector<2x128xf32>
    %663 = arith.subf %662, %655 : vector<2x128xf32>
    %664 = arith.mulf %663, %661 : vector<2x128xf32>
    %665 = arith.mulf %655, %0 : vector<2x128xf32>
    %666 = arith.addf %664, %665 : vector<2x128xf32>
    %c1_i32_185 = arith.constant 1 : i32
    %c7_i32_186 = arith.constant 7 : i32
    %667 = arith.subi %c7_i32_186, %c1_i32_185 : i32
    %cst_187 = arith.constant dense<0.000000e+00> : vector<2x384xf32>
    %668 = tpu.matmul %636, %596, %cst_187 {dimension_numbers = #tpu.dot_dimension_numbers<[1], [0], [0], [1], [0, 0, 1, 1], [], []>} : vector<2x128xf32>, vector<128x384xf32>, vector<2x384xf32> -> vector<2x384xf32>
    %cst_188 = arith.constant dense<0.000000e+00> : vector<2x384xf32>
    %669 = tpu.matmul %666, %597, %cst_188 {dimension_numbers = #tpu.dot_dimension_numbers<[1], [0], [0], [1], [0, 0, 1, 1], [], []>} : vector<2x128xf32>, vector<128x384xf32>, vector<2x384xf32> -> vector<2x384xf32>
    %670 = arith.index_cast %c1_i32_185 : i32 to index
    %c0_189 = arith.constant 0 : index
    %c0_190 = arith.constant 0 : index
    %671 = vector.load %arg14[%670, %c0_189, %c0_190] : memref<8x2x768xf32, #tpu.memory_space<vmem>>, vector<1x2x384xf32>
    %672 = vector.shape_cast %671 : vector<1x2x384xf32> to vector<2x384xf32>
    %673 = vector.extract_strided_slice %672 {offsets = [0, 0], sizes = [2, 128], strides = [1, 1]} : vector<2x384xf32> to vector<2x128xf32>
    %674 = vector.extract_strided_slice %668 {offsets = [0, 0], sizes = [2, 128], strides = [1, 1]} : vector<2x384xf32> to vector<2x128xf32>
    %675 = arith.addf %673, %674 : vector<2x128xf32>
    %676 = arith.negf %675 : vector<2x128xf32>
    %677 = math.exp %676 : vector<2x128xf32>
    %cst_191 = arith.constant 1.000000e+00 : f32
    %678 = vector.broadcast %cst_191 : f32 to vector<2x128xf32>
    %679 = arith.addf %678, %677 : vector<2x128xf32>
    %680 = arith.divf %678, %679 : vector<2x128xf32>
    %681 = vector.extract_strided_slice %672 {offsets = [0, 128], sizes = [2, 128], strides = [1, 1]} : vector<2x384xf32> to vector<2x128xf32>
    %682 = vector.extract_strided_slice %668 {offsets = [0, 128], sizes = [2, 128], strides = [1, 1]} : vector<2x384xf32> to vector<2x128xf32>
    %683 = arith.addf %681, %682 : vector<2x128xf32>
    %684 = arith.negf %683 : vector<2x128xf32>
    %685 = math.exp %684 : vector<2x128xf32>
    %cst_192 = arith.constant 1.000000e+00 : f32
    %686 = vector.broadcast %cst_192 : f32 to vector<2x128xf32>
    %687 = arith.addf %686, %685 : vector<2x128xf32>
    %688 = arith.divf %686, %687 : vector<2x128xf32>
    %689 = vector.extract_strided_slice %672 {offsets = [0, 256], sizes = [2, 128], strides = [1, 1]} : vector<2x384xf32> to vector<2x128xf32>
    %690 = vector.extract_strided_slice %668 {offsets = [0, 256], sizes = [2, 128], strides = [1, 1]} : vector<2x384xf32> to vector<2x128xf32>
    %691 = arith.addf %690, %600 : vector<2x128xf32>
    %692 = arith.mulf %680, %691 : vector<2x128xf32>
    %693 = arith.addf %689, %692 : vector<2x128xf32>
    %694 = math.tanh %693 : vector<2x128xf32>
    %cst_193 = arith.constant 1.000000e+00 : f32
    %695 = vector.broadcast %cst_193 : f32 to vector<2x128xf32>
    %696 = arith.subf %695, %688 : vector<2x128xf32>
    %697 = arith.mulf %696, %694 : vector<2x128xf32>
    %698 = arith.mulf %688, %636 : vector<2x128xf32>
    %699 = arith.addf %697, %698 : vector<2x128xf32>
    %700 = arith.index_cast %667 : i32 to index
    %c0_194 = arith.constant 0 : index
    %c384_195 = arith.constant 384 : index
    %701 = vector.load %arg14[%700, %c0_194, %c384_195] : memref<8x2x768xf32, #tpu.memory_space<vmem>>, vector<1x2x384xf32>
    %702 = vector.shape_cast %701 : vector<1x2x384xf32> to vector<2x384xf32>
    %703 = vector.extract_strided_slice %702 {offsets = [0, 0], sizes = [2, 128], strides = [1, 1]} : vector<2x384xf32> to vector<2x128xf32>
    %704 = vector.extract_strided_slice %669 {offsets = [0, 0], sizes = [2, 128], strides = [1, 1]} : vector<2x384xf32> to vector<2x128xf32>
    %705 = arith.addf %703, %704 : vector<2x128xf32>
    %706 = arith.negf %705 : vector<2x128xf32>
    %707 = math.exp %706 : vector<2x128xf32>
    %cst_196 = arith.constant 1.000000e+00 : f32
    %708 = vector.broadcast %cst_196 : f32 to vector<2x128xf32>
    %709 = arith.addf %708, %707 : vector<2x128xf32>
    %710 = arith.divf %708, %709 : vector<2x128xf32>
    %711 = vector.extract_strided_slice %702 {offsets = [0, 128], sizes = [2, 128], strides = [1, 1]} : vector<2x384xf32> to vector<2x128xf32>
    %712 = vector.extract_strided_slice %669 {offsets = [0, 128], sizes = [2, 128], strides = [1, 1]} : vector<2x384xf32> to vector<2x128xf32>
    %713 = arith.addf %711, %712 : vector<2x128xf32>
    %714 = arith.negf %713 : vector<2x128xf32>
    %715 = math.exp %714 : vector<2x128xf32>
    %cst_197 = arith.constant 1.000000e+00 : f32
    %716 = vector.broadcast %cst_197 : f32 to vector<2x128xf32>
    %717 = arith.addf %716, %715 : vector<2x128xf32>
    %718 = arith.divf %716, %717 : vector<2x128xf32>
    %719 = vector.extract_strided_slice %702 {offsets = [0, 256], sizes = [2, 128], strides = [1, 1]} : vector<2x384xf32> to vector<2x128xf32>
    %720 = vector.extract_strided_slice %669 {offsets = [0, 256], sizes = [2, 128], strides = [1, 1]} : vector<2x384xf32> to vector<2x128xf32>
    %721 = arith.addf %720, %603 : vector<2x128xf32>
    %722 = arith.mulf %710, %721 : vector<2x128xf32>
    %723 = arith.addf %719, %722 : vector<2x128xf32>
    %724 = math.tanh %723 : vector<2x128xf32>
    %cst_198 = arith.constant 1.000000e+00 : f32
    %725 = vector.broadcast %cst_198 : f32 to vector<2x128xf32>
    %726 = arith.subf %725, %718 : vector<2x128xf32>
    %727 = arith.mulf %726, %724 : vector<2x128xf32>
    %728 = arith.mulf %718, %666 : vector<2x128xf32>
    %729 = arith.addf %727, %728 : vector<2x128xf32>
    %c2_i32_199 = arith.constant 2 : i32
    %c7_i32_200 = arith.constant 7 : i32
    %730 = arith.subi %c7_i32_200, %c2_i32_199 : i32
    %cst_201 = arith.constant dense<0.000000e+00> : vector<2x384xf32>
    %731 = tpu.matmul %699, %596, %cst_201 {dimension_numbers = #tpu.dot_dimension_numbers<[1], [0], [0], [1], [0, 0, 1, 1], [], []>} : vector<2x128xf32>, vector<128x384xf32>, vector<2x384xf32> -> vector<2x384xf32>
    %cst_202 = arith.constant dense<0.000000e+00> : vector<2x384xf32>
    %732 = tpu.matmul %729, %597, %cst_202 {dimension_numbers = #tpu.dot_dimension_numbers<[1], [0], [0], [1], [0, 0, 1, 1], [], []>} : vector<2x128xf32>, vector<128x384xf32>, vector<2x384xf32> -> vector<2x384xf32>
    %733 = arith.index_cast %c2_i32_199 : i32 to index
    %c0_203 = arith.constant 0 : index
    %c0_204 = arith.constant 0 : index
    %734 = vector.load %arg14[%733, %c0_203, %c0_204] : memref<8x2x768xf32, #tpu.memory_space<vmem>>, vector<1x2x384xf32>
    %735 = vector.shape_cast %734 : vector<1x2x384xf32> to vector<2x384xf32>
    %736 = vector.extract_strided_slice %735 {offsets = [0, 0], sizes = [2, 128], strides = [1, 1]} : vector<2x384xf32> to vector<2x128xf32>
    %737 = vector.extract_strided_slice %731 {offsets = [0, 0], sizes = [2, 128], strides = [1, 1]} : vector<2x384xf32> to vector<2x128xf32>
    %738 = arith.addf %736, %737 : vector<2x128xf32>
    %739 = arith.negf %738 : vector<2x128xf32>
    %740 = math.exp %739 : vector<2x128xf32>
    %cst_205 = arith.constant 1.000000e+00 : f32
    %741 = vector.broadcast %cst_205 : f32 to vector<2x128xf32>
    %742 = arith.addf %741, %740 : vector<2x128xf32>
    %743 = arith.divf %741, %742 : vector<2x128xf32>
    %744 = vector.extract_strided_slice %735 {offsets = [0, 128], sizes = [2, 128], strides = [1, 1]} : vector<2x384xf32> to vector<2x128xf32>
    %745 = vector.extract_strided_slice %731 {offsets = [0, 128], sizes = [2, 128], strides = [1, 1]} : vector<2x384xf32> to vector<2x128xf32>
    %746 = arith.addf %744, %745 : vector<2x128xf32>
    %747 = arith.negf %746 : vector<2x128xf32>
    %748 = math.exp %747 : vector<2x128xf32>
    %cst_206 = arith.constant 1.000000e+00 : f32
    %749 = vector.broadcast %cst_206 : f32 to vector<2x128xf32>
    %750 = arith.addf %749, %748 : vector<2x128xf32>
    %751 = arith.divf %749, %750 : vector<2x128xf32>
    %752 = vector.extract_strided_slice %735 {offsets = [0, 256], sizes = [2, 128], strides = [1, 1]} : vector<2x384xf32> to vector<2x128xf32>
    %753 = vector.extract_strided_slice %731 {offsets = [0, 256], sizes = [2, 128], strides = [1, 1]} : vector<2x384xf32> to vector<2x128xf32>
    %754 = arith.addf %753, %600 : vector<2x128xf32>
    %755 = arith.mulf %743, %754 : vector<2x128xf32>
    %756 = arith.addf %752, %755 : vector<2x128xf32>
    %757 = math.tanh %756 : vector<2x128xf32>
    %cst_207 = arith.constant 1.000000e+00 : f32
    %758 = vector.broadcast %cst_207 : f32 to vector<2x128xf32>
    %759 = arith.subf %758, %751 : vector<2x128xf32>
    %760 = arith.mulf %759, %757 : vector<2x128xf32>
    %761 = arith.mulf %751, %699 : vector<2x128xf32>
    %762 = arith.addf %760, %761 : vector<2x128xf32>
    %763 = arith.index_cast %730 : i32 to index
    %c0_208 = arith.constant 0 : index
    %c384_209 = arith.constant 384 : index
    %764 = vector.load %arg14[%763, %c0_208, %c384_209] : memref<8x2x768xf32, #tpu.memory_space<vmem>>, vector<1x2x384xf32>
    %765 = vector.shape_cast %764 : vector<1x2x384xf32> to vector<2x384xf32>
    %766 = vector.extract_strided_slice %765 {offsets = [0, 0], sizes = [2, 128], strides = [1, 1]} : vector<2x384xf32> to vector<2x128xf32>
    %767 = vector.extract_strided_slice %732 {offsets = [0, 0], sizes = [2, 128], strides = [1, 1]} : vector<2x384xf32> to vector<2x128xf32>
    %768 = arith.addf %766, %767 : vector<2x128xf32>
    %769 = arith.negf %768 : vector<2x128xf32>
    %770 = math.exp %769 : vector<2x128xf32>
    %cst_210 = arith.constant 1.000000e+00 : f32
    %771 = vector.broadcast %cst_210 : f32 to vector<2x128xf32>
    %772 = arith.addf %771, %770 : vector<2x128xf32>
    %773 = arith.divf %771, %772 : vector<2x128xf32>
    %774 = vector.extract_strided_slice %765 {offsets = [0, 128], sizes = [2, 128], strides = [1, 1]} : vector<2x384xf32> to vector<2x128xf32>
    %775 = vector.extract_strided_slice %732 {offsets = [0, 128], sizes = [2, 128], strides = [1, 1]} : vector<2x384xf32> to vector<2x128xf32>
    %776 = arith.addf %774, %775 : vector<2x128xf32>
    %777 = arith.negf %776 : vector<2x128xf32>
    %778 = math.exp %777 : vector<2x128xf32>
    %cst_211 = arith.constant 1.000000e+00 : f32
    %779 = vector.broadcast %cst_211 : f32 to vector<2x128xf32>
    %780 = arith.addf %779, %778 : vector<2x128xf32>
    %781 = arith.divf %779, %780 : vector<2x128xf32>
    %782 = vector.extract_strided_slice %765 {offsets = [0, 256], sizes = [2, 128], strides = [1, 1]} : vector<2x384xf32> to vector<2x128xf32>
    %783 = vector.extract_strided_slice %732 {offsets = [0, 256], sizes = [2, 128], strides = [1, 1]} : vector<2x384xf32> to vector<2x128xf32>
    %784 = arith.addf %783, %603 : vector<2x128xf32>
    %785 = arith.mulf %773, %784 : vector<2x128xf32>
    %786 = arith.addf %782, %785 : vector<2x128xf32>
    %787 = math.tanh %786 : vector<2x128xf32>
    %cst_212 = arith.constant 1.000000e+00 : f32
    %788 = vector.broadcast %cst_212 : f32 to vector<2x128xf32>
    %789 = arith.subf %788, %781 : vector<2x128xf32>
    %790 = arith.mulf %789, %787 : vector<2x128xf32>
    %791 = arith.mulf %781, %729 : vector<2x128xf32>
    %792 = arith.addf %790, %791 : vector<2x128xf32>
    %c3_i32_213 = arith.constant 3 : i32
    %c7_i32_214 = arith.constant 7 : i32
    %793 = arith.subi %c7_i32_214, %c3_i32_213 : i32
    %cst_215 = arith.constant dense<0.000000e+00> : vector<2x384xf32>
    %794 = tpu.matmul %762, %596, %cst_215 {dimension_numbers = #tpu.dot_dimension_numbers<[1], [0], [0], [1], [0, 0, 1, 1], [], []>} : vector<2x128xf32>, vector<128x384xf32>, vector<2x384xf32> -> vector<2x384xf32>
    %cst_216 = arith.constant dense<0.000000e+00> : vector<2x384xf32>
    %795 = tpu.matmul %792, %597, %cst_216 {dimension_numbers = #tpu.dot_dimension_numbers<[1], [0], [0], [1], [0, 0, 1, 1], [], []>} : vector<2x128xf32>, vector<128x384xf32>, vector<2x384xf32> -> vector<2x384xf32>
    %796 = arith.index_cast %c3_i32_213 : i32 to index
    %c0_217 = arith.constant 0 : index
    %c0_218 = arith.constant 0 : index
    %797 = vector.load %arg14[%796, %c0_217, %c0_218] : memref<8x2x768xf32, #tpu.memory_space<vmem>>, vector<1x2x384xf32>
    %798 = vector.shape_cast %797 : vector<1x2x384xf32> to vector<2x384xf32>
    %799 = vector.extract_strided_slice %798 {offsets = [0, 0], sizes = [2, 128], strides = [1, 1]} : vector<2x384xf32> to vector<2x128xf32>
    %800 = vector.extract_strided_slice %794 {offsets = [0, 0], sizes = [2, 128], strides = [1, 1]} : vector<2x384xf32> to vector<2x128xf32>
    %801 = arith.addf %799, %800 : vector<2x128xf32>
    %802 = arith.negf %801 : vector<2x128xf32>
    %803 = math.exp %802 : vector<2x128xf32>
    %cst_219 = arith.constant 1.000000e+00 : f32
    %804 = vector.broadcast %cst_219 : f32 to vector<2x128xf32>
    %805 = arith.addf %804, %803 : vector<2x128xf32>
    %806 = arith.divf %804, %805 : vector<2x128xf32>
    %807 = vector.extract_strided_slice %798 {offsets = [0, 128], sizes = [2, 128], strides = [1, 1]} : vector<2x384xf32> to vector<2x128xf32>
    %808 = vector.extract_strided_slice %794 {offsets = [0, 128], sizes = [2, 128], strides = [1, 1]} : vector<2x384xf32> to vector<2x128xf32>
    %809 = arith.addf %807, %808 : vector<2x128xf32>
    %810 = arith.negf %809 : vector<2x128xf32>
    %811 = math.exp %810 : vector<2x128xf32>
    %cst_220 = arith.constant 1.000000e+00 : f32
    %812 = vector.broadcast %cst_220 : f32 to vector<2x128xf32>
    %813 = arith.addf %812, %811 : vector<2x128xf32>
    %814 = arith.divf %812, %813 : vector<2x128xf32>
    %815 = vector.extract_strided_slice %798 {offsets = [0, 256], sizes = [2, 128], strides = [1, 1]} : vector<2x384xf32> to vector<2x128xf32>
    %816 = vector.extract_strided_slice %794 {offsets = [0, 256], sizes = [2, 128], strides = [1, 1]} : vector<2x384xf32> to vector<2x128xf32>
    %817 = arith.addf %816, %600 : vector<2x128xf32>
    %818 = arith.mulf %806, %817 : vector<2x128xf32>
    %819 = arith.addf %815, %818 : vector<2x128xf32>
    %820 = math.tanh %819 : vector<2x128xf32>
    %cst_221 = arith.constant 1.000000e+00 : f32
    %821 = vector.broadcast %cst_221 : f32 to vector<2x128xf32>
    %822 = arith.subf %821, %814 : vector<2x128xf32>
    %823 = arith.mulf %822, %820 : vector<2x128xf32>
    %824 = arith.mulf %814, %762 : vector<2x128xf32>
    %825 = arith.addf %823, %824 : vector<2x128xf32>
    %826 = arith.index_cast %793 : i32 to index
    %c0_222 = arith.constant 0 : index
    %c384_223 = arith.constant 384 : index
    %827 = vector.load %arg14[%826, %c0_222, %c384_223] : memref<8x2x768xf32, #tpu.memory_space<vmem>>, vector<1x2x384xf32>
    %828 = vector.shape_cast %827 : vector<1x2x384xf32> to vector<2x384xf32>
    %829 = vector.extract_strided_slice %828 {offsets = [0, 0], sizes = [2, 128], strides = [1, 1]} : vector<2x384xf32> to vector<2x128xf32>
    %830 = vector.extract_strided_slice %795 {offsets = [0, 0], sizes = [2, 128], strides = [1, 1]} : vector<2x384xf32> to vector<2x128xf32>
    %831 = arith.addf %829, %830 : vector<2x128xf32>
    %832 = arith.negf %831 : vector<2x128xf32>
    %833 = math.exp %832 : vector<2x128xf32>
    %cst_224 = arith.constant 1.000000e+00 : f32
    %834 = vector.broadcast %cst_224 : f32 to vector<2x128xf32>
    %835 = arith.addf %834, %833 : vector<2x128xf32>
    %836 = arith.divf %834, %835 : vector<2x128xf32>
    %837 = vector.extract_strided_slice %828 {offsets = [0, 128], sizes = [2, 128], strides = [1, 1]} : vector<2x384xf32> to vector<2x128xf32>
    %838 = vector.extract_strided_slice %795 {offsets = [0, 128], sizes = [2, 128], strides = [1, 1]} : vector<2x384xf32> to vector<2x128xf32>
    %839 = arith.addf %837, %838 : vector<2x128xf32>
    %840 = arith.negf %839 : vector<2x128xf32>
    %841 = math.exp %840 : vector<2x128xf32>
    %cst_225 = arith.constant 1.000000e+00 : f32
    %842 = vector.broadcast %cst_225 : f32 to vector<2x128xf32>
    %843 = arith.addf %842, %841 : vector<2x128xf32>
    %844 = arith.divf %842, %843 : vector<2x128xf32>
    %845 = vector.extract_strided_slice %828 {offsets = [0, 256], sizes = [2, 128], strides = [1, 1]} : vector<2x384xf32> to vector<2x128xf32>
    %846 = vector.extract_strided_slice %795 {offsets = [0, 256], sizes = [2, 128], strides = [1, 1]} : vector<2x384xf32> to vector<2x128xf32>
    %847 = arith.addf %846, %603 : vector<2x128xf32>
    %848 = arith.mulf %836, %847 : vector<2x128xf32>
    %849 = arith.addf %845, %848 : vector<2x128xf32>
    %850 = math.tanh %849 : vector<2x128xf32>
    %cst_226 = arith.constant 1.000000e+00 : f32
    %851 = vector.broadcast %cst_226 : f32 to vector<2x128xf32>
    %852 = arith.subf %851, %844 : vector<2x128xf32>
    %853 = arith.mulf %852, %850 : vector<2x128xf32>
    %854 = arith.mulf %844, %792 : vector<2x128xf32>
    %855 = arith.addf %853, %854 : vector<2x128xf32>
    %c4_i32_227 = arith.constant 4 : i32
    %c7_i32_228 = arith.constant 7 : i32
    %856 = arith.subi %c7_i32_228, %c4_i32_227 : i32
    %cst_229 = arith.constant dense<0.000000e+00> : vector<2x384xf32>
    %857 = tpu.matmul %825, %596, %cst_229 {dimension_numbers = #tpu.dot_dimension_numbers<[1], [0], [0], [1], [0, 0, 1, 1], [], []>} : vector<2x128xf32>, vector<128x384xf32>, vector<2x384xf32> -> vector<2x384xf32>
    %cst_230 = arith.constant dense<0.000000e+00> : vector<2x384xf32>
    %858 = tpu.matmul %855, %597, %cst_230 {dimension_numbers = #tpu.dot_dimension_numbers<[1], [0], [0], [1], [0, 0, 1, 1], [], []>} : vector<2x128xf32>, vector<128x384xf32>, vector<2x384xf32> -> vector<2x384xf32>
    %859 = arith.index_cast %c4_i32_227 : i32 to index
    %c0_231 = arith.constant 0 : index
    %c0_232 = arith.constant 0 : index
    %860 = vector.load %arg14[%859, %c0_231, %c0_232] : memref<8x2x768xf32, #tpu.memory_space<vmem>>, vector<1x2x384xf32>
    %861 = vector.shape_cast %860 : vector<1x2x384xf32> to vector<2x384xf32>
    %862 = vector.extract_strided_slice %861 {offsets = [0, 0], sizes = [2, 128], strides = [1, 1]} : vector<2x384xf32> to vector<2x128xf32>
    %863 = vector.extract_strided_slice %857 {offsets = [0, 0], sizes = [2, 128], strides = [1, 1]} : vector<2x384xf32> to vector<2x128xf32>
    %864 = arith.addf %862, %863 : vector<2x128xf32>
    %865 = arith.negf %864 : vector<2x128xf32>
    %866 = math.exp %865 : vector<2x128xf32>
    %cst_233 = arith.constant 1.000000e+00 : f32
    %867 = vector.broadcast %cst_233 : f32 to vector<2x128xf32>
    %868 = arith.addf %867, %866 : vector<2x128xf32>
    %869 = arith.divf %867, %868 : vector<2x128xf32>
    %870 = vector.extract_strided_slice %861 {offsets = [0, 128], sizes = [2, 128], strides = [1, 1]} : vector<2x384xf32> to vector<2x128xf32>
    %871 = vector.extract_strided_slice %857 {offsets = [0, 128], sizes = [2, 128], strides = [1, 1]} : vector<2x384xf32> to vector<2x128xf32>
    %872 = arith.addf %870, %871 : vector<2x128xf32>
    %873 = arith.negf %872 : vector<2x128xf32>
    %874 = math.exp %873 : vector<2x128xf32>
    %cst_234 = arith.constant 1.000000e+00 : f32
    %875 = vector.broadcast %cst_234 : f32 to vector<2x128xf32>
    %876 = arith.addf %875, %874 : vector<2x128xf32>
    %877 = arith.divf %875, %876 : vector<2x128xf32>
    %878 = vector.extract_strided_slice %861 {offsets = [0, 256], sizes = [2, 128], strides = [1, 1]} : vector<2x384xf32> to vector<2x128xf32>
    %879 = vector.extract_strided_slice %857 {offsets = [0, 256], sizes = [2, 128], strides = [1, 1]} : vector<2x384xf32> to vector<2x128xf32>
    %880 = arith.addf %879, %600 : vector<2x128xf32>
    %881 = arith.mulf %869, %880 : vector<2x128xf32>
    %882 = arith.addf %878, %881 : vector<2x128xf32>
    %883 = math.tanh %882 : vector<2x128xf32>
    %cst_235 = arith.constant 1.000000e+00 : f32
    %884 = vector.broadcast %cst_235 : f32 to vector<2x128xf32>
    %885 = arith.subf %884, %877 : vector<2x128xf32>
    %886 = arith.mulf %885, %883 : vector<2x128xf32>
    %887 = arith.mulf %877, %825 : vector<2x128xf32>
    %888 = arith.addf %886, %887 : vector<2x128xf32>
    %889 = arith.index_cast %856 : i32 to index
    %c0_236 = arith.constant 0 : index
    %c384_237 = arith.constant 384 : index
    %890 = vector.load %arg14[%889, %c0_236, %c384_237] : memref<8x2x768xf32, #tpu.memory_space<vmem>>, vector<1x2x384xf32>
    %891 = vector.shape_cast %890 : vector<1x2x384xf32> to vector<2x384xf32>
    %892 = vector.extract_strided_slice %891 {offsets = [0, 0], sizes = [2, 128], strides = [1, 1]} : vector<2x384xf32> to vector<2x128xf32>
    %893 = vector.extract_strided_slice %858 {offsets = [0, 0], sizes = [2, 128], strides = [1, 1]} : vector<2x384xf32> to vector<2x128xf32>
    %894 = arith.addf %892, %893 : vector<2x128xf32>
    %895 = arith.negf %894 : vector<2x128xf32>
    %896 = math.exp %895 : vector<2x128xf32>
    %cst_238 = arith.constant 1.000000e+00 : f32
    %897 = vector.broadcast %cst_238 : f32 to vector<2x128xf32>
    %898 = arith.addf %897, %896 : vector<2x128xf32>
    %899 = arith.divf %897, %898 : vector<2x128xf32>
    %900 = vector.extract_strided_slice %891 {offsets = [0, 128], sizes = [2, 128], strides = [1, 1]} : vector<2x384xf32> to vector<2x128xf32>
    %901 = vector.extract_strided_slice %858 {offsets = [0, 128], sizes = [2, 128], strides = [1, 1]} : vector<2x384xf32> to vector<2x128xf32>
    %902 = arith.addf %900, %901 : vector<2x128xf32>
    %903 = arith.negf %902 : vector<2x128xf32>
    %904 = math.exp %903 : vector<2x128xf32>
    %cst_239 = arith.constant 1.000000e+00 : f32
    %905 = vector.broadcast %cst_239 : f32 to vector<2x128xf32>
    %906 = arith.addf %905, %904 : vector<2x128xf32>
    %907 = arith.divf %905, %906 : vector<2x128xf32>
    %908 = vector.extract_strided_slice %891 {offsets = [0, 256], sizes = [2, 128], strides = [1, 1]} : vector<2x384xf32> to vector<2x128xf32>
    %909 = vector.extract_strided_slice %858 {offsets = [0, 256], sizes = [2, 128], strides = [1, 1]} : vector<2x384xf32> to vector<2x128xf32>
    %910 = arith.addf %909, %603 : vector<2x128xf32>
    %911 = arith.mulf %899, %910 : vector<2x128xf32>
    %912 = arith.addf %908, %911 : vector<2x128xf32>
    %913 = math.tanh %912 : vector<2x128xf32>
    %cst_240 = arith.constant 1.000000e+00 : f32
    %914 = vector.broadcast %cst_240 : f32 to vector<2x128xf32>
    %915 = arith.subf %914, %907 : vector<2x128xf32>
    %916 = arith.mulf %915, %913 : vector<2x128xf32>
    %917 = arith.mulf %907, %855 : vector<2x128xf32>
    %918 = arith.addf %916, %917 : vector<2x128xf32>
    %c5_i32_241 = arith.constant 5 : i32
    %c7_i32_242 = arith.constant 7 : i32
    %919 = arith.subi %c7_i32_242, %c5_i32_241 : i32
    %cst_243 = arith.constant dense<0.000000e+00> : vector<2x384xf32>
    %920 = tpu.matmul %888, %596, %cst_243 {dimension_numbers = #tpu.dot_dimension_numbers<[1], [0], [0], [1], [0, 0, 1, 1], [], []>} : vector<2x128xf32>, vector<128x384xf32>, vector<2x384xf32> -> vector<2x384xf32>
    %cst_244 = arith.constant dense<0.000000e+00> : vector<2x384xf32>
    %921 = tpu.matmul %918, %597, %cst_244 {dimension_numbers = #tpu.dot_dimension_numbers<[1], [0], [0], [1], [0, 0, 1, 1], [], []>} : vector<2x128xf32>, vector<128x384xf32>, vector<2x384xf32> -> vector<2x384xf32>
    %922 = arith.index_cast %c5_i32_241 : i32 to index
    %c0_245 = arith.constant 0 : index
    %c0_246 = arith.constant 0 : index
    %923 = vector.load %arg14[%922, %c0_245, %c0_246] : memref<8x2x768xf32, #tpu.memory_space<vmem>>, vector<1x2x384xf32>
    %924 = vector.shape_cast %923 : vector<1x2x384xf32> to vector<2x384xf32>
    %925 = vector.extract_strided_slice %924 {offsets = [0, 0], sizes = [2, 128], strides = [1, 1]} : vector<2x384xf32> to vector<2x128xf32>
    %926 = vector.extract_strided_slice %920 {offsets = [0, 0], sizes = [2, 128], strides = [1, 1]} : vector<2x384xf32> to vector<2x128xf32>
    %927 = arith.addf %925, %926 : vector<2x128xf32>
    %928 = arith.negf %927 : vector<2x128xf32>
    %929 = math.exp %928 : vector<2x128xf32>
    %cst_247 = arith.constant 1.000000e+00 : f32
    %930 = vector.broadcast %cst_247 : f32 to vector<2x128xf32>
    %931 = arith.addf %930, %929 : vector<2x128xf32>
    %932 = arith.divf %930, %931 : vector<2x128xf32>
    %933 = vector.extract_strided_slice %924 {offsets = [0, 128], sizes = [2, 128], strides = [1, 1]} : vector<2x384xf32> to vector<2x128xf32>
    %934 = vector.extract_strided_slice %920 {offsets = [0, 128], sizes = [2, 128], strides = [1, 1]} : vector<2x384xf32> to vector<2x128xf32>
    %935 = arith.addf %933, %934 : vector<2x128xf32>
    %936 = arith.negf %935 : vector<2x128xf32>
    %937 = math.exp %936 : vector<2x128xf32>
    %cst_248 = arith.constant 1.000000e+00 : f32
    %938 = vector.broadcast %cst_248 : f32 to vector<2x128xf32>
    %939 = arith.addf %938, %937 : vector<2x128xf32>
    %940 = arith.divf %938, %939 : vector<2x128xf32>
    %941 = vector.extract_strided_slice %924 {offsets = [0, 256], sizes = [2, 128], strides = [1, 1]} : vector<2x384xf32> to vector<2x128xf32>
    %942 = vector.extract_strided_slice %920 {offsets = [0, 256], sizes = [2, 128], strides = [1, 1]} : vector<2x384xf32> to vector<2x128xf32>
    %943 = arith.addf %942, %600 : vector<2x128xf32>
    %944 = arith.mulf %932, %943 : vector<2x128xf32>
    %945 = arith.addf %941, %944 : vector<2x128xf32>
    %946 = math.tanh %945 : vector<2x128xf32>
    %cst_249 = arith.constant 1.000000e+00 : f32
    %947 = vector.broadcast %cst_249 : f32 to vector<2x128xf32>
    %948 = arith.subf %947, %940 : vector<2x128xf32>
    %949 = arith.mulf %948, %946 : vector<2x128xf32>
    %950 = arith.mulf %940, %888 : vector<2x128xf32>
    %951 = arith.addf %949, %950 : vector<2x128xf32>
    %952 = arith.index_cast %919 : i32 to index
    %c0_250 = arith.constant 0 : index
    %c384_251 = arith.constant 384 : index
    %953 = vector.load %arg14[%952, %c0_250, %c384_251] : memref<8x2x768xf32, #tpu.memory_space<vmem>>, vector<1x2x384xf32>
    %954 = vector.shape_cast %953 : vector<1x2x384xf32> to vector<2x384xf32>
    %955 = vector.extract_strided_slice %954 {offsets = [0, 0], sizes = [2, 128], strides = [1, 1]} : vector<2x384xf32> to vector<2x128xf32>
    %956 = vector.extract_strided_slice %921 {offsets = [0, 0], sizes = [2, 128], strides = [1, 1]} : vector<2x384xf32> to vector<2x128xf32>
    %957 = arith.addf %955, %956 : vector<2x128xf32>
    %958 = arith.negf %957 : vector<2x128xf32>
    %959 = math.exp %958 : vector<2x128xf32>
    %cst_252 = arith.constant 1.000000e+00 : f32
    %960 = vector.broadcast %cst_252 : f32 to vector<2x128xf32>
    %961 = arith.addf %960, %959 : vector<2x128xf32>
    %962 = arith.divf %960, %961 : vector<2x128xf32>
    %963 = vector.extract_strided_slice %954 {offsets = [0, 128], sizes = [2, 128], strides = [1, 1]} : vector<2x384xf32> to vector<2x128xf32>
    %964 = vector.extract_strided_slice %921 {offsets = [0, 128], sizes = [2, 128], strides = [1, 1]} : vector<2x384xf32> to vector<2x128xf32>
    %965 = arith.addf %963, %964 : vector<2x128xf32>
    %966 = arith.negf %965 : vector<2x128xf32>
    %967 = math.exp %966 : vector<2x128xf32>
    %cst_253 = arith.constant 1.000000e+00 : f32
    %968 = vector.broadcast %cst_253 : f32 to vector<2x128xf32>
    %969 = arith.addf %968, %967 : vector<2x128xf32>
    %970 = arith.divf %968, %969 : vector<2x128xf32>
    %971 = vector.extract_strided_slice %954 {offsets = [0, 256], sizes = [2, 128], strides = [1, 1]} : vector<2x384xf32> to vector<2x128xf32>
    %972 = vector.extract_strided_slice %921 {offsets = [0, 256], sizes = [2, 128], strides = [1, 1]} : vector<2x384xf32> to vector<2x128xf32>
    %973 = arith.addf %972, %603 : vector<2x128xf32>
    %974 = arith.mulf %962, %973 : vector<2x128xf32>
    %975 = arith.addf %971, %974 : vector<2x128xf32>
    %976 = math.tanh %975 : vector<2x128xf32>
    %cst_254 = arith.constant 1.000000e+00 : f32
    %977 = vector.broadcast %cst_254 : f32 to vector<2x128xf32>
    %978 = arith.subf %977, %970 : vector<2x128xf32>
    %979 = arith.mulf %978, %976 : vector<2x128xf32>
    %980 = arith.mulf %970, %918 : vector<2x128xf32>
    %981 = arith.addf %979, %980 : vector<2x128xf32>
    %c6_i32_255 = arith.constant 6 : i32
    %c7_i32_256 = arith.constant 7 : i32
    %982 = arith.subi %c7_i32_256, %c6_i32_255 : i32
    %cst_257 = arith.constant dense<0.000000e+00> : vector<2x384xf32>
    %983 = tpu.matmul %951, %596, %cst_257 {dimension_numbers = #tpu.dot_dimension_numbers<[1], [0], [0], [1], [0, 0, 1, 1], [], []>} : vector<2x128xf32>, vector<128x384xf32>, vector<2x384xf32> -> vector<2x384xf32>
    %cst_258 = arith.constant dense<0.000000e+00> : vector<2x384xf32>
    %984 = tpu.matmul %981, %597, %cst_258 {dimension_numbers = #tpu.dot_dimension_numbers<[1], [0], [0], [1], [0, 0, 1, 1], [], []>} : vector<2x128xf32>, vector<128x384xf32>, vector<2x384xf32> -> vector<2x384xf32>
    %985 = arith.index_cast %c6_i32_255 : i32 to index
    %c0_259 = arith.constant 0 : index
    %c0_260 = arith.constant 0 : index
    %986 = vector.load %arg14[%985, %c0_259, %c0_260] : memref<8x2x768xf32, #tpu.memory_space<vmem>>, vector<1x2x384xf32>
    %987 = vector.shape_cast %986 : vector<1x2x384xf32> to vector<2x384xf32>
    %988 = vector.extract_strided_slice %987 {offsets = [0, 0], sizes = [2, 128], strides = [1, 1]} : vector<2x384xf32> to vector<2x128xf32>
    %989 = vector.extract_strided_slice %983 {offsets = [0, 0], sizes = [2, 128], strides = [1, 1]} : vector<2x384xf32> to vector<2x128xf32>
    %990 = arith.addf %988, %989 : vector<2x128xf32>
    %991 = arith.negf %990 : vector<2x128xf32>
    %992 = math.exp %991 : vector<2x128xf32>
    %cst_261 = arith.constant 1.000000e+00 : f32
    %993 = vector.broadcast %cst_261 : f32 to vector<2x128xf32>
    %994 = arith.addf %993, %992 : vector<2x128xf32>
    %995 = arith.divf %993, %994 : vector<2x128xf32>
    %996 = vector.extract_strided_slice %987 {offsets = [0, 128], sizes = [2, 128], strides = [1, 1]} : vector<2x384xf32> to vector<2x128xf32>
    %997 = vector.extract_strided_slice %983 {offsets = [0, 128], sizes = [2, 128], strides = [1, 1]} : vector<2x384xf32> to vector<2x128xf32>
    %998 = arith.addf %996, %997 : vector<2x128xf32>
    %999 = arith.negf %998 : vector<2x128xf32>
    %1000 = math.exp %999 : vector<2x128xf32>
    %cst_262 = arith.constant 1.000000e+00 : f32
    %1001 = vector.broadcast %cst_262 : f32 to vector<2x128xf32>
    %1002 = arith.addf %1001, %1000 : vector<2x128xf32>
    %1003 = arith.divf %1001, %1002 : vector<2x128xf32>
    %1004 = vector.extract_strided_slice %987 {offsets = [0, 256], sizes = [2, 128], strides = [1, 1]} : vector<2x384xf32> to vector<2x128xf32>
    %1005 = vector.extract_strided_slice %983 {offsets = [0, 256], sizes = [2, 128], strides = [1, 1]} : vector<2x384xf32> to vector<2x128xf32>
    %1006 = arith.addf %1005, %600 : vector<2x128xf32>
    %1007 = arith.mulf %995, %1006 : vector<2x128xf32>
    %1008 = arith.addf %1004, %1007 : vector<2x128xf32>
    %1009 = math.tanh %1008 : vector<2x128xf32>
    %cst_263 = arith.constant 1.000000e+00 : f32
    %1010 = vector.broadcast %cst_263 : f32 to vector<2x128xf32>
    %1011 = arith.subf %1010, %1003 : vector<2x128xf32>
    %1012 = arith.mulf %1011, %1009 : vector<2x128xf32>
    %1013 = arith.mulf %1003, %951 : vector<2x128xf32>
    %1014 = arith.addf %1012, %1013 : vector<2x128xf32>
    %1015 = arith.index_cast %982 : i32 to index
    %c0_264 = arith.constant 0 : index
    %c384_265 = arith.constant 384 : index
    %1016 = vector.load %arg14[%1015, %c0_264, %c384_265] : memref<8x2x768xf32, #tpu.memory_space<vmem>>, vector<1x2x384xf32>
    %1017 = vector.shape_cast %1016 : vector<1x2x384xf32> to vector<2x384xf32>
    %1018 = vector.extract_strided_slice %1017 {offsets = [0, 0], sizes = [2, 128], strides = [1, 1]} : vector<2x384xf32> to vector<2x128xf32>
    %1019 = vector.extract_strided_slice %984 {offsets = [0, 0], sizes = [2, 128], strides = [1, 1]} : vector<2x384xf32> to vector<2x128xf32>
    %1020 = arith.addf %1018, %1019 : vector<2x128xf32>
    %1021 = arith.negf %1020 : vector<2x128xf32>
    %1022 = math.exp %1021 : vector<2x128xf32>
    %cst_266 = arith.constant 1.000000e+00 : f32
    %1023 = vector.broadcast %cst_266 : f32 to vector<2x128xf32>
    %1024 = arith.addf %1023, %1022 : vector<2x128xf32>
    %1025 = arith.divf %1023, %1024 : vector<2x128xf32>
    %1026 = vector.extract_strided_slice %1017 {offsets = [0, 128], sizes = [2, 128], strides = [1, 1]} : vector<2x384xf32> to vector<2x128xf32>
    %1027 = vector.extract_strided_slice %984 {offsets = [0, 128], sizes = [2, 128], strides = [1, 1]} : vector<2x384xf32> to vector<2x128xf32>
    %1028 = arith.addf %1026, %1027 : vector<2x128xf32>
    %1029 = arith.negf %1028 : vector<2x128xf32>
    %1030 = math.exp %1029 : vector<2x128xf32>
    %cst_267 = arith.constant 1.000000e+00 : f32
    %1031 = vector.broadcast %cst_267 : f32 to vector<2x128xf32>
    %1032 = arith.addf %1031, %1030 : vector<2x128xf32>
    %1033 = arith.divf %1031, %1032 : vector<2x128xf32>
    %1034 = vector.extract_strided_slice %1017 {offsets = [0, 256], sizes = [2, 128], strides = [1, 1]} : vector<2x384xf32> to vector<2x128xf32>
    %1035 = vector.extract_strided_slice %984 {offsets = [0, 256], sizes = [2, 128], strides = [1, 1]} : vector<2x384xf32> to vector<2x128xf32>
    %1036 = arith.addf %1035, %603 : vector<2x128xf32>
    %1037 = arith.mulf %1025, %1036 : vector<2x128xf32>
    %1038 = arith.addf %1034, %1037 : vector<2x128xf32>
    %1039 = math.tanh %1038 : vector<2x128xf32>
    %cst_268 = arith.constant 1.000000e+00 : f32
    %1040 = vector.broadcast %cst_268 : f32 to vector<2x128xf32>
    %1041 = arith.subf %1040, %1033 : vector<2x128xf32>
    %1042 = arith.mulf %1041, %1039 : vector<2x128xf32>
    %1043 = arith.mulf %1033, %981 : vector<2x128xf32>
    %1044 = arith.addf %1042, %1043 : vector<2x128xf32>
    %c7_i32_269 = arith.constant 7 : i32
    %c7_i32_270 = arith.constant 7 : i32
    %1045 = arith.subi %c7_i32_270, %c7_i32_269 : i32
    %cst_271 = arith.constant dense<0.000000e+00> : vector<2x384xf32>
    %1046 = tpu.matmul %1014, %596, %cst_271 {dimension_numbers = #tpu.dot_dimension_numbers<[1], [0], [0], [1], [0, 0, 1, 1], [], []>} : vector<2x128xf32>, vector<128x384xf32>, vector<2x384xf32> -> vector<2x384xf32>
    %cst_272 = arith.constant dense<0.000000e+00> : vector<2x384xf32>
    %1047 = tpu.matmul %1044, %597, %cst_272 {dimension_numbers = #tpu.dot_dimension_numbers<[1], [0], [0], [1], [0, 0, 1, 1], [], []>} : vector<2x128xf32>, vector<128x384xf32>, vector<2x384xf32> -> vector<2x384xf32>
    %1048 = arith.index_cast %c7_i32_269 : i32 to index
    %c0_273 = arith.constant 0 : index
    %c0_274 = arith.constant 0 : index
    %1049 = vector.load %arg14[%1048, %c0_273, %c0_274] : memref<8x2x768xf32, #tpu.memory_space<vmem>>, vector<1x2x384xf32>
    %1050 = vector.shape_cast %1049 : vector<1x2x384xf32> to vector<2x384xf32>
    %1051 = vector.extract_strided_slice %1050 {offsets = [0, 0], sizes = [2, 128], strides = [1, 1]} : vector<2x384xf32> to vector<2x128xf32>
    %1052 = vector.extract_strided_slice %1046 {offsets = [0, 0], sizes = [2, 128], strides = [1, 1]} : vector<2x384xf32> to vector<2x128xf32>
    %1053 = arith.addf %1051, %1052 : vector<2x128xf32>
    %1054 = arith.negf %1053 : vector<2x128xf32>
    %1055 = math.exp %1054 : vector<2x128xf32>
    %cst_275 = arith.constant 1.000000e+00 : f32
    %1056 = vector.broadcast %cst_275 : f32 to vector<2x128xf32>
    %1057 = arith.addf %1056, %1055 : vector<2x128xf32>
    %1058 = arith.divf %1056, %1057 : vector<2x128xf32>
    %1059 = vector.extract_strided_slice %1050 {offsets = [0, 128], sizes = [2, 128], strides = [1, 1]} : vector<2x384xf32> to vector<2x128xf32>
    %1060 = vector.extract_strided_slice %1046 {offsets = [0, 128], sizes = [2, 128], strides = [1, 1]} : vector<2x384xf32> to vector<2x128xf32>
    %1061 = arith.addf %1059, %1060 : vector<2x128xf32>
    %1062 = arith.negf %1061 : vector<2x128xf32>
    %1063 = math.exp %1062 : vector<2x128xf32>
    %cst_276 = arith.constant 1.000000e+00 : f32
    %1064 = vector.broadcast %cst_276 : f32 to vector<2x128xf32>
    %1065 = arith.addf %1064, %1063 : vector<2x128xf32>
    %1066 = arith.divf %1064, %1065 : vector<2x128xf32>
    %1067 = vector.extract_strided_slice %1050 {offsets = [0, 256], sizes = [2, 128], strides = [1, 1]} : vector<2x384xf32> to vector<2x128xf32>
    %1068 = vector.extract_strided_slice %1046 {offsets = [0, 256], sizes = [2, 128], strides = [1, 1]} : vector<2x384xf32> to vector<2x128xf32>
    %1069 = arith.addf %1068, %600 : vector<2x128xf32>
    %1070 = arith.mulf %1058, %1069 : vector<2x128xf32>
    %1071 = arith.addf %1067, %1070 : vector<2x128xf32>
    %1072 = math.tanh %1071 : vector<2x128xf32>
    %cst_277 = arith.constant 1.000000e+00 : f32
    %1073 = vector.broadcast %cst_277 : f32 to vector<2x128xf32>
    %1074 = arith.subf %1073, %1066 : vector<2x128xf32>
    %1075 = arith.mulf %1074, %1072 : vector<2x128xf32>
    %1076 = arith.mulf %1066, %1014 : vector<2x128xf32>
    %1077 = arith.addf %1075, %1076 : vector<2x128xf32>
    %1078 = arith.index_cast %1045 : i32 to index
    %c0_278 = arith.constant 0 : index
    %c384_279 = arith.constant 384 : index
    %1079 = vector.load %arg14[%1078, %c0_278, %c384_279] : memref<8x2x768xf32, #tpu.memory_space<vmem>>, vector<1x2x384xf32>
    %1080 = vector.shape_cast %1079 : vector<1x2x384xf32> to vector<2x384xf32>
    %1081 = vector.extract_strided_slice %1080 {offsets = [0, 0], sizes = [2, 128], strides = [1, 1]} : vector<2x384xf32> to vector<2x128xf32>
    %1082 = vector.extract_strided_slice %1047 {offsets = [0, 0], sizes = [2, 128], strides = [1, 1]} : vector<2x384xf32> to vector<2x128xf32>
    %1083 = arith.addf %1081, %1082 : vector<2x128xf32>
    %1084 = arith.negf %1083 : vector<2x128xf32>
    %1085 = math.exp %1084 : vector<2x128xf32>
    %cst_280 = arith.constant 1.000000e+00 : f32
    %1086 = vector.broadcast %cst_280 : f32 to vector<2x128xf32>
    %1087 = arith.addf %1086, %1085 : vector<2x128xf32>
    %1088 = arith.divf %1086, %1087 : vector<2x128xf32>
    %1089 = vector.extract_strided_slice %1080 {offsets = [0, 128], sizes = [2, 128], strides = [1, 1]} : vector<2x384xf32> to vector<2x128xf32>
    %1090 = vector.extract_strided_slice %1047 {offsets = [0, 128], sizes = [2, 128], strides = [1, 1]} : vector<2x384xf32> to vector<2x128xf32>
    %1091 = arith.addf %1089, %1090 : vector<2x128xf32>
    %1092 = arith.negf %1091 : vector<2x128xf32>
    %1093 = math.exp %1092 : vector<2x128xf32>
    %cst_281 = arith.constant 1.000000e+00 : f32
    %1094 = vector.broadcast %cst_281 : f32 to vector<2x128xf32>
    %1095 = arith.addf %1094, %1093 : vector<2x128xf32>
    %1096 = arith.divf %1094, %1095 : vector<2x128xf32>
    %1097 = vector.extract_strided_slice %1080 {offsets = [0, 256], sizes = [2, 128], strides = [1, 1]} : vector<2x384xf32> to vector<2x128xf32>
    %1098 = vector.extract_strided_slice %1047 {offsets = [0, 256], sizes = [2, 128], strides = [1, 1]} : vector<2x384xf32> to vector<2x128xf32>
    %1099 = arith.addf %1098, %603 : vector<2x128xf32>
    %1100 = arith.mulf %1088, %1099 : vector<2x128xf32>
    %1101 = arith.addf %1097, %1100 : vector<2x128xf32>
    %1102 = math.tanh %1101 : vector<2x128xf32>
    %cst_282 = arith.constant 1.000000e+00 : f32
    %1103 = vector.broadcast %cst_282 : f32 to vector<2x128xf32>
    %1104 = arith.subf %1103, %1096 : vector<2x128xf32>
    %1105 = arith.mulf %1104, %1102 : vector<2x128xf32>
    %1106 = arith.mulf %1096, %1044 : vector<2x128xf32>
    %1107 = arith.addf %1105, %1106 : vector<2x128xf32>
    %c8_i32_283 = arith.constant 8 : i32
    %1108 = tpu.concatenate %1077, %1107 in 1 : vector<2x128xf32>, vector<2x128xf32> -> vector<2x256xf32>
    %c0_284 = arith.constant 0 : index
    %c0_285 = arith.constant 0 : index
    %1109 = vector.load %arg11[%c0_284, %c0_285] : memref<256x4xf32, #tpu.memory_space<vmem>>, vector<256x4xf32>
    %cst_286 = arith.constant dense<0.000000e+00> : vector<2x4xf32>
    %1110 = tpu.matmul %1108, %1109, %cst_286 {dimension_numbers = #tpu.dot_dimension_numbers<[1], [0], [0], [1], [0, 0, 1, 1], [], []>} : vector<2x256xf32>, vector<256x4xf32>, vector<2x4xf32> -> vector<2x4xf32>
    %c0_287 = arith.constant 0 : index
    %c0_288 = arith.constant 0 : index
    %1111 = vector.load %arg12[%c0_287, %c0_288] : memref<1x4xf32, #tpu.memory_space<vmem>>, vector<1x4xf32>
    %1112 = vector.broadcast %1111 : vector<1x4xf32> to vector<2x4xf32>
    %1113 = arith.addf %1110, %1112 : vector<2x4xf32>
    %cst_289 = arith.constant dense<0xFF800000> : vector<2xf32>
    %1114 = vector.multi_reduction <maximumf>, %1113, %cst_289 [1] : vector<2x4xf32> to vector<2xf32>
    %1115 = vector.shape_cast %1114 : vector<2xf32> to vector<2x1xf32>
    %1116 = vector.broadcast %1115 : vector<2x1xf32> to vector<2x4xf32>
    %1117 = arith.subf %1113, %1116 : vector<2x4xf32>
    %1118 = math.exp %1117 : vector<2x4xf32>
    %1119 = vector.broadcast %1115 : vector<2x1xf32> to vector<2x4xf32>
    %1120 = arith.subf %1113, %1119 : vector<2x4xf32>
    %cst_290 = arith.constant dense<0.000000e+00> : vector<2xf32>
    %1121 = vector.multi_reduction <add>, %1118, %cst_290 [1] : vector<2x4xf32> to vector<2xf32>
    %1122 = vector.shape_cast %1121 : vector<2xf32> to vector<2x1xf32>
    %1123 = math.log %1122 : vector<2x1xf32>
    %1124 = vector.broadcast %1123 : vector<2x1xf32> to vector<2x4xf32>
    %1125 = arith.subf %1120, %1124 : vector<2x4xf32>
    %c0_291 = arith.constant 0 : index
    %c0_292 = arith.constant 0 : index
    %1126 = vector.load %arg13[%c0_291, %c0_292] : memref<2x4xf32, #tpu.memory_space<vmem>>, vector<2x4xf32>
    tpu.vector_store %arg13[%c0_291, %c0_292], %1125 {strides = array<i32>} : memref<2x4xf32, #tpu.memory_space<vmem>>, vector<2x4xf32>,
    return
  }
}

</mosaic_0001>

<llo_original>
// kernel: tpu_custom_call.1
$region0: #{tpu_custom_call.1}
  #allocation0 [shape = 'u32[]', space=smem, size = 0x4, offset = 0x4, fixed_abs, tag = 'smem constant byte address 0x4 - core index']
  #allocation1 [shape = 'u32[144,128]{1,0:T(1,128)}', space=vmem, size = 0x12000, scoped, tag = 'internal scratch']
  #allocation2 [shape = 'f32[8,2,768]{2,1,0:T(2,128)}', space=vmem, size = 0xc000, scoped, tag = 'scratch operand']
  #allocation3 [shape = 'f32[8,2,256]{2,1,0:T(2,128)}', space=vmem, size = 0x4000, scoped, tag = 'scratch operand']
  %s0 = inlined_call_operand.vmem [shape: bf16[8,2,64], index: 0, kind: input, shape index: {}]
  %s1 = inlined_call_operand.vmem [shape: bf16[64,768], index: 1, kind: input, shape index: {}]
  %s2 = inlined_call_operand.vmem [shape: f32[1,768], index: 2, kind: input, shape index: {}]
  %s3 = inlined_call_operand.hbm [shape: f32[128,384], index: 3, kind: input, shape index: {}]
  %s4 = inlined_call_operand.hbm [shape: f32[128,384], index: 4, kind: input, shape index: {}]
  %s5 = inlined_call_operand.vmem [shape: f32[1,256], index: 5, kind: input, shape index: {}]
  %s6 = inlined_call_operand.hbm [shape: bf16[256,768], index: 6, kind: input, shape index: {}]
  %s7 = inlined_call_operand.vmem [shape: f32[1,768], index: 7, kind: input, shape index: {}]
  %s8 = inlined_call_operand.hbm [shape: f32[128,384], index: 8, kind: input, shape index: {}]
  %s9 = inlined_call_operand.hbm [shape: f32[128,384], index: 9, kind: input, shape index: {}]
  %s10 = inlined_call_operand.vmem [shape: f32[1,256], index: 10, kind: input, shape index: {}]
  %s11 = inlined_call_operand.vmem [shape: f32[256,4], index: 11, kind: input, shape index: {}]
  %s12 = inlined_call_operand.vmem [shape: f32[1,4], index: 12, kind: input, shape index: {}]
  %s13 = inlined_call_operand.hbm [shape: f32[2,4], index: 13, kind: output, shape index: {}]
  %s14 = sld [smem:[#allocation0]]
  $region82: #{tpu_custom_call.1} parent=0
    _
  %s16 = ssub.s32 1, %s14
  %s17 = scalar_select 0, %s16, %s14
  $region1: #{tpu_custom_call.1} parent=0
    #allocation4 [shape = 'u8[196608]{0}', space=vmem, size = 0x30000, scoped, tag = 'input window, operand 3, single buffered']
    #allocation5 [shape = 's32[1]{0}', space=sflag, size = 0x4, scoped, tag = 'scoped memory for tpu_custom_call.1']
    #allocation6 [shape = 's32[1]{0}', space=sflag, size = 0x4, scoped, tag = 'scoped memory for tpu_custom_call.1']
    #allocation7 [shape = 'u8[196608]{0}', space=vmem, size = 0x30000, scoped, tag = 'input window, operand 4, single buffered']
    #allocation8 [shape = 's32[1]{0}', space=sflag, size = 0x4, scoped, tag = 'scoped memory for tpu_custom_call.1']
    #allocation9 [shape = 'u8[393216]{0}', space=vmem, size = 0x60000, scoped, tag = 'input window, operand 6, single buffered']
    #allocation10 [shape = 'u8[196608]{0}', space=vmem, size = 0x30000, scoped, tag = 'input window, operand 8, single buffered']
    #allocation11 [shape = 's32[1]{0}', space=sflag, size = 0x4, scoped, tag = 'scoped memory for tpu_custom_call.1']
    #allocation12 [shape = 'u8[196608]{0}', space=vmem, size = 0x30000, scoped, tag = 'input window, operand 9, single buffered']
    #allocation13 [shape = 'u8[1024]{0}', space=vmem, size = 0x400, scoped, tag = 'output window, operand 0, single buffered']
    %18 = vsyncpa [#allocation5], 0
    %19 = vsyncpa [#allocation8], 0
    %20 = vsyncpa [#allocation11], 0
    %21 = vsyncpa [#allocation6], 0
    // Predicated region
    $region2: #{tpu_custom_call.1} parent=1 // pred_check
      _
    $region3: #{tpu_custom_call.1} parent=1 // pred_check_branch
      %23 = sbr.rel (0) target = $region5
    $region4: #{tpu_custom_call.1} parent=1 // pred_region
      _
    $region5: #{tpu_custom_call.1} parent=1 // pred_fallthru
      _
    // Predicated region
    $region6: #{tpu_custom_call.1} parent=1 // pred_check
      _
    $region7: #{tpu_custom_call.1} parent=1 // pred_check_branch
      %25 = sbr.rel (0) target = $region9
    $region8: #{tpu_custom_call.1} parent=1 // pred_region
      _
    $region9: #{tpu_custom_call.1} parent=1 // pred_fallthru
      _
    // Predicated region
    $region10: #{tpu_custom_call.1} parent=1 // pred_check
      _
    $region11: #{tpu_custom_call.1} parent=1 // pred_check_branch
      %27 = sbr.rel (0) target = $region13
    $region12: #{tpu_custom_call.1} parent=1 // pred_region
      _
    $region13: #{tpu_custom_call.1} parent=1 // pred_fallthru
      _
    // Predicated region
    $region14: #{tpu_custom_call.1} parent=1 // pred_check
      _
    $region15: #{tpu_custom_call.1} parent=1 // pred_check_branch
      %29 = sbr.rel (0) target = $region17
    $region16: #{tpu_custom_call.1} parent=1 // pred_region
      %s31 = ssub.s32 6144, 6144
      %32 = vsyncadd [#allocation5], %s31
      %s33 = sshll.u32 [#allocation4], 4
      %s34 = int_to_ptr.vmem [resolvable:$true] %s33
      %39 = dma.hbm_to_vmem [thread:$0]  %s3, 6144, %s34, [#allocation5], 384, 384, 24
    $region17: #{tpu_custom_call.1} parent=1 // pred_fallthru
      _
    // Predicated region
    $region18: #{tpu_custom_call.1} parent=1 // pred_check
      _
    $region19: #{tpu_custom_call.1} parent=1 // pred_check_branch
      %41 = sbr.rel (0) target = $region21
    $region20: #{tpu_custom_call.1} parent=1 // pred_region
      %s43 = ssub.s32 6144, 6144
      %44 = vsyncadd [#allocation8], %s43
      %s45 = sshll.u32 [#allocation7], 4
      %s46 = int_to_ptr.vmem [resolvable:$true] %s45
      %51 = dma.hbm_to_vmem [thread:$0]  %s4, 6144, %s46, [#allocation8], 384, 384, 24
    $region21: #{tpu_custom_call.1} parent=1 // pred_fallthru
      _
    // Predicated region
    $region22: #{tpu_custom_call.1} parent=1 // pred_check
      _
    $region23: #{tpu_custom_call.1} parent=1 // pred_check_branch
      %53 = sbr.rel (0) target = $region25
    $region24: #{tpu_custom_call.1} parent=1 // pred_region
      _
    $region25: #{tpu_custom_call.1} parent=1 // pred_fallthru
      _
    // Predicated region
    $region26: #{tpu_custom_call.1} parent=1 // pred_check
      _
    $region27: #{tpu_custom_call.1} parent=1 // pred_check_branch
      %55 = sbr.rel (0) target = $region29
    $region28: #{tpu_custom_call.1} parent=1 // pred_region
      %s57 = ssub.s32 12288, 12288
      %58 = vsyncadd [#allocation8], %s57
      %s59 = sshll.u32 [#allocation9], 4
      %s60 = int_to_ptr.vmem [resolvable:$true] %s59
      %65 = dma.hbm_to_vmem [thread:$0]  %s6, 12288, %s60, [#allocation8], 384, 384, 24
    $region29: #{tpu_custom_call.1} parent=1 // pred_fallthru
      _
    // Predicated region
    $region30: #{tpu_custom_call.1} parent=1 // pred_check
      _
    $region31: #{tpu_custom_call.1} parent=1 // pred_check_branch
      %67 = sbr.rel (0) target = $region33
    $region32: #{tpu_custom_call.1} parent=1 // pred_region
      _
    $region33: #{tpu_custom_call.1} parent=1 // pred_fallthru
      _
    // Predicated region
    $region34: #{tpu_custom_call.1} parent=1 // pred_check
      _
    $region35: #{tpu_custom_call.1} parent=1 // pred_check_branch
      %69 = sbr.rel (0) target = $region37
    $region36: #{tpu_custom_call.1} parent=1 // pred_region
      %s71 = ssub.s32 6144, 6144
      %72 = vsyncadd [#allocation11], %s71
      %s73 = sshll.u32 [#allocation10], 4
      %s74 = int_to_ptr.vmem [resolvable:$true] %s73
      %79 = dma.hbm_to_vmem [thread:$0]  %s8, 6144, %s74, [#allocation11], 384, 384, 24
    $region37: #{tpu_custom_call.1} parent=1 // pred_fallthru
      _
    // Predicated region
    $region38: #{tpu_custom_call.1} parent=1 // pred_check
      _
    $region39: #{tpu_custom_call.1} parent=1 // pred_check_branch
      %81 = sbr.rel (0) target = $region41
    $region40: #{tpu_custom_call.1} parent=1 // pred_region
      %s83 = ssub.s32 6144, 6144
      %84 = vsyncadd [#allocation11], %s83
      %s85 = sshll.u32 [#allocation12], 4
      %s86 = int_to_ptr.vmem [resolvable:$true] %s85
      %91 = dma.hbm_to_vmem [thread:$0]  %s9, 6144, %s86, [#allocation11], 384, 384, 24
    $region41: #{tpu_custom_call.1} parent=1 // pred_fallthru
      _
    // Predicated region
    $region42: #{tpu_custom_call.1} parent=1 // pred_check
      _
    $region43: #{tpu_custom_call.1} parent=1 // pred_check_branch
      %93 = sbr.rel (0) target = $region45
    $region44: #{tpu_custom_call.1} parent=1 // pred_region
      _
    $region45: #{tpu_custom_call.1} parent=1 // pred_fallthru
      _
    // Predicated region
    $region46: #{tpu_custom_call.1} parent=1 // pred_check
      _
    $region47: #{tpu_custom_call.1} parent=1 // pred_check_branch
      %95 = sbr.rel (0) target = $region49
    $region48: #{tpu_custom_call.1} parent=1 // pred_region
      _
    $region49: #{tpu_custom_call.1} parent=1 // pred_fallthru
      _
    // Predicated region
    $region50: #{tpu_custom_call.1} parent=1 // pred_check
      _
    $region51: #{tpu_custom_call.1} parent=1 // pred_check_branch
      %97 = sbr.rel (0) target = $region53
    $region52: #{tpu_custom_call.1} parent=1 // pred_region
      _
    $region53: #{tpu_custom_call.1} parent=1 // pred_fallthru
      _
    // Predicated region
    $region54: #{tpu_custom_call.1} parent=1 // pred_check
      _
    $region55: #{tpu_custom_call.1} parent=1 // pred_check_branch
      %99 = sbr.rel (0) target = $region57
    $region56: #{tpu_custom_call.1} parent=1 // pred_region
      %100 = dma.done [#allocation5], 6144
    $region57: #{tpu_custom_call.1} parent=1 // pred_fallthru
      _
    // Predicated region
    $region58: #{tpu_custom_call.1} parent=1 // pred_check
      _
    $region59: #{tpu_custom_call.1} parent=1 // pred_check_branch
      %102 = sbr.rel (0) target = $region61
    $region60: #{tpu_custom_call.1} parent=1 // pred_region
      %103 = dma.done [#allocation8], 6144
    $region61: #{tpu_custom_call.1} parent=1 // pred_fallthru
      _
    // Predicated region
    $region62: #{tpu_custom_call.1} parent=1 // pred_check
      _
    $region63: #{tpu_custom_call.1} parent=1 // pred_check_branch
      %105 = sbr.rel (0) target = $region65
    $region64: #{tpu_custom_call.1} parent=1 // pred_region
      %106 = dma.done [#allocation8], 12288
    $region65: #{tpu_custom_call.1} parent=1 // pred_fallthru
      _
    // Predicated region
    $region66: #{tpu_custom_call.1} parent=1 // pred_check
      _
    $region67: #{tpu_custom_call.1} parent=1 // pred_check_branch
      %108 = sbr.rel (0) target = $region69
    $region68: #{tpu_custom_call.1} parent=1 // pred_region
      %109 = dma.done [#allocation11], 6144
    $region69: #{tpu_custom_call.1} parent=1 // pred_fallthru
      _
    // Predicated region
    $region70: #{tpu_custom_call.1} parent=1 // pred_check
      _
    $region71: #{tpu_custom_call.1} parent=1 // pred_check_branch
      %111 = sbr.rel (0) target = $region73
    $region72: #{tpu_custom_call.1} parent=1 // pred_region
      %112 = dma.done [#allocation11], 6144
    $region73: #{tpu_custom_call.1} parent=1 // pred_fallthru
      _
    %v114 = vld [vmem:[%s0] sm:$0x1]
    %v115 = vld [vmem:[%s0 + $0x1] sm:$0x1]
    %v116 = vld [vmem:[%s0 + $0x2] sm:$0x1]
    %v117 = vld [vmem:[%s0 + $0x3] sm:$0x1]
    %v118 = vld [vmem:[%s0 + $0x4] sm:$0x1]
    %v119 = vld [vmem:[%s0 + $0x5] sm:$0x1]
    %v120 = vld [vmem:[%s0 + $0x6] sm:$0x1]
    %v121 = vld [vmem:[%s0 + $0x7] sm:$0x1]
    %v122 = vld [vmem:[%s1] sm:$0xff]
    %v123 = vld [vmem:[%s1 + $0x8] sm:$0xff]
    %v124 = vld [vmem:[%s1 + $0x10] sm:$0xff]
    %v125 = vld [vmem:[%s1 + $0x18] sm:$0xff]
    %v126 = vld [vmem:[%s1 + $0x20] sm:$0xff]
    %v127 = vld [vmem:[%s1 + $0x28] sm:$0xff]
    %v128 = vld [vmem:[%s1 + $0x30] sm:$0xff]
    %v129 = vld [vmem:[%s1 + $0x38] sm:$0xff]
    %v130 = vld [vmem:[%s1 + $0x40] sm:$0xff]
    %v131 = vld [vmem:[%s1 + $0x48] sm:$0xff]
    %v132 = vld [vmem:[%s1 + $0x50] sm:$0xff]
    %v133 = vld [vmem:[%s1 + $0x58] sm:$0xff]
    %v134 = vld [vmem:[%s1 + $0x60] sm:$0xff]
    %v135 = vld [vmem:[%s1 + $0x68] sm:$0xff]
    %v136 = vld [vmem:[%s1 + $0x70] sm:$0xff]
    %v137 = vld [vmem:[%s1 + $0x78] sm:$0xff]
    %v138 = vld [vmem:[%s1 + $0x80] sm:$0xff]
    %v139 = vld [vmem:[%s1 + $0x88] sm:$0xff]
    %v140 = vld [vmem:[%s1 + $0x90] sm:$0xff]
    %v141 = vld [vmem:[%s1 + $0x98] sm:$0xff]
    %v142 = vld [vmem:[%s1 + $0xa0] sm:$0xff]
    %v143 = vld [vmem:[%s1 + $0xa8] sm:$0xff]
    %v144 = vld [vmem:[%s1 + $0xb0] sm:$0xff]
    %v145 = vld [vmem:[%s1 + $0xb8] sm:$0xff]
    %v146 = vld [vmem:[%s2] sm:$0x3f]
    %v148 = vlaneseq
    %v149 = vshrl.u32 %v148, 7
    %v150 = vsub.s32 0, %v149
    %v151 = vrot.slane %v146, %v150
    %v152 = vlaneseq
    %v153 = vshrl.u32 %v152, 7
    %v154 = vsub.s32 1, %v153
    %v155 = vrot.slane %v146, %v154
    %v156 = vlaneseq
    %v157 = vshrl.u32 %v156, 7
    %v158 = vsub.s32 2, %v157
    %v159 = vrot.slane %v146, %v158
    %v160 = vlaneseq
    %v161 = vshrl.u32 %v160, 7
    %v162 = vsub.s32 3, %v161
    %v163 = vrot.slane %v146, %v162
    %v164 = vlaneseq
    %v165 = vshrl.u32 %v164, 7
    %v166 = vsub.s32 4, %v165
    %v167 = vrot.slane %v146, %v166
    %v168 = vlaneseq
    %v169 = vshrl.u32 %v168, 7
    %v170 = vsub.s32 5, %v169
    %v171 = vrot.slane %v146, %v170
    %v186 = vcombine.low %v114, %v115
    %v187 = vcombine.low %v116, %v117
    %v188 = vcombine.low %v118, %v119
    %v189 = vcombine.low %v120, %v121
    %v191 = vunpack.c.l.s4 1966171168
    %v192 = vunpack.c.0.s8 %v191
    %v193 = vlaneseq
    %v194 = vshrl.u32 %v193, 7
    %v195 = vsub.s32 %v192, %v194
    %v196 = vrot.slane %v186, %v195
    %v198 = vunpack.c.l.s4 1966171168
    %v199 = vunpack.c.0.s8 %v198
    %v200 = vlaneseq
    %v201 = vshrl.u32 %v200, 7
    %v202 = vsub.s32 %v199, %v201
    %v203 = vrot.slane %v187, %v202
    %v205 = vunpack.c.l.s4 1966171168
    %v206 = vunpack.c.0.s8 %v205
    %v207 = vlaneseq
    %v208 = vshrl.u32 %v207, 7
    %v209 = vsub.s32 %v206, %v208
    %v210 = vrot.slane %v188, %v209
    %v212 = vunpack.c.l.s4 1966171168
    %v213 = vunpack.c.0.s8 %v212
    %v214 = vlaneseq
    %v215 = vshrl.u32 %v214, 7
    %v216 = vsub.s32 %v213, %v215
    %v217 = vrot.slane %v189, %v216
    %v218 = vcombine.low %v196, %v203
    %v219 = vcombine.low %v210, %v217
    %v221 = vunpack.c.l.s4 1966171168
    %v222 = vunpack.c.0.s8 %v221
    %v223 = vlaneseq
    %v224 = vshrl.u32 %v223, 7
    %v225 = vsub.s32 %v222, %v224
    %v226 = vrot.slane %v218, %v225
    %v228 = vunpack.c.l.s4 1966171168
    %v229 = vunpack.c.0.s8 %v228
    %v230 = vlaneseq
    %v231 = vshrl.u32 %v230, 7
    %v232 = vsub.s32 %v229, %v231
    %v233 = vrot.slane %v219, %v232
    %v234 = vcombine.low %v226, %v233
    %v259 = vunpack.c.l.b16 %v122
    %v260 = vunpack.c.h.b16 %v122
    %v261 = vunpack.c.l.b16 %v123
    %v262 = vunpack.c.h.b16 %v123
    %v263 = vunpack.c.l.b16 %v124
    %v264 = vunpack.c.h.b16 %v124
    %v265 = vunpack.c.l.b16 %v125
    %v266 = vunpack.c.h.b16 %v125
    %v267 = vunpack.c.l.b16 %v126
    %v268 = vunpack.c.h.b16 %v126
    %v269 = vunpack.c.l.b16 %v127
    %v270 = vunpack.c.h.b16 %v127
    %v271 = vunpack.c.l.b16 %v128
    %v272 = vunpack.c.h.b16 %v128
    %v273 = vunpack.c.l.b16 %v129
    %v274 = vunpack.c.h.b16 %v129
    %v275 = vunpack.c.l.b16 %v130
    %v276 = vunpack.c.h.b16 %v130
    %v277 = vunpack.c.l.b16 %v131
    %v278 = vunpack.c.h.b16 %v131
    %v279 = vunpack.c.l.b16 %v132
    %v280 = vunpack.c.h.b16 %v132
    %v281 = vunpack.c.l.b16 %v133
    %v282 = vunpack.c.h.b16 %v133
    %v283 = vunpack.c.l.b16 %v134
    %v284 = vunpack.c.h.b16 %v134
    %v285 = vunpack.c.l.b16 %v135
    %v286 = vunpack.c.h.b16 %v135
    %v287 = vunpack.c.l.b16 %v136
    %v288 = vunpack.c.h.b16 %v136
    %v289 = vunpack.c.l.b16 %v137
    %v290 = vunpack.c.h.b16 %v137
    %v291 = vunpack.c.l.b16 %v138
    %v292 = vunpack.c.h.b16 %v138
    %v293 = vunpack.c.l.b16 %v139
    %v294 = vunpack.c.h.b16 %v139
    %v295 = vunpack.c.l.b16 %v140
    %v296 = vunpack.c.h.b16 %v140
    %v297 = vunpack.c.l.b16 %v141
    %v298 = vunpack.c.h.b16 %v141
    %v299 = vunpack.c.l.b16 %v142
    %v300 = vunpack.c.h.b16 %v142
    %v301 = vunpack.c.l.b16 %v143
    %v302 = vunpack.c.h.b16 %v143
    %v303 = vunpack.c.l.b16 %v144
    %v304 = vunpack.c.h.b16 %v144
    %v305 = vunpack.c.l.b16 %v145
    %v306 = vunpack.c.h.b16 %v145
    %v307 = vpack.c.b16 %v265, %v259
    %v308 = vpack.c.b16 %v266, %v260
    %v309 = vpack.c.b16 %v267, %v261
    %v310 = vpack.c.b16 %v268, %v262
    %v311 = vpack.c.b16 %v269, %v263
    %v312 = vpack.c.b16 %v270, %v264
    %v313 = vpack.c.b16 %v277, %v271
    %v314 = vpack.c.b16 %v278, %v272
    %v315 = vpack.c.b16 %v279, %v273
    %v316 = vpack.c.b16 %v280, %v274
    %v317 = vpack.c.b16 %v281, %v275
    %v318 = vpack.c.b16 %v282, %v276
    %v319 = vpack.c.b16 %v289, %v283
    %v320 = vpack.c.b16 %v290, %v284
    %v321 = vpack.c.b16 %v291, %v285
    %v322 = vpack.c.b16 %v292, %v286
    %v323 = vpack.c.b16 %v293, %v287
    %v324 = vpack.c.b16 %v294, %v288
    %v325 = vpack.c.b16 %v301, %v295
    %v326 = vpack.c.b16 %v302, %v296
    %v327 = vpack.c.b16 %v303, %v297
    %v328 = vpack.c.b16 %v304, %v298
    %v329 = vpack.c.b16 %v305, %v299
    %v330 = vpack.c.b16 %v306, %v300
    %vm355 = vcmask 523264
    %v357 = vsel %vm355, %v234, 0
    %359 = vmatprep.subr.bf16.mxu0 %v308
    %360 = vmatpush1.bf16.msra.mxu0 %v307
    %361 = vmatprep.subr.bf16.mxu0 %v314
    %362 = vmatpush1.bf16.msra.mxu0 %v313
    %363 = vmatprep.subr.bf16.mxu0 %v320
    %364 = vmatpush1.bf16.msra.mxu0 %v319
    %365 = vmatprep.subr.bf16.mxu0 %v326
    %366 = vmatpush1.bf16.msra.mxu0 %v325
    %367 = vmatprep.subr.bf16.mxu0 0
    %368 = vmatpush1.bf16.msra.mxu0 0
    %369 = vmatprep.subr.bf16.mxu0 0
    %370 = vmatpush1.bf16.msra.mxu0 0
    %371 = vmatprep.subr.bf16.mxu0 0
    %372 = vmatpush1.bf16.msra.mxu0 0
    %373 = vmatprep.subr.bf16.mxu0 0
    %374 = vmatpush1.bf16.msra.mxu0 0
    %375 = vmatprep.subr.bf16.mxu0 0
    %376 = vmatpush1.bf16.msra.mxu0 0
    %377 = vmatprep.subr.bf16.mxu0 0
    %378 = vmatpush1.bf16.msra.mxu0 0
    %379 = vmatprep.subr.bf16.mxu0 0
    %380 = vmatpush1.bf16.msra.mxu0 0
    %381 = vmatprep.subr.bf16.mxu0 0
    %382 = vmatpush1.bf16.msra.mxu0 0
    %383 = vmatprep.subr.bf16.mxu0 0
    %384 = vmatpush1.bf16.msra.mxu0 0
    %385 = vmatprep.subr.bf16.mxu0 0
    %386 = vmatpush1.bf16.msra.mxu0 0
    %387 = vmatprep.subr.bf16.mxu0 0
    %388 = vmatpush1.bf16.msra.mxu0 0
    %389 = vmatprep.subr.bf16.mxu0 0
    %390 = vmatpush1.bf16.msra.mxu0 0
    %391 = vmatprep.mubr.bf16.mxu0 0
    %392 = vmatmul.mubr.bf16.gmra.mrb[0].mxu0 %v357
    %v393 = vpop.f32.mrb[0].mxu0
    %v394 = vadd.f32 %v151, %v393
    %v395 = vpop.f32.mrb[0].mxu0
    %v396 = vadd.f32 %v155, %v395
    %v397 = vpop.f32.mrb[0].mxu0
    %v398 = vadd.f32 %v151, %v397
    %v399 = vpop.f32.mrb[0].mxu0
    %v400 = vadd.f32 %v155, %v399
    %401 = vdwg.mxu0
    %402 = vmatprep.subr.bf16.mxu0 %v310
    %403 = vmatpush1.bf16.msra.mxu0 %v309
    %404 = vmatprep.subr.bf16.mxu0 %v316
    %405 = vmatpush1.bf16.msra.mxu0 %v315
    %406 = vmatprep.subr.bf16.mxu0 %v322
    %407 = vmatpush1.bf16.msra.mxu0 %v321
    %408 = vmatprep.subr.bf16.mxu0 %v328
    %409 = vmatpush1.bf16.msra.mxu0 %v327
    %410 = vmatprep.subr.bf16.mxu0 0
    %411 = vmatpush1.bf16.msra.mxu0 0
    %412 = vmatprep.subr.bf16.mxu0 0
    %413 = vmatpush1.bf16.msra.mxu0 0
    %414 = vmatprep.subr.bf16.mxu0 0
    %415 = vmatpush1.bf16.msra.mxu0 0
    %416 = vmatprep.subr.bf16.mxu0 0
    %417 = vmatpush1.bf16.msra.mxu0 0
    %418 = vmatprep.subr.bf16.mxu0 0
    %419 = vmatpush1.bf16.msra.mxu0 0
    %420 = vmatprep.subr.bf16.mxu0 0
    %421 = vmatpush1.bf16.msra.mxu0 0
    %422 = vmatprep.subr.bf16.mxu0 0
    %423 = vmatpush1.bf16.msra.mxu0 0
    %424 = vmatprep.subr.bf16.mxu0 0
    %425 = vmatpush1.bf16.msra.mxu0 0
    %426 = vmatprep.subr.bf16.mxu0 0
    %427 = vmatpush1.bf16.msra.mxu0 0
    %428 = vmatprep.subr.bf16.mxu0 0
    %429 = vmatpush1.bf16.msra.mxu0 0
    %430 = vmatprep.subr.bf16.mxu0 0
    %431 = vmatpush1.bf16.msra.mxu0 0
    %432 = vmatprep.subr.bf16.mxu0 0
    %433 = vmatpush1.bf16.msra.mxu0 0
    %434 = vmatprep.mubr.bf16.mxu0 0
    %435 = vmatmul.mubr.bf16.gmra.mrb[0].mxu0 %v357
    %v436 = vpop.f32.mrb[0].mxu0
    %v437 = vadd.f32 %v159, %v436
    %v438 = vpop.f32.mrb[0].mxu0
    %v439 = vadd.f32 %v163, %v438
    %v440 = vpop.f32.mrb[0].mxu0
    %v441 = vadd.f32 %v159, %v440
    %v442 = vpop.f32.mrb[0].mxu0
    %v443 = vadd.f32 %v163, %v442
    %444 = vdwg.mxu0
    %445 = vmatprep.subr.bf16.mxu0 %v312
    %446 = vmatpush1.bf16.msra.mxu0 %v311
    %447 = vmatprep.subr.bf16.mxu0 %v318
    %448 = vmatpush1.bf16.msra.mxu0 %v317
    %449 = vmatprep.subr.bf16.mxu0 %v324
    %450 = vmatpush1.bf16.msra.mxu0 %v323
    %451 = vmatprep.subr.bf16.mxu0 %v330
    %452 = vmatpush1.bf16.msra.mxu0 %v329
    %453 = vmatprep.subr.bf16.mxu0 0
    %454 = vmatpush1.bf16.msra.mxu0 0
    %455 = vmatprep.subr.bf16.mxu0 0
    %456 = vmatpush1.bf16.msra.mxu0 0
    %457 = vmatprep.subr.bf16.mxu0 0
    %458 = vmatpush1.bf16.msra.mxu0 0
    %459 = vmatprep.subr.bf16.mxu0 0
    %460 = vmatpush1.bf16.msra.mxu0 0
    %461 = vmatprep.subr.bf16.mxu0 0
    %462 = vmatpush1.bf16.msra.mxu0 0
    %463 = vmatprep.subr.bf16.mxu0 0
    %464 = vmatpush1.bf16.msra.mxu0 0
    %465 = vmatprep.subr.bf16.mxu0 0
    %466 = vmatpush1.bf16.msra.mxu0 0
    %467 = vmatprep.subr.bf16.mxu0 0
    %468 = vmatpush1.bf16.msra.mxu0 0
    %469 = vmatprep.subr.bf16.mxu0 0
    %470 = vmatpush1.bf16.msra.mxu0 0
    %471 = vmatprep.subr.bf16.mxu0 0
    %472 = vmatpush1.bf16.msra.mxu0 0
    %473 = vmatprep.subr.bf16.mxu0 0
    %474 = vmatpush1.bf16.msra.mxu0 0
    %475 = vmatprep.subr.bf16.mxu0 0
    %476 = vmatpush1.bf16.msra.mxu0 0
    %477 = vmatprep.mubr.bf16.mxu0 0
    %478 = vmatmul.mubr.bf16.gmra.mrb[0].mxu0 %v357
    %v479 = vpop.f32.mrb[0].mxu0
    %v480 = vadd.f32 %v167, %v479
    %v481 = vpop.f32.mrb[0].mxu0
    %v482 = vadd.f32 %v171, %v481
    %v483 = vpop.f32.mrb[0].mxu0
    %v484 = vadd.f32 %v167, %v483
    %v485 = vpop.f32.mrb[0].mxu0
    %v486 = vadd.f32 %v171, %v485
    %487 = vdwg.mxu0
    %v500 = vcombine.low %v394, %v396
    %v501 = vcombine.high %v394, %v396
    %v502 = vcombine.low %v437, %v439
    %v503 = vcombine.high %v437, %v439
    %v505 = vunpack.c.l.s4 1983009808
    %v506 = vunpack.c.0.s8 %v505
    %v507 = vlaneseq
    %v508 = vshrl.u32 %v507, 7
    %v509 = vsub.s32 %v506, %v508
    %v510 = vrot.slane %v500, %v509
    %v512 = vunpack.c.l.s4 1983009808
    %v513 = vunpack.c.0.s8 %v512
    %v514 = vlaneseq
    %v515 = vshrl.u32 %v514, 7
    %v516 = vsub.s32 %v513, %v515
    %v517 = vrot.slane %v501, %v516
    %v519 = vunpack.c.l.s4 1983009808
    %v520 = vunpack.c.0.s8 %v519
    %v521 = vlaneseq
    %v522 = vshrl.u32 %v521, 7
    %v523 = vsub.s32 %v520, %v522
    %v524 = vrot.slane %v502, %v523
    %v526 = vunpack.c.l.s4 1983009808
    %v527 = vunpack.c.0.s8 %v526
    %v528 = vlaneseq
    %v529 = vshrl.u32 %v528, 7
    %v530 = vsub.s32 %v527, %v529
    %v531 = vrot.slane %v503, %v530
    %v532 = vcombine.low %v510, %v524
    %v533 = vcombine.high %v510, %v524
    %v534 = vcombine.low %v517, %v531
    %v535 = vcombine.high %v517, %v531
    %v536 = vcombine.low %v480, %v482
    %v537 = vcombine.high %v480, %v482
    %v539 = vunpack.c.l.s4 1983009808
    %v540 = vunpack.c.0.s8 %v539
    %v541 = vlaneseq
    %v542 = vshrl.u32 %v541, 7
    %v543 = vsub.s32 %v540, %v542
    %v544 = vrot.slane %v536, %v543
    %v546 = vunpack.c.l.s4 1983009808
    %v547 = vunpack.c.0.s8 %v546
    %v548 = vlaneseq
    %v549 = vshrl.u32 %v548, 7
    %v550 = vsub.s32 %v547, %v549
    %v551 = vrot.slane %v537, %v550
    %v552 = vcombine.high %v544, %v544
    %v553 = vcombine.high %v551, %v551
    %v554 = vcombine.low %v398, %v400
    %v555 = vcombine.high %v398, %v400
    %v556 = vcombine.low %v441, %v443
    %v557 = vcombine.high %v441, %v443
    %v559 = vunpack.c.l.s4 1983009808
    %v560 = vunpack.c.0.s8 %v559
    %v561 = vlaneseq
    %v562 = vshrl.u32 %v561, 7
    %v563 = vsub.s32 %v560, %v562
    %v564 = vrot.slane %v554, %v563
    %v566 = vunpack.c.l.s4 1983009808
    %v567 = vunpack.c.0.s8 %v566
    %v568 = vlaneseq
    %v569 = vshrl.u32 %v568, 7
    %v570 = vsub.s32 %v567, %v569
    %v571 = vrot.slane %v555, %v570
    %v573 = vunpack.c.l.s4 1983009808
    %v574 = vunpack.c.0.s8 %v573
    %v575 = vlaneseq
    %v576 = vshrl.u32 %v575, 7
    %v577 = vsub.s32 %v574, %v576
    %v578 = vrot.slane %v556, %v577
    %v580 = vunpack.c.l.s4 1983009808
    %v581 = vunpack.c.0.s8 %v580
    %v582 = vlaneseq
    %v583 = vshrl.u32 %v582, 7
    %v584 = vsub.s32 %v581, %v583
    %v585 = vrot.slane %v557, %v584
    %v586 = vcombine.low %v564, %v578
    %v587 = vcombine.high %v564, %v578
    %v588 = vcombine.low %v571, %v585
    %v589 = vcombine.high %v571, %v585
    %v590 = vcombine.low %v484, %v486
    %v591 = vcombine.high %v484, %v486
    %v593 = vunpack.c.l.s4 1983009808
    %v594 = vunpack.c.0.s8 %v593
    %v595 = vlaneseq
    %v596 = vshrl.u32 %v595, 7
    %v597 = vsub.s32 %v594, %v596
    %v598 = vrot.slane %v590, %v597
    %v600 = vunpack.c.l.s4 1983009808
    %v601 = vunpack.c.0.s8 %v600
    %v602 = vlaneseq
    %v603 = vshrl.u32 %v602, 7
    %v604 = vsub.s32 %v601, %v603
    %v605 = vrot.slane %v591, %v604
    %v606 = vcombine.high %v598, %v598
    %v607 = vcombine.high %v605, %v605
    %624 = vst [vmem:[#allocation2] sm:$0xff] %v532
    %625 = vst [vmem:[#allocation2 + $0x8] sm:$0xf] %v544
    %626 = vst [vmem:[#allocation2 + $0xc] sm:$0xff] %v533
    %627 = vst [vmem:[#allocation2 + $0x14] sm:$0xf] %v552
    %628 = vst [vmem:[#allocation2 + $0x18] sm:$0xff] %v534
    %629 = vst [vmem:[#allocation2 + $0x20] sm:$0xf] %v551
    %630 = vst [vmem:[#allocation2 + $0x24] sm:$0xff] %v535
    %631 = vst [vmem:[#allocation2 + $0x2c] sm:$0xf] %v553
    %632 = vst [vmem:[#allocation2 + $0x30] sm:$0xff] %v586
    %633 = vst [vmem:[#allocation2 + $0x38] sm:$0xf] %v598
    %634 = vst [vmem:[#allocation2 + $0x3c] sm:$0xff] %v587
    %635 = vst [vmem:[#allocation2 + $0x44] sm:$0xf] %v606
    %636 = vst [vmem:[#allocation2 + $0x48] sm:$0xff] %v588
    %637 = vst [vmem:[#allocation2 + $0x50] sm:$0xf] %v605
    %638 = vst [vmem:[#allocation2 + $0x54] sm:$0xff] %v589
    %639 = vst [vmem:[#allocation2 + $0x5c] sm:$0xf] %v607
    %v640 = vld [vmem:[#allocation4] sm:$0xff]
    %v641 = vld [vmem:[#allocation4 + $0x8] sm:$0xff]
    %v642 = vld [vmem:[#allocation4 + $0x10] sm:$0xff]
    %v643 = vld [vmem:[#allocation4 + $0x18] sm:$0xff]
    %v644 = vld [vmem:[#allocation4 + $0x20] sm:$0xff]
    %v645 = vld [vmem:[#allocation4 + $0x28] sm:$0xff]
    %v646 = vld [vmem:[#allocation4 + $0x30] sm:$0xff]
    %v647 = vld [vmem:[#allocation4 + $0x38] sm:$0xff]
    %v648 = vld [vmem:[#allocation4 + $0x40] sm:$0xff]
    %v649 = vld [vmem:[#allocation4 + $0x48] sm:$0xff]
    %v650 = vld [vmem:[#allocation4 + $0x50] sm:$0xff]
    %v651 = vld [vmem:[#allocation4 + $0x58] sm:$0xff]
    %v652 = vld [vmem:[#allocation4 + $0x60] sm:$0xff]
    %v653 = vld [vmem:[#allocation4 + $0x68] sm:$0xff]
    %v654 = vld [vmem:[#allocation4 + $0x70] sm:$0xff]
    %v655 = vld [vmem:[#allocation4 + $0x78] sm:$0xff]
    %v656 = vld [vmem:[#allocation4 + $0x80] sm:$0xff]
    %v657 = vld [vmem:[#allocation4 + $0x88] sm:$0xff]
    %v658 = vld [vmem:[#allocation4 + $0x90] sm:$0xff]
    %v659 = vld [vmem:[#allocation4 + $0x98] sm:$0xff]
    %v660 = vld [vmem:[#allocation4 + $0xa0] sm:$0xff]
    %v661 = vld [vmem:[#allocation4 + $0xa8] sm:$0xff]
    %v662 = vld [vmem:[#allocation4 + $0xb0] sm:$0xff]
    %v663 = vld [vmem:[#allocation4 + $0xb8] sm:$0xff]
    %v664 = vld [vmem:[#allocation4 + $0xc0] sm:$0xff]
    %v665 = vld [vmem:[#allocation4 + $0xc8] sm:$0xff]
    %v666 = vld [vmem:[#allocation4 + $0xd0] sm:$0xff]
    %v667 = vld [vmem:[#allocation4 + $0xd8] sm:$0xff]
    %v668 = vld [vmem:[#allocation4 + $0xe0] sm:$0xff]
    %v669 = vld [vmem:[#allocation4 + $0xe8] sm:$0xff]
    %v670 = vld [vmem:[#allocation4 + $0xf0] sm:$0xff]
    %v671 = vld [vmem:[#allocation4 + $0xf8] sm:$0xff]
    %v672 = vld [vmem:[#allocation4 + $0x100] sm:$0xff]
    %v673 = vld [vmem:[#allocation4 + $0x108] sm:$0xff]
    %v674 = vld [vmem:[#allocation4 + $0x110] sm:$0xff]
    %v675 = vld [vmem:[#allocation4 + $0x118] sm:$0xff]
    %v676 = vld [vmem:[#allocation4 + $0x120] sm:$0xff]
    %v677 = vld [vmem:[#allocation4 + $0x128] sm:$0xff]
    %v678 = vld [vmem:[#allocation4 + $0x130] sm:$0xff]
    %v679 = vld [vmem:[#allocation4 + $0x138] sm:$0xff]
    %v680 = vld [vmem:[#allocation4 + $0x140] sm:$0xff]
    %v681 = vld [vmem:[#allocation4 + $0x148] sm:$0xff]
    %v682 = vld [vmem:[#allocation4 + $0x150] sm:$0xff]
    %v683 = vld [vmem:[#allocation4 + $0x158] sm:$0xff]
    %v684 = vld [vmem:[#allocation4 + $0x160] sm:$0xff]
    %v685 = vld [vmem:[#allocation4 + $0x168] sm:$0xff]
    %v686 = vld [vmem:[#allocation4 + $0x170] sm:$0xff]
    %v687 = vld [vmem:[#allocation4 + $0x178] sm:$0xff]
    %v688 = vld [vmem:[#allocation7] sm:$0xff]
    %v689 = vld [vmem:[#allocation7 + $0x8] sm:$0xff]
    %v690 = vld [vmem:[#allocation7 + $0x10] sm:$0xff]
    %v691 = vld [vmem:[#allocation7 + $0x18] sm:$0xff]
    %v692 = vld [vmem:[#allocation7 + $0x20] sm:$0xff]
    %v693 = vld [vmem:[#allocation7 + $0x28] sm:$0xff]
    %v694 = vld [vmem:[#allocation7 + $0x30] sm:$0xff]
    %v695 = vld [vmem:[#allocation7 + $0x38] sm:$0xff]
    %v696 = vld [vmem:[#allocation7 + $0x40] sm:$0xff]
    %v697 = vld [vmem:[#allocation7 + $0x48] sm:$0xff]
    %v698 = vld [vmem:[#allocation7 + $0x50] sm:$0xff]
    %v699 = vld [vmem:[#allocation7 + $0x58] sm:$0xff]
    %v700 = vld [vmem:[#allocation7 + $0x60] sm:$0xff]
    %v701 = vld [vmem:[#allocation7 + $0x68] sm:$0xff]
    %v702 = vld [vmem:[#allocation7 + $0x70] sm:$0xff]
    %v703 = vld [vmem:[#allocation7 + $0x78] sm:$0xff]
    %v704 = vld [vmem:[#allocation7 + $0x80] sm:$0xff]
    %v705 = vld [vmem:[#allocation7 + $0x88] sm:$0xff]
    %v706 = vld [vmem:[#allocation7 + $0x90] sm:$0xff]
    %v707 = vld [vmem:[#allocation7 + $0x98] sm:$0xff]
    %v708 = vld [vmem:[#allocation7 + $0xa0] sm:$0xff]
    %v709 = vld [vmem:[#allocation7 + $0xa8] sm:$0xff]
    %v710 = vld [vmem:[#allocation7 + $0xb0] sm:$0xff]
    %v711 = vld [vmem:[#allocation7 + $0xb8] sm:$0xff]
    %v712 = vld [vmem:[#allocation7 + $0xc0] sm:$0xff]
    %v713 = vld [vmem:[#allocation7 + $0xc8] sm:$0xff]
    %v714 = vld [vmem:[#allocation7 + $0xd0] sm:$0xff]
    %v715 = vld [vmem:[#allocation7 + $0xd8] sm:$0xff]
    %v716 = vld [vmem:[#allocation7 + $0xe0] sm:$0xff]
    %v717 = vld [vmem:[#allocation7 + $0xe8] sm:$0xff]
    %v718 = vld [vmem:[#allocation7 + $0xf0] sm:$0xff]
    %v719 = vld [vmem:[#allocation7 + $0xf8] sm:$0xff]
    %v720 = vld [vmem:[#allocation7 + $0x100] sm:$0xff]
    %v721 = vld [vmem:[#allocation7 + $0x108] sm:$0xff]
    %v722 = vld [vmem:[#allocation7 + $0x110] sm:$0xff]
    %v723 = vld [vmem:[#allocation7 + $0x118] sm:$0xff]
    %v724 = vld [vmem:[#allocation7 + $0x120] sm:$0xff]
    %v725 = vld [vmem:[#allocation7 + $0x128] sm:$0xff]
    %v726 = vld [vmem:[#allocation7 + $0x130] sm:$0xff]
    %v727 = vld [vmem:[#allocation7 + $0x138] sm:$0xff]
    %v728 = vld [vmem:[#allocation7 + $0x140] sm:$0xff]
    %v729 = vld [vmem:[#allocation7 + $0x148] sm:$0xff]
    %v730 = vld [vmem:[#allocation7 + $0x150] sm:$0xff]
    %v731 = vld [vmem:[#allocation7 + $0x158] sm:$0xff]
    %v732 = vld [vmem:[#allocation7 + $0x160] sm:$0xff]
    %v733 = vld [vmem:[#allocation7 + $0x168] sm:$0xff]
    %v734 = vld [vmem:[#allocation7 + $0x170] sm:$0xff]
    %v735 = vld [vmem:[#allocation7 + $0x178] sm:$0xff]
    %v736 = vld [vmem:[%s5] sm:$0x1]
    %v738 = vlaneseq
    %v739 = vshrl.u32 %v738, 7
    %v740 = vsub.s32 0, %v739
    %v741 = vrot.slane %v736, %v740
    %v743 = vld [vmem:[%s5 + $0x1] sm:$0x1]
    %v745 = vlaneseq
    %v746 = vshrl.u32 %v745, 7
    %v747 = vsub.s32 0, %v746
    %v748 = vrot.slane %v743, %v747
    %750 = vmatprep.subr.mxu0 %v641
    %751 = vmatpush1.msra.mxu0 %v640
    %752 = vmatprep.subr.mxu0 %v644
    %753 = vmatpush1.msra.mxu0 %v643
    %754 = vmatprep.subr.mxu0 %v647
    %755 = vmatpush1.msra.mxu0 %v646
    %756 = vmatprep.subr.mxu0 %v650
    %757 = vmatpush1.msra.mxu0 %v649
    %758 = vmatprep.subr.mxu0 %v653
    %759 = vmatpush1.msra.mxu0 %v652
    %760 = vmatprep.subr.mxu0 %v656
    %761 = vmatpush1.msra.mxu0 %v655
    %762 = vmatprep.subr.mxu0 %v659
    %763 = vmatpush1.msra.mxu0 %v658
    %764 = vmatprep.subr.mxu0 %v662
    %765 = vmatpush1.msra.mxu0 %v661
    %766 = vmatprep.subr.mxu0 %v665
    %767 = vmatpush1.msra.mxu0 %v664
    %768 = vmatprep.subr.mxu0 %v668
    %769 = vmatpush1.msra.mxu0 %v667
    %770 = vmatprep.subr.mxu0 %v671
    %771 = vmatpush1.msra.mxu0 %v670
    %772 = vmatprep.subr.mxu0 %v674
    %773 = vmatpush1.msra.mxu0 %v673
    %774 = vmatprep.subr.mxu0 %v677
    %775 = vmatpush1.msra.mxu0 %v676
    %776 = vmatprep.subr.mxu0 %v680
    %777 = vmatpush1.msra.mxu0 %v679
    %778 = vmatprep.subr.mxu0 %v683
    %779 = vmatpush1.msra.mxu0 %v682
    %780 = vmatprep.subr.mxu0 %v686
    %781 = vmatpush1.msra.mxu0 %v685
    %782 = vmatprep.subr.mxu0 0.0
    %783 = vmatpush1.msra.mxu0 0.0
    %784 = vmatprep.subr.mxu0 0.0
    %785 = vmatpush1.msra.mxu0 0.0
    %786 = vmatprep.subr.mxu0 0.0
    %787 = vmatpush1.msra.mxu0 0.0
    %788 = vmatprep.subr.mxu0 0.0
    %789 = vmatpush1.msra.mxu0 0.0
    %790 = vmatprep.subr.mxu0 0.0
    %791 = vmatpush1.msra.mxu0 0.0
    %792 = vmatprep.subr.mxu0 0.0
    %793 = vmatpush1.msra.mxu0 0.0
    %794 = vmatprep.subr.mxu0 0.0
    %795 = vmatpush1.msra.mxu0 0.0
    %796 = vmatprep.subr.mxu0 0.0
    %797 = vmatpush1.msra.mxu0 0.0
    %798 = vmatprep.subr.mxu0 0.0
    %799 = vmatpush1.msra.mxu0 0.0
    %800 = vmatprep.subr.mxu0 0.0
    %801 = vmatpush1.msra.mxu0 0.0
    %802 = vmatprep.subr.mxu0 0.0
    %803 = vmatpush1.msra.mxu0 0.0
    %804 = vmatprep.subr.mxu0 0.0
    %805 = vmatpush1.msra.mxu0 0.0
    %806 = vmatprep.subr.mxu0 0.0
    %807 = vmatpush1.msra.mxu0 0.0
    %808 = vmatprep.subr.mxu0 0.0
    %809 = vmatpush1.msra.mxu0 0.0
    %810 = vmatprep.subr.mxu0 0.0
    %811 = vmatpush1.msra.mxu0 0.0
    %812 = vmatprep.subr.mxu0 0.0
    %813 = vmatpush1.msra.mxu0 0.0
    %814 = vmatprep.mubr.f32.mxu0 0.0
    %815 = vmatmul.mubr.f32.gmra.mrb[0].mxu0 0.0
    %v816 = vpop.f32.mrb[0].mxu0
    %v817 = vadd.f32 0.0, %v816
    %v818 = vpop.f32.mrb[0].mxu0
    %v819 = vadd.f32 0.0, %v818
    %820 = vdwg.mxu0
    %821 = vmatprep.subr.mxu0 0.0
    %822 = vmatpush1.msra.mxu0 %v642
    %823 = vmatprep.subr.mxu0 0.0
    %824 = vmatpush1.msra.mxu0 %v645
    %825 = vmatprep.subr.mxu0 0.0
    %826 = vmatpush1.msra.mxu0 %v648
    %827 = vmatprep.subr.mxu0 0.0
    %828 = vmatpush1.msra.mxu0 %v651
    %829 = vmatprep.subr.mxu0 0.0
    %830 = vmatpush1.msra.mxu0 %v654
    %831 = vmatprep.subr.mxu0 0.0
    %832 = vmatpush1.msra.mxu0 %v657
    %833 = vmatprep.subr.mxu0 0.0
    %834 = vmatpush1.msra.mxu0 %v660
    %835 = vmatprep.subr.mxu0 0.0
    %836 = vmatpush1.msra.mxu0 %v663
    %837 = vmatprep.subr.mxu0 0.0
    %838 = vmatpush1.msra.mxu0 %v666
    %839 = vmatprep.subr.mxu0 0.0
    %840 = vmatpush1.msra.mxu0 %v669
    %841 = vmatprep.subr.mxu0 0.0
    %842 = vmatpush1.msra.mxu0 %v672
    %843 = vmatprep.subr.mxu0 0.0
    %844 = vmatpush1.msra.mxu0 %v675
    %845 = vmatprep.subr.mxu0 0.0
    %846 = vmatpush1.msra.mxu0 %v678
    %847 = vmatprep.subr.mxu0 0.0
    %848 = vmatpush1.msra.mxu0 %v681
    %849 = vmatprep.subr.mxu0 0.0
    %850 = vmatpush1.msra.mxu0 %v684
    %851 = vmatprep.subr.mxu0 0.0
    %852 = vmatpush1.msra.mxu0 %v687
    %853 = vmatprep.subr.mxu0 0.0
    %854 = vmatpush1.msra.mxu0 0.0
    %855 = vmatprep.subr.mxu0 0.0
    %856 = vmatpush1.msra.mxu0 0.0
    %857 = vmatprep.subr.mxu0 0.0
    %858 = vmatpush1.msra.mxu0 0.0
    %859 = vmatprep.subr.mxu0 0.0
    %860 = vmatpush1.msra.mxu0 0.0
    %861 = vmatprep.subr.mxu0 0.0
    %862 = vmatpush1.msra.mxu0 0.0
    %863 = vmatprep.subr.mxu0 0.0
    %864 = vmatpush1.msra.mxu0 0.0
    %865 = vmatprep.subr.mxu0 0.0
    %866 = vmatpush1.msra.mxu0 0.0
    %867 = vmatprep.subr.mxu0 0.0
    %868 = vmatpush1.msra.mxu0 0.0
    %869 = vmatprep.subr.mxu0 0.0
    %870 = vmatpush1.msra.mxu0 0.0
    %871 = vmatprep.subr.mxu0 0.0
    %872 = vmatpush1.msra.mxu0 0.0
    %873 = vmatprep.subr.mxu0 0.0
    %874 = vmatpush1.msra.mxu0 0.0
    %875 = vmatprep.subr.mxu0 0.0
    %876 = vmatpush1.msra.mxu0 0.0
    %877 = vmatprep.subr.mxu0 0.0
    %878 = vmatpush1.msra.mxu0 0.0
    %879 = vmatprep.subr.mxu0 0.0
    %880 = vmatpush1.msra.mxu0 0.0
    %881 = vmatprep.subr.mxu0 0.0
    %882 = vmatpush1.msra.mxu0 0.0
    %883 = vmatprep.subr.mxu0 0.0
    %884 = vmatpush1.msra.mxu0 0.0
    %885 = vmatprep.mubr.f32.mxu0 0.0
    %886 = vmatmul.mubr.f32.gmra.mrb[0].mxu0 0.0
    %v887 = vpop.f32.mrb[0].mxu0
    %v888 = vadd.f32 0.0, %v887
    %v889 = vpop.f32.mrb[0].mxu0
    %890 = vdwg.mxu0
    %891 = vmatprep.subr.mxu0 %v689
    %892 = vmatpush1.msra.mxu0 %v688
    %893 = vmatprep.subr.mxu0 %v692
    %894 = vmatpush1.msra.mxu0 %v691
    %895 = vmatprep.subr.mxu0 %v695
    %896 = vmatpush1.msra.mxu0 %v694
    %897 = vmatprep.subr.mxu0 %v698
    %898 = vmatpush1.msra.mxu0 %v697
    %899 = vmatprep.subr.mxu0 %v701
    %900 = vmatpush1.msra.mxu0 %v700
    %901 = vmatprep.subr.mxu0 %v704
    %902 = vmatpush1.msra.mxu0 %v703
    %903 = vmatprep.subr.mxu0 %v707
    %904 = vmatpush1.msra.mxu0 %v706
    %905 = vmatprep.subr.mxu0 %v710
    %906 = vmatpush1.msra.mxu0 %v709
    %907 = vmatprep.subr.mxu0 %v713
    %908 = vmatpush1.msra.mxu0 %v712
    %909 = vmatprep.subr.mxu0 %v716
    %910 = vmatpush1.msra.mxu0 %v715
    %911 = vmatprep.subr.mxu0 %v719
    %912 = vmatpush1.msra.mxu0 %v718
    %913 = vmatprep.subr.mxu0 %v722
    %914 = vmatpush1.msra.mxu0 %v721
    %915 = vmatprep.subr.mxu0 %v725
    %916 = vmatpush1.msra.mxu0 %v724
    %917 = vmatprep.subr.mxu0 %v728
    %918 = vmatpush1.msra.mxu0 %v727
    %919 = vmatprep.subr.mxu0 %v731
    %920 = vmatpush1.msra.mxu0 %v730
    %921 = vmatprep.subr.mxu0 %v734
    %922 = vmatpush1.msra.mxu0 %v733
    %923 = vmatprep.subr.mxu0 0.0
    %924 = vmatpush1.msra.mxu0 0.0
    %925 = vmatprep.subr.mxu0 0.0
    %926 = vmatpush1.msra.mxu0 0.0
    %927 = vmatprep.subr.mxu0 0.0
    %928 = vmatpush1.msra.mxu0 0.0
    %929 = vmatprep.subr.mxu0 0.0
    %930 = vmatpush1.msra.mxu0 0.0
    %931 = vmatprep.subr.mxu0 0.0
    %932 = vmatpush1.msra.mxu0 0.0
    %933 = vmatprep.subr.mxu0 0.0
    %934 = vmatpush1.msra.mxu0 0.0
    %935 = vmatprep.subr.mxu0 0.0
    %936 = vmatpush1.msra.mxu0 0.0
    %937 = vmatprep.subr.mxu0 0.0
    %938 = vmatpush1.msra.mxu0 0.0
    %939 = vmatprep.subr.mxu0 0.0
    %940 = vmatpush1.msra.mxu0 0.0
    %941 = vmatprep.subr.mxu0 0.0
    %942 = vmatpush1.msra.mxu0 0.0
    %943 = vmatprep.subr.mxu0 0.0
    %944 = vmatpush1.msra.mxu0 0.0
    %945 = vmatprep.subr.mxu0 0.0
    %946 = vmatpush1.msra.mxu0 0.0
    %947 = vmatprep.subr.mxu0 0.0
    %948 = vmatpush1.msra.mxu0 0.0
    %949 = vmatprep.subr.mxu0 0.0
    %950 = vmatpush1.msra.mxu0 0.0
    %951 = vmatprep.subr.mxu0 0.0
    %952 = vmatpush1.msra.mxu0 0.0
    %953 = vmatprep.subr.mxu0 0.0
    %954 = vmatpush1.msra.mxu0 0.0
    %955 = vmatprep.mubr.f32.mxu0 0.0
    %956 = vmatmul.mubr.f32.gmra.mrb[0].mxu0 0.0
    %v957 = vpop.f32.mrb[0].mxu0
    %v958 = vadd.f32 0.0, %v957
    %v959 = vpop.f32.mrb[0].mxu0
    %v960 = vadd.f32 0.0, %v959
    %961 = vdwg.mxu0
    %962 = vmatprep.subr.mxu0 0.0
    %963 = vmatpush1.msra.mxu0 %v690
    %964 = vmatprep.subr.mxu0 0.0
    %965 = vmatpush1.msra.mxu0 %v693
    %966 = vmatprep.subr.mxu0 0.0
    %967 = vmatpush1.msra.mxu0 %v696
    %968 = vmatprep.subr.mxu0 0.0
    %969 = vmatpush1.msra.mxu0 %v699
    %970 = vmatprep.subr.mxu0 0.0
    %971 = vmatpush1.msra.mxu0 %v702
    %972 = vmatprep.subr.mxu0 0.0
    %973 = vmatpush1.msra.mxu0 %v705
    %974 = vmatprep.subr.mxu0 0.0
    %975 = vmatpush1.msra.mxu0 %v708
    %976 = vmatprep.subr.mxu0 0.0
    %977 = vmatpush1.msra.mxu0 %v711
    %978 = vmatprep.subr.mxu0 0.0
    %979 = vmatpush1.msra.mxu0 %v714
    %980 = vmatprep.subr.mxu0 0.0
    %981 = vmatpush1.msra.mxu0 %v717
    %982 = vmatprep.subr.mxu0 0.0
    %983 = vmatpush1.msra.mxu0 %v720
    %984 = vmatprep.subr.mxu0 0.0
    %985 = vmatpush1.msra.mxu0 %v723
    %986 = vmatprep.subr.mxu0 0.0
    %987 = vmatpush1.msra.mxu0 %v726
    %988 = vmatprep.subr.mxu0 0.0
    %989 = vmatpush1.msra.mxu0 %v729
    %990 = vmatprep.subr.mxu0 0.0
    %991 = vmatpush1.msra.mxu0 %v732
    %992 = vmatprep.subr.mxu0 0.0
    %993 = vmatpush1.msra.mxu0 %v735
    %994 = vmatprep.subr.mxu0 0.0
    %995 = vmatpush1.msra.mxu0 0.0
    %996 = vmatprep.subr.mxu0 0.0
    %997 = vmatpush1.msra.mxu0 0.0
    %998 = vmatprep.subr.mxu0 0.0
    %999 = vmatpush1.msra.mxu0 0.0
    %1000 = vmatprep.subr.mxu0 0.0
    %1001 = vmatpush1.msra.mxu0 0.0
    %1002 = vmatprep.subr.mxu0 0.0
    %1003 = vmatpush1.msra.mxu0 0.0
    %1004 = vmatprep.subr.mxu0 0.0
    %1005 = vmatpush1.msra.mxu0 0.0
    %1006 = vmatprep.subr.mxu0 0.0
    %1007 = vmatpush1.msra.mxu0 0.0
    %1008 = vmatprep.subr.mxu0 0.0
    %1009 = vmatpush1.msra.mxu0 0.0
    %1010 = vmatprep.subr.mxu0 0.0
    %1011 = vmatpush1.msra.mxu0 0.0
    %1012 = vmatprep.subr.mxu0 0.0
    %1013 = vmatpush1.msra.mxu0 0.0
    %1014 = vmatprep.subr.mxu0 0.0
    %1015 = vmatpush1.msra.mxu0 0.0
    %1016 = vmatprep.subr.mxu0 0.0
    %1017 = vmatpush1.msra.mxu0 0.0
    %1018 = vmatprep.subr.mxu0 0.0
    %1019 = vmatpush1.msra.mxu0 0.0
    %1020 = vmatprep.subr.mxu0 0.0
    %1021 = vmatpush1.msra.mxu0 0.0
    %1022 = vmatprep.subr.mxu0 0.0
    %1023 = vmatpush1.msra.mxu0 0.0
    %1024 = vmatprep.subr.mxu0 0.0
    %1025 = vmatpush1.msra.mxu0 0.0
    %1026 = vmatprep.mubr.f32.mxu0 0.0
    %1027 = vmatmul.mubr.f32.gmra.mrb[0].mxu0 0.0
    %v1028 = vpop.f32.mrb[0].mxu0
    %v1029 = vadd.f32 0.0, %v1028
    %v1030 = vpop.f32.mrb[0].mxu0
    %1031 = vdwg.mxu0
    %v1032 = vld [vmem:[#allocation2] sm:$0x3f]
    %v1033 = vadd.f32 %v1032, %v817
    %v1034 = vxor.u32 %v1033, 2147483648
    %v1035 = vmul.f32 %v1034, 1.442695
    %v1036 = vpow.pop %v1035
    %v1037 = vadd.f32 %v1036, 1.0
    %v1038 = vrcp.pop %v1037
    %v1039 = vmul.f32 1.0, %v1038
    %v1041 = vrot.slane %v1032, 2
    %v1043 = vadd.f32 %v1041, %v819
    %v1044 = vxor.u32 %v1043, 2147483648
    %v1045 = vmul.f32 %v1044, 1.442695
    %v1046 = vpow.pop %v1045
    %v1047 = vadd.f32 %v1046, 1.0
    %v1048 = vrcp.pop %v1047
    %v1049 = vmul.f32 1.0, %v1048
    %v1050 = vadd.f32 %v888, %v741
    %v1051 = vmul.f32 %v1039, %v1050
    %v1052 = vrot.slane %v1032, 4
    %v1054 = vadd.f32 %v1052, %v1051
    %v1055 = vtanh.pop %v1054
    %v1056 = vsub.f32 1.0, %v1049
    %v1057 = vmul.f32 %v1056, %v1055
    %v1058 = vmul.f32 %v1049, 0.0
    %v1059 = vadd.f32 %v1057, %v1058
    %s1060 = scalar_lea.vmem [#allocation2], 84
    %v1061 = vld [vmem:[%s1060 + $0x6] sm:$0x3f]
    %v1062 = vadd.f32 %v1061, %v958
    %v1063 = vxor.u32 %v1062, 2147483648
    %v1064 = vmul.f32 %v1063, 1.442695
    %v1065 = vpow.pop %v1064
    %v1066 = vadd.f32 %v1065, 1.0
    %v1067 = vrcp.pop %v1066
    %v1068 = vmul.f32 1.0, %v1067
    %v1070 = vrot.slane %v1061, 2
    %v1072 = vadd.f32 %v1070, %v960
    %v1073 = vxor.u32 %v1072, 2147483648
    %v1074 = vmul.f32 %v1073, 1.442695
    %v1075 = vpow.pop %v1074
    %v1076 = vadd.f32 %v1075, 1.0
    %v1077 = vrcp.pop %v1076
    %v1078 = vmul.f32 1.0, %v1077
    %v1079 = vadd.f32 %v1029, %v748
    %v1080 = vmul.f32 %v1068, %v1079
    %v1081 = vrot.slane %v1061, 4
    %v1083 = vadd.f32 %v1081, %v1080
    %v1084 = vtanh.pop %v1083
    %v1085 = vsub.f32 1.0, %v1078
    %v1086 = vmul.f32 %v1085, %v1084
    %v1087 = vmul.f32 %v1078, 0.0
    %v1088 = vadd.f32 %v1086, %v1087
    %1089 = vst [vmem:[#allocation3] sm:$0x3] %v1059
    %s1090 = scalar_lea.vmem [#allocation3], 28
    %1091 = vst [vmem:[%s1090 + $0x2] sm:$0x3] %v1088
    %1092 = vmatprep.subr.mxu0 %v641
    %1093 = vmatpush1.msra.mxu0 %v640
    %1094 = vmatprep.subr.mxu0 %v644
    %1095 = vmatpush1.msra.mxu0 %v643
    %1096 = vmatprep.subr.mxu0 %v647
    %1097 = vmatpush1.msra.mxu0 %v646
    %1098 = vmatprep.subr.mxu0 %v650
    %1099 = vmatpush1.msra.mxu0 %v649
    %1100 = vmatprep.subr.mxu0 %v653
    %1101 = vmatpush1.msra.mxu0 %v652
    %1102 = vmatprep.subr.mxu0 %v656
    %1103 = vmatpush1.msra.mxu0 %v655
    %1104 = vmatprep.subr.mxu0 %v659
    %1105 = vmatpush1.msra.mxu0 %v658
    %1106 = vmatprep.subr.mxu0 %v662
    %1107 = vmatpush1.msra.mxu0 %v661
    %1108 = vmatprep.subr.mxu0 %v665
    %1109 = vmatpush1.msra.mxu0 %v664
    %1110 = vmatprep.subr.mxu0 %v668
    %1111 = vmatpush1.msra.mxu0 %v667
    %1112 = vmatprep.subr.mxu0 %v671
    %1113 = vmatpush1.msra.mxu0 %v670
    %1114 = vmatprep.subr.mxu0 %v674
    %1115 = vmatpush1.msra.mxu0 %v673
    %1116 = vmatprep.subr.mxu0 %v677
    %1117 = vmatpush1.msra.mxu0 %v676
    %1118 = vmatprep.subr.mxu0 %v680
    %1119 = vmatpush1.msra.mxu0 %v679
    %1120 = vmatprep.subr.mxu0 %v683
    %1121 = vmatpush1.msra.mxu0 %v682
    %1122 = vmatprep.subr.mxu0 %v686
    %1123 = vmatpush1.msra.mxu0 %v685
    %1124 = vmatprep.subr.mxu0 0.0
    %1125 = vmatpush1.msra.mxu0 0.0
    %1126 = vmatprep.subr.mxu0 0.0
    %1127 = vmatpush1.msra.mxu0 0.0
    %1128 = vmatprep.subr.mxu0 0.0
    %1129 = vmatpush1.msra.mxu0 0.0
    %1130 = vmatprep.subr.mxu0 0.0
    %1131 = vmatpush1.msra.mxu0 0.0
    %1132 = vmatprep.subr.mxu0 0.0
    %1133 = vmatpush1.msra.mxu0 0.0
    %1134 = vmatprep.subr.mxu0 0.0
    %1135 = vmatpush1.msra.mxu0 0.0
    %1136 = vmatprep.subr.mxu0 0.0
    %1137 = vmatpush1.msra.mxu0 0.0
    %1138 = vmatprep.subr.mxu0 0.0
    %1139 = vmatpush1.msra.mxu0 0.0
    %1140 = vmatprep.subr.mxu0 0.0
    %1141 = vmatpush1.msra.mxu0 0.0
    %1142 = vmatprep.subr.mxu0 0.0
    %1143 = vmatpush1.msra.mxu0 0.0
    %1144 = vmatprep.subr.mxu0 0.0
    %1145 = vmatpush1.msra.mxu0 0.0
    %1146 = vmatprep.subr.mxu0 0.0
    %1147 = vmatpush1.msra.mxu0 0.0
    %1148 = vmatprep.subr.mxu0 0.0
    %1149 = vmatpush1.msra.mxu0 0.0
    %1150 = vmatprep.subr.mxu0 0.0
    %1151 = vmatpush1.msra.mxu0 0.0
    %1152 = vmatprep.subr.mxu0 0.0
    %1153 = vmatpush1.msra.mxu0 0.0
    %1154 = vmatprep.subr.mxu0 0.0
    %1155 = vmatpush1.msra.mxu0 0.0
    %1156 = vmatprep.mubr.f32.mxu0 0.0
    %1157 = vmatmul.mubr.f32.gmra.mrb[0].mxu0 %v1059
    %v1158 = vpop.f32.mrb[0].mxu0
    %v1159 = vadd.f32 0.0, %v1158
    %v1160 = vpop.f32.mrb[0].mxu0
    %v1161 = vadd.f32 0.0, %v1160
    %1162 = vdwg.mxu0
    %1163 = vmatprep.subr.mxu0 0.0
    %1164 = vmatpush1.msra.mxu0 %v642
    %1165 = vmatprep.subr.mxu0 0.0
    %1166 = vmatpush1.msra.mxu0 %v645
    %1167 = vmatprep.subr.mxu0 0.0
    %1168 = vmatpush1.msra.mxu0 %v648
    %1169 = vmatprep.subr.mxu0 0.0
    %1170 = vmatpush1.msra.mxu0 %v651
    %1171 = vmatprep.subr.mxu0 0.0
    %1172 = vmatpush1.msra.mxu0 %v654
    %1173 = vmatprep.subr.mxu0 0.0
    %1174 = vmatpush1.msra.mxu0 %v657
    %1175 = vmatprep.subr.mxu0 0.0
    %1176 = vmatpush1.msra.mxu0 %v660
    %1177 = vmatprep.subr.mxu0 0.0
    %1178 = vmatpush1.msra.mxu0 %v663
    %1179 = vmatprep.subr.mxu0 0.0
    %1180 = vmatpush1.msra.mxu0 %v666
    %1181 = vmatprep.subr.mxu0 0.0
    %1182 = vmatpush1.msra.mxu0 %v669
    %1183 = vmatprep.subr.mxu0 0.0
    %1184 = vmatpush1.msra.mxu0 %v672
    %1185 = vmatprep.subr.mxu0 0.0
    %1186 = vmatpush1.msra.mxu0 %v675
    %1187 = vmatprep.subr.mxu0 0.0
    %1188 = vmatpush1.msra.mxu0 %v678
    %1189 = vmatprep.subr.mxu0 0.0
    %1190 = vmatpush1.msra.mxu0 %v681
    %1191 = vmatprep.subr.mxu0 0.0
    %1192 = vmatpush1.msra.mxu0 %v684
    %1193 = vmatprep.subr.mxu0 0.0
    %1194 = vmatpush1.msra.mxu0 %v687
    %1195 = vmatprep.subr.mxu0 0.0
    %1196 = vmatpush1.msra.mxu0 0.0
    %1197 = vmatprep.subr.mxu0 0.0
    %1198 = vmatpush1.msra.mxu0 0.0
    %1199 = vmatprep.subr.mxu0 0.0
    %1200 = vmatpush1.msra.mxu0 0.0
    %1201 = vmatprep.subr.mxu0 0.0
    %1202 = vmatpush1.msra.mxu0 0.0
    %1203 = vmatprep.subr.mxu0 0.0
    %1204 = vmatpush1.msra.mxu0 0.0
    %1205 = vmatprep.subr.mxu0 0.0
    %1206 = vmatpush1.msra.mxu0 0.0
    %1207 = vmatprep.subr.mxu0 0.0
    %1208 = vmatpush1.msra.mxu0 0.0
    %1209 = vmatprep.subr.mxu0 0.0
    %1210 = vmatpush1.msra.mxu0 0.0
    %1211 = vmatprep.subr.mxu0 0.0
    %1212 = vmatpush1.msra.mxu0 0.0
    %1213 = vmatprep.subr.mxu0 0.0
    %1214 = vmatpush1.msra.mxu0 0.0
    %1215 = vmatprep.subr.mxu0 0.0
    %1216 = vmatpush1.msra.mxu0 0.0
    %1217 = vmatprep.subr.mxu0 0.0
    %1218 = vmatpush1.msra.mxu0 0.0
    %1219 = vmatprep.subr.mxu0 0.0
    %1220 = vmatpush1.msra.mxu0 0.0
    %1221 = vmatprep.subr.mxu0 0.0
    %1222 = vmatpush1.msra.mxu0 0.0
    %1223 = vmatprep.subr.mxu0 0.0
    %1224 = vmatpush1.msra.mxu0 0.0
    %1225 = vmatprep.subr.mxu0 0.0
    %1226 = vmatpush1.msra.mxu0 0.0
    %1227 = vmatprep.mubr.f32.mxu0 0.0
    %1228 = vmatmul.mubr.f32.gmra.mrb[0].mxu0 %v1059
    %v1229 = vpop.f32.mrb[0].mxu0
    %v1230 = vadd.f32 0.0, %v1229
    %v1231 = vpop.f32.mrb[0].mxu0
    %1232 = vdwg.mxu0
    %1233 = vmatprep.subr.mxu0 %v689
    %1234 = vmatpush1.msra.mxu0 %v688
    %1235 = vmatprep.subr.mxu0 %v692
    %1236 = vmatpush1.msra.mxu0 %v691
    %1237 = vmatprep.subr.mxu0 %v695
    %1238 = vmatpush1.msra.mxu0 %v694
    %1239 = vmatprep.subr.mxu0 %v698
    %1240 = vmatpush1.msra.mxu0 %v697
    %1241 = vmatprep.subr.mxu0 %v701
    %1242 = vmatpush1.msra.mxu0 %v700
    %1243 = vmatprep.subr.mxu0 %v704
    %1244 = vmatpush1.msra.mxu0 %v703
    %1245 = vmatprep.subr.mxu0 %v707
    %1246 = vmatpush1.msra.mxu0 %v706
    %1247 = vmatprep.subr.mxu0 %v710
    %1248 = vmatpush1.msra.mxu0 %v709
    %1249 = vmatprep.subr.mxu0 %v713
    %1250 = vmatpush1.msra.mxu0 %v712
    %1251 = vmatprep.subr.mxu0 %v716
    %1252 = vmatpush1.msra.mxu0 %v715
    %1253 = vmatprep.subr.mxu0 %v719
    %1254 = vmatpush1.msra.mxu0 %v718
    %1255 = vmatprep.subr.mxu0 %v722
    %1256 = vmatpush1.msra.mxu0 %v721
    %1257 = vmatprep.subr.mxu0 %v725
    %1258 = vmatpush1.msra.mxu0 %v724
    %1259 = vmatprep.subr.mxu0 %v728
    %1260 = vmatpush1.msra.mxu0 %v727
    %1261 = vmatprep.subr.mxu0 %v731
    %1262 = vmatpush1.msra.mxu0 %v730
    %1263 = vmatprep.subr.mxu0 %v734
    %1264 = vmatpush1.msra.mxu0 %v733
    %1265 = vmatprep.subr.mxu0 0.0
    %1266 = vmatpush1.msra.mxu0 0.0
    %1267 = vmatprep.subr.mxu0 0.0
    %1268 = vmatpush1.msra.mxu0 0.0
    %1269 = vmatprep.subr.mxu0 0.0
    %1270 = vmatpush1.msra.mxu0 0.0
    %1271 = vmatprep.subr.mxu0 0.0
    %1272 = vmatpush1.msra.mxu0 0.0
    %1273 = vmatprep.subr.mxu0 0.0
    %1274 = vmatpush1.msra.mxu0 0.0
    %1275 = vmatprep.subr.mxu0 0.0
    %1276 = vmatpush1.msra.mxu0 0.0
    %1277 = vmatprep.subr.mxu0 0.0
    %1278 = vmatpush1.msra.mxu0 0.0
    %1279 = vmatprep.subr.mxu0 0.0
    %1280 = vmatpush1.msra.mxu0 0.0
    %1281 = vmatprep.subr.mxu0 0.0
    %1282 = vmatpush1.msra.mxu0 0.0
    %1283 = vmatprep.subr.mxu0 0.0
    %1284 = vmatpush1.msra.mxu0 0.0
    %1285 = vmatprep.subr.mxu0 0.0
    %1286 = vmatpush1.msra.mxu0 0.0
    %1287 = vmatprep.subr.mxu0 0.0
    %1288 = vmatpush1.msra.mxu0 0.0
    %1289 = vmatprep.subr.mxu0 0.0
    %1290 = vmatpush1.msra.mxu0 0.0
    %1291 = vmatprep.subr.mxu0 0.0
    %1292 = vmatpush1.msra.mxu0 0.0
    %1293 = vmatprep.subr.mxu0 0.0
    %1294 = vmatpush1.msra.mxu0 0.0
    %1295 = vmatprep.subr.mxu0 0.0
    %1296 = vmatpush1.msra.mxu0 0.0
    %1297 = vmatprep.mubr.f32.mxu0 0.0
    %1298 = vmatmul.mubr.f32.gmra.mrb[0].mxu0 %v1088
    %v1299 = vpop.f32.mrb[0].mxu0
    %v1300 = vadd.f32 0.0, %v1299
    %v1301 = vpop.f32.mrb[0].mxu0
    %v1302 = vadd.f32 0.0, %v1301
    %1303 = vdwg.mxu0
    %1304 = vmatprep.subr.mxu0 0.0
    %1305 = vmatpush1.msra.mxu0 %v690
    %1306 = vmatprep.subr.mxu0 0.0
    %1307 = vmatpush1.msra.mxu0 %v693
    %1308 = vmatprep.subr.mxu0 0.0
    %1309 = vmatpush1.msra.mxu0 %v696
    %1310 = vmatprep.subr.mxu0 0.0
    %1311 = vmatpush1.msra.mxu0 %v699
    %1312 = vmatprep.subr.mxu0 0.0
    %1313 = vmatpush1.msra.mxu0 %v702
    %1314 = vmatprep.subr.mxu0 0.0
    %1315 = vmatpush1.msra.mxu0 %v705
    %1316 = vmatprep.subr.mxu0 0.0
    %1317 = vmatpush1.msra.mxu0 %v708
    %1318 = vmatprep.subr.mxu0 0.0
    %1319 = vmatpush1.msra.mxu0 %v711
    %1320 = vmatprep.subr.mxu0 0.0
    %1321 = vmatpush1.msra.mxu0 %v714
    %1322 = vmatprep.subr.mxu0 0.0
    %1323 = vmatpush1.msra.mxu0 %v717
    %1324 = vmatprep.subr.mxu0 0.0
    %1325 = vmatpush1.msra.mxu0 %v720
    %1326 = vmatprep.subr.mxu0 0.0
    %1327 = vmatpush1.msra.mxu0 %v723
    %1328 = vmatprep.subr.mxu0 0.0
    %1329 = vmatpush1.msra.mxu0 %v726
    %1330 = vmatprep.subr.mxu0 0.0
    %1331 = vmatpush1.msra.mxu0 %v729
    %1332 = vmatprep.subr.mxu0 0.0
    %1333 = vmatpush1.msra.mxu0 %v732
    %1334 = vmatprep.subr.mxu0 0.0
    %1335 = vmatpush1.msra.mxu0 %v735
    %1336 = vmatprep.subr.mxu0 0.0
    %1337 = vmatpush1.msra.mxu0 0.0
    %1338 = vmatprep.subr.mxu0 0.0
    %1339 = vmatpush1.msra.mxu0 0.0
    %1340 = vmatprep.subr.mxu0 0.0
    %1341 = vmatpush1.msra.mxu0 0.0
    %1342 = vmatprep.subr.mxu0 0.0
    %1343 = vmatpush1.msra.mxu0 0.0
    %1344 = vmatprep.subr.mxu0 0.0
    %1345 = vmatpush1.msra.mxu0 0.0
    %1346 = vmatprep.subr.mxu0 0.0
    %1347 = vmatpush1.msra.mxu0 0.0
    %1348 = vmatprep.subr.mxu0 0.0
    %1349 = vmatpush1.msra.mxu0 0.0
    %1350 = vmatprep.subr.mxu0 0.0
    %1351 = vmatpush1.msra.mxu0 0.0
    %1352 = vmatprep.subr.mxu0 0.0
    %1353 = vmatpush1.msra.mxu0 0.0
    %1354 = vmatprep.subr.mxu0 0.0
    %1355 = vmatpush1.msra.mxu0 0.0
    %1356 = vmatprep.subr.mxu0 0.0
    %1357 = vmatpush1.msra.mxu0 0.0
    %1358 = vmatprep.subr.mxu0 0.0
    %1359 = vmatpush1.msra.mxu0 0.0
    %1360 = vmatprep.subr.mxu0 0.0
    %1361 = vmatpush1.msra.mxu0 0.0
    %1362 = vmatprep.subr.mxu0 0.0
    %1363 = vmatpush1.msra.mxu0 0.0
    %1364 = vmatprep.subr.mxu0 0.0
    %1365 = vmatpush1.msra.mxu0 0.0
    %1366 = vmatprep.subr.mxu0 0.0
    %1367 = vmatpush1.msra.mxu0 0.0
    %1368 = vmatprep.mubr.f32.mxu0 0.0
    %1369 = vmatmul.mubr.f32.gmra.mrb[0].mxu0 %v1088
    %v1370 = vpop.f32.mrb[0].mxu0
    %v1371 = vadd.f32 0.0, %v1370
    %v1372 = vpop.f32.mrb[0].mxu0
    %1373 = vdwg.mxu0
    %s1374 = scalar_lea.vmem [#allocation2], 12
    %v1375 = vld [vmem:[%s1374] sm:$0x3f]
    %v1376 = vadd.f32 %v1375, %v1159
    %v1377 = vxor.u32 %v1376, 2147483648
    %v1378 = vmul.f32 %v1377, 1.442695
    %v1379 = vpow.pop %v1378
    %v1380 = vadd.f32 %v1379, 1.0
    %v1381 = vrcp.pop %v1380
    %v1382 = vmul.f32 1.0, %v1381
    %v1384 = vrot.slane %v1375, 2
    %v1386 = vadd.f32 %v1384, %v1161
    %v1387 = vxor.u32 %v1386, 2147483648
    %v1388 = vmul.f32 %v1387, 1.442695
    %v1389 = vpow.pop %v1388
    %v1390 = vadd.f32 %v1389, 1.0
    %v1391 = vrcp.pop %v1390
    %v1392 = vmul.f32 1.0, %v1391
    %v1393 = vadd.f32 %v1230, %v741
    %v1394 = vmul.f32 %v1382, %v1393
    %v1395 = vrot.slane %v1375, 4
    %v1397 = vadd.f32 %v1395, %v1394
    %v1398 = vtanh.pop %v1397
    %v1399 = vsub.f32 1.0, %v1392
    %v1400 = vmul.f32 %v1399, %v1398
    %v1401 = vmul.f32 %v1392, %v1059
    %v1402 = vadd.f32 %v1400, %v1401
    %s1403 = scalar_lea.vmem [#allocation2], 72
    %v1404 = vld [vmem:[%s1403 + $0x6] sm:$0x3f]
    %v1405 = vadd.f32 %v1404, %v1300
    %v1406 = vxor.u32 %v1405, 2147483648
    %v1407 = vmul.f32 %v1406, 1.442695
    %v1408 = vpow.pop %v1407
    %v1409 = vadd.f32 %v1408, 1.0
    %v1410 = vrcp.pop %v1409
    %v1411 = vmul.f32 1.0, %v1410
    %v1413 = vrot.slane %v1404, 2
    %v1415 = vadd.f32 %v1413, %v1302
    %v1416 = vxor.u32 %v1415, 2147483648
    %v1417 = vmul.f32 %v1416, 1.442695
    %v1418 = vpow.pop %v1417
    %v1419 = vadd.f32 %v1418, 1.0
    %v1420 = vrcp.pop %v1419
    %v1421 = vmul.f32 1.0, %v1420
    %v1422 = vadd.f32 %v1371, %v748
    %v1423 = vmul.f32 %v1411, %v1422
    %v1424 = vrot.slane %v1404, 4
    %v1426 = vadd.f32 %v1424, %v1423
    %v1427 = vtanh.pop %v1426
    %v1428 = vsub.f32 1.0, %v1421
    %v1429 = vmul.f32 %v1428, %v1427
    %v1430 = vmul.f32 %v1421, %v1088
    %v1431 = vadd.f32 %v1429, %v1430
    %s1432 = scalar_lea.vmem [#allocation3], 4
    %1433 = vst [vmem:[%s1432] sm:$0x3] %v1402
    %s1434 = scalar_lea.vmem [#allocation3], 24
    %1435 = vst [vmem:[%s1434 + $0x2] sm:$0x3] %v1431
    %1436 = vmatprep.subr.mxu0 %v641
    %1437 = vmatpush1.msra.mxu0 %v640
    %1438 = vmatprep.subr.mxu0 %v644
    %1439 = vmatpush1.msra.mxu0 %v643
    %1440 = vmatprep.subr.mxu0 %v647
    %1441 = vmatpush1.msra.mxu0 %v646
    %1442 = vmatprep.subr.mxu0 %v650
    %1443 = vmatpush1.msra.mxu0 %v649
    %1444 = vmatprep.subr.mxu0 %v653
    %1445 = vmatpush1.msra.mxu0 %v652
    %1446 = vmatprep.subr.mxu0 %v656
    %1447 = vmatpush1.msra.mxu0 %v655
    %1448 = vmatprep.subr.mxu0 %v659
    %1449 = vmatpush1.msra.mxu0 %v658
    %1450 = vmatprep.subr.mxu0 %v662
    %1451 = vmatpush1.msra.mxu0 %v661
    %1452 = vmatprep.subr.mxu0 %v665
    %1453 = vmatpush1.msra.mxu0 %v664
    %1454 = vmatprep.subr.mxu0 %v668
    %1455 = vmatpush1.msra.mxu0 %v667
    %1456 = vmatprep.subr.mxu0 %v671
    %1457 = vmatpush1.msra.mxu0 %v670
    %1458 = vmatprep.subr.mxu0 %v674
    %1459 = vmatpush1.msra.mxu0 %v673
    %1460 = vmatprep.subr.mxu0 %v677
    %1461 = vmatpush1.msra.mxu0 %v676
    %1462 = vmatprep.subr.mxu0 %v680
    %1463 = vmatpush1.msra.mxu0 %v679
    %1464 = vmatprep.subr.mxu0 %v683
    %1465 = vmatpush1.msra.mxu0 %v682
    %1466 = vmatprep.subr.mxu0 %v686
    %1467 = vmatpush1.msra.mxu0 %v685
    %1468 = vmatprep.subr.mxu0 0.0
    %1469 = vmatpush1.msra.mxu0 0.0
    %1470 = vmatprep.subr.mxu0 0.0
    %1471 = vmatpush1.msra.mxu0 0.0
    %1472 = vmatprep.subr.mxu0 0.0
    %1473 = vmatpush1.msra.mxu0 0.0
    %1474 = vmatprep.subr.mxu0 0.0
    %1475 = vmatpush1.msra.mxu0 0.0
    %1476 = vmatprep.subr.mxu0 0.0
    %1477 = vmatpush1.msra.mxu0 0.0
    %1478 = vmatprep.subr.mxu0 0.0
    %1479 = vmatpush1.msra.mxu0 0.0
    %1480 = vmatprep.subr.mxu0 0.0
    %1481 = vmatpush1.msra.mxu0 0.0
    %1482 = vmatprep.subr.mxu0 0.0
    %1483 = vmatpush1.msra.mxu0 0.0
    %1484 = vmatprep.subr.mxu0 0.0
    %1485 = vmatpush1.msra.mxu0 0.0
    %1486 = vmatprep.subr.mxu0 0.0
    %1487 = vmatpush1.msra.mxu0 0.0
    %1488 = vmatprep.subr.mxu0 0.0
    %1489 = vmatpush1.msra.mxu0 0.0
    %1490 = vmatprep.subr.mxu0 0.0
    %1491 = vmatpush1.msra.mxu0 0.0
    %1492 = vmatprep.subr.mxu0 0.0
    %1493 = vmatpush1.msra.mxu0 0.0
    %1494 = vmatprep.subr.mxu0 0.0
    %1495 = vmatpush1.msra.mxu0 0.0
    %1496 = vmatprep.subr.mxu0 0.0
    %1497 = vmatpush1.msra.mxu0 0.0
    %1498 = vmatprep.subr.mxu0 0.0
    %1499 = vmatpush1.msra.mxu0 0.0
    %1500 = vmatprep.mubr.f32.mxu0 0.0
    %1501 = vmatmul.mubr.f32.gmra.mrb[0].mxu0 %v1402
    %v1502 = vpop.f32.mrb[0].mxu0
    %v1503 = vadd.f32 0.0, %v1502
    %v1504 = vpop.f32.mrb[0].mxu0
    %v1505 = vadd.f32 0.0, %v1504
    %1506 = vdwg.mxu0
    %1507 = vmatprep.subr.mxu0 0.0
    %1508 = vmatpush1.msra.mxu0 %v642
    %1509 = vmatprep.subr.mxu0 0.0
    %1510 = vmatpush1.msra.mxu0 %v645
    %1511 = vmatprep.subr.mxu0 0.0
    %1512 = vmatpush1.msra.mxu0 %v648
    %1513 = vmatprep.subr.mxu0 0.0
    %1514 = vmatpush1.msra.mxu0 %v651
    %1515 = vmatprep.subr.mxu0 0.0
    %1516 = vmatpush1.msra.mxu0 %v654
    %1517 = vmatprep.subr.mxu0 0.0
    %1518 = vmatpush1.msra.mxu0 %v657
    %1519 = vmatprep.subr.mxu0 0.0
    %1520 = vmatpush1.msra.mxu0 %v660
    %1521 = vmatprep.subr.mxu0 0.0
    %1522 = vmatpush1.msra.mxu0 %v663
    %1523 = vmatprep.subr.mxu0 0.0
    %1524 = vmatpush1.msra.mxu0 %v666
    %1525 = vmatprep.subr.mxu0 0.0
    %1526 = vmatpush1.msra.mxu0 %v669
    %1527 = vmatprep.subr.mxu0 0.0
    %1528 = vmatpush1.msra.mxu0 %v672
    %1529 = vmatprep.subr.mxu0 0.0
    %1530 = vmatpush1.msra.mxu0 %v675
    %1531 = vmatprep.subr.mxu0 0.0
    %1532 = vmatpush1.msra.mxu0 %v678
    %1533 = vmatprep.subr.mxu0 0.0
    %1534 = vmatpush1.msra.mxu0 %v681
    %1535 = vmatprep.subr.mxu0 0.0
    %1536 = vmatpush1.msra.mxu0 %v684
    %1537 = vmatprep.subr.mxu0 0.0
    %1538 = vmatpush1.msra.mxu0 %v687
    %1539 = vmatprep.subr.mxu0 0.0
    %1540 = vmatpush1.msra.mxu0 0.0
    %1541 = vmatprep.subr.mxu0 0.0
    %1542 = vmatpush1.msra.mxu0 0.0
    %1543 = vmatprep.subr.mxu0 0.0
    %1544 = vmatpush1.msra.mxu0 0.0
    %1545 = vmatprep.subr.mxu0 0.0
    %1546 = vmatpush1.msra.mxu0 0.0
    %1547 = vmatprep.subr.mxu0 0.0
    %1548 = vmatpush1.msra.mxu0 0.0
    %1549 = vmatprep.subr.mxu0 0.0
    %1550 = vmatpush1.msra.mxu0 0.0
    %1551 = vmatprep.subr.mxu0 0.0
    %1552 = vmatpush1.msra.mxu0 0.0
    %1553 = vmatprep.subr.mxu0 0.0
    %1554 = vmatpush1.msra.mxu0 0.0
    %1555 = vmatprep.subr.mxu0 0.0
    %1556 = vmatpush1.msra.mxu0 0.0
    %1557 = vmatprep.subr.mxu0 0.0
    %1558 = vmatpush1.msra.mxu0 0.0
    %1559 = vmatprep.subr.mxu0 0.0
    %1560 = vmatpush1.msra.mxu0 0.0
    %1561 = vmatprep.subr.mxu0 0.0
    %1562 = vmatpush1.msra.mxu0 0.0
    %1563 = vmatprep.subr.mxu0 0.0
    %1564 = vmatpush1.msra.mxu0 0.0
    %1565 = vmatprep.subr.mxu0 0.0
    %1566 = vmatpush1.msra.mxu0 0.0
    %1567 = vmatprep.subr.mxu0 0.0
    %1568 = vmatpush1.msra.mxu0 0.0
    %1569 = vmatprep.subr.mxu0 0.0
    %1570 = vmatpush1.msra.mxu0 0.0
    %1571 = vmatprep.mubr.f32.mxu0 0.0
    %1572 = vmatmul.mubr.f32.gmra.mrb[0].mxu0 %v1402
    %v1573 = vpop.f32.mrb[0].mxu0
    %v1574 = vadd.f32 0.0, %v1573
    %v1575 = vpop.f32.mrb[0].mxu0
    %1576 = vdwg.mxu0
    %1577 = vmatprep.subr.mxu0 %v689
    %1578 = vmatpush1.msra.mxu0 %v688
    %1579 = vmatprep.subr.mxu0 %v692
    %1580 = vmatpush1.msra.mxu0 %v691
    %1581 = vmatprep.subr.mxu0 %v695
    %1582 = vmatpush1.msra.mxu0 %v694
    %1583 = vmatprep.subr.mxu0 %v698
    %1584 = vmatpush1.msra.mxu0 %v697
    %1585 = vmatprep.subr.mxu0 %v701
    %1586 = vmatpush1.msra.mxu0 %v700
    %1587 = vmatprep.subr.mxu0 %v704
    %1588 = vmatpush1.msra.mxu0 %v703
    %1589 = vmatprep.subr.mxu0 %v707
    %1590 = vmatpush1.msra.mxu0 %v706
    %1591 = vmatprep.subr.mxu0 %v710
    %1592 = vmatpush1.msra.mxu0 %v709
    %1593 = vmatprep.subr.mxu0 %v713
    %1594 = vmatpush1.msra.mxu0 %v712
    %1595 = vmatprep.subr.mxu0 %v716
    %1596 = vmatpush1.msra.mxu0 %v715
    %1597 = vmatprep.subr.mxu0 %v719
    %1598 = vmatpush1.msra.mxu0 %v718
    %1599 = vmatprep.subr.mxu0 %v722
    %1600 = vmatpush1.msra.mxu0 %v721
    %1601 = vmatprep.subr.mxu0 %v725
    %1602 = vmatpush1.msra.mxu0 %v724
    %1603 = vmatprep.subr.mxu0 %v728
    %1604 = vmatpush1.msra.mxu0 %v727
    %1605 = vmatprep.subr.mxu0 %v731
    %1606 = vmatpush1.msra.mxu0 %v730
    %1607 = vmatprep.subr.mxu0 %v734
    %1608 = vmatpush1.msra.mxu0 %v733
    %1609 = vmatprep.subr.mxu0 0.0
    %1610 = vmatpush1.msra.mxu0 0.0
    %1611 = vmatprep.subr.mxu0 0.0
    %1612 = vmatpush1.msra.mxu0 0.0
    %1613 = vmatprep.subr.mxu0 0.0
    %1614 = vmatpush1.msra.mxu0 0.0
    %1615 = vmatprep.subr.mxu0 0.0
    %1616 = vmatpush1.msra.mxu0 0.0
    %1617 = vmatprep.subr.mxu0 0.0
    %1618 = vmatpush1.msra.mxu0 0.0
    %1619 = vmatprep.subr.mxu0 0.0
    %1620 = vmatpush1.msra.mxu0 0.0
    %1621 = vmatprep.subr.mxu0 0.0
    %1622 = vmatpush1.msra.mxu0 0.0
    %1623 = vmatprep.subr.mxu0 0.0
    %1624 = vmatpush1.msra.mxu0 0.0
    %1625 = vmatprep.subr.mxu0 0.0
    %1626 = vmatpush1.msra.mxu0 0.0
    %1627 = vmatprep.subr.mxu0 0.0
    %1628 = vmatpush1.msra.mxu0 0.0
    %1629 = vmatprep.subr.mxu0 0.0
    %1630 = vmatpush1.msra.mxu0 0.0
    %1631 = vmatprep.subr.mxu0 0.0
    %1632 = vmatpush1.msra.mxu0 0.0
    %1633 = vmatprep.subr.mxu0 0.0
    %1634 = vmatpush1.msra.mxu0 0.0
    %1635 = vmatprep.subr.mxu0 0.0
    %1636 = vmatpush1.msra.mxu0 0.0
    %1637 = vmatprep.subr.mxu0 0.0
    %1638 = vmatpush1.msra.mxu0 0.0
    %1639 = vmatprep.subr.mxu0 0.0
    %1640 = vmatpush1.msra.mxu0 0.0
    %1641 = vmatprep.mubr.f32.mxu0 0.0
    %1642 = vmatmul.mubr.f32.gmra.mrb[0].mxu0 %v1431
    %v1643 = vpop.f32.mrb[0].mxu0
    %v1644 = vadd.f32 0.0, %v1643
    %v1645 = vpop.f32.mrb[0].mxu0
    %v1646 = vadd.f32 0.0, %v1645
    %1647 = vdwg.mxu0
    %1648 = vmatprep.subr.mxu0 0.0
    %1649 = vmatpush1.msra.mxu0 %v690
    %1650 = vmatprep.subr.mxu0 0.0
    %1651 = vmatpush1.msra.mxu0 %v693
    %1652 = vmatprep.subr.mxu0 0.0
    %1653 = vmatpush1.msra.mxu0 %v696
    %1654 = vmatprep.subr.mxu0 0.0
    %1655 = vmatpush1.msra.mxu0 %v699
    %1656 = vmatprep.subr.mxu0 0.0
    %1657 = vmatpush1.msra.mxu0 %v702
    %1658 = vmatprep.subr.mxu0 0.0
    %1659 = vmatpush1.msra.mxu0 %v705
    %1660 = vmatprep.subr.mxu0 0.0
    %1661 = vmatpush1.msra.mxu0 %v708
    %1662 = vmatprep.subr.mxu0 0.0
    %1663 = vmatpush1.msra.mxu0 %v711
    %1664 = vmatprep.subr.mxu0 0.0
    %1665 = vmatpush1.msra.mxu0 %v714
    %1666 = vmatprep.subr.mxu0 0.0
    %1667 = vmatpush1.msra.mxu0 %v717
    %1668 = vmatprep.subr.mxu0 0.0
    %1669 = vmatpush1.msra.mxu0 %v720
    %1670 = vmatprep.subr.mxu0 0.0
    %1671 = vmatpush1.msra.mxu0 %v723
    %1672 = vmatprep.subr.mxu0 0.0
    %1673 = vmatpush1.msra.mxu0 %v726
    %1674 = vmatprep.subr.mxu0 0.0
    %1675 = vmatpush1.msra.mxu0 %v729
    %1676 = vmatprep.subr.mxu0 0.0
    %1677 = vmatpush1.msra.mxu0 %v732
    %1678 = vmatprep.subr.mxu0 0.0
    %1679 = vmatpush1.msra.mxu0 %v735
    %1680 = vmatprep.subr.mxu0 0.0
    %1681 = vmatpush1.msra.mxu0 0.0
    %1682 = vmatprep.subr.mxu0 0.0
    %1683 = vmatpush1.msra.mxu0 0.0
    %1684 = vmatprep.subr.mxu0 0.0
    %1685 = vmatpush1.msra.mxu0 0.0
    %1686 = vmatprep.subr.mxu0 0.0
    %1687 = vmatpush1.msra.mxu0 0.0
    %1688 = vmatprep.subr.mxu0 0.0
    %1689 = vmatpush1.msra.mxu0 0.0
    %1690 = vmatprep.subr.mxu0 0.0
    %1691 = vmatpush1.msra.mxu0 0.0
    %1692 = vmatprep.subr.mxu0 0.0
    %1693 = vmatpush1.msra.mxu0 0.0
    %1694 = vmatprep.subr.mxu0 0.0
    %1695 = vmatpush1.msra.mxu0 0.0
    %1696 = vmatprep.subr.mxu0 0.0
    %1697 = vmatpush1.msra.mxu0 0.0
    %1698 = vmatprep.subr.mxu0 0.0
    %1699 = vmatpush1.msra.mxu0 0.0
    %1700 = vmatprep.subr.mxu0 0.0
    %1701 = vmatpush1.msra.mxu0 0.0
    %1702 = vmatprep.subr.mxu0 0.0
    %1703 = vmatpush1.msra.mxu0 0.0
    %1704 = vmatprep.subr.mxu0 0.0
    %1705 = vmatpush1.msra.mxu0 0.0
    %1706 = vmatprep.subr.mxu0 0.0
    %1707 = vmatpush1.msra.mxu0 0.0
    %1708 = vmatprep.subr.mxu0 0.0
    %1709 = vmatpush1.msra.mxu0 0.0
    %1710 = vmatprep.subr.mxu0 0.0
    %1711 = vmatpush1.msra.mxu0 0.0
    %1712 = vmatprep.mubr.f32.mxu0 0.0
    %1713 = vmatmul.mubr.f32.gmra.mrb[0].mxu0 %v1431
    %v1714 = vpop.f32.mrb[0].mxu0
    %v1715 = vadd.f32 0.0, %v1714
    %v1716 = vpop.f32.mrb[0].mxu0
    %1717 = vdwg.mxu0
    %s1718 = scalar_lea.vmem [#allocation2], 24
    %v1719 = vld [vmem:[%s1718] sm:$0x3f]
    %v1720 = vadd.f32 %v1719, %v1503
    %v1721 = vxor.u32 %v1720, 2147483648
    %v1722 = vmul.f32 %v1721, 1.442695
    %v1723 = vpow.pop %v1722
    %v1724 = vadd.f32 %v1723, 1.0
    %v1725 = vrcp.pop %v1724
    %v1726 = vmul.f32 1.0, %v1725
    %v1728 = vrot.slane %v1719, 2
    %v1730 = vadd.f32 %v1728, %v1505
    %v1731 = vxor.u32 %v1730, 2147483648
    %v1732 = vmul.f32 %v1731, 1.442695
    %v1733 = vpow.pop %v1732
    %v1734 = vadd.f32 %v1733, 1.0
    %v1735 = vrcp.pop %v1734
    %v1736 = vmul.f32 1.0, %v1735
    %v1737 = vadd.f32 %v1574, %v741
    %v1738 = vmul.f32 %v1726, %v1737
    %v1739 = vrot.slane %v1719, 4
    %v1741 = vadd.f32 %v1739, %v1738
    %v1742 = vtanh.pop %v1741
    %v1743 = vsub.f32 1.0, %v1736
    %v1744 = vmul.f32 %v1743, %v1742
    %v1745 = vmul.f32 %v1736, %v1402
    %v1746 = vadd.f32 %v1744, %v1745
    %s1747 = scalar_lea.vmem [#allocation2], 60
    %v1748 = vld [vmem:[%s1747 + $0x6] sm:$0x3f]
    %v1749 = vadd.f32 %v1748, %v1644
    %v1750 = vxor.u32 %v1749, 2147483648
    %v1751 = vmul.f32 %v1750, 1.442695
    %v1752 = vpow.pop %v1751
    %v1753 = vadd.f32 %v1752, 1.0
    %v1754 = vrcp.pop %v1753
    %v1755 = vmul.f32 1.0, %v1754
    %v1757 = vrot.slane %v1748, 2
    %v1759 = vadd.f32 %v1757, %v1646
    %v1760 = vxor.u32 %v1759, 2147483648
    %v1761 = vmul.f32 %v1760, 1.442695
    %v1762 = vpow.pop %v1761
    %v1763 = vadd.f32 %v1762, 1.0
    %v1764 = vrcp.pop %v1763
    %v1765 = vmul.f32 1.0, %v1764
    %v1766 = vadd.f32 %v1715, %v748
    %v1767 = vmul.f32 %v1755, %v1766
    %v1768 = vrot.slane %v1748, 4
    %v1770 = vadd.f32 %v1768, %v1767
    %v1771 = vtanh.pop %v1770
    %v1772 = vsub.f32 1.0, %v1765
    %v1773 = vmul.f32 %v1772, %v1771
    %v1774 = vmul.f32 %v1765, %v1431
    %v1775 = vadd.f32 %v1773, %v1774
    %s1776 = scalar_lea.vmem [#allocation3], 8
    %1777 = vst [vmem:[%s1776] sm:$0x3] %v1746
    %s1778 = scalar_lea.vmem [#allocation3], 20
    %1779 = vst [vmem:[%s1778 + $0x2] sm:$0x3] %v1775
    %1780 = vmatprep.subr.mxu0 %v641
    %1781 = vmatpush1.msra.mxu0 %v640
    %1782 = vmatprep.subr.mxu0 %v644
    %1783 = vmatpush1.msra.mxu0 %v643
    %1784 = vmatprep.subr.mxu0 %v647
    %1785 = vmatpush1.msra.mxu0 %v646
    %1786 = vmatprep.subr.mxu0 %v650
    %1787 = vmatpush1.msra.mxu0 %v649
    %1788 = vmatprep.subr.mxu0 %v653
    %1789 = vmatpush1.msra.mxu0 %v652
    %1790 = vmatprep.subr.mxu0 %v656
    %1791 = vmatpush1.msra.mxu0 %v655
    %1792 = vmatprep.subr.mxu0 %v659
    %1793 = vmatpush1.msra.mxu0 %v658
    %1794 = vmatprep.subr.mxu0 %v662
    %1795 = vmatpush1.msra.mxu0 %v661
    %1796 = vmatprep.subr.mxu0 %v665
    %1797 = vmatpush1.msra.mxu0 %v664
    %1798 = vmatprep.subr.mxu0 %v668
    %1799 = vmatpush1.msra.mxu0 %v667
    %1800 = vmatprep.subr.mxu0 %v671
    %1801 = vmatpush1.msra.mxu0 %v670
    %1802 = vmatprep.subr.mxu0 %v674
    %1803 = vmatpush1.msra.mxu0 %v673
    %1804 = vmatprep.subr.mxu0 %v677
    %1805 = vmatpush1.msra.mxu0 %v676
    %1806 = vmatprep.subr.mxu0 %v680
    %1807 = vmatpush1.msra.mxu0 %v679
    %1808 = vmatprep.subr.mxu0 %v683
    %1809 = vmatpush1.msra.mxu0 %v682
    %1810 = vmatprep.subr.mxu0 %v686
    %1811 = vmatpush1.msra.mxu0 %v685
    %1812 = vmatprep.subr.mxu0 0.0
    %1813 = vmatpush1.msra.mxu0 0.0
    %1814 = vmatprep.subr.mxu0 0.0
    %1815 = vmatpush1.msra.mxu0 0.0
    %1816 = vmatprep.subr.mxu0 0.0
    %1817 = vmatpush1.msra.mxu0 0.0
    %1818 = vmatprep.subr.mxu0 0.0
    %1819 = vmatpush1.msra.mxu0 0.0
    %1820 = vmatprep.subr.mxu0 0.0
    %1821 = vmatpush1.msra.mxu0 0.0
    %1822 = vmatprep.subr.mxu0 0.0
    %1823 = vmatpush1.msra.mxu0 0.0
    %1824 = vmatprep.subr.mxu0 0.0
    %1825 = vmatpush1.msra.mxu0 0.0
    %1826 = vmatprep.subr.mxu0 0.0
    %1827 = vmatpush1.msra.mxu0 0.0
    %1828 = vmatprep.subr.mxu0 0.0
    %1829 = vmatpush1.msra.mxu0 0.0
    %1830 = vmatprep.subr.mxu0 0.0
    %1831 = vmatpush1.msra.mxu0 0.0
    %1832 = vmatprep.subr.mxu0 0.0
    %1833 = vmatpush1.msra.mxu0 0.0
    %1834 = vmatprep.subr.mxu0 0.0
    %1835 = vmatpush1.msra.mxu0 0.0
    %1836 = vmatprep.subr.mxu0 0.0
    %1837 = vmatpush1.msra.mxu0 0.0
    %1838 = vmatprep.subr.mxu0 0.0
    %1839 = vmatpush1.msra.mxu0 0.0
    %1840 = vmatprep.subr.mxu0 0.0
    %1841 = vmatpush1.msra.mxu0 0.0
    %1842 = vmatprep.subr.mxu0 0.0
    %1843 = vmatpush1.msra.mxu0 0.0
    %1844 = vmatprep.mubr.f32.mxu0 0.0
    %1845 = vmatmul.mubr.f32.gmra.mrb[0].mxu0 %v1746
    %v1846 = vpop.f32.mrb[0].mxu0
    %v1847 = vadd.f32 0.0, %v1846
    %v1848 = vpop.f32.mrb[0].mxu0
    %v1849 = vadd.f32 0.0, %v1848
    %1850 = vdwg.mxu0
    %1851 = vmatprep.subr.mxu0 0.0
    %1852 = vmatpush1.msra.mxu0 %v642
    %1853 = vmatprep.subr.mxu0 0.0
    %1854 = vmatpush1.msra.mxu0 %v645
    %1855 = vmatprep.subr.mxu0 0.0
    %1856 = vmatpush1.msra.mxu0 %v648
    %1857 = vmatprep.subr.mxu0 0.0
    %1858 = vmatpush1.msra.mxu0 %v651
    %1859 = vmatprep.subr.mxu0 0.0
    %1860 = vmatpush1.msra.mxu0 %v654
    %1861 = vmatprep.subr.mxu0 0.0
    %1862 = vmatpush1.msra.mxu0 %v657
    %1863 = vmatprep.subr.mxu0 0.0
    %1864 = vmatpush1.msra.mxu0 %v660
    %1865 = vmatprep.subr.mxu0 0.0
    %1866 = vmatpush1.msra.mxu0 %v663
    %1867 = vmatprep.subr.mxu0 0.0
    %1868 = vmatpush1.msra.mxu0 %v666
    %1869 = vmatprep.subr.mxu0 0.0
    %1870 = vmatpush1.msra.mxu0 %v669
    %1871 = vmatprep.subr.mxu0 0.0
    %1872 = vmatpush1.msra.mxu0 %v672
    %1873 = vmatprep.subr.mxu0 0.0
    %1874 = vmatpush1.msra.mxu0 %v675
    %1875 = vmatprep.subr.mxu0 0.0
    %1876 = vmatpush1.msra.mxu0 %v678
    %1877 = vmatprep.subr.mxu0 0.0
    %1878 = vmatpush1.msra.mxu0 %v681
    %1879 = vmatprep.subr.mxu0 0.0
    %1880 = vmatpush1.msra.mxu0 %v684
    %1881 = vmatprep.subr.mxu0 0.0
    %1882 = vmatpush1.msra.mxu0 %v687
    %1883 = vmatprep.subr.mxu0 0.0
    %1884 = vmatpush1.msra.mxu0 0.0
    %1885 = vmatprep.subr.mxu0 0.0
    %1886 = vmatpush1.msra.mxu0 0.0
    %1887 = vmatprep.subr.mxu0 0.0
    %1888 = vmatpush1.msra.mxu0 0.0
    %1889 = vmatprep.subr.mxu0 0.0
    %1890 = vmatpush1.msra.mxu0 0.0
    %1891 = vmatprep.subr.mxu0 0.0
    %1892 = vmatpush1.msra.mxu0 0.0
    %1893 = vmatprep.subr.mxu0 0.0
    %1894 = vmatpush1.msra.mxu0 0.0
    %1895 = vmatprep.subr.mxu0 0.0
    %1896 = vmatpush1.msra.mxu0 0.0
    %1897 = vmatprep.subr.mxu0 0.0
    %1898 = vmatpush1.msra.mxu0 0.0
    %1899 = vmatprep.subr.mxu0 0.0
    %1900 = vmatpush1.msra.mxu0 0.0
    %1901 = vmatprep.subr.mxu0 0.0
    %1902 = vmatpush1.msra.mxu0 0.0
    %1903 = vmatprep.subr.mxu0 0.0
    %1904 = vmatpush1.msra.mxu0 0.0
    %1905 = vmatprep.subr.mxu0 0.0
    %1906 = vmatpush1.msra.mxu0 0.0
    %1907 = vmatprep.subr.mxu0 0.0
    %1908 = vmatpush1.msra.mxu0 0.0
    %1909 = vmatprep.subr.mxu0 0.0
    %1910 = vmatpush1.msra.mxu0 0.0
    %1911 = vmatprep.subr.mxu0 0.0
    %1912 = vmatpush1.msra.mxu0 0.0
    %1913 = vmatprep.subr.mxu0 0.0
    %1914 = vmatpush1.msra.mxu0 0.0
    %1915 = vmatprep.mubr.f32.mxu0 0.0
    %1916 = vmatmul.mubr.f32.gmra.mrb[0].mxu0 %v1746
    %v1917 = vpop.f32.mrb[0].mxu0
    %v1918 = vadd.f32 0.0, %v1917
    %v1919 = vpop.f32.mrb[0].mxu0
    %1920 = vdwg.mxu0
    %1921 = vmatprep.subr.mxu0 %v689
    %1922 = vmatpush1.msra.mxu0 %v688
    %1923 = vmatprep.subr.mxu0 %v692
    %1924 = vmatpush1.msra.mxu0 %v691
    %1925 = vmatprep.subr.mxu0 %v695
    %1926 = vmatpush1.msra.mxu0 %v694
    %1927 = vmatprep.subr.mxu0 %v698
    %1928 = vmatpush1.msra.mxu0 %v697
    %1929 = vmatprep.subr.mxu0 %v701
    %1930 = vmatpush1.msra.mxu0 %v700
    %1931 = vmatprep.subr.mxu0 %v704
    %1932 = vmatpush1.msra.mxu0 %v703
    %1933 = vmatprep.subr.mxu0 %v707
    %1934 = vmatpush1.msra.mxu0 %v706
    %1935 = vmatprep.subr.mxu0 %v710
    %1936 = vmatpush1.msra.mxu0 %v709
    %1937 = vmatprep.subr.mxu0 %v713
    %1938 = vmatpush1.msra.mxu0 %v712
    %1939 = vmatprep.subr.mxu0 %v716
    %1940 = vmatpush1.msra.mxu0 %v715
    %1941 = vmatprep.subr.mxu0 %v719
    %1942 = vmatpush1.msra.mxu0 %v718
    %1943 = vmatprep.subr.mxu0 %v722
    %1944 = vmatpush1.msra.mxu0 %v721
    %1945 = vmatprep.subr.mxu0 %v725
    %1946 = vmatpush1.msra.mxu0 %v724
    %1947 = vmatprep.subr.mxu0 %v728
    %1948 = vmatpush1.msra.mxu0 %v727
    %1949 = vmatprep.subr.mxu0 %v731
    %1950 = vmatpush1.msra.mxu0 %v730
    %1951 = vmatprep.subr.mxu0 %v734
    %1952 = vmatpush1.msra.mxu0 %v733
    %1953 = vmatprep.subr.mxu0 0.0
    %1954 = vmatpush1.msra.mxu0 0.0
    %1955 = vmatprep.subr.mxu0 0.0
    %1956 = vmatpush1.msra.mxu0 0.0
    %1957 = vmatprep.subr.mxu0 0.0
    %1958 = vmatpush1.msra.mxu0 0.0
    %1959 = vmatprep.subr.mxu0 0.0
    %1960 = vmatpush1.msra.mxu0 0.0
    %1961 = vmatprep.subr.mxu0 0.0
    %1962 = vmatpush1.msra.mxu0 0.0
    %1963 = vmatprep.subr.mxu0 0.0
    %1964 = vmatpush1.msra.mxu0 0.0
    %1965 = vmatprep.subr.mxu0 0.0
    %1966 = vmatpush1.msra.mxu0 0.0
    %1967 = vmatprep.subr.mxu0 0.0
    %1968 = vmatpush1.msra.mxu0 0.0
    %1969 = vmatprep.subr.mxu0 0.0
    %1970 = vmatpush1.msra.mxu0 0.0
    %1971 = vmatprep.subr.mxu0 0.0
    %1972 = vmatpush1.msra.mxu0 0.0
    %1973 = vmatprep.subr.mxu0 0.0
    %1974 = vmatpush1.msra.mxu0 0.0
    %1975 = vmatprep.subr.mxu0 0.0
    %1976 = vmatpush1.msra.mxu0 0.0
    %1977 = vmatprep.subr.mxu0 0.0
    %1978 = vmatpush1.msra.mxu0 0.0
    %1979 = vmatprep.subr.mxu0 0.0
    %1980 = vmatpush1.msra.mxu0 0.0
    %1981 = vmatprep.subr.mxu0 0.0
    %1982 = vmatpush1.msra.mxu0 0.0
    %1983 = vmatprep.subr.mxu0 0.0
    %1984 = vmatpush1.msra.mxu0 0.0
    %1985 = vmatprep.mubr.f32.mxu0 0.0
    %1986 = vmatmul.mubr.f32.gmra.mrb[0].mxu0 %v1775
    %v1987 = vpop.f32.mrb[0].mxu0
    %v1988 = vadd.f32 0.0, %v1987
    %v1989 = vpop.f32.mrb[0].mxu0
    %v1990 = vadd.f32 0.0, %v1989
    %1991 = vdwg.mxu0
    %1992 = vmatprep.subr.mxu0 0.0
    %1993 = vmatpush1.msra.mxu0 %v690
    %1994 = vmatprep.subr.mxu0 0.0
    %1995 = vmatpush1.msra.mxu0 %v693
    %1996 = vmatprep.subr.mxu0 0.0
    %1997 = vmatpush1.msra.mxu0 %v696
    %1998 = vmatprep.subr.mxu0 0.0
    %1999 = vmatpush1.msra.mxu0 %v699
    %2000 = vmatprep.subr.mxu0 0.0
    %2001 = vmatpush1.msra.mxu0 %v702
    %2002 = vmatprep.subr.mxu0 0.0
    %2003 = vmatpush1.msra.mxu0 %v705
    %2004 = vmatprep.subr.mxu0 0.0
    %2005 = vmatpush1.msra.mxu0 %v708
    %2006 = vmatprep.subr.mxu0 0.0
    %2007 = vmatpush1.msra.mxu0 %v711
    %2008 = vmatprep.subr.mxu0 0.0
    %2009 = vmatpush1.msra.mxu0 %v714
    %2010 = vmatprep.subr.mxu0 0.0
    %2011 = vmatpush1.msra.mxu0 %v717
    %2012 = vmatprep.subr.mxu0 0.0
    %2013 = vmatpush1.msra.mxu0 %v720
    %2014 = vmatprep.subr.mxu0 0.0
    %2015 = vmatpush1.msra.mxu0 %v723
    %2016 = vmatprep.subr.mxu0 0.0
    %2017 = vmatpush1.msra.mxu0 %v726
    %2018 = vmatprep.subr.mxu0 0.0
    %2019 = vmatpush1.msra.mxu0 %v729
    %2020 = vmatprep.subr.mxu0 0.0
    %2021 = vmatpush1.msra.mxu0 %v732
    %2022 = vmatprep.subr.mxu0 0.0
    %2023 = vmatpush1.msra.mxu0 %v735
    %2024 = vmatprep.subr.mxu0 0.0
    %2025 = vmatpush1.msra.mxu0 0.0
    %2026 = vmatprep.subr.mxu0 0.0
    %2027 = vmatpush1.msra.mxu0 0.0
    %2028 = vmatprep.subr.mxu0 0.0
    %2029 = vmatpush1.msra.mxu0 0.0
    %2030 = vmatprep.subr.mxu0 0.0
    %2031 = vmatpush1.msra.mxu0 0.0
    %2032 = vmatprep.subr.mxu0 0.0
    %2033 = vmatpush1.msra.mxu0 0.0
    %2034 = vmatprep.subr.mxu0 0.0
    %2035 = vmatpush1.msra.mxu0 0.0
    %2036 = vmatprep.subr.mxu0 0.0
    %2037 = vmatpush1.msra.mxu0 0.0
    %2038 = vmatprep.subr.mxu0 0.0
    %2039 = vmatpush1.msra.mxu0 0.0
    %2040 = vmatprep.subr.mxu0 0.0
    %2041 = vmatpush1.msra.mxu0 0.0
    %2042 = vmatprep.subr.mxu0 0.0
    %2043 = vmatpush1.msra.mxu0 0.0
    %2044 = vmatprep.subr.mxu0 0.0
    %2045 = vmatpush1.msra.mxu0 0.0
    %2046 = vmatprep.subr.mxu0 0.0
    %2047 = vmatpush1.msra.mxu0 0.0
    %2048 = vmatprep.subr.mxu0 0.0
    %2049 = vmatpush1.msra.mxu0 0.0
    %2050 = vmatprep.subr.mxu0 0.0
    %2051 = vmatpush1.msra.mxu0 0.0
    %2052 = vmatprep.subr.mxu0 0.0
    %2053 = vmatpush1.msra.mxu0 0.0
    %2054 = vmatprep.subr.mxu0 0.0
    %2055 = vmatpush1.msra.mxu0 0.0
    %2056 = vmatprep.mubr.f32.mxu0 0.0
    %2057 = vmatmul.mubr.f32.gmra.mrb[0].mxu0 %v1775
    %v2058 = vpop.f32.mrb[0].mxu0
    %v2059 = vadd.f32 0.0, %v2058
    %v2060 = vpop.f32.mrb[0].mxu0
    %2061 = vdwg.mxu0
    %s2062 = scalar_lea.vmem [#allocation2], 36
    %v2063 = vld [vmem:[%s2062] sm:$0x3f]
    %v2064 = vadd.f32 %v2063, %v1847
    %v2065 = vxor.u32 %v2064, 2147483648
    %v2066 = vmul.f32 %v2065, 1.442695
    %v2067 = vpow.pop %v2066
    %v2068 = vadd.f32 %v2067, 1.0
    %v2069 = vrcp.pop %v2068
    %v2070 = vmul.f32 1.0, %v2069
    %v2072 = vrot.slane %v2063, 2
    %v2074 = vadd.f32 %v2072, %v1849
    %v2075 = vxor.u32 %v2074, 2147483648
    %v2076 = vmul.f32 %v2075, 1.442695
    %v2077 = vpow.pop %v2076
    %v2078 = vadd.f32 %v2077, 1.0
    %v2079 = vrcp.pop %v2078
    %v2080 = vmul.f32 1.0, %v2079
    %v2081 = vadd.f32 %v1918, %v741
    %v2082 = vmul.f32 %v2070, %v2081
    %v2083 = vrot.slane %v2063, 4
    %v2085 = vadd.f32 %v2083, %v2082
    %v2086 = vtanh.pop %v2085
    %v2087 = vsub.f32 1.0, %v2080
    %v2088 = vmul.f32 %v2087, %v2086
    %v2089 = vmul.f32 %v2080, %v1746
    %v2090 = vadd.f32 %v2088, %v2089
    %s2091 = scalar_lea.vmem [#allocation2], 48
    %v2092 = vld [vmem:[%s2091 + $0x6] sm:$0x3f]
    %v2093 = vadd.f32 %v2092, %v1988
    %v2094 = vxor.u32 %v2093, 2147483648
    %v2095 = vmul.f32 %v2094, 1.442695
    %v2096 = vpow.pop %v2095
    %v2097 = vadd.f32 %v2096, 1.0
    %v2098 = vrcp.pop %v2097
    %v2099 = vmul.f32 1.0, %v2098
    %v2101 = vrot.slane %v2092, 2
    %v2103 = vadd.f32 %v2101, %v1990
    %v2104 = vxor.u32 %v2103, 2147483648
    %v2105 = vmul.f32 %v2104, 1.442695
    %v2106 = vpow.pop %v2105
    %v2107 = vadd.f32 %v2106, 1.0
    %v2108 = vrcp.pop %v2107
    %v2109 = vmul.f32 1.0, %v2108
    %v2110 = vadd.f32 %v2059, %v748
    %v2111 = vmul.f32 %v2099, %v2110
    %v2112 = vrot.slane %v2092, 4
    %v2114 = vadd.f32 %v2112, %v2111
    %v2115 = vtanh.pop %v2114
    %v2116 = vsub.f32 1.0, %v2109
    %v2117 = vmul.f32 %v2116, %v2115
    %v2118 = vmul.f32 %v2109, %v1775
    %v2119 = vadd.f32 %v2117, %v2118
    %s2120 = scalar_lea.vmem [#allocation3], 12
    %2121 = vst [vmem:[%s2120] sm:$0x3] %v2090
    %s2122 = scalar_lea.vmem [#allocation3], 16
    %2123 = vst [vmem:[%s2122 + $0x2] sm:$0x3] %v2119
    %2124 = vmatprep.subr.mxu0 %v641
    %2125 = vmatpush1.msra.mxu0 %v640
    %2126 = vmatprep.subr.mxu0 %v644
    %2127 = vmatpush1.msra.mxu0 %v643
    %2128 = vmatprep.subr.mxu0 %v647
    %2129 = vmatpush1.msra.mxu0 %v646
    %2130 = vmatprep.subr.mxu0 %v650
    %2131 = vmatpush1.msra.mxu0 %v649
    %2132 = vmatprep.subr.mxu0 %v653
    %2133 = vmatpush1.msra.mxu0 %v652
    %2134 = vmatprep.subr.mxu0 %v656
    %2135 = vmatpush1.msra.mxu0 %v655
    %2136 = vmatprep.subr.mxu0 %v659
    %2137 = vmatpush1.msra.mxu0 %v658
    %2138 = vmatprep.subr.mxu0 %v662
    %2139 = vmatpush1.msra.mxu0 %v661
    %2140 = vmatprep.subr.mxu0 %v665
    %2141 = vmatpush1.msra.mxu0 %v664
    %2142 = vmatprep.subr.mxu0 %v668
    %2143 = vmatpush1.msra.mxu0 %v667
    %2144 = vmatprep.subr.mxu0 %v671
    %2145 = vmatpush1.msra.mxu0 %v670
    %2146 = vmatprep.subr.mxu0 %v674
    %2147 = vmatpush1.msra.mxu0 %v673
    %2148 = vmatprep.subr.mxu0 %v677
    %2149 = vmatpush1.msra.mxu0 %v676
    %2150 = vmatprep.subr.mxu0 %v680
    %2151 = vmatpush1.msra.mxu0 %v679
    %2152 = vmatprep.subr.mxu0 %v683
    %2153 = vmatpush1.msra.mxu0 %v682
    %2154 = vmatprep.subr.mxu0 %v686
    %2155 = vmatpush1.msra.mxu0 %v685
    %2156 = vmatprep.subr.mxu0 0.0
    %2157 = vmatpush1.msra.mxu0 0.0
    %2158 = vmatprep.subr.mxu0 0.0
    %2159 = vmatpush1.msra.mxu0 0.0
    %2160 = vmatprep.subr.mxu0 0.0
    %2161 = vmatpush1.msra.mxu0 0.0
    %2162 = vmatprep.subr.mxu0 0.0
    %2163 = vmatpush1.msra.mxu0 0.0
    %2164 = vmatprep.subr.mxu0 0.0
    %2165 = vmatpush1.msra.mxu0 0.0
    %2166 = vmatprep.subr.mxu0 0.0
    %2167 = vmatpush1.msra.mxu0 0.0
    %2168 = vmatprep.subr.mxu0 0.0
    %2169 = vmatpush1.msra.mxu0 0.0
    %2170 = vmatprep.subr.mxu0 0.0
    %2171 = vmatpush1.msra.mxu0 0.0
    %2172 = vmatprep.subr.mxu0 0.0
    %2173 = vmatpush1.msra.mxu0 0.0
    %2174 = vmatprep.subr.mxu0 0.0
    %2175 = vmatpush1.msra.mxu0 0.0
    %2176 = vmatprep.subr.mxu0 0.0
    %2177 = vmatpush1.msra.mxu0 0.0
    %2178 = vmatprep.subr.mxu0 0.0
    %2179 = vmatpush1.msra.mxu0 0.0
    %2180 = vmatprep.subr.mxu0 0.0
    %2181 = vmatpush1.msra.mxu0 0.0
    %2182 = vmatprep.subr.mxu0 0.0
    %2183 = vmatpush1.msra.mxu0 0.0
    %2184 = vmatprep.subr.mxu0 0.0
    %2185 = vmatpush1.msra.mxu0 0.0
    %2186 = vmatprep.subr.mxu0 0.0
    %2187 = vmatpush1.msra.mxu0 0.0
    %2188 = vmatprep.mubr.f32.mxu0 0.0
    %2189 = vmatmul.mubr.f32.gmra.mrb[0].mxu0 %v2090
    %v2190 = vpop.f32.mrb[0].mxu0
    %v2191 = vadd.f32 0.0, %v2190
    %v2192 = vpop.f32.mrb[0].mxu0
    %v2193 = vadd.f32 0.0, %v2192
    %2194 = vdwg.mxu0
    %2195 = vmatprep.subr.mxu0 0.0
    %2196 = vmatpush1.msra.mxu0 %v642
    %2197 = vmatprep.subr.mxu0 0.0
    %2198 = vmatpush1.msra.mxu0 %v645
    %2199 = vmatprep.subr.mxu0 0.0
    %2200 = vmatpush1.msra.mxu0 %v648
    %2201 = vmatprep.subr.mxu0 0.0
    %2202 = vmatpush1.msra.mxu0 %v651
    %2203 = vmatprep.subr.mxu0 0.0
    %2204 = vmatpush1.msra.mxu0 %v654
    %2205 = vmatprep.subr.mxu0 0.0
    %2206 = vmatpush1.msra.mxu0 %v657
    %2207 = vmatprep.subr.mxu0 0.0
    %2208 = vmatpush1.msra.mxu0 %v660
    %2209 = vmatprep.subr.mxu0 0.0
    %2210 = vmatpush1.msra.mxu0 %v663
    %2211 = vmatprep.subr.mxu0 0.0
    %2212 = vmatpush1.msra.mxu0 %v666
    %2213 = vmatprep.subr.mxu0 0.0
    %2214 = vmatpush1.msra.mxu0 %v669
    %2215 = vmatprep.subr.mxu0 0.0
    %2216 = vmatpush1.msra.mxu0 %v672
    %2217 = vmatprep.subr.mxu0 0.0
    %2218 = vmatpush1.msra.mxu0 %v675
    %2219 = vmatprep.subr.mxu0 0.0
    %2220 = vmatpush1.msra.mxu0 %v678
    %2221 = vmatprep.subr.mxu0 0.0
    %2222 = vmatpush1.msra.mxu0 %v681
    %2223 = vmatprep.subr.mxu0 0.0
    %2224 = vmatpush1.msra.mxu0 %v684
    %2225 = vmatprep.subr.mxu0 0.0
    %2226 = vmatpush1.msra.mxu0 %v687
    %2227 = vmatprep.subr.mxu0 0.0
    %2228 = vmatpush1.msra.mxu0 0.0
    %2229 = vmatprep.subr.mxu0 0.0
    %2230 = vmatpush1.msra.mxu0 0.0
    %2231 = vmatprep.subr.mxu0 0.0
    %2232 = vmatpush1.msra.mxu0 0.0
    %2233 = vmatprep.subr.mxu0 0.0
    %2234 = vmatpush1.msra.mxu0 0.0
    %2235 = vmatprep.subr.mxu0 0.0
    %2236 = vmatpush1.msra.mxu0 0.0
    %2237 = vmatprep.subr.mxu0 0.0
    %2238 = vmatpush1.msra.mxu0 0.0
    %2239 = vmatprep.subr.mxu0 0.0
    %2240 = vmatpush1.msra.mxu0 0.0
    %2241 = vmatprep.subr.mxu0 0.0
    %2242 = vmatpush1.msra.mxu0 0.0
    %2243 = vmatprep.subr.mxu0 0.0
    %2244 = vmatpush1.msra.mxu0 0.0
    %2245 = vmatprep.subr.mxu0 0.0
    %2246 = vmatpush1.msra.mxu0 0.0
    %2247 = vmatprep.subr.mxu0 0.0
    %2248 = vmatpush1.msra.mxu0 0.0
    %2249 = vmatprep.subr.mxu0 0.0
    %2250 = vmatpush1.msra.mxu0 0.0
    %2251 = vmatprep.subr.mxu0 0.0
    %2252 = vmatpush1.msra.mxu0 0.0
    %2253 = vmatprep.subr.mxu0 0.0
    %2254 = vmatpush1.msra.mxu0 0.0
    %2255 = vmatprep.subr.mxu0 0.0
    %2256 = vmatpush1.msra.mxu0 0.0
    %2257 = vmatprep.subr.mxu0 0.0
    %2258 = vmatpush1.msra.mxu0 0.0
    %2259 = vmatprep.mubr.f32.mxu0 0.0
    %2260 = vmatmul.mubr.f32.gmra.mrb[0].mxu0 %v2090
    %v2261 = vpop.f32.mrb[0].mxu0
    %v2262 = vadd.f32 0.0, %v2261
    %v2263 = vpop.f32.mrb[0].mxu0
    %2264 = vdwg.mxu0
    %2265 = vmatprep.subr.mxu0 %v689
    %2266 = vmatpush1.msra.mxu0 %v688
    %2267 = vmatprep.subr.mxu0 %v692
    %2268 = vmatpush1.msra.mxu0 %v691
    %2269 = vmatprep.subr.mxu0 %v695
    %2270 = vmatpush1.msra.mxu0 %v694
    %2271 = vmatprep.subr.mxu0 %v698
    %2272 = vmatpush1.msra.mxu0 %v697
    %2273 = vmatprep.subr.mxu0 %v701
    %2274 = vmatpush1.msra.mxu0 %v700
    %2275 = vmatprep.subr.mxu0 %v704
    %2276 = vmatpush1.msra.mxu0 %v703
    %2277 = vmatprep.subr.mxu0 %v707
    %2278 = vmatpush1.msra.mxu0 %v706
    %2279 = vmatprep.subr.mxu0 %v710
    %2280 = vmatpush1.msra.mxu0 %v709
    %2281 = vmatprep.subr.mxu0 %v713
    %2282 = vmatpush1.msra.mxu0 %v712
    %2283 = vmatprep.subr.mxu0 %v716
    %2284 = vmatpush1.msra.mxu0 %v715
    %2285 = vmatprep.subr.mxu0 %v719
    %2286 = vmatpush1.msra.mxu0 %v718
    %2287 = vmatprep.subr.mxu0 %v722
    %2288 = vmatpush1.msra.mxu0 %v721
    %2289 = vmatprep.subr.mxu0 %v725
    %2290 = vmatpush1.msra.mxu0 %v724
    %2291 = vmatprep.subr.mxu0 %v728
    %2292 = vmatpush1.msra.mxu0 %v727
    %2293 = vmatprep.subr.mxu0 %v731
    %2294 = vmatpush1.msra.mxu0 %v730
    %2295 = vmatprep.subr.mxu0 %v734
    %2296 = vmatpush1.msra.mxu0 %v733
    %2297 = vmatprep.subr.mxu0 0.0
    %2298 = vmatpush1.msra.mxu0 0.0
    %2299 = vmatprep.subr.mxu0 0.0
    %2300 = vmatpush1.msra.mxu0 0.0
    %2301 = vmatprep.subr.mxu0 0.0
    %2302 = vmatpush1.msra.mxu0 0.0
    %2303 = vmatprep.subr.mxu0 0.0
    %2304 = vmatpush1.msra.mxu0 0.0
    %2305 = vmatprep.subr.mxu0 0.0
    %2306 = vmatpush1.msra.mxu0 0.0
    %2307 = vmatprep.subr.mxu0 0.0
    %2308 = vmatpush1.msra.mxu0 0.0
    %2309 = vmatprep.subr.mxu0 0.0
    %2310 = vmatpush1.msra.mxu0 0.0
    %2311 = vmatprep.subr.mxu0 0.0
    %2312 = vmatpush1.msra.mxu0 0.0
    %2313 = vmatprep.subr.mxu0 0.0
    %2314 = vmatpush1.msra.mxu0 0.0
    %2315 = vmatprep.subr.mxu0 0.0
    %2316 = vmatpush1.msra.mxu0 0.0
    %2317 = vmatprep.subr.mxu0 0.0
    %2318 = vmatpush1.msra.mxu0 0.0
    %2319 = vmatprep.subr.mxu0 0.0
    %2320 = vmatpush1.msra.mxu0 0.0
    %2321 = vmatprep.subr.mxu0 0.0
    %2322 = vmatpush1.msra.mxu0 0.0
    %2323 = vmatprep.subr.mxu0 0.0
    %2324 = vmatpush1.msra.mxu0 0.0
    %2325 = vmatprep.subr.mxu0 0.0
    %2326 = vmatpush1.msra.mxu0 0.0
    %2327 = vmatprep.subr.mxu0 0.0
    %2328 = vmatpush1.msra.mxu0 0.0
    %2329 = vmatprep.mubr.f32.mxu0 0.0
    %2330 = vmatmul.mubr.f32.gmra.mrb[0].mxu0 %v2119
    %v2331 = vpop.f32.mrb[0].mxu0
    %v2332 = vadd.f32 0.0, %v2331
    %v2333 = vpop.f32.mrb[0].mxu0
    %v2334 = vadd.f32 0.0, %v2333
    %2335 = vdwg.mxu0
    %2336 = vmatprep.subr.mxu0 0.0
    %2337 = vmatpush1.msra.mxu0 %v690
    %2338 = vmatprep.subr.mxu0 0.0
    %2339 = vmatpush1.msra.mxu0 %v693
    %2340 = vmatprep.subr.mxu0 0.0
    %2341 = vmatpush1.msra.mxu0 %v696
    %2342 = vmatprep.subr.mxu0 0.0
    %2343 = vmatpush1.msra.mxu0 %v699
    %2344 = vmatprep.subr.mxu0 0.0
    %2345 = vmatpush1.msra.mxu0 %v702
    %2346 = vmatprep.subr.mxu0 0.0
    %2347 = vmatpush1.msra.mxu0 %v705
    %2348 = vmatprep.subr.mxu0 0.0
    %2349 = vmatpush1.msra.mxu0 %v708
    %2350 = vmatprep.subr.mxu0 0.0
    %2351 = vmatpush1.msra.mxu0 %v711
    %2352 = vmatprep.subr.mxu0 0.0
    %2353 = vmatpush1.msra.mxu0 %v714
    %2354 = vmatprep.subr.mxu0 0.0
    %2355 = vmatpush1.msra.mxu0 %v717
    %2356 = vmatprep.subr.mxu0 0.0
    %2357 = vmatpush1.msra.mxu0 %v720
    %2358 = vmatprep.subr.mxu0 0.0
    %2359 = vmatpush1.msra.mxu0 %v723
    %2360 = vmatprep.subr.mxu0 0.0
    %2361 = vmatpush1.msra.mxu0 %v726
    %2362 = vmatprep.subr.mxu0 0.0
    %2363 = vmatpush1.msra.mxu0 %v729
    %2364 = vmatprep.subr.mxu0 0.0
    %2365 = vmatpush1.msra.mxu0 %v732
    %2366 = vmatprep.subr.mxu0 0.0
    %2367 = vmatpush1.msra.mxu0 %v735
    %2368 = vmatprep.subr.mxu0 0.0
    %2369 = vmatpush1.msra.mxu0 0.0
    %2370 = vmatprep.subr.mxu0 0.0
    %2371 = vmatpush1.msra.mxu0 0.0
    %2372 = vmatprep.subr.mxu0 0.0
    %2373 = vmatpush1.msra.mxu0 0.0
    %2374 = vmatprep.subr.mxu0 0.0
    %2375 = vmatpush1.msra.mxu0 0.0
    %2376 = vmatprep.subr.mxu0 0.0
    %2377 = vmatpush1.msra.mxu0 0.0
    %2378 = vmatprep.subr.mxu0 0.0
    %2379 = vmatpush1.msra.mxu0 0.0
    %2380 = vmatprep.subr.mxu0 0.0
    %2381 = vmatpush1.msra.mxu0 0.0
    %2382 = vmatprep.subr.mxu0 0.0
    %2383 = vmatpush1.msra.mxu0 0.0
    %2384 = vmatprep.subr.mxu0 0.0
    %2385 = vmatpush1.msra.mxu0 0.0
    %2386 = vmatprep.subr.mxu0 0.0
    %2387 = vmatpush1.msra.mxu0 0.0
    %2388 = vmatprep.subr.mxu0 0.0
    %2389 = vmatpush1.msra.mxu0 0.0
    %2390 = vmatprep.subr.mxu0 0.0
    %2391 = vmatpush1.msra.mxu0 0.0
    %2392 = vmatprep.subr.mxu0 0.0
    %2393 = vmatpush1.msra.mxu0 0.0
    %2394 = vmatprep.subr.mxu0 0.0
    %2395 = vmatpush1.msra.mxu0 0.0
    %2396 = vmatprep.subr.mxu0 0.0
    %2397 = vmatpush1.msra.mxu0 0.0
    %2398 = vmatprep.subr.mxu0 0.0
    %2399 = vmatpush1.msra.mxu0 0.0
    %2400 = vmatprep.mubr.f32.mxu0 0.0
    %2401 = vmatmul.mubr.f32.gmra.mrb[0].mxu0 %v2119
    %v2402 = vpop.f32.mrb[0].mxu0
    %v2403 = vadd.f32 0.0, %v2402
    %v2404 = vpop.f32.mrb[0].mxu0
    %2405 = vdwg.mxu0
    %v2406 = vld [vmem:[%s2091] sm:$0x3f]
    %v2407 = vadd.f32 %v2406, %v2191
    %v2408 = vxor.u32 %v2407, 2147483648
    %v2409 = vmul.f32 %v2408, 1.442695
    %v2410 = vpow.pop %v2409
    %v2411 = vadd.f32 %v2410, 1.0
    %v2412 = vrcp.pop %v2411
    %v2413 = vmul.f32 1.0, %v2412
    %v2415 = vrot.slane %v2406, 2
    %v2417 = vadd.f32 %v2415, %v2193
    %v2418 = vxor.u32 %v2417, 2147483648
    %v2419 = vmul.f32 %v2418, 1.442695
    %v2420 = vpow.pop %v2419
    %v2421 = vadd.f32 %v2420, 1.0
    %v2422 = vrcp.pop %v2421
    %v2423 = vmul.f32 1.0, %v2422
    %v2424 = vadd.f32 %v2262, %v741
    %v2425 = vmul.f32 %v2413, %v2424
    %v2426 = vrot.slane %v2406, 4
    %v2428 = vadd.f32 %v2426, %v2425
    %v2429 = vtanh.pop %v2428
    %v2430 = vsub.f32 1.0, %v2423
    %v2431 = vmul.f32 %v2430, %v2429
    %v2432 = vmul.f32 %v2423, %v2090
    %v2433 = vadd.f32 %v2431, %v2432
    %v2434 = vld [vmem:[%s2062 + $0x6] sm:$0x3f]
    %v2435 = vadd.f32 %v2434, %v2332
    %v2436 = vxor.u32 %v2435, 2147483648
    %v2437 = vmul.f32 %v2436, 1.442695
    %v2438 = vpow.pop %v2437
    %v2439 = vadd.f32 %v2438, 1.0
    %v2440 = vrcp.pop %v2439
    %v2441 = vmul.f32 1.0, %v2440
    %v2443 = vrot.slane %v2434, 2
    %v2445 = vadd.f32 %v2443, %v2334
    %v2446 = vxor.u32 %v2445, 2147483648
    %v2447 = vmul.f32 %v2446, 1.442695
    %v2448 = vpow.pop %v2447
    %v2449 = vadd.f32 %v2448, 1.0
    %v2450 = vrcp.pop %v2449
    %v2451 = vmul.f32 1.0, %v2450
    %v2452 = vadd.f32 %v2403, %v748
    %v2453 = vmul.f32 %v2441, %v2452
    %v2454 = vrot.slane %v2434, 4
    %v2456 = vadd.f32 %v2454, %v2453
    %v2457 = vtanh.pop %v2456
    %v2458 = vsub.f32 1.0, %v2451
    %v2459 = vmul.f32 %v2458, %v2457
    %v2460 = vmul.f32 %v2451, %v2119
    %v2461 = vadd.f32 %v2459, %v2460
    %2462 = vst [vmem:[%s2122] sm:$0x3] %v2433
    %2463 = vst [vmem:[%s2120 + $0x2] sm:$0x3] %v2461
    %2464 = vmatprep.subr.mxu0 %v641
    %2465 = vmatpush1.msra.mxu0 %v640
    %2466 = vmatprep.subr.mxu0 %v644
    %2467 = vmatpush1.msra.mxu0 %v643
    %2468 = vmatprep.subr.mxu0 %v647
    %2469 = vmatpush1.msra.mxu0 %v646
    %2470 = vmatprep.subr.mxu0 %v650
    %2471 = vmatpush1.msra.mxu0 %v649
    %2472 = vmatprep.subr.mxu0 %v653
    %2473 = vmatpush1.msra.mxu0 %v652
    %2474 = vmatprep.subr.mxu0 %v656
    %2475 = vmatpush1.msra.mxu0 %v655
    %2476 = vmatprep.subr.mxu0 %v659
    %2477 = vmatpush1.msra.mxu0 %v658
    %2478 = vmatprep.subr.mxu0 %v662
    %2479 = vmatpush1.msra.mxu0 %v661
    %2480 = vmatprep.subr.mxu0 %v665
    %2481 = vmatpush1.msra.mxu0 %v664
    %2482 = vmatprep.subr.mxu0 %v668
    %2483 = vmatpush1.msra.mxu0 %v667
    %2484 = vmatprep.subr.mxu0 %v671
    %2485 = vmatpush1.msra.mxu0 %v670
    %2486 = vmatprep.subr.mxu0 %v674
    %2487 = vmatpush1.msra.mxu0 %v673
    %2488 = vmatprep.subr.mxu0 %v677
    %2489 = vmatpush1.msra.mxu0 %v676
    %2490 = vmatprep.subr.mxu0 %v680
    %2491 = vmatpush1.msra.mxu0 %v679
    %2492 = vmatprep.subr.mxu0 %v683
    %2493 = vmatpush1.msra.mxu0 %v682
    %2494 = vmatprep.subr.mxu0 %v686
    %2495 = vmatpush1.msra.mxu0 %v685
    %2496 = vmatprep.subr.mxu0 0.0
    %2497 = vmatpush1.msra.mxu0 0.0
    %2498 = vmatprep.subr.mxu0 0.0
    %2499 = vmatpush1.msra.mxu0 0.0
    %2500 = vmatprep.subr.mxu0 0.0
    %2501 = vmatpush1.msra.mxu0 0.0
    %2502 = vmatprep.subr.mxu0 0.0
    %2503 = vmatpush1.msra.mxu0 0.0
    %2504 = vmatprep.subr.mxu0 0.0
    %2505 = vmatpush1.msra.mxu0 0.0
    %2506 = vmatprep.subr.mxu0 0.0
    %2507 = vmatpush1.msra.mxu0 0.0
    %2508 = vmatprep.subr.mxu0 0.0
    %2509 = vmatpush1.msra.mxu0 0.0
    %2510 = vmatprep.subr.mxu0 0.0
    %2511 = vmatpush1.msra.mxu0 0.0
    %2512 = vmatprep.subr.mxu0 0.0
    %2513 = vmatpush1.msra.mxu0 0.0
    %2514 = vmatprep.subr.mxu0 0.0
    %2515 = vmatpush1.msra.mxu0 0.0
    %2516 = vmatprep.subr.mxu0 0.0
    %2517 = vmatpush1.msra.mxu0 0.0
    %2518 = vmatprep.subr.mxu0 0.0
    %2519 = vmatpush1.msra.mxu0 0.0
    %2520 = vmatprep.subr.mxu0 0.0
    %2521 = vmatpush1.msra.mxu0 0.0
    %2522 = vmatprep.subr.mxu0 0.0
    %2523 = vmatpush1.msra.mxu0 0.0
    %2524 = vmatprep.subr.mxu0 0.0
    %2525 = vmatpush1.msra.mxu0 0.0
    %2526 = vmatprep.subr.mxu0 0.0
    %2527 = vmatpush1.msra.mxu0 0.0
    %2528 = vmatprep.mubr.f32.mxu0 0.0
    %2529 = vmatmul.mubr.f32.gmra.mrb[0].mxu0 %v2433
    %v2530 = vpop.f32.mrb[0].mxu0
    %v2531 = vadd.f32 0.0, %v2530
    %v2532 = vpop.f32.mrb[0].mxu0
    %v2533 = vadd.f32 0.0, %v2532
    %2534 = vdwg.mxu0
    %2535 = vmatprep.subr.mxu0 0.0
    %2536 = vmatpush1.msra.mxu0 %v642
    %2537 = vmatprep.subr.mxu0 0.0
    %2538 = vmatpush1.msra.mxu0 %v645
    %2539 = vmatprep.subr.mxu0 0.0
    %2540 = vmatpush1.msra.mxu0 %v648
    %2541 = vmatprep.subr.mxu0 0.0
    %2542 = vmatpush1.msra.mxu0 %v651
    %2543 = vmatprep.subr.mxu0 0.0
    %2544 = vmatpush1.msra.mxu0 %v654
    %2545 = vmatprep.subr.mxu0 0.0
    %2546 = vmatpush1.msra.mxu0 %v657
    %2547 = vmatprep.subr.mxu0 0.0
    %2548 = vmatpush1.msra.mxu0 %v660
    %2549 = vmatprep.subr.mxu0 0.0
    %2550 = vmatpush1.msra.mxu0 %v663
    %2551 = vmatprep.subr.mxu0 0.0
    %2552 = vmatpush1.msra.mxu0 %v666
    %2553 = vmatprep.subr.mxu0 0.0
    %2554 = vmatpush1.msra.mxu0 %v669
    %2555 = vmatprep.subr.mxu0 0.0
    %2556 = vmatpush1.msra.mxu0 %v672
    %2557 = vmatprep.subr.mxu0 0.0
    %2558 = vmatpush1.msra.mxu0 %v675
    %2559 = vmatprep.subr.mxu0 0.0
    %2560 = vmatpush1.msra.mxu0 %v678
    %2561 = vmatprep.subr.mxu0 0.0
    %2562 = vmatpush1.msra.mxu0 %v681
    %2563 = vmatprep.subr.mxu0 0.0
    %2564 = vmatpush1.msra.mxu0 %v684
    %2565 = vmatprep.subr.mxu0 0.0
    %2566 = vmatpush1.msra.mxu0 %v687
    %2567 = vmatprep.subr.mxu0 0.0
    %2568 = vmatpush1.msra.mxu0 0.0
    %2569 = vmatprep.subr.mxu0 0.0
    %2570 = vmatpush1.msra.mxu0 0.0
    %2571 = vmatprep.subr.mxu0 0.0
    %2572 = vmatpush1.msra.mxu0 0.0
    %2573 = vmatprep.subr.mxu0 0.0
    %2574 = vmatpush1.msra.mxu0 0.0
    %2575 = vmatprep.subr.mxu0 0.0
    %2576 = vmatpush1.msra.mxu0 0.0
    %2577 = vmatprep.subr.mxu0 0.0
    %2578 = vmatpush1.msra.mxu0 0.0
    %2579 = vmatprep.subr.mxu0 0.0
    %2580 = vmatpush1.msra.mxu0 0.0
    %2581 = vmatprep.subr.mxu0 0.0
    %2582 = vmatpush1.msra.mxu0 0.0
    %2583 = vmatprep.subr.mxu0 0.0
    %2584 = vmatpush1.msra.mxu0 0.0
    %2585 = vmatprep.subr.mxu0 0.0
    %2586 = vmatpush1.msra.mxu0 0.0
    %2587 = vmatprep.subr.mxu0 0.0
    %2588 = vmatpush1.msra.mxu0 0.0
    %2589 = vmatprep.subr.mxu0 0.0
    %2590 = vmatpush1.msra.mxu0 0.0
    %2591 = vmatprep.subr.mxu0 0.0
    %2592 = vmatpush1.msra.mxu0 0.0
    %2593 = vmatprep.subr.mxu0 0.0
    %2594 = vmatpush1.msra.mxu0 0.0
    %2595 = vmatprep.subr.mxu0 0.0
    %2596 = vmatpush1.msra.mxu0 0.0
    %2597 = vmatprep.subr.mxu0 0.0
    %2598 = vmatpush1.msra.mxu0 0.0
    %2599 = vmatprep.mubr.f32.mxu0 0.0
    %2600 = vmatmul.mubr.f32.gmra.mrb[0].mxu0 %v2433
    %v2601 = vpop.f32.mrb[0].mxu0
    %v2602 = vadd.f32 0.0, %v2601
    %v2603 = vpop.f32.mrb[0].mxu0
    %2604 = vdwg.mxu0
    %2605 = vmatprep.subr.mxu0 %v689
    %2606 = vmatpush1.msra.mxu0 %v688
    %2607 = vmatprep.subr.mxu0 %v692
    %2608 = vmatpush1.msra.mxu0 %v691
    %2609 = vmatprep.subr.mxu0 %v695
    %2610 = vmatpush1.msra.mxu0 %v694
    %2611 = vmatprep.subr.mxu0 %v698
    %2612 = vmatpush1.msra.mxu0 %v697
    %2613 = vmatprep.subr.mxu0 %v701
    %2614 = vmatpush1.msra.mxu0 %v700
    %2615 = vmatprep.subr.mxu0 %v704
    %2616 = vmatpush1.msra.mxu0 %v703
    %2617 = vmatprep.subr.mxu0 %v707
    %2618 = vmatpush1.msra.mxu0 %v706
    %2619 = vmatprep.subr.mxu0 %v710
    %2620 = vmatpush1.msra.mxu0 %v709
    %2621 = vmatprep.subr.mxu0 %v713
    %2622 = vmatpush1.msra.mxu0 %v712
    %2623 = vmatprep.subr.mxu0 %v716
    %2624 = vmatpush1.msra.mxu0 %v715
    %2625 = vmatprep.subr.mxu0 %v719
    %2626 = vmatpush1.msra.mxu0 %v718
    %2627 = vmatprep.subr.mxu0 %v722
    %2628 = vmatpush1.msra.mxu0 %v721
    %2629 = vmatprep.subr.mxu0 %v725
    %2630 = vmatpush1.msra.mxu0 %v724
    %2631 = vmatprep.subr.mxu0 %v728
    %2632 = vmatpush1.msra.mxu0 %v727
    %2633 = vmatprep.subr.mxu0 %v731
    %2634 = vmatpush1.msra.mxu0 %v730
    %2635 = vmatprep.subr.mxu0 %v734
    %2636 = vmatpush1.msra.mxu0 %v733
    %2637 = vmatprep.subr.mxu0 0.0
    %2638 = vmatpush1.msra.mxu0 0.0
    %2639 = vmatprep.subr.mxu0 0.0
    %2640 = vmatpush1.msra.mxu0 0.0
    %2641 = vmatprep.subr.mxu0 0.0
    %2642 = vmatpush1.msra.mxu0 0.0
    %2643 = vmatprep.subr.mxu0 0.0
    %2644 = vmatpush1.msra.mxu0 0.0
    %2645 = vmatprep.subr.mxu0 0.0
    %2646 = vmatpush1.msra.mxu0 0.0
    %2647 = vmatprep.subr.mxu0 0.0
    %2648 = vmatpush1.msra.mxu0 0.0
    %2649 = vmatprep.subr.mxu0 0.0
    %2650 = vmatpush1.msra.mxu0 0.0
    %2651 = vmatprep.subr.mxu0 0.0
    %2652 = vmatpush1.msra.mxu0 0.0
    %2653 = vmatprep.subr.mxu0 0.0
    %2654 = vmatpush1.msra.mxu0 0.0
    %2655 = vmatprep.subr.mxu0 0.0
    %2656 = vmatpush1.msra.mxu0 0.0
    %2657 = vmatprep.subr.mxu0 0.0
    %2658 = vmatpush1.msra.mxu0 0.0
    %2659 = vmatprep.subr.mxu0 0.0
    %2660 = vmatpush1.msra.mxu0 0.0
    %2661 = vmatprep.subr.mxu0 0.0
    %2662 = vmatpush1.msra.mxu0 0.0
    %2663 = vmatprep.subr.mxu0 0.0
    %2664 = vmatpush1.msra.mxu0 0.0
    %2665 = vmatprep.subr.mxu0 0.0
    %2666 = vmatpush1.msra.mxu0 0.0
    %2667 = vmatprep.subr.mxu0 0.0
    %2668 = vmatpush1.msra.mxu0 0.0
    %2669 = vmatprep.mubr.f32.mxu0 0.0
    %2670 = vmatmul.mubr.f32.gmra.mrb[0].mxu0 %v2461
    %v2671 = vpop.f32.mrb[0].mxu0
    %v2672 = vadd.f32 0.0, %v2671
    %v2673 = vpop.f32.mrb[0].mxu0
    %v2674 = vadd.f32 0.0, %v2673
    %2675 = vdwg.mxu0
    %2676 = vmatprep.subr.mxu0 0.0
    %2677 = vmatpush1.msra.mxu0 %v690
    %2678 = vmatprep.subr.mxu0 0.0
    %2679 = vmatpush1.msra.mxu0 %v693
    %2680 = vmatprep.subr.mxu0 0.0
    %2681 = vmatpush1.msra.mxu0 %v696
    %2682 = vmatprep.subr.mxu0 0.0
    %2683 = vmatpush1.msra.mxu0 %v699
    %2684 = vmatprep.subr.mxu0 0.0
    %2685 = vmatpush1.msra.mxu0 %v702
    %2686 = vmatprep.subr.mxu0 0.0
    %2687 = vmatpush1.msra.mxu0 %v705
    %2688 = vmatprep.subr.mxu0 0.0
    %2689 = vmatpush1.msra.mxu0 %v708
    %2690 = vmatprep.subr.mxu0 0.0
    %2691 = vmatpush1.msra.mxu0 %v711
    %2692 = vmatprep.subr.mxu0 0.0
    %2693 = vmatpush1.msra.mxu0 %v714
    %2694 = vmatprep.subr.mxu0 0.0
    %2695 = vmatpush1.msra.mxu0 %v717
    %2696 = vmatprep.subr.mxu0 0.0
    %2697 = vmatpush1.msra.mxu0 %v720
    %2698 = vmatprep.subr.mxu0 0.0
    %2699 = vmatpush1.msra.mxu0 %v723
    %2700 = vmatprep.subr.mxu0 0.0
    %2701 = vmatpush1.msra.mxu0 %v726
    %2702 = vmatprep.subr.mxu0 0.0
    %2703 = vmatpush1.msra.mxu0 %v729
    %2704 = vmatprep.subr.mxu0 0.0
    %2705 = vmatpush1.msra.mxu0 %v732
    %2706 = vmatprep.subr.mxu0 0.0
    %2707 = vmatpush1.msra.mxu0 %v735
    %2708 = vmatprep.subr.mxu0 0.0
    %2709 = vmatpush1.msra.mxu0 0.0
    %2710 = vmatprep.subr.mxu0 0.0
    %2711 = vmatpush1.msra.mxu0 0.0
    %2712 = vmatprep.subr.mxu0 0.0
    %2713 = vmatpush1.msra.mxu0 0.0
    %2714 = vmatprep.subr.mxu0 0.0
    %2715 = vmatpush1.msra.mxu0 0.0
    %2716 = vmatprep.subr.mxu0 0.0
    %2717 = vmatpush1.msra.mxu0 0.0
    %2718 = vmatprep.subr.mxu0 0.0
    %2719 = vmatpush1.msra.mxu0 0.0
    %2720 = vmatprep.subr.mxu0 0.0
    %2721 = vmatpush1.msra.mxu0 0.0
    %2722 = vmatprep.subr.mxu0 0.0
    %2723 = vmatpush1.msra.mxu0 0.0
    %2724 = vmatprep.subr.mxu0 0.0
    %2725 = vmatpush1.msra.mxu0 0.0
    %2726 = vmatprep.subr.mxu0 0.0
    %2727 = vmatpush1.msra.mxu0 0.0
    %2728 = vmatprep.subr.mxu0 0.0
    %2729 = vmatpush1.msra.mxu0 0.0
    %2730 = vmatprep.subr.mxu0 0.0
    %2731 = vmatpush1.msra.mxu0 0.0
    %2732 = vmatprep.subr.mxu0 0.0
    %2733 = vmatpush1.msra.mxu0 0.0
    %2734 = vmatprep.subr.mxu0 0.0
    %2735 = vmatpush1.msra.mxu0 0.0
    %2736 = vmatprep.subr.mxu0 0.0
    %2737 = vmatpush1.msra.mxu0 0.0
    %2738 = vmatprep.subr.mxu0 0.0
    %2739 = vmatpush1.msra.mxu0 0.0
    %2740 = vmatprep.mubr.f32.mxu0 0.0
    %2741 = vmatmul.mubr.f32.gmra.mrb[0].mxu0 %v2461
    %v2742 = vpop.f32.mrb[0].mxu0
    %v2743 = vadd.f32 0.0, %v2742
    %v2744 = vpop.f32.mrb[0].mxu0
    %2745 = vdwg.mxu0
    %v2746 = vld [vmem:[%s1747] sm:$0x3f]
    %v2747 = vadd.f32 %v2746, %v2531
    %v2748 = vxor.u32 %v2747, 2147483648
    %v2749 = vmul.f32 %v2748, 1.442695
    %v2750 = vpow.pop %v2749
    %v2751 = vadd.f32 %v2750, 1.0
    %v2752 = vrcp.pop %v2751
    %v2753 = vmul.f32 1.0, %v2752
    %v2755 = vrot.slane %v2746, 2
    %v2757 = vadd.f32 %v2755, %v2533
    %v2758 = vxor.u32 %v2757, 2147483648
    %v2759 = vmul.f32 %v2758, 1.442695
    %v2760 = vpow.pop %v2759
    %v2761 = vadd.f32 %v2760, 1.0
    %v2762 = vrcp.pop %v2761
    %v2763 = vmul.f32 1.0, %v2762
    %v2764 = vadd.f32 %v2602, %v741
    %v2765 = vmul.f32 %v2753, %v2764
    %v2766 = vrot.slane %v2746, 4
    %v2768 = vadd.f32 %v2766, %v2765
    %v2769 = vtanh.pop %v2768
    %v2770 = vsub.f32 1.0, %v2763
    %v2771 = vmul.f32 %v2770, %v2769
    %v2772 = vmul.f32 %v2763, %v2433
    %v2773 = vadd.f32 %v2771, %v2772
    %v2774 = vld [vmem:[%s1718 + $0x6] sm:$0x3f]
    %v2775 = vadd.f32 %v2774, %v2672
    %v2776 = vxor.u32 %v2775, 2147483648
    %v2777 = vmul.f32 %v2776, 1.442695
    %v2778 = vpow.pop %v2777
    %v2779 = vadd.f32 %v2778, 1.0
    %v2780 = vrcp.pop %v2779
    %v2781 = vmul.f32 1.0, %v2780
    %v2783 = vrot.slane %v2774, 2
    %v2785 = vadd.f32 %v2783, %v2674
    %v2786 = vxor.u32 %v2785, 2147483648
    %v2787 = vmul.f32 %v2786, 1.442695
    %v2788 = vpow.pop %v2787
    %v2789 = vadd.f32 %v2788, 1.0
    %v2790 = vrcp.pop %v2789
    %v2791 = vmul.f32 1.0, %v2790
    %v2792 = vadd.f32 %v2743, %v748
    %v2793 = vmul.f32 %v2781, %v2792
    %v2794 = vrot.slane %v2774, 4
    %v2796 = vadd.f32 %v2794, %v2793
    %v2797 = vtanh.pop %v2796
    %v2798 = vsub.f32 1.0, %v2791
    %v2799 = vmul.f32 %v2798, %v2797
    %v2800 = vmul.f32 %v2791, %v2461
    %v2801 = vadd.f32 %v2799, %v2800
    %2802 = vst [vmem:[%s1778] sm:$0x3] %v2773
    %2803 = vst [vmem:[%s1776 + $0x2] sm:$0x3] %v2801
    %2804 = vmatprep.subr.mxu0 %v641
    %2805 = vmatpush1.msra.mxu0 %v640
    %2806 = vmatprep.subr.mxu0 %v644
    %2807 = vmatpush1.msra.mxu0 %v643
    %2808 = vmatprep.subr.mxu0 %v647
    %2809 = vmatpush1.msra.mxu0 %v646
    %2810 = vmatprep.subr.mxu0 %v650
    %2811 = vmatpush1.msra.mxu0 %v649
    %2812 = vmatprep.subr.mxu0 %v653
    %2813 = vmatpush1.msra.mxu0 %v652
    %2814 = vmatprep.subr.mxu0 %v656
    %2815 = vmatpush1.msra.mxu0 %v655
    %2816 = vmatprep.subr.mxu0 %v659
    %2817 = vmatpush1.msra.mxu0 %v658
    %2818 = vmatprep.subr.mxu0 %v662
    %2819 = vmatpush1.msra.mxu0 %v661
    %2820 = vmatprep.subr.mxu0 %v665
    %2821 = vmatpush1.msra.mxu0 %v664
    %2822 = vmatprep.subr.mxu0 %v668
    %2823 = vmatpush1.msra.mxu0 %v667
    %2824 = vmatprep.subr.mxu0 %v671
    %2825 = vmatpush1.msra.mxu0 %v670
    %2826 = vmatprep.subr.mxu0 %v674
    %2827 = vmatpush1.msra.mxu0 %v673
    %2828 = vmatprep.subr.mxu0 %v677
    %2829 = vmatpush1.msra.mxu0 %v676
    %2830 = vmatprep.subr.mxu0 %v680
    %2831 = vmatpush1.msra.mxu0 %v679
    %2832 = vmatprep.subr.mxu0 %v683
    %2833 = vmatpush1.msra.mxu0 %v682
    %2834 = vmatprep.subr.mxu0 %v686
    %2835 = vmatpush1.msra.mxu0 %v685
    %2836 = vmatprep.subr.mxu0 0.0
    %2837 = vmatpush1.msra.mxu0 0.0
    %2838 = vmatprep.subr.mxu0 0.0
    %2839 = vmatpush1.msra.mxu0 0.0
    %2840 = vmatprep.subr.mxu0 0.0
    %2841 = vmatpush1.msra.mxu0 0.0
    %2842 = vmatprep.subr.mxu0 0.0
    %2843 = vmatpush1.msra.mxu0 0.0
    %2844 = vmatprep.subr.mxu0 0.0
    %2845 = vmatpush1.msra.mxu0 0.0
    %2846 = vmatprep.subr.mxu0 0.0
    %2847 = vmatpush1.msra.mxu0 0.0
    %2848 = vmatprep.subr.mxu0 0.0
    %2849 = vmatpush1.msra.mxu0 0.0
    %2850 = vmatprep.subr.mxu0 0.0
    %2851 = vmatpush1.msra.mxu0 0.0
    %2852 = vmatprep.subr.mxu0 0.0
    %2853 = vmatpush1.msra.mxu0 0.0
    %2854 = vmatprep.subr.mxu0 0.0
    %2855 = vmatpush1.msra.mxu0 0.0
    %2856 = vmatprep.subr.mxu0 0.0
    %2857 = vmatpush1.msra.mxu0 0.0
    %2858 = vmatprep.subr.mxu0 0.0
    %2859 = vmatpush1.msra.mxu0 0.0
    %2860 = vmatprep.subr.mxu0 0.0
    %2861 = vmatpush1.msra.mxu0 0.0
    %2862 = vmatprep.subr.mxu0 0.0
    %2863 = vmatpush1.msra.mxu0 0.0
    %2864 = vmatprep.subr.mxu0 0.0
    %2865 = vmatpush1.msra.mxu0 0.0
    %2866 = vmatprep.subr.mxu0 0.0
    %2867 = vmatpush1.msra.mxu0 0.0
    %2868 = vmatprep.mubr.f32.mxu0 0.0
    %2869 = vmatmul.mubr.f32.gmra.mrb[0].mxu0 %v2773
    %v2870 = vpop.f32.mrb[0].mxu0
    %v2871 = vadd.f32 0.0, %v2870
    %v2872 = vpop.f32.mrb[0].mxu0
    %v2873 = vadd.f32 0.0, %v2872
    %2874 = vdwg.mxu0
    %2875 = vmatprep.subr.mxu0 0.0
    %2876 = vmatpush1.msra.mxu0 %v642
    %2877 = vmatprep.subr.mxu0 0.0
    %2878 = vmatpush1.msra.mxu0 %v645
    %2879 = vmatprep.subr.mxu0 0.0
    %2880 = vmatpush1.msra.mxu0 %v648
    %2881 = vmatprep.subr.mxu0 0.0
    %2882 = vmatpush1.msra.mxu0 %v651
    %2883 = vmatprep.subr.mxu0 0.0
    %2884 = vmatpush1.msra.mxu0 %v654
    %2885 = vmatprep.subr.mxu0 0.0
    %2886 = vmatpush1.msra.mxu0 %v657
    %2887 = vmatprep.subr.mxu0 0.0
    %2888 = vmatpush1.msra.mxu0 %v660
    %2889 = vmatprep.subr.mxu0 0.0
    %2890 = vmatpush1.msra.mxu0 %v663
    %2891 = vmatprep.subr.mxu0 0.0
    %2892 = vmatpush1.msra.mxu0 %v666
    %2893 = vmatprep.subr.mxu0 0.0
    %2894 = vmatpush1.msra.mxu0 %v669
    %2895 = vmatprep.subr.mxu0 0.0
    %2896 = vmatpush1.msra.mxu0 %v672
    %2897 = vmatprep.subr.mxu0 0.0
    %2898 = vmatpush1.msra.mxu0 %v675
    %2899 = vmatprep.subr.mxu0 0.0
    %2900 = vmatpush1.msra.mxu0 %v678
    %2901 = vmatprep.subr.mxu0 0.0
    %2902 = vmatpush1.msra.mxu0 %v681
    %2903 = vmatprep.subr.mxu0 0.0
    %2904 = vmatpush1.msra.mxu0 %v684
    %2905 = vmatprep.subr.mxu0 0.0
    %2906 = vmatpush1.msra.mxu0 %v687
    %2907 = vmatprep.subr.mxu0 0.0
    %2908 = vmatpush1.msra.mxu0 0.0
    %2909 = vmatprep.subr.mxu0 0.0
    %2910 = vmatpush1.msra.mxu0 0.0
    %2911 = vmatprep.subr.mxu0 0.0
    %2912 = vmatpush1.msra.mxu0 0.0
    %2913 = vmatprep.subr.mxu0 0.0
    %2914 = vmatpush1.msra.mxu0 0.0
    %2915 = vmatprep.subr.mxu0 0.0
    %2916 = vmatpush1.msra.mxu0 0.0
    %2917 = vmatprep.subr.mxu0 0.0
    %2918 = vmatpush1.msra.mxu0 0.0
    %2919 = vmatprep.subr.mxu0 0.0
    %2920 = vmatpush1.msra.mxu0 0.0
    %2921 = vmatprep.subr.mxu0 0.0
    %2922 = vmatpush1.msra.mxu0 0.0
    %2923 = vmatprep.subr.mxu0 0.0
    %2924 = vmatpush1.msra.mxu0 0.0
    %2925 = vmatprep.subr.mxu0 0.0
    %2926 = vmatpush1.msra.mxu0 0.0
    %2927 = vmatprep.subr.mxu0 0.0
    %2928 = vmatpush1.msra.mxu0 0.0
    %2929 = vmatprep.subr.mxu0 0.0
    %2930 = vmatpush1.msra.mxu0 0.0
    %2931 = vmatprep.subr.mxu0 0.0
    %2932 = vmatpush1.msra.mxu0 0.0
    %2933 = vmatprep.subr.mxu0 0.0
    %2934 = vmatpush1.msra.mxu0 0.0
    %2935 = vmatprep.subr.mxu0 0.0
    %2936 = vmatpush1.msra.mxu0 0.0
    %2937 = vmatprep.subr.mxu0 0.0
    %2938 = vmatpush1.msra.mxu0 0.0
    %2939 = vmatprep.mubr.f32.mxu0 0.0
    %2940 = vmatmul.mubr.f32.gmra.mrb[0].mxu0 %v2773
    %v2941 = vpop.f32.mrb[0].mxu0
    %v2942 = vadd.f32 0.0, %v2941
    %v2943 = vpop.f32.mrb[0].mxu0
    %2944 = vdwg.mxu0
    %2945 = vmatprep.subr.mxu0 %v689
    %2946 = vmatpush1.msra.mxu0 %v688
    %2947 = vmatprep.subr.mxu0 %v692
    %2948 = vmatpush1.msra.mxu0 %v691
    %2949 = vmatprep.subr.mxu0 %v695
    %2950 = vmatpush1.msra.mxu0 %v694
    %2951 = vmatprep.subr.mxu0 %v698
    %2952 = vmatpush1.msra.mxu0 %v697
    %2953 = vmatprep.subr.mxu0 %v701
    %2954 = vmatpush1.msra.mxu0 %v700
    %2955 = vmatprep.subr.mxu0 %v704
    %2956 = vmatpush1.msra.mxu0 %v703
    %2957 = vmatprep.subr.mxu0 %v707
    %2958 = vmatpush1.msra.mxu0 %v706
    %2959 = vmatprep.subr.mxu0 %v710
    %2960 = vmatpush1.msra.mxu0 %v709
    %2961 = vmatprep.subr.mxu0 %v713
    %2962 = vmatpush1.msra.mxu0 %v712
    %2963 = vmatprep.subr.mxu0 %v716
    %2964 = vmatpush1.msra.mxu0 %v715
    %2965 = vmatprep.subr.mxu0 %v719
    %2966 = vmatpush1.msra.mxu0 %v718
    %2967 = vmatprep.subr.mxu0 %v722
    %2968 = vmatpush1.msra.mxu0 %v721
    %2969 = vmatprep.subr.mxu0 %v725
    %2970 = vmatpush1.msra.mxu0 %v724
    %2971 = vmatprep.subr.mxu0 %v728
    %2972 = vmatpush1.msra.mxu0 %v727
    %2973 = vmatprep.subr.mxu0 %v731
    %2974 = vmatpush1.msra.mxu0 %v730
    %2975 = vmatprep.subr.mxu0 %v734
    %2976 = vmatpush1.msra.mxu0 %v733
    %2977 = vmatprep.subr.mxu0 0.0
    %2978 = vmatpush1.msra.mxu0 0.0
    %2979 = vmatprep.subr.mxu0 0.0
    %2980 = vmatpush1.msra.mxu0 0.0
    %2981 = vmatprep.subr.mxu0 0.0
    %2982 = vmatpush1.msra.mxu0 0.0
    %2983 = vmatprep.subr.mxu0 0.0
    %2984 = vmatpush1.msra.mxu0 0.0
    %2985 = vmatprep.subr.mxu0 0.0
    %2986 = vmatpush1.msra.mxu0 0.0
    %2987 = vmatprep.subr.mxu0 0.0
    %2988 = vmatpush1.msra.mxu0 0.0
    %2989 = vmatprep.subr.mxu0 0.0
    %2990 = vmatpush1.msra.mxu0 0.0
    %2991 = vmatprep.subr.mxu0 0.0
    %2992 = vmatpush1.msra.mxu0 0.0
    %2993 = vmatprep.subr.mxu0 0.0
    %2994 = vmatpush1.msra.mxu0 0.0
    %2995 = vmatprep.subr.mxu0 0.0
    %2996 = vmatpush1.msra.mxu0 0.0
    %2997 = vmatprep.subr.mxu0 0.0
    %2998 = vmatpush1.msra.mxu0 0.0
    %2999 = vmatprep.subr.mxu0 0.0
    %3000 = vmatpush1.msra.mxu0 0.0
    %3001 = vmatprep.subr.mxu0 0.0
    %3002 = vmatpush1.msra.mxu0 0.0
    %3003 = vmatprep.subr.mxu0 0.0
    %3004 = vmatpush1.msra.mxu0 0.0
    %3005 = vmatprep.subr.mxu0 0.0
    %3006 = vmatpush1.msra.mxu0 0.0
    %3007 = vmatprep.subr.mxu0 0.0
    %3008 = vmatpush1.msra.mxu0 0.0
    %3009 = vmatprep.mubr.f32.mxu0 0.0
    %3010 = vmatmul.mubr.f32.gmra.mrb[0].mxu0 %v2801
    %v3011 = vpop.f32.mrb[0].mxu0
    %v3012 = vadd.f32 0.0, %v3011
    %v3013 = vpop.f32.mrb[0].mxu0
    %v3014 = vadd.f32 0.0, %v3013
    %3015 = vdwg.mxu0
    %3016 = vmatprep.subr.mxu0 0.0
    %3017 = vmatpush1.msra.mxu0 %v690
    %3018 = vmatprep.subr.mxu0 0.0
    %3019 = vmatpush1.msra.mxu0 %v693
    %3020 = vmatprep.subr.mxu0 0.0
    %3021 = vmatpush1.msra.mxu0 %v696
    %3022 = vmatprep.subr.mxu0 0.0
    %3023 = vmatpush1.msra.mxu0 %v699
    %3024 = vmatprep.subr.mxu0 0.0
    %3025 = vmatpush1.msra.mxu0 %v702
    %3026 = vmatprep.subr.mxu0 0.0
    %3027 = vmatpush1.msra.mxu0 %v705
    %3028 = vmatprep.subr.mxu0 0.0
    %3029 = vmatpush1.msra.mxu0 %v708
    %3030 = vmatprep.subr.mxu0 0.0
    %3031 = vmatpush1.msra.mxu0 %v711
    %3032 = vmatprep.subr.mxu0 0.0
    %3033 = vmatpush1.msra.mxu0 %v714
    %3034 = vmatprep.subr.mxu0 0.0
    %3035 = vmatpush1.msra.mxu0 %v717
    %3036 = vmatprep.subr.mxu0 0.0
    %3037 = vmatpush1.msra.mxu0 %v720
    %3038 = vmatprep.subr.mxu0 0.0
    %3039 = vmatpush1.msra.mxu0 %v723
    %3040 = vmatprep.subr.mxu0 0.0
    %3041 = vmatpush1.msra.mxu0 %v726
    %3042 = vmatprep.subr.mxu0 0.0
    %3043 = vmatpush1.msra.mxu0 %v729
    %3044 = vmatprep.subr.mxu0 0.0
    %3045 = vmatpush1.msra.mxu0 %v732
    %3046 = vmatprep.subr.mxu0 0.0
    %3047 = vmatpush1.msra.mxu0 %v735
    %3048 = vmatprep.subr.mxu0 0.0
    %3049 = vmatpush1.msra.mxu0 0.0
    %3050 = vmatprep.subr.mxu0 0.0
    %3051 = vmatpush1.msra.mxu0 0.0
    %3052 = vmatprep.subr.mxu0 0.0
    %3053 = vmatpush1.msra.mxu0 0.0
    %3054 = vmatprep.subr.mxu0 0.0
    %3055 = vmatpush1.msra.mxu0 0.0
    %3056 = vmatprep.subr.mxu0 0.0
    %3057 = vmatpush1.msra.mxu0 0.0
    %3058 = vmatprep.subr.mxu0 0.0
    %3059 = vmatpush1.msra.mxu0 0.0
    %3060 = vmatprep.subr.mxu0 0.0
    %3061 = vmatpush1.msra.mxu0 0.0
    %3062 = vmatprep.subr.mxu0 0.0
    %3063 = vmatpush1.msra.mxu0 0.0
    %3064 = vmatprep.subr.mxu0 0.0
    %3065 = vmatpush1.msra.mxu0 0.0
    %3066 = vmatprep.subr.mxu0 0.0
    %3067 = vmatpush1.msra.mxu0 0.0
    %3068 = vmatprep.subr.mxu0 0.0
    %3069 = vmatpush1.msra.mxu0 0.0
    %3070 = vmatprep.subr.mxu0 0.0
    %3071 = vmatpush1.msra.mxu0 0.0
    %3072 = vmatprep.subr.mxu0 0.0
    %3073 = vmatpush1.msra.mxu0 0.0
    %3074 = vmatprep.subr.mxu0 0.0
    %3075 = vmatpush1.msra.mxu0 0.0
    %3076 = vmatprep.subr.mxu0 0.0
    %3077 = vmatpush1.msra.mxu0 0.0
    %3078 = vmatprep.subr.mxu0 0.0
    %3079 = vmatpush1.msra.mxu0 0.0
    %3080 = vmatprep.mubr.f32.mxu0 0.0
    %3081 = vmatmul.mubr.f32.gmra.mrb[0].mxu0 %v2801
    %v3082 = vpop.f32.mrb[0].mxu0
    %v3083 = vadd.f32 0.0, %v3082
    %v3084 = vpop.f32.mrb[0].mxu0
    %3085 = vdwg.mxu0
    %v3086 = vld [vmem:[%s1403] sm:$0x3f]
    %v3087 = vadd.f32 %v3086, %v2871
    %v3088 = vxor.u32 %v3087, 2147483648
    %v3089 = vmul.f32 %v3088, 1.442695
    %v3090 = vpow.pop %v3089
    %v3091 = vadd.f32 %v3090, 1.0
    %v3092 = vrcp.pop %v3091
    %v3093 = vmul.f32 1.0, %v3092
    %v3095 = vrot.slane %v3086, 2
    %v3097 = vadd.f32 %v3095, %v2873
    %v3098 = vxor.u32 %v3097, 2147483648
    %v3099 = vmul.f32 %v3098, 1.442695
    %v3100 = vpow.pop %v3099
    %v3101 = vadd.f32 %v3100, 1.0
    %v3102 = vrcp.pop %v3101
    %v3103 = vmul.f32 1.0, %v3102
    %v3104 = vadd.f32 %v2942, %v741
    %v3105 = vmul.f32 %v3093, %v3104
    %v3106 = vrot.slane %v3086, 4
    %v3108 = vadd.f32 %v3106, %v3105
    %v3109 = vtanh.pop %v3108
    %v3110 = vsub.f32 1.0, %v3103
    %v3111 = vmul.f32 %v3110, %v3109
    %v3112 = vmul.f32 %v3103, %v2773
    %v3113 = vadd.f32 %v3111, %v3112
    %v3114 = vld [vmem:[%s1374 + $0x6] sm:$0x3f]
    %v3115 = vadd.f32 %v3114, %v3012
    %v3116 = vxor.u32 %v3115, 2147483648
    %v3117 = vmul.f32 %v3116, 1.442695
    %v3118 = vpow.pop %v3117
    %v3119 = vadd.f32 %v3118, 1.0
    %v3120 = vrcp.pop %v3119
    %v3121 = vmul.f32 1.0, %v3120
    %v3123 = vrot.slane %v3114, 2
    %v3125 = vadd.f32 %v3123, %v3014
    %v3126 = vxor.u32 %v3125, 2147483648
    %v3127 = vmul.f32 %v3126, 1.442695
    %v3128 = vpow.pop %v3127
    %v3129 = vadd.f32 %v3128, 1.0
    %v3130 = vrcp.pop %v3129
    %v3131 = vmul.f32 1.0, %v3130
    %v3132 = vadd.f32 %v3083, %v748
    %v3133 = vmul.f32 %v3121, %v3132
    %v3134 = vrot.slane %v3114, 4
    %v3136 = vadd.f32 %v3134, %v3133
    %v3137 = vtanh.pop %v3136
    %v3138 = vsub.f32 1.0, %v3131
    %v3139 = vmul.f32 %v3138, %v3137
    %v3140 = vmul.f32 %v3131, %v2801
    %v3141 = vadd.f32 %v3139, %v3140
    %3142 = vst [vmem:[%s1434] sm:$0x3] %v3113
    %3143 = vst [vmem:[%s1432 + $0x2] sm:$0x3] %v3141
    %3144 = vmatprep.subr.mxu0 %v641
    %3145 = vmatpush1.msra.mxu0 %v640
    %3146 = vmatprep.subr.mxu0 %v644
    %3147 = vmatpush1.msra.mxu0 %v643
    %3148 = vmatprep.subr.mxu0 %v647
    %3149 = vmatpush1.msra.mxu0 %v646
    %3150 = vmatprep.subr.mxu0 %v650
    %3151 = vmatpush1.msra.mxu0 %v649
    %3152 = vmatprep.subr.mxu0 %v653
    %3153 = vmatpush1.msra.mxu0 %v652
    %3154 = vmatprep.subr.mxu0 %v656
    %3155 = vmatpush1.msra.mxu0 %v655
    %3156 = vmatprep.subr.mxu0 %v659
    %3157 = vmatpush1.msra.mxu0 %v658
    %3158 = vmatprep.subr.mxu0 %v662
    %3159 = vmatpush1.msra.mxu0 %v661
    %3160 = vmatprep.subr.mxu0 %v665
    %3161 = vmatpush1.msra.mxu0 %v664
    %3162 = vmatprep.subr.mxu0 %v668
    %3163 = vmatpush1.msra.mxu0 %v667
    %3164 = vmatprep.subr.mxu0 %v671
    %3165 = vmatpush1.msra.mxu0 %v670
    %3166 = vmatprep.subr.mxu0 %v674
    %3167 = vmatpush1.msra.mxu0 %v673
    %3168 = vmatprep.subr.mxu0 %v677
    %3169 = vmatpush1.msra.mxu0 %v676
    %3170 = vmatprep.subr.mxu0 %v680
    %3171 = vmatpush1.msra.mxu0 %v679
    %3172 = vmatprep.subr.mxu0 %v683
    %3173 = vmatpush1.msra.mxu0 %v682
    %3174 = vmatprep.subr.mxu0 %v686
    %3175 = vmatpush1.msra.mxu0 %v685
    %3176 = vmatprep.subr.mxu0 0.0
    %3177 = vmatpush1.msra.mxu0 0.0
    %3178 = vmatprep.subr.mxu0 0.0
    %3179 = vmatpush1.msra.mxu0 0.0
    %3180 = vmatprep.subr.mxu0 0.0
    %3181 = vmatpush1.msra.mxu0 0.0
    %3182 = vmatprep.subr.mxu0 0.0
    %3183 = vmatpush1.msra.mxu0 0.0
    %3184 = vmatprep.subr.mxu0 0.0
    %3185 = vmatpush1.msra.mxu0 0.0
    %3186 = vmatprep.subr.mxu0 0.0
    %3187 = vmatpush1.msra.mxu0 0.0
    %3188 = vmatprep.subr.mxu0 0.0
    %3189 = vmatpush1.msra.mxu0 0.0
    %3190 = vmatprep.subr.mxu0 0.0
    %3191 = vmatpush1.msra.mxu0 0.0
    %3192 = vmatprep.subr.mxu0 0.0
    %3193 = vmatpush1.msra.mxu0 0.0
    %3194 = vmatprep.subr.mxu0 0.0
    %3195 = vmatpush1.msra.mxu0 0.0
    %3196 = vmatprep.subr.mxu0 0.0
    %3197 = vmatpush1.msra.mxu0 0.0
    %3198 = vmatprep.subr.mxu0 0.0
    %3199 = vmatpush1.msra.mxu0 0.0
    %3200 = vmatprep.subr.mxu0 0.0
    %3201 = vmatpush1.msra.mxu0 0.0
    %3202 = vmatprep.subr.mxu0 0.0
    %3203 = vmatpush1.msra.mxu0 0.0
    %3204 = vmatprep.subr.mxu0 0.0
    %3205 = vmatpush1.msra.mxu0 0.0
    %3206 = vmatprep.subr.mxu0 0.0
    %3207 = vmatpush1.msra.mxu0 0.0
    %3208 = vmatprep.mubr.f32.mxu0 0.0
    %3209 = vmatmul.mubr.f32.gmra.mrb[0].mxu0 %v3113
    %v3210 = vpop.f32.mrb[0].mxu0
    %v3211 = vadd.f32 0.0, %v3210
    %v3212 = vpop.f32.mrb[0].mxu0
    %v3213 = vadd.f32 0.0, %v3212
    %3214 = vdwg.mxu0
    %3215 = vmatprep.subr.mxu0 0.0
    %3216 = vmatpush1.msra.mxu0 %v642
    %3217 = vmatprep.subr.mxu0 0.0
    %3218 = vmatpush1.msra.mxu0 %v645
    %3219 = vmatprep.subr.mxu0 0.0
    %3220 = vmatpush1.msra.mxu0 %v648
    %3221 = vmatprep.subr.mxu0 0.0
    %3222 = vmatpush1.msra.mxu0 %v651
    %3223 = vmatprep.subr.mxu0 0.0
    %3224 = vmatpush1.msra.mxu0 %v654
    %3225 = vmatprep.subr.mxu0 0.0
    %3226 = vmatpush1.msra.mxu0 %v657
    %3227 = vmatprep.subr.mxu0 0.0
    %3228 = vmatpush1.msra.mxu0 %v660
    %3229 = vmatprep.subr.mxu0 0.0
    %3230 = vmatpush1.msra.mxu0 %v663
    %3231 = vmatprep.subr.mxu0 0.0
    %3232 = vmatpush1.msra.mxu0 %v666
    %3233 = vmatprep.subr.mxu0 0.0
    %3234 = vmatpush1.msra.mxu0 %v669
    %3235 = vmatprep.subr.mxu0 0.0
    %3236 = vmatpush1.msra.mxu0 %v672
    %3237 = vmatprep.subr.mxu0 0.0
    %3238 = vmatpush1.msra.mxu0 %v675
    %3239 = vmatprep.subr.mxu0 0.0
    %3240 = vmatpush1.msra.mxu0 %v678
    %3241 = vmatprep.subr.mxu0 0.0
    %3242 = vmatpush1.msra.mxu0 %v681
    %3243 = vmatprep.subr.mxu0 0.0
    %3244 = vmatpush1.msra.mxu0 %v684
    %3245 = vmatprep.subr.mxu0 0.0
    %3246 = vmatpush1.msra.mxu0 %v687
    %3247 = vmatprep.subr.mxu0 0.0
    %3248 = vmatpush1.msra.mxu0 0.0
    %3249 = vmatprep.subr.mxu0 0.0
    %3250 = vmatpush1.msra.mxu0 0.0
    %3251 = vmatprep.subr.mxu0 0.0
    %3252 = vmatpush1.msra.mxu0 0.0
    %3253 = vmatprep.subr.mxu0 0.0
    %3254 = vmatpush1.msra.mxu0 0.0
    %3255 = vmatprep.subr.mxu0 0.0
    %3256 = vmatpush1.msra.mxu0 0.0
    %3257 = vmatprep.subr.mxu0 0.0
    %3258 = vmatpush1.msra.mxu0 0.0
    %3259 = vmatprep.subr.mxu0 0.0
    %3260 = vmatpush1.msra.mxu0 0.0
    %3261 = vmatprep.subr.mxu0 0.0
    %3262 = vmatpush1.msra.mxu0 0.0
    %3263 = vmatprep.subr.mxu0 0.0
    %3264 = vmatpush1.msra.mxu0 0.0
    %3265 = vmatprep.subr.mxu0 0.0
    %3266 = vmatpush1.msra.mxu0 0.0
    %3267 = vmatprep.subr.mxu0 0.0
    %3268 = vmatpush1.msra.mxu0 0.0
    %3269 = vmatprep.subr.mxu0 0.0
    %3270 = vmatpush1.msra.mxu0 0.0
    %3271 = vmatprep.subr.mxu0 0.0
    %3272 = vmatpush1.msra.mxu0 0.0
    %3273 = vmatprep.subr.mxu0 0.0
    %3274 = vmatpush1.msra.mxu0 0.0
    %3275 = vmatprep.subr.mxu0 0.0
    %3276 = vmatpush1.msra.mxu0 0.0
    %3277 = vmatprep.subr.mxu0 0.0
    %3278 = vmatpush1.msra.mxu0 0.0
    %3279 = vmatprep.mubr.f32.mxu0 0.0
    %3280 = vmatmul.mubr.f32.gmra.mrb[0].mxu0 %v3113
    %v3281 = vpop.f32.mrb[0].mxu0
    %v3282 = vadd.f32 0.0, %v3281
    %v3283 = vpop.f32.mrb[0].mxu0
    %3284 = vdwg.mxu0
    %3285 = vmatprep.subr.mxu0 %v689
    %3286 = vmatpush1.msra.mxu0 %v688
    %3287 = vmatprep.subr.mxu0 %v692
    %3288 = vmatpush1.msra.mxu0 %v691
    %3289 = vmatprep.subr.mxu0 %v695
    %3290 = vmatpush1.msra.mxu0 %v694
    %3291 = vmatprep.subr.mxu0 %v698
    %3292 = vmatpush1.msra.mxu0 %v697
    %3293 = vmatprep.subr.mxu0 %v701
    %3294 = vmatpush1.msra.mxu0 %v700
    %3295 = vmatprep.subr.mxu0 %v704
    %3296 = vmatpush1.msra.mxu0 %v703
    %3297 = vmatprep.subr.mxu0 %v707
    %3298 = vmatpush1.msra.mxu0 %v706
    %3299 = vmatprep.subr.mxu0 %v710
    %3300 = vmatpush1.msra.mxu0 %v709
    %3301 = vmatprep.subr.mxu0 %v713
    %3302 = vmatpush1.msra.mxu0 %v712
    %3303 = vmatprep.subr.mxu0 %v716
    %3304 = vmatpush1.msra.mxu0 %v715
    %3305 = vmatprep.subr.mxu0 %v719
    %3306 = vmatpush1.msra.mxu0 %v718
    %3307 = vmatprep.subr.mxu0 %v722
    %3308 = vmatpush1.msra.mxu0 %v721
    %3309 = vmatprep.subr.mxu0 %v725
    %3310 = vmatpush1.msra.mxu0 %v724
    %3311 = vmatprep.subr.mxu0 %v728
    %3312 = vmatpush1.msra.mxu0 %v727
    %3313 = vmatprep.subr.mxu0 %v731
    %3314 = vmatpush1.msra.mxu0 %v730
    %3315 = vmatprep.subr.mxu0 %v734
    %3316 = vmatpush1.msra.mxu0 %v733
    %3317 = vmatprep.subr.mxu0 0.0
    %3318 = vmatpush1.msra.mxu0 0.0
    %3319 = vmatprep.subr.mxu0 0.0
    %3320 = vmatpush1.msra.mxu0 0.0
    %3321 = vmatprep.subr.mxu0 0.0
    %3322 = vmatpush1.msra.mxu0 0.0
    %3323 = vmatprep.subr.mxu0 0.0
    %3324 = vmatpush1.msra.mxu0 0.0
    %3325 = vmatprep.subr.mxu0 0.0
    %3326 = vmatpush1.msra.mxu0 0.0
    %3327 = vmatprep.subr.mxu0 0.0
    %3328 = vmatpush1.msra.mxu0 0.0
    %3329 = vmatprep.subr.mxu0 0.0
    %3330 = vmatpush1.msra.mxu0 0.0
    %3331 = vmatprep.subr.mxu0 0.0
    %3332 = vmatpush1.msra.mxu0 0.0
    %3333 = vmatprep.subr.mxu0 0.0
    %3334 = vmatpush1.msra.mxu0 0.0
    %3335 = vmatprep.subr.mxu0 0.0
    %3336 = vmatpush1.msra.mxu0 0.0
    %3337 = vmatprep.subr.mxu0 0.0
    %3338 = vmatpush1.msra.mxu0 0.0
    %3339 = vmatprep.subr.mxu0 0.0
    %3340 = vmatpush1.msra.mxu0 0.0
    %3341 = vmatprep.subr.mxu0 0.0
    %3342 = vmatpush1.msra.mxu0 0.0
    %3343 = vmatprep.subr.mxu0 0.0
    %3344 = vmatpush1.msra.mxu0 0.0
    %3345 = vmatprep.subr.mxu0 0.0
    %3346 = vmatpush1.msra.mxu0 0.0
    %3347 = vmatprep.subr.mxu0 0.0
    %3348 = vmatpush1.msra.mxu0 0.0
    %3349 = vmatprep.mubr.f32.mxu0 0.0
    %3350 = vmatmul.mubr.f32.gmra.mrb[0].mxu0 %v3141
    %v3351 = vpop.f32.mrb[0].mxu0
    %v3352 = vadd.f32 0.0, %v3351
    %v3353 = vpop.f32.mrb[0].mxu0
    %v3354 = vadd.f32 0.0, %v3353
    %3355 = vdwg.mxu0
    %3356 = vmatprep.subr.mxu0 0.0
    %3357 = vmatpush1.msra.mxu0 %v690
    %3358 = vmatprep.subr.mxu0 0.0
    %3359 = vmatpush1.msra.mxu0 %v693
    %3360 = vmatprep.subr.mxu0 0.0
    %3361 = vmatpush1.msra.mxu0 %v696
    %3362 = vmatprep.subr.mxu0 0.0
    %3363 = vmatpush1.msra.mxu0 %v699
    %3364 = vmatprep.subr.mxu0 0.0
    %3365 = vmatpush1.msra.mxu0 %v702
    %3366 = vmatprep.subr.mxu0 0.0
    %3367 = vmatpush1.msra.mxu0 %v705
    %3368 = vmatprep.subr.mxu0 0.0
    %3369 = vmatpush1.msra.mxu0 %v708
    %3370 = vmatprep.subr.mxu0 0.0
    %3371 = vmatpush1.msra.mxu0 %v711
    %3372 = vmatprep.subr.mxu0 0.0
    %3373 = vmatpush1.msra.mxu0 %v714
    %3374 = vmatprep.subr.mxu0 0.0
    %3375 = vmatpush1.msra.mxu0 %v717
    %3376 = vmatprep.subr.mxu0 0.0
    %3377 = vmatpush1.msra.mxu0 %v720
    %3378 = vmatprep.subr.mxu0 0.0
    %3379 = vmatpush1.msra.mxu0 %v723
    %3380 = vmatprep.subr.mxu0 0.0
    %3381 = vmatpush1.msra.mxu0 %v726
    %3382 = vmatprep.subr.mxu0 0.0
    %3383 = vmatpush1.msra.mxu0 %v729
    %3384 = vmatprep.subr.mxu0 0.0
    %3385 = vmatpush1.msra.mxu0 %v732
    %3386 = vmatprep.subr.mxu0 0.0
    %3387 = vmatpush1.msra.mxu0 %v735
    %3388 = vmatprep.subr.mxu0 0.0
    %3389 = vmatpush1.msra.mxu0 0.0
    %3390 = vmatprep.subr.mxu0 0.0
    %3391 = vmatpush1.msra.mxu0 0.0
    %3392 = vmatprep.subr.mxu0 0.0
    %3393 = vmatpush1.msra.mxu0 0.0
    %3394 = vmatprep.subr.mxu0 0.0
    %3395 = vmatpush1.msra.mxu0 0.0
    %3396 = vmatprep.subr.mxu0 0.0
    %3397 = vmatpush1.msra.mxu0 0.0
    %3398 = vmatprep.subr.mxu0 0.0
    %3399 = vmatpush1.msra.mxu0 0.0
    %3400 = vmatprep.subr.mxu0 0.0
    %3401 = vmatpush1.msra.mxu0 0.0
    %3402 = vmatprep.subr.mxu0 0.0
    %3403 = vmatpush1.msra.mxu0 0.0
    %3404 = vmatprep.subr.mxu0 0.0
    %3405 = vmatpush1.msra.mxu0 0.0
    %3406 = vmatprep.subr.mxu0 0.0
    %3407 = vmatpush1.msra.mxu0 0.0
    %3408 = vmatprep.subr.mxu0 0.0
    %3409 = vmatpush1.msra.mxu0 0.0
    %3410 = vmatprep.subr.mxu0 0.0
    %3411 = vmatpush1.msra.mxu0 0.0
    %3412 = vmatprep.subr.mxu0 0.0
    %3413 = vmatpush1.msra.mxu0 0.0
    %3414 = vmatprep.subr.mxu0 0.0
    %3415 = vmatpush1.msra.mxu0 0.0
    %3416 = vmatprep.subr.mxu0 0.0
    %3417 = vmatpush1.msra.mxu0 0.0
    %3418 = vmatprep.subr.mxu0 0.0
    %3419 = vmatpush1.msra.mxu0 0.0
    %3420 = vmatprep.mubr.f32.mxu0 0.0
    %3421 = vmatmul.mubr.f32.gmra.mrb[0].mxu0 %v3141
    %v3422 = vpop.f32.mrb[0].mxu0
    %v3423 = vadd.f32 0.0, %v3422
    %v3424 = vpop.f32.mrb[0].mxu0
    %3425 = vdwg.mxu0
    %v3426 = vld [vmem:[%s1060] sm:$0x3f]
    %v3427 = vadd.f32 %v3426, %v3211
    %v3428 = vxor.u32 %v3427, 2147483648
    %v3429 = vmul.f32 %v3428, 1.442695
    %v3430 = vpow.pop %v3429
    %v3431 = vadd.f32 %v3430, 1.0
    %v3432 = vrcp.pop %v3431
    %v3433 = vmul.f32 1.0, %v3432
    %v3435 = vrot.slane %v3426, 2
    %v3437 = vadd.f32 %v3435, %v3213
    %v3438 = vxor.u32 %v3437, 2147483648
    %v3439 = vmul.f32 %v3438, 1.442695
    %v3440 = vpow.pop %v3439
    %v3441 = vadd.f32 %v3440, 1.0
    %v3442 = vrcp.pop %v3441
    %v3443 = vmul.f32 1.0, %v3442
    %v3444 = vadd.f32 %v3282, %v741
    %v3445 = vmul.f32 %v3433, %v3444
    %v3446 = vrot.slane %v3426, 4
    %v3448 = vadd.f32 %v3446, %v3445
    %v3449 = vtanh.pop %v3448
    %v3450 = vsub.f32 1.0, %v3443
    %v3451 = vmul.f32 %v3450, %v3449
    %v3452 = vmul.f32 %v3443, %v3113
    %v3453 = vadd.f32 %v3451, %v3452
    %v3454 = vld [vmem:[#allocation2 + $0x6] sm:$0x3f]
    %v3455 = vadd.f32 %v3454, %v3352
    %v3456 = vxor.u32 %v3455, 2147483648
    %v3457 = vmul.f32 %v3456, 1.442695
    %v3458 = vpow.pop %v3457
    %v3459 = vadd.f32 %v3458, 1.0
    %v3460 = vrcp.pop %v3459
    %v3461 = vmul.f32 1.0, %v3460
    %v3463 = vrot.slane %v3454, 2
    %v3465 = vadd.f32 %v3463, %v3354
    %v3466 = vxor.u32 %v3465, 2147483648
    %v3467 = vmul.f32 %v3466, 1.442695
    %v3468 = vpow.pop %v3467
    %v3469 = vadd.f32 %v3468, 1.0
    %v3470 = vrcp.pop %v3469
    %v3471 = vmul.f32 1.0, %v3470
    %v3472 = vadd.f32 %v3423, %v748
    %v3473 = vmul.f32 %v3461, %v3472
    %v3474 = vrot.slane %v3454, 4
    %v3476 = vadd.f32 %v3474, %v3473
    %v3477 = vtanh.pop %v3476
    %v3478 = vsub.f32 1.0, %v3471
    %v3479 = vmul.f32 %v3478, %v3477
    %v3480 = vmul.f32 %v3471, %v3141
    %v3481 = vadd.f32 %v3479, %v3480
    %3482 = vst [vmem:[%s1090] sm:$0x3] %v3453
    %3483 = vst [vmem:[#allocation3 + $0x2] sm:$0x3] %v3481
    %v3484 = vld [vmem:[#allocation3] sm:$0xf]
    %v3485 = vld [vmem:[#allocation3 + $0x4] sm:$0xf]
    %v3486 = vld [vmem:[#allocation3 + $0x8] sm:$0xf]
    %v3487 = vld [vmem:[#allocation3 + $0xc] sm:$0xf]
    %v3488 = vld [vmem:[#allocation3 + $0x10] sm:$0xf]
    %v3489 = vld [vmem:[#allocation3 + $0x14] sm:$0xf]
    %v3490 = vld [vmem:[#allocation3 + $0x18] sm:$0xf]
    %v3491 = vld [vmem:[#allocation3 + $0x1c] sm:$0xf]
    %v3500 = vcombine.low %v3484, %v3485
    %v3501 = vcombine.low %v3486, %v3487
    %v3503 = vunpack.c.l.s4 1983009808
    %v3504 = vunpack.c.0.s8 %v3503
    %v3505 = vlaneseq
    %v3506 = vshrl.u32 %v3505, 7
    %v3507 = vsub.s32 %v3504, %v3506
    %v3508 = vrot.slane %v3500, %v3507
    %v3510 = vunpack.c.l.s4 1983009808
    %v3511 = vunpack.c.0.s8 %v3510
    %v3512 = vlaneseq
    %v3513 = vshrl.u32 %v3512, 7
    %v3514 = vsub.s32 %v3511, %v3513
    %v3515 = vrot.slane %v3501, %v3514
    %v3516 = vcombine.low %v3508, %v3515
    %v3517 = vcombine.high %v3508, %v3515
    %v3518 = vcombine.low %v3488, %v3489
    %v3519 = vcombine.low %v3490, %v3491
    %v3521 = vunpack.c.l.s4 1983009808
    %v3522 = vunpack.c.0.s8 %v3521
    %v3523 = vlaneseq
    %v3524 = vshrl.u32 %v3523, 7
    %v3525 = vsub.s32 %v3522, %v3524
    %v3526 = vrot.slane %v3518, %v3525
    %v3528 = vunpack.c.l.s4 1983009808
    %v3529 = vunpack.c.0.s8 %v3528
    %v3530 = vlaneseq
    %v3531 = vshrl.u32 %v3530, 7
    %v3532 = vsub.s32 %v3529, %v3531
    %v3533 = vrot.slane %v3519, %v3532
    %v3534 = vcombine.low %v3526, %v3533
    %v3535 = vcombine.high %v3526, %v3533
    %v3540 = vpack.c.bf16 %v3534, %v3516
    %v3541 = vpack.c.bf16 %v3535, %v3517
    %v3542 = vld [vmem:[#allocation9] sm:$0xff]
    %v3543 = vld [vmem:[#allocation9 + $0x8] sm:$0xff]
    %v3544 = vld [vmem:[#allocation9 + $0x10] sm:$0xff]
    %v3545 = vld [vmem:[#allocation9 + $0x18] sm:$0xff]
    %v3546 = vld [vmem:[#allocation9 + $0x20] sm:$0xff]
    %v3547 = vld [vmem:[#allocation9 + $0x28] sm:$0xff]
    %v3548 = vld [vmem:[#allocation9 + $0x30] sm:$0xff]
    %v3549 = vld [vmem:[#allocation9 + $0x38] sm:$0xff]
    %v3550 = vld [vmem:[#allocation9 + $0x40] sm:$0xff]
    %v3551 = vld [vmem:[#allocation9 + $0x48] sm:$0xff]
    %v3552 = vld [vmem:[#allocation9 + $0x50] sm:$0xff]
    %v3553 = vld [vmem:[#allocation9 + $0x58] sm:$0xff]
    %v3554 = vld [vmem:[#allocation9 + $0x60] sm:$0xff]
    %v3555 = vld [vmem:[#allocation9 + $0x68] sm:$0xff]
    %v3556 = vld [vmem:[#allocation9 + $0x70] sm:$0xff]
    %v3557 = vld [vmem:[#allocation9 + $0x78] sm:$0xff]
    %v3558 = vld [vmem:[#allocation9 + $0x80] sm:$0xff]
    %v3559 = vld [vmem:[#allocation9 + $0x88] sm:$0xff]
    %v3560 = vld [vmem:[#allocation9 + $0x90] sm:$0xff]
    %v3561 = vld [vmem:[#allocation9 + $0x98] sm:$0xff]
    %v3562 = vld [vmem:[#allocation9 + $0xa0] sm:$0xff]
    %v3563 = vld [vmem:[#allocation9 + $0xa8] sm:$0xff]
    %v3564 = vld [vmem:[#allocation9 + $0xb0] sm:$0xff]
    %v3565 = vld [vmem:[#allocation9 + $0xb8] sm:$0xff]
    %v3566 = vld [vmem:[#allocation9 + $0xc0] sm:$0xff]
    %v3567 = vld [vmem:[#allocation9 + $0xc8] sm:$0xff]
    %v3568 = vld [vmem:[#allocation9 + $0xd0] sm:$0xff]
    %v3569 = vld [vmem:[#allocation9 + $0xd8] sm:$0xff]
    %v3570 = vld [vmem:[#allocation9 + $0xe0] sm:$0xff]
    %v3571 = vld [vmem:[#allocation9 + $0xe8] sm:$0xff]
    %v3572 = vld [vmem:[#allocation9 + $0xf0] sm:$0xff]
    %v3573 = vld [vmem:[#allocation9 + $0xf8] sm:$0xff]
    %v3574 = vld [vmem:[#allocation9 + $0x100] sm:$0xff]
    %v3575 = vld [vmem:[#allocation9 + $0x108] sm:$0xff]
    %v3576 = vld [vmem:[#allocation9 + $0x110] sm:$0xff]
    %v3577 = vld [vmem:[#allocation9 + $0x118] sm:$0xff]
    %v3578 = vld [vmem:[#allocation9 + $0x120] sm:$0xff]
    %v3579 = vld [vmem:[#allocation9 + $0x128] sm:$0xff]
    %v3580 = vld [vmem:[#allocation9 + $0x130] sm:$0xff]
    %v3581 = vld [vmem:[#allocation9 + $0x138] sm:$0xff]
    %v3582 = vld [vmem:[#allocation9 + $0x140] sm:$0xff]
    %v3583 = vld [vmem:[#allocation9 + $0x148] sm:$0xff]
    %v3584 = vld [vmem:[#allocation9 + $0x150] sm:$0xff]
    %v3585 = vld [vmem:[#allocation9 + $0x158] sm:$0xff]
    %v3586 = vld [vmem:[#allocation9 + $0x160] sm:$0xff]
    %v3587 = vld [vmem:[#allocation9 + $0x168] sm:$0xff]
    %v3588 = vld [vmem:[#allocation9 + $0x170] sm:$0xff]
    %v3589 = vld [vmem:[#allocation9 + $0x178] sm:$0xff]
    %v3590 = vld [vmem:[#allocation9 + $0x180] sm:$0xff]
    %v3591 = vld [vmem:[#allocation9 + $0x188] sm:$0xff]
    %v3592 = vld [vmem:[#allocation9 + $0x190] sm:$0xff]
    %v3593 = vld [vmem:[#allocation9 + $0x198] sm:$0xff]
    %v3594 = vld [vmem:[#allocation9 + $0x1a0] sm:$0xff]
    %v3595 = vld [vmem:[#allocation9 + $0x1a8] sm:$0xff]
    %v3596 = vld [vmem:[#allocation9 + $0x1b0] sm:$0xff]
    %v3597 = vld [vmem:[#allocation9 + $0x1b8] sm:$0xff]
    %v3598 = vld [vmem:[#allocation9 + $0x1c0] sm:$0xff]
    %v3599 = vld [vmem:[#allocation9 + $0x1c8] sm:$0xff]
    %v3600 = vld [vmem:[#allocation9 + $0x1d0] sm:$0xff]
    %v3601 = vld [vmem:[#allocation9 + $0x1d8] sm:$0xff]
    %v3602 = vld [vmem:[#allocation9 + $0x1e0] sm:$0xff]
    %v3603 = vld [vmem:[#allocation9 + $0x1e8] sm:$0xff]
    %v3604 = vld [vmem:[#allocation9 + $0x1f0] sm:$0xff]
    %v3605 = vld [vmem:[#allocation9 + $0x1f8] sm:$0xff]
    %v3606 = vld [vmem:[#allocation9 + $0x200] sm:$0xff]
    %v3607 = vld [vmem:[#allocation9 + $0x208] sm:$0xff]
    %v3608 = vld [vmem:[#allocation9 + $0x210] sm:$0xff]
    %v3609 = vld [vmem:[#allocation9 + $0x218] sm:$0xff]
    %v3610 = vld [vmem:[#allocation9 + $0x220] sm:$0xff]
    %v3611 = vld [vmem:[#allocation9 + $0x228] sm:$0xff]
    %v3612 = vld [vmem:[#allocation9 + $0x230] sm:$0xff]
    %v3613 = vld [vmem:[#allocation9 + $0x238] sm:$0xff]
    %v3614 = vld [vmem:[#allocation9 + $0x240] sm:$0xff]
    %v3615 = vld [vmem:[#allocation9 + $0x248] sm:$0xff]
    %v3616 = vld [vmem:[#allocation9 + $0x250] sm:$0xff]
    %v3617 = vld [vmem:[#allocation9 + $0x258] sm:$0xff]
    %v3618 = vld [vmem:[#allocation9 + $0x260] sm:$0xff]
    %v3619 = vld [vmem:[#allocation9 + $0x268] sm:$0xff]
    %v3620 = vld [vmem:[#allocation9 + $0x270] sm:$0xff]
    %v3621 = vld [vmem:[#allocation9 + $0x278] sm:$0xff]
    %v3622 = vld [vmem:[#allocation9 + $0x280] sm:$0xff]
    %v3623 = vld [vmem:[#allocation9 + $0x288] sm:$0xff]
    %v3624 = vld [vmem:[#allocation9 + $0x290] sm:$0xff]
    %v3625 = vld [vmem:[#allocation9 + $0x298] sm:$0xff]
    %v3626 = vld [vmem:[#allocation9 + $0x2a0] sm:$0xff]
    %v3627 = vld [vmem:[#allocation9 + $0x2a8] sm:$0xff]
    %v3628 = vld [vmem:[#allocation9 + $0x2b0] sm:$0xff]
    %v3629 = vld [vmem:[#allocation9 + $0x2b8] sm:$0xff]
    %v3630 = vld [vmem:[#allocation9 + $0x2c0] sm:$0xff]
    %v3631 = vld [vmem:[#allocation9 + $0x2c8] sm:$0xff]
    %v3632 = vld [vmem:[#allocation9 + $0x2d0] sm:$0xff]
    %v3633 = vld [vmem:[#allocation9 + $0x2d8] sm:$0xff]
    %v3634 = vld [vmem:[#allocation9 + $0x2e0] sm:$0xff]
    %v3635 = vld [vmem:[#allocation9 + $0x2e8] sm:$0xff]
    %v3636 = vld [vmem:[#allocation9 + $0x2f0] sm:$0xff]
    %v3637 = vld [vmem:[#allocation9 + $0x2f8] sm:$0xff]
    %v3638 = vld [vmem:[%s7] sm:$0x3f]
    %v3640 = vlaneseq
    %v3641 = vshrl.u32 %v3640, 7
    %v3642 = vsub.s32 0, %v3641
    %v3643 = vrot.slane %v3638, %v3642
    %v3644 = vlaneseq
    %v3645 = vshrl.u32 %v3644, 7
    %v3646 = vsub.s32 1, %v3645
    %v3647 = vrot.slane %v3638, %v3646
    %v3648 = vlaneseq
    %v3649 = vshrl.u32 %v3648, 7
    %v3650 = vsub.s32 2, %v3649
    %v3651 = vrot.slane %v3638, %v3650
    %v3652 = vlaneseq
    %v3653 = vshrl.u32 %v3652, 7
    %v3654 = vsub.s32 3, %v3653
    %v3655 = vrot.slane %v3638, %v3654
    %v3656 = vlaneseq
    %v3657 = vshrl.u32 %v3656, 7
    %v3658 = vsub.s32 4, %v3657
    %v3659 = vrot.slane %v3638, %v3658
    %v3660 = vlaneseq
    %v3661 = vshrl.u32 %v3660, 7
    %v3662 = vsub.s32 5, %v3661
    %v3663 = vrot.slane %v3638, %v3662
    %v3766 = vunpack.c.l.b16 %v3542
    %v3767 = vunpack.c.h.b16 %v3542
    %v3768 = vunpack.c.l.b16 %v3543
    %v3769 = vunpack.c.h.b16 %v3543
    %v3770 = vunpack.c.l.b16 %v3544
    %v3771 = vunpack.c.h.b16 %v3544
    %v3772 = vunpack.c.l.b16 %v3545
    %v3773 = vunpack.c.h.b16 %v3545
    %v3774 = vunpack.c.l.b16 %v3546
    %v3775 = vunpack.c.h.b16 %v3546
    %v3776 = vunpack.c.l.b16 %v3547
    %v3777 = vunpack.c.h.b16 %v3547
    %v3778 = vunpack.c.l.b16 %v3548
    %v3779 = vunpack.c.h.b16 %v3548
    %v3780 = vunpack.c.l.b16 %v3549
    %v3781 = vunpack.c.h.b16 %v3549
    %v3782 = vunpack.c.l.b16 %v3550
    %v3783 = vunpack.c.h.b16 %v3550
    %v3784 = vunpack.c.l.b16 %v3551
    %v3785 = vunpack.c.h.b16 %v3551
    %v3786 = vunpack.c.l.b16 %v3552
    %v3787 = vunpack.c.h.b16 %v3552
    %v3788 = vunpack.c.l.b16 %v3553
    %v3789 = vunpack.c.h.b16 %v3553
    %v3790 = vunpack.c.l.b16 %v3554
    %v3791 = vunpack.c.h.b16 %v3554
    %v3792 = vunpack.c.l.b16 %v3555
    %v3793 = vunpack.c.h.b16 %v3555
    %v3794 = vunpack.c.l.b16 %v3556
    %v3795 = vunpack.c.h.b16 %v3556
    %v3796 = vunpack.c.l.b16 %v3557
    %v3797 = vunpack.c.h.b16 %v3557
    %v3798 = vunpack.c.l.b16 %v3558
    %v3799 = vunpack.c.h.b16 %v3558
    %v3800 = vunpack.c.l.b16 %v3559
    %v3801 = vunpack.c.h.b16 %v3559
    %v3802 = vunpack.c.l.b16 %v3560
    %v3803 = vunpack.c.h.b16 %v3560
    %v3804 = vunpack.c.l.b16 %v3561
    %v3805 = vunpack.c.h.b16 %v3561
    %v3806 = vunpack.c.l.b16 %v3562
    %v3807 = vunpack.c.h.b16 %v3562
    %v3808 = vunpack.c.l.b16 %v3563
    %v3809 = vunpack.c.h.b16 %v3563
    %v3810 = vunpack.c.l.b16 %v3564
    %v3811 = vunpack.c.h.b16 %v3564
    %v3812 = vunpack.c.l.b16 %v3565
    %v3813 = vunpack.c.h.b16 %v3565
    %v3814 = vunpack.c.l.b16 %v3566
    %v3815 = vunpack.c.h.b16 %v3566
    %v3816 = vunpack.c.l.b16 %v3567
    %v3817 = vunpack.c.h.b16 %v3567
    %v3818 = vunpack.c.l.b16 %v3568
    %v3819 = vunpack.c.h.b16 %v3568
    %v3820 = vunpack.c.l.b16 %v3569
    %v3821 = vunpack.c.h.b16 %v3569
    %v3822 = vunpack.c.l.b16 %v3570
    %v3823 = vunpack.c.h.b16 %v3570
    %v3824 = vunpack.c.l.b16 %v3571
    %v3825 = vunpack.c.h.b16 %v3571
    %v3826 = vunpack.c.l.b16 %v3572
    %v3827 = vunpack.c.h.b16 %v3572
    %v3828 = vunpack.c.l.b16 %v3573
    %v3829 = vunpack.c.h.b16 %v3573
    %v3830 = vunpack.c.l.b16 %v3574
    %v3831 = vunpack.c.h.b16 %v3574
    %v3832 = vunpack.c.l.b16 %v3575
    %v3833 = vunpack.c.h.b16 %v3575
    %v3834 = vunpack.c.l.b16 %v3576
    %v3835 = vunpack.c.h.b16 %v3576
    %v3836 = vunpack.c.l.b16 %v3577
    %v3837 = vunpack.c.h.b16 %v3577
    %v3838 = vunpack.c.l.b16 %v3578
    %v3839 = vunpack.c.h.b16 %v3578
    %v3840 = vunpack.c.l.b16 %v3579
    %v3841 = vunpack.c.h.b16 %v3579
    %v3842 = vunpack.c.l.b16 %v3580
    %v3843 = vunpack.c.h.b16 %v3580
    %v3844 = vunpack.c.l.b16 %v3581
    %v3845 = vunpack.c.h.b16 %v3581
    %v3846 = vunpack.c.l.b16 %v3582
    %v3847 = vunpack.c.h.b16 %v3582
    %v3848 = vunpack.c.l.b16 %v3583
    %v3849 = vunpack.c.h.b16 %v3583
    %v3850 = vunpack.c.l.b16 %v3584
    %v3851 = vunpack.c.h.b16 %v3584
    %v3852 = vunpack.c.l.b16 %v3585
    %v3853 = vunpack.c.h.b16 %v3585
    %v3854 = vunpack.c.l.b16 %v3586
    %v3855 = vunpack.c.h.b16 %v3586
    %v3856 = vunpack.c.l.b16 %v3587
    %v3857 = vunpack.c.h.b16 %v3587
    %v3858 = vunpack.c.l.b16 %v3588
    %v3859 = vunpack.c.h.b16 %v3588
    %v3860 = vunpack.c.l.b16 %v3589
    %v3861 = vunpack.c.h.b16 %v3589
    %v3862 = vunpack.c.l.b16 %v3590
    %v3863 = vunpack.c.h.b16 %v3590
    %v3864 = vunpack.c.l.b16 %v3591
    %v3865 = vunpack.c.h.b16 %v3591
    %v3866 = vunpack.c.l.b16 %v3592
    %v3867 = vunpack.c.h.b16 %v3592
    %v3868 = vunpack.c.l.b16 %v3593
    %v3869 = vunpack.c.h.b16 %v3593
    %v3870 = vunpack.c.l.b16 %v3594
    %v3871 = vunpack.c.h.b16 %v3594
    %v3872 = vunpack.c.l.b16 %v3595
    %v3873 = vunpack.c.h.b16 %v3595
    %v3874 = vunpack.c.l.b16 %v3596
    %v3875 = vunpack.c.h.b16 %v3596
    %v3876 = vunpack.c.l.b16 %v3597
    %v3877 = vunpack.c.h.b16 %v3597
    %v3878 = vunpack.c.l.b16 %v3598
    %v3879 = vunpack.c.h.b16 %v3598
    %v3880 = vunpack.c.l.b16 %v3599
    %v3881 = vunpack.c.h.b16 %v3599
    %v3882 = vunpack.c.l.b16 %v3600
    %v3883 = vunpack.c.h.b16 %v3600
    %v3884 = vunpack.c.l.b16 %v3601
    %v3885 = vunpack.c.h.b16 %v3601
    %v3886 = vunpack.c.l.b16 %v3602
    %v3887 = vunpack.c.h.b16 %v3602
    %v3888 = vunpack.c.l.b16 %v3603
    %v3889 = vunpack.c.h.b16 %v3603
    %v3890 = vunpack.c.l.b16 %v3604
    %v3891 = vunpack.c.h.b16 %v3604
    %v3892 = vunpack.c.l.b16 %v3605
    %v3893 = vunpack.c.h.b16 %v3605
    %v3894 = vunpack.c.l.b16 %v3606
    %v3895 = vunpack.c.h.b16 %v3606
    %v3896 = vunpack.c.l.b16 %v3607
    %v3897 = vunpack.c.h.b16 %v3607
    %v3898 = vunpack.c.l.b16 %v3608
    %v3899 = vunpack.c.h.b16 %v3608
    %v3900 = vunpack.c.l.b16 %v3609
    %v3901 = vunpack.c.h.b16 %v3609
    %v3902 = vunpack.c.l.b16 %v3610
    %v3903 = vunpack.c.h.b16 %v3610
    %v3904 = vunpack.c.l.b16 %v3611
    %v3905 = vunpack.c.h.b16 %v3611
    %v3906 = vunpack.c.l.b16 %v3612
    %v3907 = vunpack.c.h.b16 %v3612
    %v3908 = vunpack.c.l.b16 %v3613
    %v3909 = vunpack.c.h.b16 %v3613
    %v3910 = vunpack.c.l.b16 %v3614
    %v3911 = vunpack.c.h.b16 %v3614
    %v3912 = vunpack.c.l.b16 %v3615
    %v3913 = vunpack.c.h.b16 %v3615
    %v3914 = vunpack.c.l.b16 %v3616
    %v3915 = vunpack.c.h.b16 %v3616
    %v3916 = vunpack.c.l.b16 %v3617
    %v3917 = vunpack.c.h.b16 %v3617
    %v3918 = vunpack.c.l.b16 %v3618
    %v3919 = vunpack.c.h.b16 %v3618
    %v3920 = vunpack.c.l.b16 %v3619
    %v3921 = vunpack.c.h.b16 %v3619
    %v3922 = vunpack.c.l.b16 %v3620
    %v3923 = vunpack.c.h.b16 %v3620
    %v3924 = vunpack.c.l.b16 %v3621
    %v3925 = vunpack.c.h.b16 %v3621
    %v3926 = vunpack.c.l.b16 %v3622
    %v3927 = vunpack.c.h.b16 %v3622
    %v3928 = vunpack.c.l.b16 %v3623
    %v3929 = vunpack.c.h.b16 %v3623
    %v3930 = vunpack.c.l.b16 %v3624
    %v3931 = vunpack.c.h.b16 %v3624
    %v3932 = vunpack.c.l.b16 %v3625
    %v3933 = vunpack.c.h.b16 %v3625
    %v3934 = vunpack.c.l.b16 %v3626
    %v3935 = vunpack.c.h.b16 %v3626
    %v3936 = vunpack.c.l.b16 %v3627
    %v3937 = vunpack.c.h.b16 %v3627
    %v3938 = vunpack.c.l.b16 %v3628
    %v3939 = vunpack.c.h.b16 %v3628
    %v3940 = vunpack.c.l.b16 %v3629
    %v3941 = vunpack.c.h.b16 %v3629
    %v3942 = vunpack.c.l.b16 %v3630
    %v3943 = vunpack.c.h.b16 %v3630
    %v3944 = vunpack.c.l.b16 %v3631
    %v3945 = vunpack.c.h.b16 %v3631
    %v3946 = vunpack.c.l.b16 %v3632
    %v3947 = vunpack.c.h.b16 %v3632
    %v3948 = vunpack.c.l.b16 %v3633
    %v3949 = vunpack.c.h.b16 %v3633
    %v3950 = vunpack.c.l.b16 %v3634
    %v3951 = vunpack.c.h.b16 %v3634
    %v3952 = vunpack.c.l.b16 %v3635
    %v3953 = vunpack.c.h.b16 %v3635
    %v3954 = vunpack.c.l.b16 %v3636
    %v3955 = vunpack.c.h.b16 %v3636
    %v3956 = vunpack.c.l.b16 %v3637
    %v3957 = vunpack.c.h.b16 %v3637
    %v3958 = vpack.c.b16 %v3772, %v3766
    %v3959 = vpack.c.b16 %v3773, %v3767
    %v3960 = vpack.c.b16 %v3774, %v3768
    %v3961 = vpack.c.b16 %v3775, %v3769
    %v3962 = vpack.c.b16 %v3776, %v3770
    %v3963 = vpack.c.b16 %v3777, %v3771
    %v3964 = vpack.c.b16 %v3784, %v3778
    %v3965 = vpack.c.b16 %v3785, %v3779
    %v3966 = vpack.c.b16 %v3786, %v3780
    %v3967 = vpack.c.b16 %v3787, %v3781
    %v3968 = vpack.c.b16 %v3788, %v3782
    %v3969 = vpack.c.b16 %v3789, %v3783
    %v3970 = vpack.c.b16 %v3796, %v3790
    %v3971 = vpack.c.b16 %v3797, %v3791
    %v3972 = vpack.c.b16 %v3798, %v3792
    %v3973 = vpack.c.b16 %v3799, %v3793
    %v3974 = vpack.c.b16 %v3800, %v3794
    %v3975 = vpack.c.b16 %v3801, %v3795
    %v3976 = vpack.c.b16 %v3808, %v3802
    %v3977 = vpack.c.b16 %v3809, %v3803
    %v3978 = vpack.c.b16 %v3810, %v3804
    %v3979 = vpack.c.b16 %v3811, %v3805
    %v3980 = vpack.c.b16 %v3812, %v3806
    %v3981 = vpack.c.b16 %v3813, %v3807
    %v3982 = vpack.c.b16 %v3820, %v3814
    %v3983 = vpack.c.b16 %v3821, %v3815
    %v3984 = vpack.c.b16 %v3822, %v3816
    %v3985 = vpack.c.b16 %v3823, %v3817
    %v3986 = vpack.c.b16 %v3824, %v3818
    %v3987 = vpack.c.b16 %v3825, %v3819
    %v3988 = vpack.c.b16 %v3832, %v3826
    %v3989 = vpack.c.b16 %v3833, %v3827
    %v3990 = vpack.c.b16 %v3834, %v3828
    %v3991 = vpack.c.b16 %v3835, %v3829
    %v3992 = vpack.c.b16 %v3836, %v3830
    %v3993 = vpack.c.b16 %v3837, %v3831
    %v3994 = vpack.c.b16 %v3844, %v3838
    %v3995 = vpack.c.b16 %v3845, %v3839
    %v3996 = vpack.c.b16 %v3846, %v3840
    %v3997 = vpack.c.b16 %v3847, %v3841
    %v3998 = vpack.c.b16 %v3848, %v3842
    %v3999 = vpack.c.b16 %v3849, %v3843
    %v4000 = vpack.c.b16 %v3856, %v3850
    %v4001 = vpack.c.b16 %v3857, %v3851
    %v4002 = vpack.c.b16 %v3858, %v3852
    %v4003 = vpack.c.b16 %v3859, %v3853
    %v4004 = vpack.c.b16 %v3860, %v3854
    %v4005 = vpack.c.b16 %v3861, %v3855
    %v4006 = vpack.c.b16 %v3868, %v3862
    %v4007 = vpack.c.b16 %v3869, %v3863
    %v4008 = vpack.c.b16 %v3870, %v3864
    %v4009 = vpack.c.b16 %v3871, %v3865
    %v4010 = vpack.c.b16 %v3872, %v3866
    %v4011 = vpack.c.b16 %v3873, %v3867
    %v4012 = vpack.c.b16 %v3880, %v3874
    %v4013 = vpack.c.b16 %v3881, %v3875
    %v4014 = vpack.c.b16 %v3882, %v3876
    %v4015 = vpack.c.b16 %v3883, %v3877
    %v4016 = vpack.c.b16 %v3884, %v3878
    %v4017 = vpack.c.b16 %v3885, %v3879
    %v4018 = vpack.c.b16 %v3892, %v3886
    %v4019 = vpack.c.b16 %v3893, %v3887
    %v4020 = vpack.c.b16 %v3894, %v3888
    %v4021 = vpack.c.b16 %v3895, %v3889
    %v4022 = vpack.c.b16 %v3896, %v3890
    %v4023 = vpack.c.b16 %v3897, %v3891
    %v4024 = vpack.c.b16 %v3904, %v3898
    %v4025 = vpack.c.b16 %v3905, %v3899
    %v4026 = vpack.c.b16 %v3906, %v3900
    %v4027 = vpack.c.b16 %v3907, %v3901
    %v4028 = vpack.c.b16 %v3908, %v3902
    %v4029 = vpack.c.b16 %v3909, %v3903
    %v4030 = vpack.c.b16 %v3916, %v3910
    %v4031 = vpack.c.b16 %v3917, %v3911
    %v4032 = vpack.c.b16 %v3918, %v3912
    %v4033 = vpack.c.b16 %v3919, %v3913
    %v4034 = vpack.c.b16 %v3920, %v3914
    %v4035 = vpack.c.b16 %v3921, %v3915
    %v4036 = vpack.c.b16 %v3928, %v3922
    %v4037 = vpack.c.b16 %v3929, %v3923
    %v4038 = vpack.c.b16 %v3930, %v3924
    %v4039 = vpack.c.b16 %v3931, %v3925
    %v4040 = vpack.c.b16 %v3932, %v3926
    %v4041 = vpack.c.b16 %v3933, %v3927
    %v4042 = vpack.c.b16 %v3940, %v3934
    %v4043 = vpack.c.b16 %v3941, %v3935
    %v4044 = vpack.c.b16 %v3942, %v3936
    %v4045 = vpack.c.b16 %v3943, %v3937
    %v4046 = vpack.c.b16 %v3944, %v3938
    %v4047 = vpack.c.b16 %v3945, %v3939
    %v4048 = vpack.c.b16 %v3952, %v3946
    %v4049 = vpack.c.b16 %v3953, %v3947
    %v4050 = vpack.c.b16 %v3954, %v3948
    %v4051 = vpack.c.b16 %v3955, %v3949
    %v4052 = vpack.c.b16 %v3956, %v3950
    %v4053 = vpack.c.b16 %v3957, %v3951
    %4150 = vmatprep.subr.bf16.mxu0 %v3959
    %4151 = vmatpush1.bf16.msra.mxu0 %v3958
    %4152 = vmatprep.subr.bf16.mxu0 %v3965
    %4153 = vmatpush1.bf16.msra.mxu0 %v3964
    %4154 = vmatprep.subr.bf16.mxu0 %v3971
    %4155 = vmatpush1.bf16.msra.mxu0 %v3970
    %4156 = vmatprep.subr.bf16.mxu0 %v3977
    %4157 = vmatpush1.bf16.msra.mxu0 %v3976
    %4158 = vmatprep.subr.bf16.mxu0 %v3983
    %4159 = vmatpush1.bf16.msra.mxu0 %v3982
    %4160 = vmatprep.subr.bf16.mxu0 %v3989
    %4161 = vmatpush1.bf16.msra.mxu0 %v3988
    %4162 = vmatprep.subr.bf16.mxu0 %v3995
    %4163 = vmatpush1.bf16.msra.mxu0 %v3994
    %4164 = vmatprep.subr.bf16.mxu0 %v4001
    %4165 = vmatpush1.bf16.msra.mxu0 %v4000
    %4166 = vmatprep.subr.bf16.mxu0 %v4007
    %4167 = vmatpush1.bf16.msra.mxu0 %v4006
    %4168 = vmatprep.subr.bf16.mxu0 %v4013
    %4169 = vmatpush1.bf16.msra.mxu0 %v4012
    %4170 = vmatprep.subr.bf16.mxu0 %v4019
    %4171 = vmatpush1.bf16.msra.mxu0 %v4018
    %4172 = vmatprep.subr.bf16.mxu0 %v4025
    %4173 = vmatpush1.bf16.msra.mxu0 %v4024
    %4174 = vmatprep.subr.bf16.mxu0 %v4031
    %4175 = vmatpush1.bf16.msra.mxu0 %v4030
    %4176 = vmatprep.subr.bf16.mxu0 %v4037
    %4177 = vmatpush1.bf16.msra.mxu0 %v4036
    %4178 = vmatprep.subr.bf16.mxu0 %v4043
    %4179 = vmatpush1.bf16.msra.mxu0 %v4042
    %4180 = vmatprep.subr.bf16.mxu0 %v4049
    %4181 = vmatpush1.bf16.msra.mxu0 %v4048
    %4182 = vmatprep.mubr.bf16.mxu0 %v3541
    %4183 = vmatmul.mubr.bf16.gmra.mrb[0].mxu0 %v3540
    %v4184 = vpop.f32.mrb[0].mxu0
    %v4185 = vadd.f32 %v3643, %v4184
    %v4186 = vpop.f32.mrb[0].mxu0
    %v4187 = vadd.f32 %v3647, %v4186
    %v4188 = vpop.f32.mrb[0].mxu0
    %v4189 = vadd.f32 %v3643, %v4188
    %v4190 = vpop.f32.mrb[0].mxu0
    %v4191 = vadd.f32 %v3647, %v4190
    %4192 = vdwg.mxu0
    %4193 = vmatprep.subr.bf16.mxu0 %v3961
    %4194 = vmatpush1.bf16.msra.mxu0 %v3960
    %4195 = vmatprep.subr.bf16.mxu0 %v3967
    %4196 = vmatpush1.bf16.msra.mxu0 %v3966
    %4197 = vmatprep.subr.bf16.mxu0 %v3973
    %4198 = vmatpush1.bf16.msra.mxu0 %v3972
    %4199 = vmatprep.subr.bf16.mxu0 %v3979
    %4200 = vmatpush1.bf16.msra.mxu0 %v3978
    %4201 = vmatprep.subr.bf16.mxu0 %v3985
    %4202 = vmatpush1.bf16.msra.mxu0 %v3984
    %4203 = vmatprep.subr.bf16.mxu0 %v3991
    %4204 = vmatpush1.bf16.msra.mxu0 %v3990
    %4205 = vmatprep.subr.bf16.mxu0 %v3997
    %4206 = vmatpush1.bf16.msra.mxu0 %v3996
    %4207 = vmatprep.subr.bf16.mxu0 %v4003
    %4208 = vmatpush1.bf16.msra.mxu0 %v4002
    %4209 = vmatprep.subr.bf16.mxu0 %v4009
    %4210 = vmatpush1.bf16.msra.mxu0 %v4008
    %4211 = vmatprep.subr.bf16.mxu0 %v4015
    %4212 = vmatpush1.bf16.msra.mxu0 %v4014
    %4213 = vmatprep.subr.bf16.mxu0 %v4021
    %4214 = vmatpush1.bf16.msra.mxu0 %v4020
    %4215 = vmatprep.subr.bf16.mxu0 %v4027
    %4216 = vmatpush1.bf16.msra.mxu0 %v4026
    %4217 = vmatprep.subr.bf16.mxu0 %v4033
    %4218 = vmatpush1.bf16.msra.mxu0 %v4032
    %4219 = vmatprep.subr.bf16.mxu0 %v4039
    %4220 = vmatpush1.bf16.msra.mxu0 %v4038
    %4221 = vmatprep.subr.bf16.mxu0 %v4045
    %4222 = vmatpush1.bf16.msra.mxu0 %v4044
    %4223 = vmatprep.subr.bf16.mxu0 %v4051
    %4224 = vmatpush1.bf16.msra.mxu0 %v4050
    %4225 = vmatprep.mubr.bf16.mxu0 %v3541
    %4226 = vmatmul.mubr.bf16.gmra.mrb[0].mxu0 %v3540
    %v4227 = vpop.f32.mrb[0].mxu0
    %v4228 = vadd.f32 %v3651, %v4227
    %v4229 = vpop.f32.mrb[0].mxu0
    %v4230 = vadd.f32 %v3655, %v4229
    %v4231 = vpop.f32.mrb[0].mxu0
    %v4232 = vadd.f32 %v3651, %v4231
    %v4233 = vpop.f32.mrb[0].mxu0
    %v4234 = vadd.f32 %v3655, %v4233
    %4235 = vdwg.mxu0
    %4236 = vmatprep.subr.bf16.mxu0 %v3963
    %4237 = vmatpush1.bf16.msra.mxu0 %v3962
    %4238 = vmatprep.subr.bf16.mxu0 %v3969
    %4239 = vmatpush1.bf16.msra.mxu0 %v3968
    %4240 = vmatprep.subr.bf16.mxu0 %v3975
    %4241 = vmatpush1.bf16.msra.mxu0 %v3974
    %4242 = vmatprep.subr.bf16.mxu0 %v3981
    %4243 = vmatpush1.bf16.msra.mxu0 %v3980
    %4244 = vmatprep.subr.bf16.mxu0 %v3987
    %4245 = vmatpush1.bf16.msra.mxu0 %v3986
    %4246 = vmatprep.subr.bf16.mxu0 %v3993
    %4247 = vmatpush1.bf16.msra.mxu0 %v3992
    %4248 = vmatprep.subr.bf16.mxu0 %v3999
    %4249 = vmatpush1.bf16.msra.mxu0 %v3998
    %4250 = vmatprep.subr.bf16.mxu0 %v4005
    %4251 = vmatpush1.bf16.msra.mxu0 %v4004
    %4252 = vmatprep.subr.bf16.mxu0 %v4011
    %4253 = vmatpush1.bf16.msra.mxu0 %v4010
    %4254 = vmatprep.subr.bf16.mxu0 %v4017
    %4255 = vmatpush1.bf16.msra.mxu0 %v4016
    %4256 = vmatprep.subr.bf16.mxu0 %v4023
    %4257 = vmatpush1.bf16.msra.mxu0 %v4022
    %4258 = vmatprep.subr.bf16.mxu0 %v4029
    %4259 = vmatpush1.bf16.msra.mxu0 %v4028
    %4260 = vmatprep.subr.bf16.mxu0 %v4035
    %4261 = vmatpush1.bf16.msra.mxu0 %v4034
    %4262 = vmatprep.subr.bf16.mxu0 %v4041
    %4263 = vmatpush1.bf16.msra.mxu0 %v4040
    %4264 = vmatprep.subr.bf16.mxu0 %v4047
    %4265 = vmatpush1.bf16.msra.mxu0 %v4046
    %4266 = vmatprep.subr.bf16.mxu0 %v4053
    %4267 = vmatpush1.bf16.msra.mxu0 %v4052
    %4268 = vmatprep.mubr.bf16.mxu0 %v3541
    %4269 = vmatmul.mubr.bf16.gmra.mrb[0].mxu0 %v3540
    %v4270 = vpop.f32.mrb[0].mxu0
    %v4271 = vadd.f32 %v3659, %v4270
    %v4272 = vpop.f32.mrb[0].mxu0
    %v4273 = vadd.f32 %v3663, %v4272
    %v4274 = vpop.f32.mrb[0].mxu0
    %v4275 = vadd.f32 %v3659, %v4274
    %v4276 = vpop.f32.mrb[0].mxu0
    %v4277 = vadd.f32 %v3663, %v4276
    %4278 = vdwg.mxu0
    %v4291 = vcombine.low %v4185, %v4187
    %v4292 = vcombine.high %v4185, %v4187
    %v4293 = vcombine.low %v4228, %v4230
    %v4294 = vcombine.high %v4228, %v4230
    %v4296 = vunpack.c.l.s4 1983009808
    %v4297 = vunpack.c.0.s8 %v4296
    %v4298 = vlaneseq
    %v4299 = vshrl.u32 %v4298, 7
    %v4300 = vsub.s32 %v4297, %v4299
    %v4301 = vrot.slane %v4291, %v4300
    %v4303 = vunpack.c.l.s4 1983009808
    %v4304 = vunpack.c.0.s8 %v4303
    %v4305 = vlaneseq
    %v4306 = vshrl.u32 %v4305, 7
    %v4307 = vsub.s32 %v4304, %v4306
    %v4308 = vrot.slane %v4292, %v4307
    %v4310 = vunpack.c.l.s4 1983009808
    %v4311 = vunpack.c.0.s8 %v4310
    %v4312 = vlaneseq
    %v4313 = vshrl.u32 %v4312, 7
    %v4314 = vsub.s32 %v4311, %v4313
    %v4315 = vrot.slane %v4293, %v4314
    %v4317 = vunpack.c.l.s4 1983009808
    %v4318 = vunpack.c.0.s8 %v4317
    %v4319 = vlaneseq
    %v4320 = vshrl.u32 %v4319, 7
    %v4321 = vsub.s32 %v4318, %v4320
    %v4322 = vrot.slane %v4294, %v4321
    %v4323 = vcombine.low %v4301, %v4315
    %v4324 = vcombine.high %v4301, %v4315
    %v4325 = vcombine.low %v4308, %v4322
    %v4326 = vcombine.high %v4308, %v4322
    %v4327 = vcombine.low %v4271, %v4273
    %v4328 = vcombine.high %v4271, %v4273
    %v4330 = vunpack.c.l.s4 1983009808
    %v4331 = vunpack.c.0.s8 %v4330
    %v4332 = vlaneseq
    %v4333 = vshrl.u32 %v4332, 7
    %v4334 = vsub.s32 %v4331, %v4333
    %v4335 = vrot.slane %v4327, %v4334
    %v4337 = vunpack.c.l.s4 1983009808
    %v4338 = vunpack.c.0.s8 %v4337
    %v4339 = vlaneseq
    %v4340 = vshrl.u32 %v4339, 7
    %v4341 = vsub.s32 %v4338, %v4340
    %v4342 = vrot.slane %v4328, %v4341
    %v4343 = vcombine.high %v4335, %v4335
    %v4344 = vcombine.high %v4342, %v4342
    %v4345 = vcombine.low %v4189, %v4191
    %v4346 = vcombine.high %v4189, %v4191
    %v4347 = vcombine.low %v4232, %v4234
    %v4348 = vcombine.high %v4232, %v4234
    %v4350 = vunpack.c.l.s4 1983009808
    %v4351 = vunpack.c.0.s8 %v4350
    %v4352 = vlaneseq
    %v4353 = vshrl.u32 %v4352, 7
    %v4354 = vsub.s32 %v4351, %v4353
    %v4355 = vrot.slane %v4345, %v4354
    %v4357 = vunpack.c.l.s4 1983009808
    %v4358 = vunpack.c.0.s8 %v4357
    %v4359 = vlaneseq
    %v4360 = vshrl.u32 %v4359, 7
    %v4361 = vsub.s32 %v4358, %v4360
    %v4362 = vrot.slane %v4346, %v4361
    %v4364 = vunpack.c.l.s4 1983009808
    %v4365 = vunpack.c.0.s8 %v4364
    %v4366 = vlaneseq
    %v4367 = vshrl.u32 %v4366, 7
    %v4368 = vsub.s32 %v4365, %v4367
    %v4369 = vrot.slane %v4347, %v4368
    %v4371 = vunpack.c.l.s4 1983009808
    %v4372 = vunpack.c.0.s8 %v4371
    %v4373 = vlaneseq
    %v4374 = vshrl.u32 %v4373, 7
    %v4375 = vsub.s32 %v4372, %v4374
    %v4376 = vrot.slane %v4348, %v4375
    %v4377 = vcombine.low %v4355, %v4369
    %v4378 = vcombine.high %v4355, %v4369
    %v4379 = vcombine.low %v4362, %v4376
    %v4380 = vcombine.high %v4362, %v4376
    %v4381 = vcombine.low %v4275, %v4277
    %v4382 = vcombine.high %v4275, %v4277
    %v4384 = vunpack.c.l.s4 1983009808
    %v4385 = vunpack.c.0.s8 %v4384
    %v4386 = vlaneseq
    %v4387 = vshrl.u32 %v4386, 7
    %v4388 = vsub.s32 %v4385, %v4387
    %v4389 = vrot.slane %v4381, %v4388
    %v4391 = vunpack.c.l.s4 1983009808
    %v4392 = vunpack.c.0.s8 %v4391
    %v4393 = vlaneseq
    %v4394 = vshrl.u32 %v4393, 7
    %v4395 = vsub.s32 %v4392, %v4394
    %v4396 = vrot.slane %v4382, %v4395
    %v4397 = vcombine.high %v4389, %v4389
    %v4398 = vcombine.high %v4396, %v4396
    %4415 = vst [vmem:[#allocation2] sm:$0xff] %v4323
    %4416 = vst [vmem:[#allocation2 + $0x8] sm:$0xf] %v4335
    %4417 = vst [vmem:[#allocation2 + $0xc] sm:$0xff] %v4324
    %4418 = vst [vmem:[#allocation2 + $0x14] sm:$0xf] %v4343
    %4419 = vst [vmem:[#allocation2 + $0x18] sm:$0xff] %v4325
    %4420 = vst [vmem:[#allocation2 + $0x20] sm:$0xf] %v4342
    %4421 = vst [vmem:[#allocation2 + $0x24] sm:$0xff] %v4326
    %4422 = vst [vmem:[#allocation2 + $0x2c] sm:$0xf] %v4344
    %4423 = vst [vmem:[#allocation2 + $0x30] sm:$0xff] %v4377
    %4424 = vst [vmem:[#allocation2 + $0x38] sm:$0xf] %v4389
    %4425 = vst [vmem:[#allocation2 + $0x3c] sm:$0xff] %v4378
    %4426 = vst [vmem:[#allocation2 + $0x44] sm:$0xf] %v4397
    %4427 = vst [vmem:[#allocation2 + $0x48] sm:$0xff] %v4379
    %4428 = vst [vmem:[#allocation2 + $0x50] sm:$0xf] %v4396
    %4429 = vst [vmem:[#allocation2 + $0x54] sm:$0xff] %v4380
    %4430 = vst [vmem:[#allocation2 + $0x5c] sm:$0xf] %v4398
    %v4431 = vld [vmem:[#allocation10] sm:$0xff]
    %v4432 = vld [vmem:[#allocation10 + $0x8] sm:$0xff]
    %v4433 = vld [vmem:[#allocation10 + $0x10] sm:$0xff]
    %v4434 = vld [vmem:[#allocation10 + $0x18] sm:$0xff]
    %v4435 = vld [vmem:[#allocation10 + $0x20] sm:$0xff]
    %v4436 = vld [vmem:[#allocation10 + $0x28] sm:$0xff]
    %v4437 = vld [vmem:[#allocation10 + $0x30] sm:$0xff]
    %v4438 = vld [vmem:[#allocation10 + $0x38] sm:$0xff]
    %v4439 = vld [vmem:[#allocation10 + $0x40] sm:$0xff]
    %v4440 = vld [vmem:[#allocation10 + $0x48] sm:$0xff]
    %v4441 = vld [vmem:[#allocation10 + $0x50] sm:$0xff]
    %v4442 = vld [vmem:[#allocation10 + $0x58] sm:$0xff]
    %v4443 = vld [vmem:[#allocation10 + $0x60] sm:$0xff]
    %v4444 = vld [vmem:[#allocation10 + $0x68] sm:$0xff]
    %v4445 = vld [vmem:[#allocation10 + $0x70] sm:$0xff]
    %v4446 = vld [vmem:[#allocation10 + $0x78] sm:$0xff]
    %v4447 = vld [vmem:[#allocation10 + $0x80] sm:$0xff]
    %v4448 = vld [vmem:[#allocation10 + $0x88] sm:$0xff]
    %v4449 = vld [vmem:[#allocation10 + $0x90] sm:$0xff]
    %v4450 = vld [vmem:[#allocation10 + $0x98] sm:$0xff]
    %v4451 = vld [vmem:[#allocation10 + $0xa0] sm:$0xff]
    %v4452 = vld [vmem:[#allocation10 + $0xa8] sm:$0xff]
    %v4453 = vld [vmem:[#allocation10 + $0xb0] sm:$0xff]
    %v4454 = vld [vmem:[#allocation10 + $0xb8] sm:$0xff]
    %v4455 = vld [vmem:[#allocation10 + $0xc0] sm:$0xff]
    %v4456 = vld [vmem:[#allocation10 + $0xc8] sm:$0xff]
    %v4457 = vld [vmem:[#allocation10 + $0xd0] sm:$0xff]
    %v4458 = vld [vmem:[#allocation10 + $0xd8] sm:$0xff]
    %v4459 = vld [vmem:[#allocation10 + $0xe0] sm:$0xff]
    %v4460 = vld [vmem:[#allocation10 + $0xe8] sm:$0xff]
    %v4461 = vld [vmem:[#allocation10 + $0xf0] sm:$0xff]
    %v4462 = vld [vmem:[#allocation10 + $0xf8] sm:$0xff]
    %v4463 = vld [vmem:[#allocation10 + $0x100] sm:$0xff]
    %v4464 = vld [vmem:[#allocation10 + $0x108] sm:$0xff]
    %v4465 = vld [vmem:[#allocation10 + $0x110] sm:$0xff]
    %v4466 = vld [vmem:[#allocation10 + $0x118] sm:$0xff]
    %v4467 = vld [vmem:[#allocation10 + $0x120] sm:$0xff]
    %v4468 = vld [vmem:[#allocation10 + $0x128] sm:$0xff]
    %v4469 = vld [vmem:[#allocation10 + $0x130] sm:$0xff]
    %v4470 = vld [vmem:[#allocation10 + $0x138] sm:$0xff]
    %v4471 = vld [vmem:[#allocation10 + $0x140] sm:$0xff]
    %v4472 = vld [vmem:[#allocation10 + $0x148] sm:$0xff]
    %v4473 = vld [vmem:[#allocation10 + $0x150] sm:$0xff]
    %v4474 = vld [vmem:[#allocation10 + $0x158] sm:$0xff]
    %v4475 = vld [vmem:[#allocation10 + $0x160] sm:$0xff]
    %v4476 = vld [vmem:[#allocation10 + $0x168] sm:$0xff]
    %v4477 = vld [vmem:[#allocation10 + $0x170] sm:$0xff]
    %v4478 = vld [vmem:[#allocation10 + $0x178] sm:$0xff]
    %v4479 = vld [vmem:[#allocation12] sm:$0xff]
    %v4480 = vld [vmem:[#allocation12 + $0x8] sm:$0xff]
    %v4481 = vld [vmem:[#allocation12 + $0x10] sm:$0xff]
    %v4482 = vld [vmem:[#allocation12 + $0x18] sm:$0xff]
    %v4483 = vld [vmem:[#allocation12 + $0x20] sm:$0xff]
    %v4484 = vld [vmem:[#allocation12 + $0x28] sm:$0xff]
    %v4485 = vld [vmem:[#allocation12 + $0x30] sm:$0xff]
    %v4486 = vld [vmem:[#allocation12 + $0x38] sm:$0xff]
    %v4487 = vld [vmem:[#allocation12 + $0x40] sm:$0xff]
    %v4488 = vld [vmem:[#allocation12 + $0x48] sm:$0xff]
    %v4489 = vld [vmem:[#allocation12 + $0x50] sm:$0xff]
    %v4490 = vld [vmem:[#allocation12 + $0x58] sm:$0xff]
    %v4491 = vld [vmem:[#allocation12 + $0x60] sm:$0xff]
    %v4492 = vld [vmem:[#allocation12 + $0x68] sm:$0xff]
    %v4493 = vld [vmem:[#allocation12 + $0x70] sm:$0xff]
    %v4494 = vld [vmem:[#allocation12 + $0x78] sm:$0xff]
    %v4495 = vld [vmem:[#allocation12 + $0x80] sm:$0xff]
    %v4496 = vld [vmem:[#allocation12 + $0x88] sm:$0xff]
    %v4497 = vld [vmem:[#allocation12 + $0x90] sm:$0xff]
    %v4498 = vld [vmem:[#allocation12 + $0x98] sm:$0xff]
    %v4499 = vld [vmem:[#allocation12 + $0xa0] sm:$0xff]
    %v4500 = vld [vmem:[#allocation12 + $0xa8] sm:$0xff]
    %v4501 = vld [vmem:[#allocation12 + $0xb0] sm:$0xff]
    %v4502 = vld [vmem:[#allocation12 + $0xb8] sm:$0xff]
    %v4503 = vld [vmem:[#allocation12 + $0xc0] sm:$0xff]
    %v4504 = vld [vmem:[#allocation12 + $0xc8] sm:$0xff]
    %v4505 = vld [vmem:[#allocation12 + $0xd0] sm:$0xff]
    %v4506 = vld [vmem:[#allocation12 + $0xd8] sm:$0xff]
    %v4507 = vld [vmem:[#allocation12 + $0xe0] sm:$0xff]
    %v4508 = vld [vmem:[#allocation12 + $0xe8] sm:$0xff]
    %v4509 = vld [vmem:[#allocation12 + $0xf0] sm:$0xff]
    %v4510 = vld [vmem:[#allocation12 + $0xf8] sm:$0xff]
    %v4511 = vld [vmem:[#allocation12 + $0x100] sm:$0xff]
    %v4512 = vld [vmem:[#allocation12 + $0x108] sm:$0xff]
    %v4513 = vld [vmem:[#allocation12 + $0x110] sm:$0xff]
    %v4514 = vld [vmem:[#allocation12 + $0x118] sm:$0xff]
    %v4515 = vld [vmem:[#allocation12 + $0x120] sm:$0xff]
    %v4516 = vld [vmem:[#allocation12 + $0x128] sm:$0xff]
    %v4517 = vld [vmem:[#allocation12 + $0x130] sm:$0xff]
    %v4518 = vld [vmem:[#allocation12 + $0x138] sm:$0xff]
    %v4519 = vld [vmem:[#allocation12 + $0x140] sm:$0xff]
    %v4520 = vld [vmem:[#allocation12 + $0x148] sm:$0xff]
    %v4521 = vld [vmem:[#allocation12 + $0x150] sm:$0xff]
    %v4522 = vld [vmem:[#allocation12 + $0x158] sm:$0xff]
    %v4523 = vld [vmem:[#allocation12 + $0x160] sm:$0xff]
    %v4524 = vld [vmem:[#allocation12 + $0x168] sm:$0xff]
    %v4525 = vld [vmem:[#allocation12 + $0x170] sm:$0xff]
    %v4526 = vld [vmem:[#allocation12 + $0x178] sm:$0xff]
    %v4527 = vld [vmem:[%s10] sm:$0x1]
    %v4529 = vlaneseq
    %v4530 = vshrl.u32 %v4529, 7
    %v4531 = vsub.s32 0, %v4530
    %v4532 = vrot.slane %v4527, %v4531
    %v4534 = vld [vmem:[%s10 + $0x1] sm:$0x1]
    %v4536 = vlaneseq
    %v4537 = vshrl.u32 %v4536, 7
    %v4538 = vsub.s32 0, %v4537
    %v4539 = vrot.slane %v4534, %v4538
    %4541 = vmatprep.subr.mxu0 %v4432
    %4542 = vmatpush1.msra.mxu0 %v4431
    %4543 = vmatprep.subr.mxu0 %v4435
    %4544 = vmatpush1.msra.mxu0 %v4434
    %4545 = vmatprep.subr.mxu0 %v4438
    %4546 = vmatpush1.msra.mxu0 %v4437
    %4547 = vmatprep.subr.mxu0 %v4441
    %4548 = vmatpush1.msra.mxu0 %v4440
    %4549 = vmatprep.subr.mxu0 %v4444
    %4550 = vmatpush1.msra.mxu0 %v4443
    %4551 = vmatprep.subr.mxu0 %v4447
    %4552 = vmatpush1.msra.mxu0 %v4446
    %4553 = vmatprep.subr.mxu0 %v4450
    %4554 = vmatpush1.msra.mxu0 %v4449
    %4555 = vmatprep.subr.mxu0 %v4453
    %4556 = vmatpush1.msra.mxu0 %v4452
    %4557 = vmatprep.subr.mxu0 %v4456
    %4558 = vmatpush1.msra.mxu0 %v4455
    %4559 = vmatprep.subr.mxu0 %v4459
    %4560 = vmatpush1.msra.mxu0 %v4458
    %4561 = vmatprep.subr.mxu0 %v4462
    %4562 = vmatpush1.msra.mxu0 %v4461
    %4563 = vmatprep.subr.mxu0 %v4465
    %4564 = vmatpush1.msra.mxu0 %v4464
    %4565 = vmatprep.subr.mxu0 %v4468
    %4566 = vmatpush1.msra.mxu0 %v4467
    %4567 = vmatprep.subr.mxu0 %v4471
    %4568 = vmatpush1.msra.mxu0 %v4470
    %4569 = vmatprep.subr.mxu0 %v4474
    %4570 = vmatpush1.msra.mxu0 %v4473
    %4571 = vmatprep.subr.mxu0 %v4477
    %4572 = vmatpush1.msra.mxu0 %v4476
    %4573 = vmatprep.subr.mxu0 0.0
    %4574 = vmatpush1.msra.mxu0 0.0
    %4575 = vmatprep.subr.mxu0 0.0
    %4576 = vmatpush1.msra.mxu0 0.0
    %4577 = vmatprep.subr.mxu0 0.0
    %4578 = vmatpush1.msra.mxu0 0.0
    %4579 = vmatprep.subr.mxu0 0.0
    %4580 = vmatpush1.msra.mxu0 0.0
    %4581 = vmatprep.subr.mxu0 0.0
    %4582 = vmatpush1.msra.mxu0 0.0
    %4583 = vmatprep.subr.mxu0 0.0
    %4584 = vmatpush1.msra.mxu0 0.0
    %4585 = vmatprep.subr.mxu0 0.0
    %4586 = vmatpush1.msra.mxu0 0.0
    %4587 = vmatprep.subr.mxu0 0.0
    %4588 = vmatpush1.msra.mxu0 0.0
    %4589 = vmatprep.subr.mxu0 0.0
    %4590 = vmatpush1.msra.mxu0 0.0
    %4591 = vmatprep.subr.mxu0 0.0
    %4592 = vmatpush1.msra.mxu0 0.0
    %4593 = vmatprep.subr.mxu0 0.0
    %4594 = vmatpush1.msra.mxu0 0.0
    %4595 = vmatprep.subr.mxu0 0.0
    %4596 = vmatpush1.msra.mxu0 0.0
    %4597 = vmatprep.subr.mxu0 0.0
    %4598 = vmatpush1.msra.mxu0 0.0
    %4599 = vmatprep.subr.mxu0 0.0
    %4600 = vmatpush1.msra.mxu0 0.0
    %4601 = vmatprep.subr.mxu0 0.0
    %4602 = vmatpush1.msra.mxu0 0.0
    %4603 = vmatprep.subr.mxu0 0.0
    %4604 = vmatpush1.msra.mxu0 0.0
    %4605 = vmatprep.mubr.f32.mxu0 0.0
    %4606 = vmatmul.mubr.f32.gmra.mrb[0].mxu0 0.0
    %v4607 = vpop.f32.mrb[0].mxu0
    %v4608 = vadd.f32 0.0, %v4607
    %v4609 = vpop.f32.mrb[0].mxu0
    %v4610 = vadd.f32 0.0, %v4609
    %4611 = vdwg.mxu0
    %4612 = vmatprep.subr.mxu0 0.0
    %4613 = vmatpush1.msra.mxu0 %v4433
    %4614 = vmatprep.subr.mxu0 0.0
    %4615 = vmatpush1.msra.mxu0 %v4436
    %4616 = vmatprep.subr.mxu0 0.0
    %4617 = vmatpush1.msra.mxu0 %v4439
    %4618 = vmatprep.subr.mxu0 0.0
    %4619 = vmatpush1.msra.mxu0 %v4442
    %4620 = vmatprep.subr.mxu0 0.0
    %4621 = vmatpush1.msra.mxu0 %v4445
    %4622 = vmatprep.subr.mxu0 0.0
    %4623 = vmatpush1.msra.mxu0 %v4448
    %4624 = vmatprep.subr.mxu0 0.0
    %4625 = vmatpush1.msra.mxu0 %v4451
    %4626 = vmatprep.subr.mxu0 0.0
    %4627 = vmatpush1.msra.mxu0 %v4454
    %4628 = vmatprep.subr.mxu0 0.0
    %4629 = vmatpush1.msra.mxu0 %v4457
    %4630 = vmatprep.subr.mxu0 0.0
    %4631 = vmatpush1.msra.mxu0 %v4460
    %4632 = vmatprep.subr.mxu0 0.0
    %4633 = vmatpush1.msra.mxu0 %v4463
    %4634 = vmatprep.subr.mxu0 0.0
    %4635 = vmatpush1.msra.mxu0 %v4466
    %4636 = vmatprep.subr.mxu0 0.0
    %4637 = vmatpush1.msra.mxu0 %v4469
    %4638 = vmatprep.subr.mxu0 0.0
    %4639 = vmatpush1.msra.mxu0 %v4472
    %4640 = vmatprep.subr.mxu0 0.0
    %4641 = vmatpush1.msra.mxu0 %v4475
    %4642 = vmatprep.subr.mxu0 0.0
    %4643 = vmatpush1.msra.mxu0 %v4478
    %4644 = vmatprep.subr.mxu0 0.0
    %4645 = vmatpush1.msra.mxu0 0.0
    %4646 = vmatprep.subr.mxu0 0.0
    %4647 = vmatpush1.msra.mxu0 0.0
    %4648 = vmatprep.subr.mxu0 0.0
    %4649 = vmatpush1.msra.mxu0 0.0
    %4650 = vmatprep.subr.mxu0 0.0
    %4651 = vmatpush1.msra.mxu0 0.0
    %4652 = vmatprep.subr.mxu0 0.0
    %4653 = vmatpush1.msra.mxu0 0.0
    %4654 = vmatprep.subr.mxu0 0.0
    %4655 = vmatpush1.msra.mxu0 0.0
    %4656 = vmatprep.subr.mxu0 0.0
    %4657 = vmatpush1.msra.mxu0 0.0
    %4658 = vmatprep.subr.mxu0 0.0
    %4659 = vmatpush1.msra.mxu0 0.0
    %4660 = vmatprep.subr.mxu0 0.0
    %4661 = vmatpush1.msra.mxu0 0.0
    %4662 = vmatprep.subr.mxu0 0.0
    %4663 = vmatpush1.msra.mxu0 0.0
    %4664 = vmatprep.subr.mxu0 0.0
    %4665 = vmatpush1.msra.mxu0 0.0
    %4666 = vmatprep.subr.mxu0 0.0
    %4667 = vmatpush1.msra.mxu0 0.0
    %4668 = vmatprep.subr.mxu0 0.0
    %4669 = vmatpush1.msra.mxu0 0.0
    %4670 = vmatprep.subr.mxu0 0.0
    %4671 = vmatpush1.msra.mxu0 0.0
    %4672 = vmatprep.subr.mxu0 0.0
    %4673 = vmatpush1.msra.mxu0 0.0
    %4674 = vmatprep.subr.mxu0 0.0
    %4675 = vmatpush1.msra.mxu0 0.0
    %4676 = vmatprep.mubr.f32.mxu0 0.0
    %4677 = vmatmul.mubr.f32.gmra.mrb[0].mxu0 0.0
    %v4678 = vpop.f32.mrb[0].mxu0
    %v4679 = vadd.f32 0.0, %v4678
    %v4680 = vpop.f32.mrb[0].mxu0
    %4681 = vdwg.mxu0
    %4682 = vmatprep.subr.mxu0 %v4480
    %4683 = vmatpush1.msra.mxu0 %v4479
    %4684 = vmatprep.subr.mxu0 %v4483
    %4685 = vmatpush1.msra.mxu0 %v4482
    %4686 = vmatprep.subr.mxu0 %v4486
    %4687 = vmatpush1.msra.mxu0 %v4485
    %4688 = vmatprep.subr.mxu0 %v4489
    %4689 = vmatpush1.msra.mxu0 %v4488
    %4690 = vmatprep.subr.mxu0 %v4492
    %4691 = vmatpush1.msra.mxu0 %v4491
    %4692 = vmatprep.subr.mxu0 %v4495
    %4693 = vmatpush1.msra.mxu0 %v4494
    %4694 = vmatprep.subr.mxu0 %v4498
    %4695 = vmatpush1.msra.mxu0 %v4497
    %4696 = vmatprep.subr.mxu0 %v4501
    %4697 = vmatpush1.msra.mxu0 %v4500
    %4698 = vmatprep.subr.mxu0 %v4504
    %4699 = vmatpush1.msra.mxu0 %v4503
    %4700 = vmatprep.subr.mxu0 %v4507
    %4701 = vmatpush1.msra.mxu0 %v4506
    %4702 = vmatprep.subr.mxu0 %v4510
    %4703 = vmatpush1.msra.mxu0 %v4509
    %4704 = vmatprep.subr.mxu0 %v4513
    %4705 = vmatpush1.msra.mxu0 %v4512
    %4706 = vmatprep.subr.mxu0 %v4516
    %4707 = vmatpush1.msra.mxu0 %v4515
    %4708 = vmatprep.subr.mxu0 %v4519
    %4709 = vmatpush1.msra.mxu0 %v4518
    %4710 = vmatprep.subr.mxu0 %v4522
    %4711 = vmatpush1.msra.mxu0 %v4521
    %4712 = vmatprep.subr.mxu0 %v4525
    %4713 = vmatpush1.msra.mxu0 %v4524
    %4714 = vmatprep.subr.mxu0 0.0
    %4715 = vmatpush1.msra.mxu0 0.0
    %4716 = vmatprep.subr.mxu0 0.0
    %4717 = vmatpush1.msra.mxu0 0.0
    %4718 = vmatprep.subr.mxu0 0.0
    %4719 = vmatpush1.msra.mxu0 0.0
    %4720 = vmatprep.subr.mxu0 0.0
    %4721 = vmatpush1.msra.mxu0 0.0
    %4722 = vmatprep.subr.mxu0 0.0
    %4723 = vmatpush1.msra.mxu0 0.0
    %4724 = vmatprep.subr.mxu0 0.0
    %4725 = vmatpush1.msra.mxu0 0.0
    %4726 = vmatprep.subr.mxu0 0.0
    %4727 = vmatpush1.msra.mxu0 0.0
    %4728 = vmatprep.subr.mxu0 0.0
    %4729 = vmatpush1.msra.mxu0 0.0
    %4730 = vmatprep.subr.mxu0 0.0
    %4731 = vmatpush1.msra.mxu0 0.0
    %4732 = vmatprep.subr.mxu0 0.0
    %4733 = vmatpush1.msra.mxu0 0.0
    %4734 = vmatprep.subr.mxu0 0.0
    %4735 = vmatpush1.msra.mxu0 0.0
    %4736 = vmatprep.subr.mxu0 0.0
    %4737 = vmatpush1.msra.mxu0 0.0
    %4738 = vmatprep.subr.mxu0 0.0
    %4739 = vmatpush1.msra.mxu0 0.0
    %4740 = vmatprep.subr.mxu0 0.0
    %4741 = vmatpush1.msra.mxu0 0.0
    %4742 = vmatprep.subr.mxu0 0.0
    %4743 = vmatpush1.msra.mxu0 0.0
    %4744 = vmatprep.subr.mxu0 0.0
    %4745 = vmatpush1.msra.mxu0 0.0
    %4746 = vmatprep.mubr.f32.mxu0 0.0
    %4747 = vmatmul.mubr.f32.gmra.mrb[0].mxu0 0.0
    %v4748 = vpop.f32.mrb[0].mxu0
    %v4749 = vadd.f32 0.0, %v4748
    %v4750 = vpop.f32.mrb[0].mxu0
    %v4751 = vadd.f32 0.0, %v4750
    %4752 = vdwg.mxu0
    %4753 = vmatprep.subr.mxu0 0.0
    %4754 = vmatpush1.msra.mxu0 %v4481
    %4755 = vmatprep.subr.mxu0 0.0
    %4756 = vmatpush1.msra.mxu0 %v4484
    %4757 = vmatprep.subr.mxu0 0.0
    %4758 = vmatpush1.msra.mxu0 %v4487
    %4759 = vmatprep.subr.mxu0 0.0
    %4760 = vmatpush1.msra.mxu0 %v4490
    %4761 = vmatprep.subr.mxu0 0.0
    %4762 = vmatpush1.msra.mxu0 %v4493
    %4763 = vmatprep.subr.mxu0 0.0
    %4764 = vmatpush1.msra.mxu0 %v4496
    %4765 = vmatprep.subr.mxu0 0.0
    %4766 = vmatpush1.msra.mxu0 %v4499
    %4767 = vmatprep.subr.mxu0 0.0
    %4768 = vmatpush1.msra.mxu0 %v4502
    %4769 = vmatprep.subr.mxu0 0.0
    %4770 = vmatpush1.msra.mxu0 %v4505
    %4771 = vmatprep.subr.mxu0 0.0
    %4772 = vmatpush1.msra.mxu0 %v4508
    %4773 = vmatprep.subr.mxu0 0.0
    %4774 = vmatpush1.msra.mxu0 %v4511
    %4775 = vmatprep.subr.mxu0 0.0
    %4776 = vmatpush1.msra.mxu0 %v4514
    %4777 = vmatprep.subr.mxu0 0.0
    %4778 = vmatpush1.msra.mxu0 %v4517
    %4779 = vmatprep.subr.mxu0 0.0
    %4780 = vmatpush1.msra.mxu0 %v4520
    %4781 = vmatprep.subr.mxu0 0.0
    %4782 = vmatpush1.msra.mxu0 %v4523
    %4783 = vmatprep.subr.mxu0 0.0
    %4784 = vmatpush1.msra.mxu0 %v4526
    %4785 = vmatprep.subr.mxu0 0.0
    %4786 = vmatpush1.msra.mxu0 0.0
    %4787 = vmatprep.subr.mxu0 0.0
    %4788 = vmatpush1.msra.mxu0 0.0
    %4789 = vmatprep.subr.mxu0 0.0
    %4790 = vmatpush1.msra.mxu0 0.0
    %4791 = vmatprep.subr.mxu0 0.0
    %4792 = vmatpush1.msra.mxu0 0.0
    %4793 = vmatprep.subr.mxu0 0.0
    %4794 = vmatpush1.msra.mxu0 0.0
    %4795 = vmatprep.subr.mxu0 0.0
    %4796 = vmatpush1.msra.mxu0 0.0
    %4797 = vmatprep.subr.mxu0 0.0
    %4798 = vmatpush1.msra.mxu0 0.0
    %4799 = vmatprep.subr.mxu0 0.0
    %4800 = vmatpush1.msra.mxu0 0.0
    %4801 = vmatprep.subr.mxu0 0.0
    %4802 = vmatpush1.msra.mxu0 0.0
    %4803 = vmatprep.subr.mxu0 0.0
    %4804 = vmatpush1.msra.mxu0 0.0
    %4805 = vmatprep.subr.mxu0 0.0
    %4806 = vmatpush1.msra.mxu0 0.0
    %4807 = vmatprep.subr.mxu0 0.0
    %4808 = vmatpush1.msra.mxu0 0.0
    %4809 = vmatprep.subr.mxu0 0.0
    %4810 = vmatpush1.msra.mxu0 0.0
    %4811 = vmatprep.subr.mxu0 0.0
    %4812 = vmatpush1.msra.mxu0 0.0
    %4813 = vmatprep.subr.mxu0 0.0
    %4814 = vmatpush1.msra.mxu0 0.0
    %4815 = vmatprep.subr.mxu0 0.0
    %4816 = vmatpush1.msra.mxu0 0.0
    %4817 = vmatprep.mubr.f32.mxu0 0.0
    %4818 = vmatmul.mubr.f32.gmra.mrb[0].mxu0 0.0
    %v4819 = vpop.f32.mrb[0].mxu0
    %v4820 = vadd.f32 0.0, %v4819
    %v4821 = vpop.f32.mrb[0].mxu0
    %4822 = vdwg.mxu0
    %v4823 = vld [vmem:[#allocation2] sm:$0x3f]
    %v4824 = vadd.f32 %v4823, %v4608
    %v4825 = vxor.u32 %v4824, 2147483648
    %v4826 = vmul.f32 %v4825, 1.442695
    %v4827 = vpow.pop %v4826
    %v4828 = vadd.f32 %v4827, 1.0
    %v4829 = vrcp.pop %v4828
    %v4830 = vmul.f32 1.0, %v4829
    %v4832 = vrot.slane %v4823, 2
    %v4834 = vadd.f32 %v4832, %v4610
    %v4835 = vxor.u32 %v4834, 2147483648
    %v4836 = vmul.f32 %v4835, 1.442695
    %v4837 = vpow.pop %v4836
    %v4838 = vadd.f32 %v4837, 1.0
    %v4839 = vrcp.pop %v4838
    %v4840 = vmul.f32 1.0, %v4839
    %v4841 = vadd.f32 %v4679, %v4532
    %v4842 = vmul.f32 %v4830, %v4841
    %v4843 = vrot.slane %v4823, 4
    %v4845 = vadd.f32 %v4843, %v4842
    %v4846 = vtanh.pop %v4845
    %v4847 = vsub.f32 1.0, %v4840
    %v4848 = vmul.f32 %v4847, %v4846
    %v4849 = vmul.f32 %v4840, 0.0
    %v4850 = vadd.f32 %v4848, %v4849
    %v4851 = vld [vmem:[%s1060 + $0x6] sm:$0x3f]
    %v4852 = vadd.f32 %v4851, %v4749
    %v4853 = vxor.u32 %v4852, 2147483648
    %v4854 = vmul.f32 %v4853, 1.442695
    %v4855 = vpow.pop %v4854
    %v4856 = vadd.f32 %v4855, 1.0
    %v4857 = vrcp.pop %v4856
    %v4858 = vmul.f32 1.0, %v4857
    %v4860 = vrot.slane %v4851, 2
    %v4862 = vadd.f32 %v4860, %v4751
    %v4863 = vxor.u32 %v4862, 2147483648
    %v4864 = vmul.f32 %v4863, 1.442695
    %v4865 = vpow.pop %v4864
    %v4866 = vadd.f32 %v4865, 1.0
    %v4867 = vrcp.pop %v4866
    %v4868 = vmul.f32 1.0, %v4867
    %v4869 = vadd.f32 %v4820, %v4539
    %v4870 = vmul.f32 %v4858, %v4869
    %v4871 = vrot.slane %v4851, 4
    %v4873 = vadd.f32 %v4871, %v4870
    %v4874 = vtanh.pop %v4873
    %v4875 = vsub.f32 1.0, %v4868
    %v4876 = vmul.f32 %v4875, %v4874
    %v4877 = vmul.f32 %v4868, 0.0
    %v4878 = vadd.f32 %v4876, %v4877
    %4879 = vmatprep.subr.mxu0 %v4432
    %4880 = vmatpush1.msra.mxu0 %v4431
    %4881 = vmatprep.subr.mxu0 %v4435
    %4882 = vmatpush1.msra.mxu0 %v4434
    %4883 = vmatprep.subr.mxu0 %v4438
    %4884 = vmatpush1.msra.mxu0 %v4437
    %4885 = vmatprep.subr.mxu0 %v4441
    %4886 = vmatpush1.msra.mxu0 %v4440
    %4887 = vmatprep.subr.mxu0 %v4444
    %4888 = vmatpush1.msra.mxu0 %v4443
    %4889 = vmatprep.subr.mxu0 %v4447
    %4890 = vmatpush1.msra.mxu0 %v4446
    %4891 = vmatprep.subr.mxu0 %v4450
    %4892 = vmatpush1.msra.mxu0 %v4449
    %4893 = vmatprep.subr.mxu0 %v4453
    %4894 = vmatpush1.msra.mxu0 %v4452
    %4895 = vmatprep.subr.mxu0 %v4456
    %4896 = vmatpush1.msra.mxu0 %v4455
    %4897 = vmatprep.subr.mxu0 %v4459
    %4898 = vmatpush1.msra.mxu0 %v4458
    %4899 = vmatprep.subr.mxu0 %v4462
    %4900 = vmatpush1.msra.mxu0 %v4461
    %4901 = vmatprep.subr.mxu0 %v4465
    %4902 = vmatpush1.msra.mxu0 %v4464
    %4903 = vmatprep.subr.mxu0 %v4468
    %4904 = vmatpush1.msra.mxu0 %v4467
    %4905 = vmatprep.subr.mxu0 %v4471
    %4906 = vmatpush1.msra.mxu0 %v4470
    %4907 = vmatprep.subr.mxu0 %v4474
    %4908 = vmatpush1.msra.mxu0 %v4473
    %4909 = vmatprep.subr.mxu0 %v4477
    %4910 = vmatpush1.msra.mxu0 %v4476
    %4911 = vmatprep.subr.mxu0 0.0
    %4912 = vmatpush1.msra.mxu0 0.0
    %4913 = vmatprep.subr.mxu0 0.0
    %4914 = vmatpush1.msra.mxu0 0.0
    %4915 = vmatprep.subr.mxu0 0.0
    %4916 = vmatpush1.msra.mxu0 0.0
    %4917 = vmatprep.subr.mxu0 0.0
    %4918 = vmatpush1.msra.mxu0 0.0
    %4919 = vmatprep.subr.mxu0 0.0
    %4920 = vmatpush1.msra.mxu0 0.0
    %4921 = vmatprep.subr.mxu0 0.0
    %4922 = vmatpush1.msra.mxu0 0.0
    %4923 = vmatprep.subr.mxu0 0.0
    %4924 = vmatpush1.msra.mxu0 0.0
    %4925 = vmatprep.subr.mxu0 0.0
    %4926 = vmatpush1.msra.mxu0 0.0
    %4927 = vmatprep.subr.mxu0 0.0
    %4928 = vmatpush1.msra.mxu0 0.0
    %4929 = vmatprep.subr.mxu0 0.0
    %4930 = vmatpush1.msra.mxu0 0.0
    %4931 = vmatprep.subr.mxu0 0.0
    %4932 = vmatpush1.msra.mxu0 0.0
    %4933 = vmatprep.subr.mxu0 0.0
    %4934 = vmatpush1.msra.mxu0 0.0
    %4935 = vmatprep.subr.mxu0 0.0
    %4936 = vmatpush1.msra.mxu0 0.0
    %4937 = vmatprep.subr.mxu0 0.0
    %4938 = vmatpush1.msra.mxu0 0.0
    %4939 = vmatprep.subr.mxu0 0.0
    %4940 = vmatpush1.msra.mxu0 0.0
    %4941 = vmatprep.subr.mxu0 0.0
    %4942 = vmatpush1.msra.mxu0 0.0
    %4943 = vmatprep.mubr.f32.mxu0 0.0
    %4944 = vmatmul.mubr.f32.gmra.mrb[0].mxu0 %v4850
    %v4945 = vpop.f32.mrb[0].mxu0
    %v4946 = vadd.f32 0.0, %v4945
    %v4947 = vpop.f32.mrb[0].mxu0
    %v4948 = vadd.f32 0.0, %v4947
    %4949 = vdwg.mxu0
    %4950 = vmatprep.subr.mxu0 0.0
    %4951 = vmatpush1.msra.mxu0 %v4433
    %4952 = vmatprep.subr.mxu0 0.0
    %4953 = vmatpush1.msra.mxu0 %v4436
    %4954 = vmatprep.subr.mxu0 0.0
    %4955 = vmatpush1.msra.mxu0 %v4439
    %4956 = vmatprep.subr.mxu0 0.0
    %4957 = vmatpush1.msra.mxu0 %v4442
    %4958 = vmatprep.subr.mxu0 0.0
    %4959 = vmatpush1.msra.mxu0 %v4445
    %4960 = vmatprep.subr.mxu0 0.0
    %4961 = vmatpush1.msra.mxu0 %v4448
    %4962 = vmatprep.subr.mxu0 0.0
    %4963 = vmatpush1.msra.mxu0 %v4451
    %4964 = vmatprep.subr.mxu0 0.0
    %4965 = vmatpush1.msra.mxu0 %v4454
    %4966 = vmatprep.subr.mxu0 0.0
    %4967 = vmatpush1.msra.mxu0 %v4457
    %4968 = vmatprep.subr.mxu0 0.0
    %4969 = vmatpush1.msra.mxu0 %v4460
    %4970 = vmatprep.subr.mxu0 0.0
    %4971 = vmatpush1.msra.mxu0 %v4463
    %4972 = vmatprep.subr.mxu0 0.0
    %4973 = vmatpush1.msra.mxu0 %v4466
    %4974 = vmatprep.subr.mxu0 0.0
    %4975 = vmatpush1.msra.mxu0 %v4469
    %4976 = vmatprep.subr.mxu0 0.0
    %4977 = vmatpush1.msra.mxu0 %v4472
    %4978 = vmatprep.subr.mxu0 0.0
    %4979 = vmatpush1.msra.mxu0 %v4475
    %4980 = vmatprep.subr.mxu0 0.0
    %4981 = vmatpush1.msra.mxu0 %v4478
    %4982 = vmatprep.subr.mxu0 0.0
    %4983 = vmatpush1.msra.mxu0 0.0
    %4984 = vmatprep.subr.mxu0 0.0
    %4985 = vmatpush1.msra.mxu0 0.0
    %4986 = vmatprep.subr.mxu0 0.0
    %4987 = vmatpush1.msra.mxu0 0.0
    %4988 = vmatprep.subr.mxu0 0.0
    %4989 = vmatpush1.msra.mxu0 0.0
    %4990 = vmatprep.subr.mxu0 0.0
    %4991 = vmatpush1.msra.mxu0 0.0
    %4992 = vmatprep.subr.mxu0 0.0
    %4993 = vmatpush1.msra.mxu0 0.0
    %4994 = vmatprep.subr.mxu0 0.0
    %4995 = vmatpush1.msra.mxu0 0.0
    %4996 = vmatprep.subr.mxu0 0.0
    %4997 = vmatpush1.msra.mxu0 0.0
    %4998 = vmatprep.subr.mxu0 0.0
    %4999 = vmatpush1.msra.mxu0 0.0
    %5000 = vmatprep.subr.mxu0 0.0
    %5001 = vmatpush1.msra.mxu0 0.0
    %5002 = vmatprep.subr.mxu0 0.0
    %5003 = vmatpush1.msra.mxu0 0.0
    %5004 = vmatprep.subr.mxu0 0.0
    %5005 = vmatpush1.msra.mxu0 0.0
    %5006 = vmatprep.subr.mxu0 0.0
    %5007 = vmatpush1.msra.mxu0 0.0
    %5008 = vmatprep.subr.mxu0 0.0
    %5009 = vmatpush1.msra.mxu0 0.0
    %5010 = vmatprep.subr.mxu0 0.0
    %5011 = vmatpush1.msra.mxu0 0.0
    %5012 = vmatprep.subr.mxu0 0.0
    %5013 = vmatpush1.msra.mxu0 0.0
    %5014 = vmatprep.mubr.f32.mxu0 0.0
    %5015 = vmatmul.mubr.f32.gmra.mrb[0].mxu0 %v4850
    %v5016 = vpop.f32.mrb[0].mxu0
    %v5017 = vadd.f32 0.0, %v5016
    %v5018 = vpop.f32.mrb[0].mxu0
    %5019 = vdwg.mxu0
    %5020 = vmatprep.subr.mxu0 %v4480
    %5021 = vmatpush1.msra.mxu0 %v4479
    %5022 = vmatprep.subr.mxu0 %v4483
    %5023 = vmatpush1.msra.mxu0 %v4482
    %5024 = vmatprep.subr.mxu0 %v4486
    %5025 = vmatpush1.msra.mxu0 %v4485
    %5026 = vmatprep.subr.mxu0 %v4489
    %5027 = vmatpush1.msra.mxu0 %v4488
    %5028 = vmatprep.subr.mxu0 %v4492
    %5029 = vmatpush1.msra.mxu0 %v4491
    %5030 = vmatprep.subr.mxu0 %v4495
    %5031 = vmatpush1.msra.mxu0 %v4494
    %5032 = vmatprep.subr.mxu0 %v4498
    %5033 = vmatpush1.msra.mxu0 %v4497
    %5034 = vmatprep.subr.mxu0 %v4501
    %5035 = vmatpush1.msra.mxu0 %v4500
    %5036 = vmatprep.subr.mxu0 %v4504
    %5037 = vmatpush1.msra.mxu0 %v4503
    %5038 = vmatprep.subr.mxu0 %v4507
    %5039 = vmatpush1.msra.mxu0 %v4506
    %5040 = vmatprep.subr.mxu0 %v4510
    %5041 = vmatpush1.msra.mxu0 %v4509
    %5042 = vmatprep.subr.mxu0 %v4513
    %5043 = vmatpush1.msra.mxu0 %v4512
    %5044 = vmatprep.subr.mxu0 %v4516
    %5045 = vmatpush1.msra.mxu0 %v4515
    %5046 = vmatprep.subr.mxu0 %v4519
    %5047 = vmatpush1.msra.mxu0 %v4518
    %5048 = vmatprep.subr.mxu0 %v4522
    %5049 = vmatpush1.msra.mxu0 %v4521
    %5050 = vmatprep.subr.mxu0 %v4525
    %5051 = vmatpush1.msra.mxu0 %v4524
    %5052 = vmatprep.subr.mxu0 0.0
    %5053 = vmatpush1.msra.mxu0 0.0
    %5054 = vmatprep.subr.mxu0 0.0
    %5055 = vmatpush1.msra.mxu0 0.0
    %5056 = vmatprep.subr.mxu0 0.0
    %5057 = vmatpush1.msra.mxu0 0.0
    %5058 = vmatprep.subr.mxu0 0.0
    %5059 = vmatpush1.msra.mxu0 0.0
    %5060 = vmatprep.subr.mxu0 0.0
    %5061 = vmatpush1.msra.mxu0 0.0
    %5062 = vmatprep.subr.mxu0 0.0
    %5063 = vmatpush1.msra.mxu0 0.0
    %5064 = vmatprep.subr.mxu0 0.0
    %5065 = vmatpush1.msra.mxu0 0.0
    %5066 = vmatprep.subr.mxu0 0.0
    %5067 = vmatpush1.msra.mxu0 0.0
    %5068 = vmatprep.subr.mxu0 0.0
    %5069 = vmatpush1.msra.mxu0 0.0
    %5070 = vmatprep.subr.mxu0 0.0
    %5071 = vmatpush1.msra.mxu0 0.0
    %5072 = vmatprep.subr.mxu0 0.0
    %5073 = vmatpush1.msra.mxu0 0.0
    %5074 = vmatprep.subr.mxu0 0.0
    %5075 = vmatpush1.msra.mxu0 0.0
    %5076 = vmatprep.subr.mxu0 0.0
    %5077 = vmatpush1.msra.mxu0 0.0
    %5078 = vmatprep.subr.mxu0 0.0
    %5079 = vmatpush1.msra.mxu0 0.0
    %5080 = vmatprep.subr.mxu0 0.0
    %5081 = vmatpush1.msra.mxu0 0.0
    %5082 = vmatprep.subr.mxu0 0.0
    %5083 = vmatpush1.msra.mxu0 0.0
    %5084 = vmatprep.mubr.f32.mxu0 0.0
    %5085 = vmatmul.mubr.f32.gmra.mrb[0].mxu0 %v4878
    %v5086 = vpop.f32.mrb[0].mxu0
    %v5087 = vadd.f32 0.0, %v5086
    %v5088 = vpop.f32.mrb[0].mxu0
    %v5089 = vadd.f32 0.0, %v5088
    %5090 = vdwg.mxu0
    %5091 = vmatprep.subr.mxu0 0.0
    %5092 = vmatpush1.msra.mxu0 %v4481
    %5093 = vmatprep.subr.mxu0 0.0
    %5094 = vmatpush1.msra.mxu0 %v4484
    %5095 = vmatprep.subr.mxu0 0.0
    %5096 = vmatpush1.msra.mxu0 %v4487
    %5097 = vmatprep.subr.mxu0 0.0
    %5098 = vmatpush1.msra.mxu0 %v4490
    %5099 = vmatprep.subr.mxu0 0.0
    %5100 = vmatpush1.msra.mxu0 %v4493
    %5101 = vmatprep.subr.mxu0 0.0
    %5102 = vmatpush1.msra.mxu0 %v4496
    %5103 = vmatprep.subr.mxu0 0.0
    %5104 = vmatpush1.msra.mxu0 %v4499
    %5105 = vmatprep.subr.mxu0 0.0
    %5106 = vmatpush1.msra.mxu0 %v4502
    %5107 = vmatprep.subr.mxu0 0.0
    %5108 = vmatpush1.msra.mxu0 %v4505
    %5109 = vmatprep.subr.mxu0 0.0
    %5110 = vmatpush1.msra.mxu0 %v4508
    %5111 = vmatprep.subr.mxu0 0.0
    %5112 = vmatpush1.msra.mxu0 %v4511
    %5113 = vmatprep.subr.mxu0 0.0
    %5114 = vmatpush1.msra.mxu0 %v4514
    %5115 = vmatprep.subr.mxu0 0.0
    %5116 = vmatpush1.msra.mxu0 %v4517
    %5117 = vmatprep.subr.mxu0 0.0
    %5118 = vmatpush1.msra.mxu0 %v4520
    %5119 = vmatprep.subr.mxu0 0.0
    %5120 = vmatpush1.msra.mxu0 %v4523
    %5121 = vmatprep.subr.mxu0 0.0
    %5122 = vmatpush1.msra.mxu0 %v4526
    %5123 = vmatprep.subr.mxu0 0.0
    %5124 = vmatpush1.msra.mxu0 0.0
    %5125 = vmatprep.subr.mxu0 0.0
    %5126 = vmatpush1.msra.mxu0 0.0
    %5127 = vmatprep.subr.mxu0 0.0
    %5128 = vmatpush1.msra.mxu0 0.0
    %5129 = vmatprep.subr.mxu0 0.0
    %5130 = vmatpush1.msra.mxu0 0.0
    %5131 = vmatprep.subr.mxu0 0.0
    %5132 = vmatpush1.msra.mxu0 0.0
    %5133 = vmatprep.subr.mxu0 0.0
    %5134 = vmatpush1.msra.mxu0 0.0
    %5135 = vmatprep.subr.mxu0 0.0
    %5136 = vmatpush1.msra.mxu0 0.0
    %5137 = vmatprep.subr.mxu0 0.0
    %5138 = vmatpush1.msra.mxu0 0.0
    %5139 = vmatprep.subr.mxu0 0.0
    %5140 = vmatpush1.msra.mxu0 0.0
    %5141 = vmatprep.subr.mxu0 0.0
    %5142 = vmatpush1.msra.mxu0 0.0
    %5143 = vmatprep.subr.mxu0 0.0
    %5144 = vmatpush1.msra.mxu0 0.0
    %5145 = vmatprep.subr.mxu0 0.0
    %5146 = vmatpush1.msra.mxu0 0.0
    %5147 = vmatprep.subr.mxu0 0.0
    %5148 = vmatpush1.msra.mxu0 0.0
    %5149 = vmatprep.subr.mxu0 0.0
    %5150 = vmatpush1.msra.mxu0 0.0
    %5151 = vmatprep.subr.mxu0 0.0
    %5152 = vmatpush1.msra.mxu0 0.0
    %5153 = vmatprep.subr.mxu0 0.0
    %5154 = vmatpush1.msra.mxu0 0.0
    %5155 = vmatprep.mubr.f32.mxu0 0.0
    %5156 = vmatmul.mubr.f32.gmra.mrb[0].mxu0 %v4878
    %v5157 = vpop.f32.mrb[0].mxu0
    %v5158 = vadd.f32 0.0, %v5157
    %v5159 = vpop.f32.mrb[0].mxu0
    %5160 = vdwg.mxu0
    %v5161 = vld [vmem:[%s1374] sm:$0x3f]
    %v5162 = vadd.f32 %v5161, %v4946
    %v5163 = vxor.u32 %v5162, 2147483648
    %v5164 = vmul.f32 %v5163, 1.442695
    %v5165 = vpow.pop %v5164
    %v5166 = vadd.f32 %v5165, 1.0
    %v5167 = vrcp.pop %v5166
    %v5168 = vmul.f32 1.0, %v5167
    %v5170 = vrot.slane %v5161, 2
    %v5172 = vadd.f32 %v5170, %v4948
    %v5173 = vxor.u32 %v5172, 2147483648
    %v5174 = vmul.f32 %v5173, 1.442695
    %v5175 = vpow.pop %v5174
    %v5176 = vadd.f32 %v5175, 1.0
    %v5177 = vrcp.pop %v5176
    %v5178 = vmul.f32 1.0, %v5177
    %v5179 = vadd.f32 %v5017, %v4532
    %v5180 = vmul.f32 %v5168, %v5179
    %v5181 = vrot.slane %v5161, 4
    %v5183 = vadd.f32 %v5181, %v5180
    %v5184 = vtanh.pop %v5183
    %v5185 = vsub.f32 1.0, %v5178
    %v5186 = vmul.f32 %v5185, %v5184
    %v5187 = vmul.f32 %v5178, %v4850
    %v5188 = vadd.f32 %v5186, %v5187
    %v5189 = vld [vmem:[%s1403 + $0x6] sm:$0x3f]
    %v5190 = vadd.f32 %v5189, %v5087
    %v5191 = vxor.u32 %v5190, 2147483648
    %v5192 = vmul.f32 %v5191, 1.442695
    %v5193 = vpow.pop %v5192
    %v5194 = vadd.f32 %v5193, 1.0
    %v5195 = vrcp.pop %v5194
    %v5196 = vmul.f32 1.0, %v5195
    %v5198 = vrot.slane %v5189, 2
    %v5200 = vadd.f32 %v5198, %v5089
    %v5201 = vxor.u32 %v5200, 2147483648
    %v5202 = vmul.f32 %v5201, 1.442695
    %v5203 = vpow.pop %v5202
    %v5204 = vadd.f32 %v5203, 1.0
    %v5205 = vrcp.pop %v5204
    %v5206 = vmul.f32 1.0, %v5205
    %v5207 = vadd.f32 %v5158, %v4539
    %v5208 = vmul.f32 %v5196, %v5207
    %v5209 = vrot.slane %v5189, 4
    %v5211 = vadd.f32 %v5209, %v5208
    %v5212 = vtanh.pop %v5211
    %v5213 = vsub.f32 1.0, %v5206
    %v5214 = vmul.f32 %v5213, %v5212
    %v5215 = vmul.f32 %v5206, %v4878
    %v5216 = vadd.f32 %v5214, %v5215
    %5217 = vmatprep.subr.mxu0 %v4432
    %5218 = vmatpush1.msra.mxu0 %v4431
    %5219 = vmatprep.subr.mxu0 %v4435
    %5220 = vmatpush1.msra.mxu0 %v4434
    %5221 = vmatprep.subr.mxu0 %v4438
    %5222 = vmatpush1.msra.mxu0 %v4437
    %5223 = vmatprep.subr.mxu0 %v4441
    %5224 = vmatpush1.msra.mxu0 %v4440
    %5225 = vmatprep.subr.mxu0 %v4444
    %5226 = vmatpush1.msra.mxu0 %v4443
    %5227 = vmatprep.subr.mxu0 %v4447
    %5228 = vmatpush1.msra.mxu0 %v4446
    %5229 = vmatprep.subr.mxu0 %v4450
    %5230 = vmatpush1.msra.mxu0 %v4449
    %5231 = vmatprep.subr.mxu0 %v4453
    %5232 = vmatpush1.msra.mxu0 %v4452
    %5233 = vmatprep.subr.mxu0 %v4456
    %5234 = vmatpush1.msra.mxu0 %v4455
    %5235 = vmatprep.subr.mxu0 %v4459
    %5236 = vmatpush1.msra.mxu0 %v4458
    %5237 = vmatprep.subr.mxu0 %v4462
    %5238 = vmatpush1.msra.mxu0 %v4461
    %5239 = vmatprep.subr.mxu0 %v4465
    %5240 = vmatpush1.msra.mxu0 %v4464
    %5241 = vmatprep.subr.mxu0 %v4468
    %5242 = vmatpush1.msra.mxu0 %v4467
    %5243 = vmatprep.subr.mxu0 %v4471
    %5244 = vmatpush1.msra.mxu0 %v4470
    %5245 = vmatprep.subr.mxu0 %v4474
    %5246 = vmatpush1.msra.mxu0 %v4473
    %5247 = vmatprep.subr.mxu0 %v4477
    %5248 = vmatpush1.msra.mxu0 %v4476
    %5249 = vmatprep.subr.mxu0 0.0
    %5250 = vmatpush1.msra.mxu0 0.0
    %5251 = vmatprep.subr.mxu0 0.0
    %5252 = vmatpush1.msra.mxu0 0.0
    %5253 = vmatprep.subr.mxu0 0.0
    %5254 = vmatpush1.msra.mxu0 0.0
    %5255 = vmatprep.subr.mxu0 0.0
    %5256 = vmatpush1.msra.mxu0 0.0
    %5257 = vmatprep.subr.mxu0 0.0
    %5258 = vmatpush1.msra.mxu0 0.0
    %5259 = vmatprep.subr.mxu0 0.0
    %5260 = vmatpush1.msra.mxu0 0.0
    %5261 = vmatprep.subr.mxu0 0.0
    %5262 = vmatpush1.msra.mxu0 0.0
    %5263 = vmatprep.subr.mxu0 0.0
    %5264 = vmatpush1.msra.mxu0 0.0
    %5265 = vmatprep.subr.mxu0 0.0
    %5266 = vmatpush1.msra.mxu0 0.0
    %5267 = vmatprep.subr.mxu0 0.0
    %5268 = vmatpush1.msra.mxu0 0.0
    %5269 = vmatprep.subr.mxu0 0.0
    %5270 = vmatpush1.msra.mxu0 0.0
    %5271 = vmatprep.subr.mxu0 0.0
    %5272 = vmatpush1.msra.mxu0 0.0
    %5273 = vmatprep.subr.mxu0 0.0
    %5274 = vmatpush1.msra.mxu0 0.0
    %5275 = vmatprep.subr.mxu0 0.0
    %5276 = vmatpush1.msra.mxu0 0.0
    %5277 = vmatprep.subr.mxu0 0.0
    %5278 = vmatpush1.msra.mxu0 0.0
    %5279 = vmatprep.subr.mxu0 0.0
    %5280 = vmatpush1.msra.mxu0 0.0
    %5281 = vmatprep.mubr.f32.mxu0 0.0
    %5282 = vmatmul.mubr.f32.gmra.mrb[0].mxu0 %v5188
    %v5283 = vpop.f32.mrb[0].mxu0
    %v5284 = vadd.f32 0.0, %v5283
    %v5285 = vpop.f32.mrb[0].mxu0
    %v5286 = vadd.f32 0.0, %v5285
    %5287 = vdwg.mxu0
    %5288 = vmatprep.subr.mxu0 0.0
    %5289 = vmatpush1.msra.mxu0 %v4433
    %5290 = vmatprep.subr.mxu0 0.0
    %5291 = vmatpush1.msra.mxu0 %v4436
    %5292 = vmatprep.subr.mxu0 0.0
    %5293 = vmatpush1.msra.mxu0 %v4439
    %5294 = vmatprep.subr.mxu0 0.0
    %5295 = vmatpush1.msra.mxu0 %v4442
    %5296 = vmatprep.subr.mxu0 0.0
    %5297 = vmatpush1.msra.mxu0 %v4445
    %5298 = vmatprep.subr.mxu0 0.0
    %5299 = vmatpush1.msra.mxu0 %v4448
    %5300 = vmatprep.subr.mxu0 0.0
    %5301 = vmatpush1.msra.mxu0 %v4451
    %5302 = vmatprep.subr.mxu0 0.0
    %5303 = vmatpush1.msra.mxu0 %v4454
    %5304 = vmatprep.subr.mxu0 0.0
    %5305 = vmatpush1.msra.mxu0 %v4457
    %5306 = vmatprep.subr.mxu0 0.0
    %5307 = vmatpush1.msra.mxu0 %v4460
    %5308 = vmatprep.subr.mxu0 0.0
    %5309 = vmatpush1.msra.mxu0 %v4463
    %5310 = vmatprep.subr.mxu0 0.0
    %5311 = vmatpush1.msra.mxu0 %v4466
    %5312 = vmatprep.subr.mxu0 0.0
    %5313 = vmatpush1.msra.mxu0 %v4469
    %5314 = vmatprep.subr.mxu0 0.0
    %5315 = vmatpush1.msra.mxu0 %v4472
    %5316 = vmatprep.subr.mxu0 0.0
    %5317 = vmatpush1.msra.mxu0 %v4475
    %5318 = vmatprep.subr.mxu0 0.0
    %5319 = vmatpush1.msra.mxu0 %v4478
    %5320 = vmatprep.subr.mxu0 0.0
    %5321 = vmatpush1.msra.mxu0 0.0
    %5322 = vmatprep.subr.mxu0 0.0
    %5323 = vmatpush1.msra.mxu0 0.0
    %5324 = vmatprep.subr.mxu0 0.0
    %5325 = vmatpush1.msra.mxu0 0.0
    %5326 = vmatprep.subr.mxu0 0.0
    %5327 = vmatpush1.msra.mxu0 0.0
    %5328 = vmatprep.subr.mxu0 0.0
    %5329 = vmatpush1.msra.mxu0 0.0
    %5330 = vmatprep.subr.mxu0 0.0
    %5331 = vmatpush1.msra.mxu0 0.0
    %5332 = vmatprep.subr.mxu0 0.0
    %5333 = vmatpush1.msra.mxu0 0.0
    %5334 = vmatprep.subr.mxu0 0.0
    %5335 = vmatpush1.msra.mxu0 0.0
    %5336 = vmatprep.subr.mxu0 0.0
    %5337 = vmatpush1.msra.mxu0 0.0
    %5338 = vmatprep.subr.mxu0 0.0
    %5339 = vmatpush1.msra.mxu0 0.0
    %5340 = vmatprep.subr.mxu0 0.0
    %5341 = vmatpush1.msra.mxu0 0.0
    %5342 = vmatprep.subr.mxu0 0.0
    %5343 = vmatpush1.msra.mxu0 0.0
    %5344 = vmatprep.subr.mxu0 0.0
    %5345 = vmatpush1.msra.mxu0 0.0
    %5346 = vmatprep.subr.mxu0 0.0
    %5347 = vmatpush1.msra.mxu0 0.0
    %5348 = vmatprep.subr.mxu0 0.0
    %5349 = vmatpush1.msra.mxu0 0.0
    %5350 = vmatprep.subr.mxu0 0.0
    %5351 = vmatpush1.msra.mxu0 0.0
    %5352 = vmatprep.mubr.f32.mxu0 0.0
    %5353 = vmatmul.mubr.f32.gmra.mrb[0].mxu0 %v5188
    %v5354 = vpop.f32.mrb[0].mxu0
    %v5355 = vadd.f32 0.0, %v5354
    %v5356 = vpop.f32.mrb[0].mxu0
    %5357 = vdwg.mxu0
    %5358 = vmatprep.subr.mxu0 %v4480
    %5359 = vmatpush1.msra.mxu0 %v4479
    %5360 = vmatprep.subr.mxu0 %v4483
    %5361 = vmatpush1.msra.mxu0 %v4482
    %5362 = vmatprep.subr.mxu0 %v4486
    %5363 = vmatpush1.msra.mxu0 %v4485
    %5364 = vmatprep.subr.mxu0 %v4489
    %5365 = vmatpush1.msra.mxu0 %v4488
    %5366 = vmatprep.subr.mxu0 %v4492
    %5367 = vmatpush1.msra.mxu0 %v4491
    %5368 = vmatprep.subr.mxu0 %v4495
    %5369 = vmatpush1.msra.mxu0 %v4494
    %5370 = vmatprep.subr.mxu0 %v4498
    %5371 = vmatpush1.msra.mxu0 %v4497
    %5372 = vmatprep.subr.mxu0 %v4501
    %5373 = vmatpush1.msra.mxu0 %v4500
    %5374 = vmatprep.subr.mxu0 %v4504
    %5375 = vmatpush1.msra.mxu0 %v4503
    %5376 = vmatprep.subr.mxu0 %v4507
    %5377 = vmatpush1.msra.mxu0 %v4506
    %5378 = vmatprep.subr.mxu0 %v4510
    %5379 = vmatpush1.msra.mxu0 %v4509
    %5380 = vmatprep.subr.mxu0 %v4513
    %5381 = vmatpush1.msra.mxu0 %v4512
    %5382 = vmatprep.subr.mxu0 %v4516
    %5383 = vmatpush1.msra.mxu0 %v4515
    %5384 = vmatprep.subr.mxu0 %v4519
    %5385 = vmatpush1.msra.mxu0 %v4518
    %5386 = vmatprep.subr.mxu0 %v4522
    %5387 = vmatpush1.msra.mxu0 %v4521
    %5388 = vmatprep.subr.mxu0 %v4525
    %5389 = vmatpush1.msra.mxu0 %v4524
    %5390 = vmatprep.subr.mxu0 0.0
    %5391 = vmatpush1.msra.mxu0 0.0
    %5392 = vmatprep.subr.mxu0 0.0
    %5393 = vmatpush1.msra.mxu0 0.0
    %5394 = vmatprep.subr.mxu0 0.0
    %5395 = vmatpush1.msra.mxu0 0.0
    %5396 = vmatprep.subr.mxu0 0.0
    %5397 = vmatpush1.msra.mxu0 0.0
    %5398 = vmatprep.subr.mxu0 0.0
    %5399 = vmatpush1.msra.mxu0 0.0
    %5400 = vmatprep.subr.mxu0 0.0
    %5401 = vmatpush1.msra.mxu0 0.0
    %5402 = vmatprep.subr.mxu0 0.0
    %5403 = vmatpush1.msra.mxu0 0.0
    %5404 = vmatprep.subr.mxu0 0.0
    %5405 = vmatpush1.msra.mxu0 0.0
    %5406 = vmatprep.subr.mxu0 0.0
    %5407 = vmatpush1.msra.mxu0 0.0
    %5408 = vmatprep.subr.mxu0 0.0
    %5409 = vmatpush1.msra.mxu0 0.0
    %5410 = vmatprep.subr.mxu0 0.0
    %5411 = vmatpush1.msra.mxu0 0.0
    %5412 = vmatprep.subr.mxu0 0.0
    %5413 = vmatpush1.msra.mxu0 0.0
    %5414 = vmatprep.subr.mxu0 0.0
    %5415 = vmatpush1.msra.mxu0 0.0
    %5416 = vmatprep.subr.mxu0 0.0
    %5417 = vmatpush1.msra.mxu0 0.0
    %5418 = vmatprep.subr.mxu0 0.0
    %5419 = vmatpush1.msra.mxu0 0.0
    %5420 = vmatprep.subr.mxu0 0.0
    %5421 = vmatpush1.msra.mxu0 0.0
    %5422 = vmatprep.mubr.f32.mxu0 0.0
    %5423 = vmatmul.mubr.f32.gmra.mrb[0].mxu0 %v5216
    %v5424 = vpop.f32.mrb[0].mxu0
    %v5425 = vadd.f32 0.0, %v5424
    %v5426 = vpop.f32.mrb[0].mxu0
    %v5427 = vadd.f32 0.0, %v5426
    %5428 = vdwg.mxu0
    %5429 = vmatprep.subr.mxu0 0.0
    %5430 = vmatpush1.msra.mxu0 %v4481
    %5431 = vmatprep.subr.mxu0 0.0
    %5432 = vmatpush1.msra.mxu0 %v4484
    %5433 = vmatprep.subr.mxu0 0.0
    %5434 = vmatpush1.msra.mxu0 %v4487
    %5435 = vmatprep.subr.mxu0 0.0
    %5436 = vmatpush1.msra.mxu0 %v4490
    %5437 = vmatprep.subr.mxu0 0.0
    %5438 = vmatpush1.msra.mxu0 %v4493
    %5439 = vmatprep.subr.mxu0 0.0
    %5440 = vmatpush1.msra.mxu0 %v4496
    %5441 = vmatprep.subr.mxu0 0.0
    %5442 = vmatpush1.msra.mxu0 %v4499
    %5443 = vmatprep.subr.mxu0 0.0
    %5444 = vmatpush1.msra.mxu0 %v4502
    %5445 = vmatprep.subr.mxu0 0.0
    %5446 = vmatpush1.msra.mxu0 %v4505
    %5447 = vmatprep.subr.mxu0 0.0
    %5448 = vmatpush1.msra.mxu0 %v4508
    %5449 = vmatprep.subr.mxu0 0.0
    %5450 = vmatpush1.msra.mxu0 %v4511
    %5451 = vmatprep.subr.mxu0 0.0
    %5452 = vmatpush1.msra.mxu0 %v4514
    %5453 = vmatprep.subr.mxu0 0.0
    %5454 = vmatpush1.msra.mxu0 %v4517
    %5455 = vmatprep.subr.mxu0 0.0
    %5456 = vmatpush1.msra.mxu0 %v4520
    %5457 = vmatprep.subr.mxu0 0.0
    %5458 = vmatpush1.msra.mxu0 %v4523
    %5459 = vmatprep.subr.mxu0 0.0
    %5460 = vmatpush1.msra.mxu0 %v4526
    %5461 = vmatprep.subr.mxu0 0.0
    %5462 = vmatpush1.msra.mxu0 0.0
    %5463 = vmatprep.subr.mxu0 0.0
    %5464 = vmatpush1.msra.mxu0 0.0
    %5465 = vmatprep.subr.mxu0 0.0
    %5466 = vmatpush1.msra.mxu0 0.0
    %5467 = vmatprep.subr.mxu0 0.0
    %5468 = vmatpush1.msra.mxu0 0.0
    %5469 = vmatprep.subr.mxu0 0.0
    %5470 = vmatpush1.msra.mxu0 0.0
    %5471 = vmatprep.subr.mxu0 0.0
    %5472 = vmatpush1.msra.mxu0 0.0
    %5473 = vmatprep.subr.mxu0 0.0
    %5474 = vmatpush1.msra.mxu0 0.0
    %5475 = vmatprep.subr.mxu0 0.0
    %5476 = vmatpush1.msra.mxu0 0.0
    %5477 = vmatprep.subr.mxu0 0.0
    %5478 = vmatpush1.msra.mxu0 0.0
    %5479 = vmatprep.subr.mxu0 0.0
    %5480 = vmatpush1.msra.mxu0 0.0
    %5481 = vmatprep.subr.mxu0 0.0
    %5482 = vmatpush1.msra.mxu0 0.0
    %5483 = vmatprep.subr.mxu0 0.0
    %5484 = vmatpush1.msra.mxu0 0.0
    %5485 = vmatprep.subr.mxu0 0.0
    %5486 = vmatpush1.msra.mxu0 0.0
    %5487 = vmatprep.subr.mxu0 0.0
    %5488 = vmatpush1.msra.mxu0 0.0
    %5489 = vmatprep.subr.mxu0 0.0
    %5490 = vmatpush1.msra.mxu0 0.0
    %5491 = vmatprep.subr.mxu0 0.0
    %5492 = vmatpush1.msra.mxu0 0.0
    %5493 = vmatprep.mubr.f32.mxu0 0.0
    %5494 = vmatmul.mubr.f32.gmra.mrb[0].mxu0 %v5216
    %v5495 = vpop.f32.mrb[0].mxu0
    %v5496 = vadd.f32 0.0, %v5495
    %v5497 = vpop.f32.mrb[0].mxu0
    %5498 = vdwg.mxu0
    %v5499 = vld [vmem:[%s1718] sm:$0x3f]
    %v5500 = vadd.f32 %v5499, %v5284
    %v5501 = vxor.u32 %v5500, 2147483648
    %v5502 = vmul.f32 %v5501, 1.442695
    %v5503 = vpow.pop %v5502
    %v5504 = vadd.f32 %v5503, 1.0
    %v5505 = vrcp.pop %v5504
    %v5506 = vmul.f32 1.0, %v5505
    %v5508 = vrot.slane %v5499, 2
    %v5510 = vadd.f32 %v5508, %v5286
    %v5511 = vxor.u32 %v5510, 2147483648
    %v5512 = vmul.f32 %v5511, 1.442695
    %v5513 = vpow.pop %v5512
    %v5514 = vadd.f32 %v5513, 1.0
    %v5515 = vrcp.pop %v5514
    %v5516 = vmul.f32 1.0, %v5515
    %v5517 = vadd.f32 %v5355, %v4532
    %v5518 = vmul.f32 %v5506, %v5517
    %v5519 = vrot.slane %v5499, 4
    %v5521 = vadd.f32 %v5519, %v5518
    %v5522 = vtanh.pop %v5521
    %v5523 = vsub.f32 1.0, %v5516
    %v5524 = vmul.f32 %v5523, %v5522
    %v5525 = vmul.f32 %v5516, %v5188
    %v5526 = vadd.f32 %v5524, %v5525
    %v5527 = vld [vmem:[%s1747 + $0x6] sm:$0x3f]
    %v5528 = vadd.f32 %v5527, %v5425
    %v5529 = vxor.u32 %v5528, 2147483648
    %v5530 = vmul.f32 %v5529, 1.442695
    %v5531 = vpow.pop %v5530
    %v5532 = vadd.f32 %v5531, 1.0
    %v5533 = vrcp.pop %v5532
    %v5534 = vmul.f32 1.0, %v5533
    %v5536 = vrot.slane %v5527, 2
    %v5538 = vadd.f32 %v5536, %v5427
    %v5539 = vxor.u32 %v5538, 2147483648
    %v5540 = vmul.f32 %v5539, 1.442695
    %v5541 = vpow.pop %v5540
    %v5542 = vadd.f32 %v5541, 1.0
    %v5543 = vrcp.pop %v5542
    %v5544 = vmul.f32 1.0, %v5543
    %v5545 = vadd.f32 %v5496, %v4539
    %v5546 = vmul.f32 %v5534, %v5545
    %v5547 = vrot.slane %v5527, 4
    %v5549 = vadd.f32 %v5547, %v5546
    %v5550 = vtanh.pop %v5549
    %v5551 = vsub.f32 1.0, %v5544
    %v5552 = vmul.f32 %v5551, %v5550
    %v5553 = vmul.f32 %v5544, %v5216
    %v5554 = vadd.f32 %v5552, %v5553
    %5555 = vmatprep.subr.mxu0 %v4432
    %5556 = vmatpush1.msra.mxu0 %v4431
    %5557 = vmatprep.subr.mxu0 %v4435
    %5558 = vmatpush1.msra.mxu0 %v4434
    %5559 = vmatprep.subr.mxu0 %v4438
    %5560 = vmatpush1.msra.mxu0 %v4437
    %5561 = vmatprep.subr.mxu0 %v4441
    %5562 = vmatpush1.msra.mxu0 %v4440
    %5563 = vmatprep.subr.mxu0 %v4444
    %5564 = vmatpush1.msra.mxu0 %v4443
    %5565 = vmatprep.subr.mxu0 %v4447
    %5566 = vmatpush1.msra.mxu0 %v4446
    %5567 = vmatprep.subr.mxu0 %v4450
    %5568 = vmatpush1.msra.mxu0 %v4449
    %5569 = vmatprep.subr.mxu0 %v4453
    %5570 = vmatpush1.msra.mxu0 %v4452
    %5571 = vmatprep.subr.mxu0 %v4456
    %5572 = vmatpush1.msra.mxu0 %v4455
    %5573 = vmatprep.subr.mxu0 %v4459
    %5574 = vmatpush1.msra.mxu0 %v4458
    %5575 = vmatprep.subr.mxu0 %v4462
    %5576 = vmatpush1.msra.mxu0 %v4461
    %5577 = vmatprep.subr.mxu0 %v4465
    %5578 = vmatpush1.msra.mxu0 %v4464
    %5579 = vmatprep.subr.mxu0 %v4468
    %5580 = vmatpush1.msra.mxu0 %v4467
    %5581 = vmatprep.subr.mxu0 %v4471
    %5582 = vmatpush1.msra.mxu0 %v4470
    %5583 = vmatprep.subr.mxu0 %v4474
    %5584 = vmatpush1.msra.mxu0 %v4473
    %5585 = vmatprep.subr.mxu0 %v4477
    %5586 = vmatpush1.msra.mxu0 %v4476
    %5587 = vmatprep.subr.mxu0 0.0
    %5588 = vmatpush1.msra.mxu0 0.0
    %5589 = vmatprep.subr.mxu0 0.0
    %5590 = vmatpush1.msra.mxu0 0.0
    %5591 = vmatprep.subr.mxu0 0.0
    %5592 = vmatpush1.msra.mxu0 0.0
    %5593 = vmatprep.subr.mxu0 0.0
    %5594 = vmatpush1.msra.mxu0 0.0
    %5595 = vmatprep.subr.mxu0 0.0
    %5596 = vmatpush1.msra.mxu0 0.0
    %5597 = vmatprep.subr.mxu0 0.0
    %5598 = vmatpush1.msra.mxu0 0.0
    %5599 = vmatprep.subr.mxu0 0.0
    %5600 = vmatpush1.msra.mxu0 0.0
    %5601 = vmatprep.subr.mxu0 0.0
    %5602 = vmatpush1.msra.mxu0 0.0
    %5603 = vmatprep.subr.mxu0 0.0
    %5604 = vmatpush1.msra.mxu0 0.0
    %5605 = vmatprep.subr.mxu0 0.0
    %5606 = vmatpush1.msra.mxu0 0.0
    %5607 = vmatprep.subr.mxu0 0.0
    %5608 = vmatpush1.msra.mxu0 0.0
    %5609 = vmatprep.subr.mxu0 0.0
    %5610 = vmatpush1.msra.mxu0 0.0
    %5611 = vmatprep.subr.mxu0 0.0
    %5612 = vmatpush1.msra.mxu0 0.0
    %5613 = vmatprep.subr.mxu0 0.0
    %5614 = vmatpush1.msra.mxu0 0.0
    %5615 = vmatprep.subr.mxu0 0.0
    %5616 = vmatpush1.msra.mxu0 0.0
    %5617 = vmatprep.subr.mxu0 0.0
    %5618 = vmatpush1.msra.mxu0 0.0
    %5619 = vmatprep.mubr.f32.mxu0 0.0
    %5620 = vmatmul.mubr.f32.gmra.mrb[0].mxu0 %v5526
    %v5621 = vpop.f32.mrb[0].mxu0
    %v5622 = vadd.f32 0.0, %v5621
    %v5623 = vpop.f32.mrb[0].mxu0
    %v5624 = vadd.f32 0.0, %v5623
    %5625 = vdwg.mxu0
    %5626 = vmatprep.subr.mxu0 0.0
    %5627 = vmatpush1.msra.mxu0 %v4433
    %5628 = vmatprep.subr.mxu0 0.0
    %5629 = vmatpush1.msra.mxu0 %v4436
    %5630 = vmatprep.subr.mxu0 0.0
    %5631 = vmatpush1.msra.mxu0 %v4439
    %5632 = vmatprep.subr.mxu0 0.0
    %5633 = vmatpush1.msra.mxu0 %v4442
    %5634 = vmatprep.subr.mxu0 0.0
    %5635 = vmatpush1.msra.mxu0 %v4445
    %5636 = vmatprep.subr.mxu0 0.0
    %5637 = vmatpush1.msra.mxu0 %v4448
    %5638 = vmatprep.subr.mxu0 0.0
    %5639 = vmatpush1.msra.mxu0 %v4451
    %5640 = vmatprep.subr.mxu0 0.0
    %5641 = vmatpush1.msra.mxu0 %v4454
    %5642 = vmatprep.subr.mxu0 0.0
    %5643 = vmatpush1.msra.mxu0 %v4457
    %5644 = vmatprep.subr.mxu0 0.0
    %5645 = vmatpush1.msra.mxu0 %v4460
    %5646 = vmatprep.subr.mxu0 0.0
    %5647 = vmatpush1.msra.mxu0 %v4463
    %5648 = vmatprep.subr.mxu0 0.0
    %5649 = vmatpush1.msra.mxu0 %v4466
    %5650 = vmatprep.subr.mxu0 0.0
    %5651 = vmatpush1.msra.mxu0 %v4469
    %5652 = vmatprep.subr.mxu0 0.0
    %5653 = vmatpush1.msra.mxu0 %v4472
    %5654 = vmatprep.subr.mxu0 0.0
    %5655 = vmatpush1.msra.mxu0 %v4475
    %5656 = vmatprep.subr.mxu0 0.0
    %5657 = vmatpush1.msra.mxu0 %v4478
    %5658 = vmatprep.subr.mxu0 0.0
    %5659 = vmatpush1.msra.mxu0 0.0
    %5660 = vmatprep.subr.mxu0 0.0
    %5661 = vmatpush1.msra.mxu0 0.0
    %5662 = vmatprep.subr.mxu0 0.0
    %5663 = vmatpush1.msra.mxu0 0.0
    %5664 = vmatprep.subr.mxu0 0.0
    %5665 = vmatpush1.msra.mxu0 0.0
    %5666 = vmatprep.subr.mxu0 0.0
    %5667 = vmatpush1.msra.mxu0 0.0
    %5668 = vmatprep.subr.mxu0 0.0
    %5669 = vmatpush1.msra.mxu0 0.0
    %5670 = vmatprep.subr.mxu0 0.0
    %5671 = vmatpush1.msra.mxu0 0.0
    %5672 = vmatprep.subr.mxu0 0.0
    %5673 = vmatpush1.msra.mxu0 0.0
    %5674 = vmatprep.subr.mxu0 0.0
    %5675 = vmatpush1.msra.mxu0 0.0
    %5676 = vmatprep.subr.mxu0 0.0
    %5677 = vmatpush1.msra.mxu0 0.0
    %5678 = vmatprep.subr.mxu0 0.0
    %5679 = vmatpush1.msra.mxu0 0.0
    %5680 = vmatprep.subr.mxu0 0.0
    %5681 = vmatpush1.msra.mxu0 0.0
    %5682 = vmatprep.subr.mxu0 0.0
    %5683 = vmatpush1.msra.mxu0 0.0
    %5684 = vmatprep.subr.mxu0 0.0
    %5685 = vmatpush1.msra.mxu0 0.0
    %5686 = vmatprep.subr.mxu0 0.0
    %5687 = vmatpush1.msra.mxu0 0.0
    %5688 = vmatprep.subr.mxu0 0.0
    %5689 = vmatpush1.msra.mxu0 0.0
    %5690 = vmatprep.mubr.f32.mxu0 0.0
    %5691 = vmatmul.mubr.f32.gmra.mrb[0].mxu0 %v5526
    %v5692 = vpop.f32.mrb[0].mxu0
    %v5693 = vadd.f32 0.0, %v5692
    %v5694 = vpop.f32.mrb[0].mxu0
    %5695 = vdwg.mxu0
    %5696 = vmatprep.subr.mxu0 %v4480
    %5697 = vmatpush1.msra.mxu0 %v4479
    %5698 = vmatprep.subr.mxu0 %v4483
    %5699 = vmatpush1.msra.mxu0 %v4482
    %5700 = vmatprep.subr.mxu0 %v4486
    %5701 = vmatpush1.msra.mxu0 %v4485
    %5702 = vmatprep.subr.mxu0 %v4489
    %5703 = vmatpush1.msra.mxu0 %v4488
    %5704 = vmatprep.subr.mxu0 %v4492
    %5705 = vmatpush1.msra.mxu0 %v4491
    %5706 = vmatprep.subr.mxu0 %v4495
    %5707 = vmatpush1.msra.mxu0 %v4494
    %5708 = vmatprep.subr.mxu0 %v4498
    %5709 = vmatpush1.msra.mxu0 %v4497
    %5710 = vmatprep.subr.mxu0 %v4501
    %5711 = vmatpush1.msra.mxu0 %v4500
    %5712 = vmatprep.subr.mxu0 %v4504
    %5713 = vmatpush1.msra.mxu0 %v4503
    %5714 = vmatprep.subr.mxu0 %v4507
    %5715 = vmatpush1.msra.mxu0 %v4506
    %5716 = vmatprep.subr.mxu0 %v4510
    %5717 = vmatpush1.msra.mxu0 %v4509
    %5718 = vmatprep.subr.mxu0 %v4513
    %5719 = vmatpush1.msra.mxu0 %v4512
    %5720 = vmatprep.subr.mxu0 %v4516
    %5721 = vmatpush1.msra.mxu0 %v4515
    %5722 = vmatprep.subr.mxu0 %v4519
    %5723 = vmatpush1.msra.mxu0 %v4518
    %5724 = vmatprep.subr.mxu0 %v4522
    %5725 = vmatpush1.msra.mxu0 %v4521
    %5726 = vmatprep.subr.mxu0 %v4525
    %5727 = vmatpush1.msra.mxu0 %v4524
    %5728 = vmatprep.subr.mxu0 0.0
    %5729 = vmatpush1.msra.mxu0 0.0
    %5730 = vmatprep.subr.mxu0 0.0
    %5731 = vmatpush1.msra.mxu0 0.0
    %5732 = vmatprep.subr.mxu0 0.0
    %5733 = vmatpush1.msra.mxu0 0.0
    %5734 = vmatprep.subr.mxu0 0.0
    %5735 = vmatpush1.msra.mxu0 0.0
    %5736 = vmatprep.subr.mxu0 0.0
    %5737 = vmatpush1.msra.mxu0 0.0
    %5738 = vmatprep.subr.mxu0 0.0
    %5739 = vmatpush1.msra.mxu0 0.0
    %5740 = vmatprep.subr.mxu0 0.0
    %5741 = vmatpush1.msra.mxu0 0.0
    %5742 = vmatprep.subr.mxu0 0.0
    %5743 = vmatpush1.msra.mxu0 0.0
    %5744 = vmatprep.subr.mxu0 0.0
    %5745 = vmatpush1.msra.mxu0 0.0
    %5746 = vmatprep.subr.mxu0 0.0
    %5747 = vmatpush1.msra.mxu0 0.0
    %5748 = vmatprep.subr.mxu0 0.0
    %5749 = vmatpush1.msra.mxu0 0.0
    %5750 = vmatprep.subr.mxu0 0.0
    %5751 = vmatpush1.msra.mxu0 0.0
    %5752 = vmatprep.subr.mxu0 0.0
    %5753 = vmatpush1.msra.mxu0 0.0
    %5754 = vmatprep.subr.mxu0 0.0
    %5755 = vmatpush1.msra.mxu0 0.0
    %5756 = vmatprep.subr.mxu0 0.0
    %5757 = vmatpush1.msra.mxu0 0.0
    %5758 = vmatprep.subr.mxu0 0.0
    %5759 = vmatpush1.msra.mxu0 0.0
    %5760 = vmatprep.mubr.f32.mxu0 0.0
    %5761 = vmatmul.mubr.f32.gmra.mrb[0].mxu0 %v5554
    %v5762 = vpop.f32.mrb[0].mxu0
    %v5763 = vadd.f32 0.0, %v5762
    %v5764 = vpop.f32.mrb[0].mxu0
    %v5765 = vadd.f32 0.0, %v5764
    %5766 = vdwg.mxu0
    %5767 = vmatprep.subr.mxu0 0.0
    %5768 = vmatpush1.msra.mxu0 %v4481
    %5769 = vmatprep.subr.mxu0 0.0
    %5770 = vmatpush1.msra.mxu0 %v4484
    %5771 = vmatprep.subr.mxu0 0.0
    %5772 = vmatpush1.msra.mxu0 %v4487
    %5773 = vmatprep.subr.mxu0 0.0
    %5774 = vmatpush1.msra.mxu0 %v4490
    %5775 = vmatprep.subr.mxu0 0.0
    %5776 = vmatpush1.msra.mxu0 %v4493
    %5777 = vmatprep.subr.mxu0 0.0
    %5778 = vmatpush1.msra.mxu0 %v4496
    %5779 = vmatprep.subr.mxu0 0.0
    %5780 = vmatpush1.msra.mxu0 %v4499
    %5781 = vmatprep.subr.mxu0 0.0
    %5782 = vmatpush1.msra.mxu0 %v4502
    %5783 = vmatprep.subr.mxu0 0.0
    %5784 = vmatpush1.msra.mxu0 %v4505
    %5785 = vmatprep.subr.mxu0 0.0
    %5786 = vmatpush1.msra.mxu0 %v4508
    %5787 = vmatprep.subr.mxu0 0.0
    %5788 = vmatpush1.msra.mxu0 %v4511
    %5789 = vmatprep.subr.mxu0 0.0
    %5790 = vmatpush1.msra.mxu0 %v4514
    %5791 = vmatprep.subr.mxu0 0.0
    %5792 = vmatpush1.msra.mxu0 %v4517
    %5793 = vmatprep.subr.mxu0 0.0
    %5794 = vmatpush1.msra.mxu0 %v4520
    %5795 = vmatprep.subr.mxu0 0.0
    %5796 = vmatpush1.msra.mxu0 %v4523
    %5797 = vmatprep.subr.mxu0 0.0
    %5798 = vmatpush1.msra.mxu0 %v4526
    %5799 = vmatprep.subr.mxu0 0.0
    %5800 = vmatpush1.msra.mxu0 0.0
    %5801 = vmatprep.subr.mxu0 0.0
    %5802 = vmatpush1.msra.mxu0 0.0
    %5803 = vmatprep.subr.mxu0 0.0
    %5804 = vmatpush1.msra.mxu0 0.0
    %5805 = vmatprep.subr.mxu0 0.0
    %5806 = vmatpush1.msra.mxu0 0.0
    %5807 = vmatprep.subr.mxu0 0.0
    %5808 = vmatpush1.msra.mxu0 0.0
    %5809 = vmatprep.subr.mxu0 0.0
    %5810 = vmatpush1.msra.mxu0 0.0
    %5811 = vmatprep.subr.mxu0 0.0
    %5812 = vmatpush1.msra.mxu0 0.0
    %5813 = vmatprep.subr.mxu0 0.0
    %5814 = vmatpush1.msra.mxu0 0.0
    %5815 = vmatprep.subr.mxu0 0.0
    %5816 = vmatpush1.msra.mxu0 0.0
    %5817 = vmatprep.subr.mxu0 0.0
    %5818 = vmatpush1.msra.mxu0 0.0
    %5819 = vmatprep.subr.mxu0 0.0
    %5820 = vmatpush1.msra.mxu0 0.0
    %5821 = vmatprep.subr.mxu0 0.0
    %5822 = vmatpush1.msra.mxu0 0.0
    %5823 = vmatprep.subr.mxu0 0.0
    %5824 = vmatpush1.msra.mxu0 0.0
    %5825 = vmatprep.subr.mxu0 0.0
    %5826 = vmatpush1.msra.mxu0 0.0
    %5827 = vmatprep.subr.mxu0 0.0
    %5828 = vmatpush1.msra.mxu0 0.0
    %5829 = vmatprep.subr.mxu0 0.0
    %5830 = vmatpush1.msra.mxu0 0.0
    %5831 = vmatprep.mubr.f32.mxu0 0.0
    %5832 = vmatmul.mubr.f32.gmra.mrb[0].mxu0 %v5554
    %v5833 = vpop.f32.mrb[0].mxu0
    %v5834 = vadd.f32 0.0, %v5833
    %v5835 = vpop.f32.mrb[0].mxu0
    %5836 = vdwg.mxu0
    %v5837 = vld [vmem:[%s2062] sm:$0x3f]
    %v5838 = vadd.f32 %v5837, %v5622
    %v5839 = vxor.u32 %v5838, 2147483648
    %v5840 = vmul.f32 %v5839, 1.442695
    %v5841 = vpow.pop %v5840
    %v5842 = vadd.f32 %v5841, 1.0
    %v5843 = vrcp.pop %v5842
    %v5844 = vmul.f32 1.0, %v5843
    %v5846 = vrot.slane %v5837, 2
    %v5848 = vadd.f32 %v5846, %v5624
    %v5849 = vxor.u32 %v5848, 2147483648
    %v5850 = vmul.f32 %v5849, 1.442695
    %v5851 = vpow.pop %v5850
    %v5852 = vadd.f32 %v5851, 1.0
    %v5853 = vrcp.pop %v5852
    %v5854 = vmul.f32 1.0, %v5853
    %v5855 = vadd.f32 %v5693, %v4532
    %v5856 = vmul.f32 %v5844, %v5855
    %v5857 = vrot.slane %v5837, 4
    %v5859 = vadd.f32 %v5857, %v5856
    %v5860 = vtanh.pop %v5859
    %v5861 = vsub.f32 1.0, %v5854
    %v5862 = vmul.f32 %v5861, %v5860
    %v5863 = vmul.f32 %v5854, %v5526
    %v5864 = vadd.f32 %v5862, %v5863
    %v5865 = vld [vmem:[%s2091 + $0x6] sm:$0x3f]
    %v5866 = vadd.f32 %v5865, %v5763
    %v5867 = vxor.u32 %v5866, 2147483648
    %v5868 = vmul.f32 %v5867, 1.442695
    %v5869 = vpow.pop %v5868
    %v5870 = vadd.f32 %v5869, 1.0
    %v5871 = vrcp.pop %v5870
    %v5872 = vmul.f32 1.0, %v5871
    %v5874 = vrot.slane %v5865, 2
    %v5876 = vadd.f32 %v5874, %v5765
    %v5877 = vxor.u32 %v5876, 2147483648
    %v5878 = vmul.f32 %v5877, 1.442695
    %v5879 = vpow.pop %v5878
    %v5880 = vadd.f32 %v5879, 1.0
    %v5881 = vrcp.pop %v5880
    %v5882 = vmul.f32 1.0, %v5881
    %v5883 = vadd.f32 %v5834, %v4539
    %v5884 = vmul.f32 %v5872, %v5883
    %v5885 = vrot.slane %v5865, 4
    %v5887 = vadd.f32 %v5885, %v5884
    %v5888 = vtanh.pop %v5887
    %v5889 = vsub.f32 1.0, %v5882
    %v5890 = vmul.f32 %v5889, %v5888
    %v5891 = vmul.f32 %v5882, %v5554
    %v5892 = vadd.f32 %v5890, %v5891
    %5893 = vmatprep.subr.mxu0 %v4432
    %5894 = vmatpush1.msra.mxu0 %v4431
    %5895 = vmatprep.subr.mxu0 %v4435
    %5896 = vmatpush1.msra.mxu0 %v4434
    %5897 = vmatprep.subr.mxu0 %v4438
    %5898 = vmatpush1.msra.mxu0 %v4437
    %5899 = vmatprep.subr.mxu0 %v4441
    %5900 = vmatpush1.msra.mxu0 %v4440
    %5901 = vmatprep.subr.mxu0 %v4444
    %5902 = vmatpush1.msra.mxu0 %v4443
    %5903 = vmatprep.subr.mxu0 %v4447
    %5904 = vmatpush1.msra.mxu0 %v4446
    %5905 = vmatprep.subr.mxu0 %v4450
    %5906 = vmatpush1.msra.mxu0 %v4449
    %5907 = vmatprep.subr.mxu0 %v4453
    %5908 = vmatpush1.msra.mxu0 %v4452
    %5909 = vmatprep.subr.mxu0 %v4456
    %5910 = vmatpush1.msra.mxu0 %v4455
    %5911 = vmatprep.subr.mxu0 %v4459
    %5912 = vmatpush1.msra.mxu0 %v4458
    %5913 = vmatprep.subr.mxu0 %v4462
    %5914 = vmatpush1.msra.mxu0 %v4461
    %5915 = vmatprep.subr.mxu0 %v4465
    %5916 = vmatpush1.msra.mxu0 %v4464
    %5917 = vmatprep.subr.mxu0 %v4468
    %5918 = vmatpush1.msra.mxu0 %v4467
    %5919 = vmatprep.subr.mxu0 %v4471
    %5920 = vmatpush1.msra.mxu0 %v4470
    %5921 = vmatprep.subr.mxu0 %v4474
    %5922 = vmatpush1.msra.mxu0 %v4473
    %5923 = vmatprep.subr.mxu0 %v4477
    %5924 = vmatpush1.msra.mxu0 %v4476
    %5925 = vmatprep.subr.mxu0 0.0
    %5926 = vmatpush1.msra.mxu0 0.0
    %5927 = vmatprep.subr.mxu0 0.0
    %5928 = vmatpush1.msra.mxu0 0.0
    %5929 = vmatprep.subr.mxu0 0.0
    %5930 = vmatpush1.msra.mxu0 0.0
    %5931 = vmatprep.subr.mxu0 0.0
    %5932 = vmatpush1.msra.mxu0 0.0
    %5933 = vmatprep.subr.mxu0 0.0
    %5934 = vmatpush1.msra.mxu0 0.0
    %5935 = vmatprep.subr.mxu0 0.0
    %5936 = vmatpush1.msra.mxu0 0.0
    %5937 = vmatprep.subr.mxu0 0.0
    %5938 = vmatpush1.msra.mxu0 0.0
    %5939 = vmatprep.subr.mxu0 0.0
    %5940 = vmatpush1.msra.mxu0 0.0
    %5941 = vmatprep.subr.mxu0 0.0
    %5942 = vmatpush1.msra.mxu0 0.0
    %5943 = vmatprep.subr.mxu0 0.0
    %5944 = vmatpush1.msra.mxu0 0.0
    %5945 = vmatprep.subr.mxu0 0.0
    %5946 = vmatpush1.msra.mxu0 0.0
    %5947 = vmatprep.subr.mxu0 0.0
    %5948 = vmatpush1.msra.mxu0 0.0
    %5949 = vmatprep.subr.mxu0 0.0
    %5950 = vmatpush1.msra.mxu0 0.0
    %5951 = vmatprep.subr.mxu0 0.0
    %5952 = vmatpush1.msra.mxu0 0.0
    %5953 = vmatprep.subr.mxu0 0.0
    %5954 = vmatpush1.msra.mxu0 0.0
    %5955 = vmatprep.subr.mxu0 0.0
    %5956 = vmatpush1.msra.mxu0 0.0
    %5957 = vmatprep.mubr.f32.mxu0 0.0
    %5958 = vmatmul.mubr.f32.gmra.mrb[0].mxu0 %v5864
    %v5959 = vpop.f32.mrb[0].mxu0
    %v5960 = vadd.f32 0.0, %v5959
    %v5961 = vpop.f32.mrb[0].mxu0
    %v5962 = vadd.f32 0.0, %v5961
    %5963 = vdwg.mxu0
    %5964 = vmatprep.subr.mxu0 0.0
    %5965 = vmatpush1.msra.mxu0 %v4433
    %5966 = vmatprep.subr.mxu0 0.0
    %5967 = vmatpush1.msra.mxu0 %v4436
    %5968 = vmatprep.subr.mxu0 0.0
    %5969 = vmatpush1.msra.mxu0 %v4439
    %5970 = vmatprep.subr.mxu0 0.0
    %5971 = vmatpush1.msra.mxu0 %v4442
    %5972 = vmatprep.subr.mxu0 0.0
    %5973 = vmatpush1.msra.mxu0 %v4445
    %5974 = vmatprep.subr.mxu0 0.0
    %5975 = vmatpush1.msra.mxu0 %v4448
    %5976 = vmatprep.subr.mxu0 0.0
    %5977 = vmatpush1.msra.mxu0 %v4451
    %5978 = vmatprep.subr.mxu0 0.0
    %5979 = vmatpush1.msra.mxu0 %v4454
    %5980 = vmatprep.subr.mxu0 0.0
    %5981 = vmatpush1.msra.mxu0 %v4457
    %5982 = vmatprep.subr.mxu0 0.0
    %5983 = vmatpush1.msra.mxu0 %v4460
    %5984 = vmatprep.subr.mxu0 0.0
    %5985 = vmatpush1.msra.mxu0 %v4463
    %5986 = vmatprep.subr.mxu0 0.0
    %5987 = vmatpush1.msra.mxu0 %v4466
    %5988 = vmatprep.subr.mxu0 0.0
    %5989 = vmatpush1.msra.mxu0 %v4469
    %5990 = vmatprep.subr.mxu0 0.0
    %5991 = vmatpush1.msra.mxu0 %v4472
    %5992 = vmatprep.subr.mxu0 0.0
    %5993 = vmatpush1.msra.mxu0 %v4475
    %5994 = vmatprep.subr.mxu0 0.0
    %5995 = vmatpush1.msra.mxu0 %v4478
    %5996 = vmatprep.subr.mxu0 0.0
    %5997 = vmatpush1.msra.mxu0 0.0
    %5998 = vmatprep.subr.mxu0 0.0
    %5999 = vmatpush1.msra.mxu0 0.0
    %6000 = vmatprep.subr.mxu0 0.0
    %6001 = vmatpush1.msra.mxu0 0.0
    %6002 = vmatprep.subr.mxu0 0.0
    %6003 = vmatpush1.msra.mxu0 0.0
    %6004 = vmatprep.subr.mxu0 0.0
    %6005 = vmatpush1.msra.mxu0 0.0
    %6006 = vmatprep.subr.mxu0 0.0
    %6007 = vmatpush1.msra.mxu0 0.0
    %6008 = vmatprep.subr.mxu0 0.0
    %6009 = vmatpush1.msra.mxu0 0.0
    %6010 = vmatprep.subr.mxu0 0.0
    %6011 = vmatpush1.msra.mxu0 0.0
    %6012 = vmatprep.subr.mxu0 0.0
    %6013 = vmatpush1.msra.mxu0 0.0
    %6014 = vmatprep.subr.mxu0 0.0
    %6015 = vmatpush1.msra.mxu0 0.0
    %6016 = vmatprep.subr.mxu0 0.0
    %6017 = vmatpush1.msra.mxu0 0.0
    %6018 = vmatprep.subr.mxu0 0.0
    %6019 = vmatpush1.msra.mxu0 0.0
    %6020 = vmatprep.subr.mxu0 0.0
    %6021 = vmatpush1.msra.mxu0 0.0
    %6022 = vmatprep.subr.mxu0 0.0
    %6023 = vmatpush1.msra.mxu0 0.0
    %6024 = vmatprep.subr.mxu0 0.0
    %6025 = vmatpush1.msra.mxu0 0.0
    %6026 = vmatprep.subr.mxu0 0.0
    %6027 = vmatpush1.msra.mxu0 0.0
    %6028 = vmatprep.mubr.f32.mxu0 0.0
    %6029 = vmatmul.mubr.f32.gmra.mrb[0].mxu0 %v5864
    %v6030 = vpop.f32.mrb[0].mxu0
    %v6031 = vadd.f32 0.0, %v6030
    %v6032 = vpop.f32.mrb[0].mxu0
    %6033 = vdwg.mxu0
    %6034 = vmatprep.subr.mxu0 %v4480
    %6035 = vmatpush1.msra.mxu0 %v4479
    %6036 = vmatprep.subr.mxu0 %v4483
    %6037 = vmatpush1.msra.mxu0 %v4482
    %6038 = vmatprep.subr.mxu0 %v4486
    %6039 = vmatpush1.msra.mxu0 %v4485
    %6040 = vmatprep.subr.mxu0 %v4489
    %6041 = vmatpush1.msra.mxu0 %v4488
    %6042 = vmatprep.subr.mxu0 %v4492
    %6043 = vmatpush1.msra.mxu0 %v4491
    %6044 = vmatprep.subr.mxu0 %v4495
    %6045 = vmatpush1.msra.mxu0 %v4494
    %6046 = vmatprep.subr.mxu0 %v4498
    %6047 = vmatpush1.msra.mxu0 %v4497
    %6048 = vmatprep.subr.mxu0 %v4501
    %6049 = vmatpush1.msra.mxu0 %v4500
    %6050 = vmatprep.subr.mxu0 %v4504
    %6051 = vmatpush1.msra.mxu0 %v4503
    %6052 = vmatprep.subr.mxu0 %v4507
    %6053 = vmatpush1.msra.mxu0 %v4506
    %6054 = vmatprep.subr.mxu0 %v4510
    %6055 = vmatpush1.msra.mxu0 %v4509
    %6056 = vmatprep.subr.mxu0 %v4513
    %6057 = vmatpush1.msra.mxu0 %v4512
    %6058 = vmatprep.subr.mxu0 %v4516
    %6059 = vmatpush1.msra.mxu0 %v4515
    %6060 = vmatprep.subr.mxu0 %v4519
    %6061 = vmatpush1.msra.mxu0 %v4518
    %6062 = vmatprep.subr.mxu0 %v4522
    %6063 = vmatpush1.msra.mxu0 %v4521
    %6064 = vmatprep.subr.mxu0 %v4525
    %6065 = vmatpush1.msra.mxu0 %v4524
    %6066 = vmatprep.subr.mxu0 0.0
    %6067 = vmatpush1.msra.mxu0 0.0
    %6068 = vmatprep.subr.mxu0 0.0
    %6069 = vmatpush1.msra.mxu0 0.0
    %6070 = vmatprep.subr.mxu0 0.0
    %6071 = vmatpush1.msra.mxu0 0.0
    %6072 = vmatprep.subr.mxu0 0.0
    %6073 = vmatpush1.msra.mxu0 0.0
    %6074 = vmatprep.subr.mxu0 0.0
    %6075 = vmatpush1.msra.mxu0 0.0
    %6076 = vmatprep.subr.mxu0 0.0
    %6077 = vmatpush1.msra.mxu0 0.0
    %6078 = vmatprep.subr.mxu0 0.0
    %6079 = vmatpush1.msra.mxu0 0.0
    %6080 = vmatprep.subr.mxu0 0.0
    %6081 = vmatpush1.msra.mxu0 0.0
    %6082 = vmatprep.subr.mxu0 0.0
    %6083 = vmatpush1.msra.mxu0 0.0
    %6084 = vmatprep.subr.mxu0 0.0
    %6085 = vmatpush1.msra.mxu0 0.0
    %6086 = vmatprep.subr.mxu0 0.0
    %6087 = vmatpush1.msra.mxu0 0.0
    %6088 = vmatprep.subr.mxu0 0.0
    %6089 = vmatpush1.msra.mxu0 0.0
    %6090 = vmatprep.subr.mxu0 0.0
    %6091 = vmatpush1.msra.mxu0 0.0
    %6092 = vmatprep.subr.mxu0 0.0
    %6093 = vmatpush1.msra.mxu0 0.0
    %6094 = vmatprep.subr.mxu0 0.0
    %6095 = vmatpush1.msra.mxu0 0.0
    %6096 = vmatprep.subr.mxu0 0.0
    %6097 = vmatpush1.msra.mxu0 0.0
    %6098 = vmatprep.mubr.f32.mxu0 0.0
    %6099 = vmatmul.mubr.f32.gmra.mrb[0].mxu0 %v5892
    %v6100 = vpop.f32.mrb[0].mxu0
    %v6101 = vadd.f32 0.0, %v6100
    %v6102 = vpop.f32.mrb[0].mxu0
    %v6103 = vadd.f32 0.0, %v6102
    %6104 = vdwg.mxu0
    %6105 = vmatprep.subr.mxu0 0.0
    %6106 = vmatpush1.msra.mxu0 %v4481
    %6107 = vmatprep.subr.mxu0 0.0
    %6108 = vmatpush1.msra.mxu0 %v4484
    %6109 = vmatprep.subr.mxu0 0.0
    %6110 = vmatpush1.msra.mxu0 %v4487
    %6111 = vmatprep.subr.mxu0 0.0
    %6112 = vmatpush1.msra.mxu0 %v4490
    %6113 = vmatprep.subr.mxu0 0.0
    %6114 = vmatpush1.msra.mxu0 %v4493
    %6115 = vmatprep.subr.mxu0 0.0
    %6116 = vmatpush1.msra.mxu0 %v4496
    %6117 = vmatprep.subr.mxu0 0.0
    %6118 = vmatpush1.msra.mxu0 %v4499
    %6119 = vmatprep.subr.mxu0 0.0
    %6120 = vmatpush1.msra.mxu0 %v4502
    %6121 = vmatprep.subr.mxu0 0.0
    %6122 = vmatpush1.msra.mxu0 %v4505
    %6123 = vmatprep.subr.mxu0 0.0
    %6124 = vmatpush1.msra.mxu0 %v4508
    %6125 = vmatprep.subr.mxu0 0.0
    %6126 = vmatpush1.msra.mxu0 %v4511
    %6127 = vmatprep.subr.mxu0 0.0
    %6128 = vmatpush1.msra.mxu0 %v4514
    %6129 = vmatprep.subr.mxu0 0.0
    %6130 = vmatpush1.msra.mxu0 %v4517
    %6131 = vmatprep.subr.mxu0 0.0
    %6132 = vmatpush1.msra.mxu0 %v4520
    %6133 = vmatprep.subr.mxu0 0.0
    %6134 = vmatpush1.msra.mxu0 %v4523
    %6135 = vmatprep.subr.mxu0 0.0
    %6136 = vmatpush1.msra.mxu0 %v4526
    %6137 = vmatprep.subr.mxu0 0.0
    %6138 = vmatpush1.msra.mxu0 0.0
    %6139 = vmatprep.subr.mxu0 0.0
    %6140 = vmatpush1.msra.mxu0 0.0
    %6141 = vmatprep.subr.mxu0 0.0
    %6142 = vmatpush1.msra.mxu0 0.0
    %6143 = vmatprep.subr.mxu0 0.0
    %6144 = vmatpush1.msra.mxu0 0.0
    %6145 = vmatprep.subr.mxu0 0.0
    %6146 = vmatpush1.msra.mxu0 0.0
    %6147 = vmatprep.subr.mxu0 0.0
    %6148 = vmatpush1.msra.mxu0 0.0
    %6149 = vmatprep.subr.mxu0 0.0
    %6150 = vmatpush1.msra.mxu0 0.0
    %6151 = vmatprep.subr.mxu0 0.0
    %6152 = vmatpush1.msra.mxu0 0.0
    %6153 = vmatprep.subr.mxu0 0.0
    %6154 = vmatpush1.msra.mxu0 0.0
    %6155 = vmatprep.subr.mxu0 0.0
    %6156 = vmatpush1.msra.mxu0 0.0
    %6157 = vmatprep.subr.mxu0 0.0
    %6158 = vmatpush1.msra.mxu0 0.0
    %6159 = vmatprep.subr.mxu0 0.0
    %6160 = vmatpush1.msra.mxu0 0.0
    %6161 = vmatprep.subr.mxu0 0.0
    %6162 = vmatpush1.msra.mxu0 0.0
    %6163 = vmatprep.subr.mxu0 0.0
    %6164 = vmatpush1.msra.mxu0 0.0
    %6165 = vmatprep.subr.mxu0 0.0
    %6166 = vmatpush1.msra.mxu0 0.0
    %6167 = vmatprep.subr.mxu0 0.0
    %6168 = vmatpush1.msra.mxu0 0.0
    %6169 = vmatprep.mubr.f32.mxu0 0.0
    %6170 = vmatmul.mubr.f32.gmra.mrb[0].mxu0 %v5892
    %v6171 = vpop.f32.mrb[0].mxu0
    %v6172 = vadd.f32 0.0, %v6171
    %v6173 = vpop.f32.mrb[0].mxu0
    %6174 = vdwg.mxu0
    %v6175 = vld [vmem:[%s2091] sm:$0x3f]
    %v6176 = vadd.f32 %v6175, %v5960
    %v6177 = vxor.u32 %v6176, 2147483648
    %v6178 = vmul.f32 %v6177, 1.442695
    %v6179 = vpow.pop %v6178
    %v6180 = vadd.f32 %v6179, 1.0
    %v6181 = vrcp.pop %v6180
    %v6182 = vmul.f32 1.0, %v6181
    %v6184 = vrot.slane %v6175, 2
    %v6186 = vadd.f32 %v6184, %v5962
    %v6187 = vxor.u32 %v6186, 2147483648
    %v6188 = vmul.f32 %v6187, 1.442695
    %v6189 = vpow.pop %v6188
    %v6190 = vadd.f32 %v6189, 1.0
    %v6191 = vrcp.pop %v6190
    %v6192 = vmul.f32 1.0, %v6191
    %v6193 = vadd.f32 %v6031, %v4532
    %v6194 = vmul.f32 %v6182, %v6193
    %v6195 = vrot.slane %v6175, 4
    %v6197 = vadd.f32 %v6195, %v6194
    %v6198 = vtanh.pop %v6197
    %v6199 = vsub.f32 1.0, %v6192
    %v6200 = vmul.f32 %v6199, %v6198
    %v6201 = vmul.f32 %v6192, %v5864
    %v6202 = vadd.f32 %v6200, %v6201
    %v6203 = vld [vmem:[%s2062 + $0x6] sm:$0x3f]
    %v6204 = vadd.f32 %v6203, %v6101
    %v6205 = vxor.u32 %v6204, 2147483648
    %v6206 = vmul.f32 %v6205, 1.442695
    %v6207 = vpow.pop %v6206
    %v6208 = vadd.f32 %v6207, 1.0
    %v6209 = vrcp.pop %v6208
    %v6210 = vmul.f32 1.0, %v6209
    %v6212 = vrot.slane %v6203, 2
    %v6214 = vadd.f32 %v6212, %v6103
    %v6215 = vxor.u32 %v6214, 2147483648
    %v6216 = vmul.f32 %v6215, 1.442695
    %v6217 = vpow.pop %v6216
    %v6218 = vadd.f32 %v6217, 1.0
    %v6219 = vrcp.pop %v6218
    %v6220 = vmul.f32 1.0, %v6219
    %v6221 = vadd.f32 %v6172, %v4539
    %v6222 = vmul.f32 %v6210, %v6221
    %v6223 = vrot.slane %v6203, 4
    %v6225 = vadd.f32 %v6223, %v6222
    %v6226 = vtanh.pop %v6225
    %v6227 = vsub.f32 1.0, %v6220
    %v6228 = vmul.f32 %v6227, %v6226
    %v6229 = vmul.f32 %v6220, %v5892
    %v6230 = vadd.f32 %v6228, %v6229
    %6231 = vmatprep.subr.mxu0 %v4432
    %6232 = vmatpush1.msra.mxu0 %v4431
    %6233 = vmatprep.subr.mxu0 %v4435
    %6234 = vmatpush1.msra.mxu0 %v4434
    %6235 = vmatprep.subr.mxu0 %v4438
    %6236 = vmatpush1.msra.mxu0 %v4437
    %6237 = vmatprep.subr.mxu0 %v4441
    %6238 = vmatpush1.msra.mxu0 %v4440
    %6239 = vmatprep.subr.mxu0 %v4444
    %6240 = vmatpush1.msra.mxu0 %v4443
    %6241 = vmatprep.subr.mxu0 %v4447
    %6242 = vmatpush1.msra.mxu0 %v4446
    %6243 = vmatprep.subr.mxu0 %v4450
    %6244 = vmatpush1.msra.mxu0 %v4449
    %6245 = vmatprep.subr.mxu0 %v4453
    %6246 = vmatpush1.msra.mxu0 %v4452
    %6247 = vmatprep.subr.mxu0 %v4456
    %6248 = vmatpush1.msra.mxu0 %v4455
    %6249 = vmatprep.subr.mxu0 %v4459
    %6250 = vmatpush1.msra.mxu0 %v4458
    %6251 = vmatprep.subr.mxu0 %v4462
    %6252 = vmatpush1.msra.mxu0 %v4461
    %6253 = vmatprep.subr.mxu0 %v4465
    %6254 = vmatpush1.msra.mxu0 %v4464
    %6255 = vmatprep.subr.mxu0 %v4468
    %6256 = vmatpush1.msra.mxu0 %v4467
    %6257 = vmatprep.subr.mxu0 %v4471
    %6258 = vmatpush1.msra.mxu0 %v4470
    %6259 = vmatprep.subr.mxu0 %v4474
    %6260 = vmatpush1.msra.mxu0 %v4473
    %6261 = vmatprep.subr.mxu0 %v4477
    %6262 = vmatpush1.msra.mxu0 %v4476
    %6263 = vmatprep.subr.mxu0 0.0
    %6264 = vmatpush1.msra.mxu0 0.0
    %6265 = vmatprep.subr.mxu0 0.0
    %6266 = vmatpush1.msra.mxu0 0.0
    %6267 = vmatprep.subr.mxu0 0.0
    %6268 = vmatpush1.msra.mxu0 0.0
    %6269 = vmatprep.subr.mxu0 0.0
    %6270 = vmatpush1.msra.mxu0 0.0
    %6271 = vmatprep.subr.mxu0 0.0
    %6272 = vmatpush1.msra.mxu0 0.0
    %6273 = vmatprep.subr.mxu0 0.0
    %6274 = vmatpush1.msra.mxu0 0.0
    %6275 = vmatprep.subr.mxu0 0.0
    %6276 = vmatpush1.msra.mxu0 0.0
    %6277 = vmatprep.subr.mxu0 0.0
    %6278 = vmatpush1.msra.mxu0 0.0
    %6279 = vmatprep.subr.mxu0 0.0
    %6280 = vmatpush1.msra.mxu0 0.0
    %6281 = vmatprep.subr.mxu0 0.0
    %6282 = vmatpush1.msra.mxu0 0.0
    %6283 = vmatprep.subr.mxu0 0.0
    %6284 = vmatpush1.msra.mxu0 0.0
    %6285 = vmatprep.subr.mxu0 0.0
    %6286 = vmatpush1.msra.mxu0 0.0
    %6287 = vmatprep.subr.mxu0 0.0
    %6288 = vmatpush1.msra.mxu0 0.0
    %6289 = vmatprep.subr.mxu0 0.0
    %6290 = vmatpush1.msra.mxu0 0.0
    %6291 = vmatprep.subr.mxu0 0.0
    %6292 = vmatpush1.msra.mxu0 0.0
    %6293 = vmatprep.subr.mxu0 0.0
    %6294 = vmatpush1.msra.mxu0 0.0
    %6295 = vmatprep.mubr.f32.mxu0 0.0
    %6296 = vmatmul.mubr.f32.gmra.mrb[0].mxu0 %v6202
    %v6297 = vpop.f32.mrb[0].mxu0
    %v6298 = vadd.f32 0.0, %v6297
    %v6299 = vpop.f32.mrb[0].mxu0
    %v6300 = vadd.f32 0.0, %v6299
    %6301 = vdwg.mxu0
    %6302 = vmatprep.subr.mxu0 0.0
    %6303 = vmatpush1.msra.mxu0 %v4433
    %6304 = vmatprep.subr.mxu0 0.0
    %6305 = vmatpush1.msra.mxu0 %v4436
    %6306 = vmatprep.subr.mxu0 0.0
    %6307 = vmatpush1.msra.mxu0 %v4439
    %6308 = vmatprep.subr.mxu0 0.0
    %6309 = vmatpush1.msra.mxu0 %v4442
    %6310 = vmatprep.subr.mxu0 0.0
    %6311 = vmatpush1.msra.mxu0 %v4445
    %6312 = vmatprep.subr.mxu0 0.0
    %6313 = vmatpush1.msra.mxu0 %v4448
    %6314 = vmatprep.subr.mxu0 0.0
    %6315 = vmatpush1.msra.mxu0 %v4451
    %6316 = vmatprep.subr.mxu0 0.0
    %6317 = vmatpush1.msra.mxu0 %v4454
    %6318 = vmatprep.subr.mxu0 0.0
    %6319 = vmatpush1.msra.mxu0 %v4457
    %6320 = vmatprep.subr.mxu0 0.0
    %6321 = vmatpush1.msra.mxu0 %v4460
    %6322 = vmatprep.subr.mxu0 0.0
    %6323 = vmatpush1.msra.mxu0 %v4463
    %6324 = vmatprep.subr.mxu0 0.0
    %6325 = vmatpush1.msra.mxu0 %v4466
    %6326 = vmatprep.subr.mxu0 0.0
    %6327 = vmatpush1.msra.mxu0 %v4469
    %6328 = vmatprep.subr.mxu0 0.0
    %6329 = vmatpush1.msra.mxu0 %v4472
    %6330 = vmatprep.subr.mxu0 0.0
    %6331 = vmatpush1.msra.mxu0 %v4475
    %6332 = vmatprep.subr.mxu0 0.0
    %6333 = vmatpush1.msra.mxu0 %v4478
    %6334 = vmatprep.subr.mxu0 0.0
    %6335 = vmatpush1.msra.mxu0 0.0
    %6336 = vmatprep.subr.mxu0 0.0
    %6337 = vmatpush1.msra.mxu0 0.0
    %6338 = vmatprep.subr.mxu0 0.0
    %6339 = vmatpush1.msra.mxu0 0.0
    %6340 = vmatprep.subr.mxu0 0.0
    %6341 = vmatpush1.msra.mxu0 0.0
    %6342 = vmatprep.subr.mxu0 0.0
    %6343 = vmatpush1.msra.mxu0 0.0
    %6344 = vmatprep.subr.mxu0 0.0
    %6345 = vmatpush1.msra.mxu0 0.0
    %6346 = vmatprep.subr.mxu0 0.0
    %6347 = vmatpush1.msra.mxu0 0.0
    %6348 = vmatprep.subr.mxu0 0.0
    %6349 = vmatpush1.msra.mxu0 0.0
    %6350 = vmatprep.subr.mxu0 0.0
    %6351 = vmatpush1.msra.mxu0 0.0
    %6352 = vmatprep.subr.mxu0 0.0
    %6353 = vmatpush1.msra.mxu0 0.0
    %6354 = vmatprep.subr.mxu0 0.0
    %6355 = vmatpush1.msra.mxu0 0.0
    %6356 = vmatprep.subr.mxu0 0.0
    %6357 = vmatpush1.msra.mxu0 0.0
    %6358 = vmatprep.subr.mxu0 0.0
    %6359 = vmatpush1.msra.mxu0 0.0
    %6360 = vmatprep.subr.mxu0 0.0
    %6361 = vmatpush1.msra.mxu0 0.0
    %6362 = vmatprep.subr.mxu0 0.0
    %6363 = vmatpush1.msra.mxu0 0.0
    %6364 = vmatprep.subr.mxu0 0.0
    %6365 = vmatpush1.msra.mxu0 0.0
    %6366 = vmatprep.mubr.f32.mxu0 0.0
    %6367 = vmatmul.mubr.f32.gmra.mrb[0].mxu0 %v6202
    %v6368 = vpop.f32.mrb[0].mxu0
    %v6369 = vadd.f32 0.0, %v6368
    %v6370 = vpop.f32.mrb[0].mxu0
    %6371 = vdwg.mxu0
    %6372 = vmatprep.subr.mxu0 %v4480
    %6373 = vmatpush1.msra.mxu0 %v4479
    %6374 = vmatprep.subr.mxu0 %v4483
    %6375 = vmatpush1.msra.mxu0 %v4482
    %6376 = vmatprep.subr.mxu0 %v4486
    %6377 = vmatpush1.msra.mxu0 %v4485
    %6378 = vmatprep.subr.mxu0 %v4489
    %6379 = vmatpush1.msra.mxu0 %v4488
    %6380 = vmatprep.subr.mxu0 %v4492
    %6381 = vmatpush1.msra.mxu0 %v4491
    %6382 = vmatprep.subr.mxu0 %v4495
    %6383 = vmatpush1.msra.mxu0 %v4494
    %6384 = vmatprep.subr.mxu0 %v4498
    %6385 = vmatpush1.msra.mxu0 %v4497
    %6386 = vmatprep.subr.mxu0 %v4501
    %6387 = vmatpush1.msra.mxu0 %v4500
    %6388 = vmatprep.subr.mxu0 %v4504
    %6389 = vmatpush1.msra.mxu0 %v4503
    %6390 = vmatprep.subr.mxu0 %v4507
    %6391 = vmatpush1.msra.mxu0 %v4506
    %6392 = vmatprep.subr.mxu0 %v4510
    %6393 = vmatpush1.msra.mxu0 %v4509
    %6394 = vmatprep.subr.mxu0 %v4513
    %6395 = vmatpush1.msra.mxu0 %v4512
    %6396 = vmatprep.subr.mxu0 %v4516
    %6397 = vmatpush1.msra.mxu0 %v4515
    %6398 = vmatprep.subr.mxu0 %v4519
    %6399 = vmatpush1.msra.mxu0 %v4518
    %6400 = vmatprep.subr.mxu0 %v4522
    %6401 = vmatpush1.msra.mxu0 %v4521
    %6402 = vmatprep.subr.mxu0 %v4525
    %6403 = vmatpush1.msra.mxu0 %v4524
    %6404 = vmatprep.subr.mxu0 0.0
    %6405 = vmatpush1.msra.mxu0 0.0
    %6406 = vmatprep.subr.mxu0 0.0
    %6407 = vmatpush1.msra.mxu0 0.0
    %6408 = vmatprep.subr.mxu0 0.0
    %6409 = vmatpush1.msra.mxu0 0.0
    %6410 = vmatprep.subr.mxu0 0.0
    %6411 = vmatpush1.msra.mxu0 0.0
    %6412 = vmatprep.subr.mxu0 0.0
    %6413 = vmatpush1.msra.mxu0 0.0
    %6414 = vmatprep.subr.mxu0 0.0
    %6415 = vmatpush1.msra.mxu0 0.0
    %6416 = vmatprep.subr.mxu0 0.0
    %6417 = vmatpush1.msra.mxu0 0.0
    %6418 = vmatprep.subr.mxu0 0.0
    %6419 = vmatpush1.msra.mxu0 0.0
    %6420 = vmatprep.subr.mxu0 0.0
    %6421 = vmatpush1.msra.mxu0 0.0
    %6422 = vmatprep.subr.mxu0 0.0
    %6423 = vmatpush1.msra.mxu0 0.0
    %6424 = vmatprep.subr.mxu0 0.0
    %6425 = vmatpush1.msra.mxu0 0.0
    %6426 = vmatprep.subr.mxu0 0.0
    %6427 = vmatpush1.msra.mxu0 0.0
    %6428 = vmatprep.subr.mxu0 0.0
    %6429 = vmatpush1.msra.mxu0 0.0
    %6430 = vmatprep.subr.mxu0 0.0
    %6431 = vmatpush1.msra.mxu0 0.0
    %6432 = vmatprep.subr.mxu0 0.0
    %6433 = vmatpush1.msra.mxu0 0.0
    %6434 = vmatprep.subr.mxu0 0.0
    %6435 = vmatpush1.msra.mxu0 0.0
    %6436 = vmatprep.mubr.f32.mxu0 0.0
    %6437 = vmatmul.mubr.f32.gmra.mrb[0].mxu0 %v6230
    %v6438 = vpop.f32.mrb[0].mxu0
    %v6439 = vadd.f32 0.0, %v6438
    %v6440 = vpop.f32.mrb[0].mxu0
    %v6441 = vadd.f32 0.0, %v6440
    %6442 = vdwg.mxu0
    %6443 = vmatprep.subr.mxu0 0.0
    %6444 = vmatpush1.msra.mxu0 %v4481
    %6445 = vmatprep.subr.mxu0 0.0
    %6446 = vmatpush1.msra.mxu0 %v4484
    %6447 = vmatprep.subr.mxu0 0.0
    %6448 = vmatpush1.msra.mxu0 %v4487
    %6449 = vmatprep.subr.mxu0 0.0
    %6450 = vmatpush1.msra.mxu0 %v4490
    %6451 = vmatprep.subr.mxu0 0.0
    %6452 = vmatpush1.msra.mxu0 %v4493
    %6453 = vmatprep.subr.mxu0 0.0
    %6454 = vmatpush1.msra.mxu0 %v4496
    %6455 = vmatprep.subr.mxu0 0.0
    %6456 = vmatpush1.msra.mxu0 %v4499
    %6457 = vmatprep.subr.mxu0 0.0
    %6458 = vmatpush1.msra.mxu0 %v4502
    %6459 = vmatprep.subr.mxu0 0.0
    %6460 = vmatpush1.msra.mxu0 %v4505
    %6461 = vmatprep.subr.mxu0 0.0
    %6462 = vmatpush1.msra.mxu0 %v4508
    %6463 = vmatprep.subr.mxu0 0.0
    %6464 = vmatpush1.msra.mxu0 %v4511
    %6465 = vmatprep.subr.mxu0 0.0
    %6466 = vmatpush1.msra.mxu0 %v4514
    %6467 = vmatprep.subr.mxu0 0.0
    %6468 = vmatpush1.msra.mxu0 %v4517
    %6469 = vmatprep.subr.mxu0 0.0
    %6470 = vmatpush1.msra.mxu0 %v4520
    %6471 = vmatprep.subr.mxu0 0.0
    %6472 = vmatpush1.msra.mxu0 %v4523
    %6473 = vmatprep.subr.mxu0 0.0
    %6474 = vmatpush1.msra.mxu0 %v4526
    %6475 = vmatprep.subr.mxu0 0.0
    %6476 = vmatpush1.msra.mxu0 0.0
    %6477 = vmatprep.subr.mxu0 0.0
    %6478 = vmatpush1.msra.mxu0 0.0
    %6479 = vmatprep.subr.mxu0 0.0
    %6480 = vmatpush1.msra.mxu0 0.0
    %6481 = vmatprep.subr.mxu0 0.0
    %6482 = vmatpush1.msra.mxu0 0.0
    %6483 = vmatprep.subr.mxu0 0.0
    %6484 = vmatpush1.msra.mxu0 0.0
    %6485 = vmatprep.subr.mxu0 0.0
    %6486 = vmatpush1.msra.mxu0 0.0
    %6487 = vmatprep.subr.mxu0 0.0
    %6488 = vmatpush1.msra.mxu0 0.0
    %6489 = vmatprep.subr.mxu0 0.0
    %6490 = vmatpush1.msra.mxu0 0.0
    %6491 = vmatprep.subr.mxu0 0.0
    %6492 = vmatpush1.msra.mxu0 0.0
    %6493 = vmatprep.subr.mxu0 0.0
    %6494 = vmatpush1.msra.mxu0 0.0
    %6495 = vmatprep.subr.mxu0 0.0
    %6496 = vmatpush1.msra.mxu0 0.0
    %6497 = vmatprep.subr.mxu0 0.0
    %6498 = vmatpush1.msra.mxu0 0.0
    %6499 = vmatprep.subr.mxu0 0.0
    %6500 = vmatpush1.msra.mxu0 0.0
    %6501 = vmatprep.subr.mxu0 0.0
    %6502 = vmatpush1.msra.mxu0 0.0
    %6503 = vmatprep.subr.mxu0 0.0
    %6504 = vmatpush1.msra.mxu0 0.0
    %6505 = vmatprep.subr.mxu0 0.0
    %6506 = vmatpush1.msra.mxu0 0.0
    %6507 = vmatprep.mubr.f32.mxu0 0.0
    %6508 = vmatmul.mubr.f32.gmra.mrb[0].mxu0 %v6230
    %v6509 = vpop.f32.mrb[0].mxu0
    %v6510 = vadd.f32 0.0, %v6509
    %v6511 = vpop.f32.mrb[0].mxu0
    %6512 = vdwg.mxu0
    %v6513 = vld [vmem:[%s1747] sm:$0x3f]
    %v6514 = vadd.f32 %v6513, %v6298
    %v6515 = vxor.u32 %v6514, 2147483648
    %v6516 = vmul.f32 %v6515, 1.442695
    %v6517 = vpow.pop %v6516
    %v6518 = vadd.f32 %v6517, 1.0
    %v6519 = vrcp.pop %v6518
    %v6520 = vmul.f32 1.0, %v6519
    %v6522 = vrot.slane %v6513, 2
    %v6524 = vadd.f32 %v6522, %v6300
    %v6525 = vxor.u32 %v6524, 2147483648
    %v6526 = vmul.f32 %v6525, 1.442695
    %v6527 = vpow.pop %v6526
    %v6528 = vadd.f32 %v6527, 1.0
    %v6529 = vrcp.pop %v6528
    %v6530 = vmul.f32 1.0, %v6529
    %v6531 = vadd.f32 %v6369, %v4532
    %v6532 = vmul.f32 %v6520, %v6531
    %v6533 = vrot.slane %v6513, 4
    %v6535 = vadd.f32 %v6533, %v6532
    %v6536 = vtanh.pop %v6535
    %v6537 = vsub.f32 1.0, %v6530
    %v6538 = vmul.f32 %v6537, %v6536
    %v6539 = vmul.f32 %v6530, %v6202
    %v6540 = vadd.f32 %v6538, %v6539
    %v6541 = vld [vmem:[%s1718 + $0x6] sm:$0x3f]
    %v6542 = vadd.f32 %v6541, %v6439
    %v6543 = vxor.u32 %v6542, 2147483648
    %v6544 = vmul.f32 %v6543, 1.442695
    %v6545 = vpow.pop %v6544
    %v6546 = vadd.f32 %v6545, 1.0
    %v6547 = vrcp.pop %v6546
    %v6548 = vmul.f32 1.0, %v6547
    %v6550 = vrot.slane %v6541, 2
    %v6552 = vadd.f32 %v6550, %v6441
    %v6553 = vxor.u32 %v6552, 2147483648
    %v6554 = vmul.f32 %v6553, 1.442695
    %v6555 = vpow.pop %v6554
    %v6556 = vadd.f32 %v6555, 1.0
    %v6557 = vrcp.pop %v6556
    %v6558 = vmul.f32 1.0, %v6557
    %v6559 = vadd.f32 %v6510, %v4539
    %v6560 = vmul.f32 %v6548, %v6559
    %v6561 = vrot.slane %v6541, 4
    %v6563 = vadd.f32 %v6561, %v6560
    %v6564 = vtanh.pop %v6563
    %v6565 = vsub.f32 1.0, %v6558
    %v6566 = vmul.f32 %v6565, %v6564
    %v6567 = vmul.f32 %v6558, %v6230
    %v6568 = vadd.f32 %v6566, %v6567
    %6569 = vmatprep.subr.mxu0 %v4432
    %6570 = vmatpush1.msra.mxu0 %v4431
    %6571 = vmatprep.subr.mxu0 %v4435
    %6572 = vmatpush1.msra.mxu0 %v4434
    %6573 = vmatprep.subr.mxu0 %v4438
    %6574 = vmatpush1.msra.mxu0 %v4437
    %6575 = vmatprep.subr.mxu0 %v4441
    %6576 = vmatpush1.msra.mxu0 %v4440
    %6577 = vmatprep.subr.mxu0 %v4444
    %6578 = vmatpush1.msra.mxu0 %v4443
    %6579 = vmatprep.subr.mxu0 %v4447
    %6580 = vmatpush1.msra.mxu0 %v4446
    %6581 = vmatprep.subr.mxu0 %v4450
    %6582 = vmatpush1.msra.mxu0 %v4449
    %6583 = vmatprep.subr.mxu0 %v4453
    %6584 = vmatpush1.msra.mxu0 %v4452
    %6585 = vmatprep.subr.mxu0 %v4456
    %6586 = vmatpush1.msra.mxu0 %v4455
    %6587 = vmatprep.subr.mxu0 %v4459
    %6588 = vmatpush1.msra.mxu0 %v4458
    %6589 = vmatprep.subr.mxu0 %v4462
    %6590 = vmatpush1.msra.mxu0 %v4461
    %6591 = vmatprep.subr.mxu0 %v4465
    %6592 = vmatpush1.msra.mxu0 %v4464
    %6593 = vmatprep.subr.mxu0 %v4468
    %6594 = vmatpush1.msra.mxu0 %v4467
    %6595 = vmatprep.subr.mxu0 %v4471
    %6596 = vmatpush1.msra.mxu0 %v4470
    %6597 = vmatprep.subr.mxu0 %v4474
    %6598 = vmatpush1.msra.mxu0 %v4473
    %6599 = vmatprep.subr.mxu0 %v4477
    %6600 = vmatpush1.msra.mxu0 %v4476
    %6601 = vmatprep.subr.mxu0 0.0
    %6602 = vmatpush1.msra.mxu0 0.0
    %6603 = vmatprep.subr.mxu0 0.0
    %6604 = vmatpush1.msra.mxu0 0.0
    %6605 = vmatprep.subr.mxu0 0.0
    %6606 = vmatpush1.msra.mxu0 0.0
    %6607 = vmatprep.subr.mxu0 0.0
    %6608 = vmatpush1.msra.mxu0 0.0
    %6609 = vmatprep.subr.mxu0 0.0
    %6610 = vmatpush1.msra.mxu0 0.0
    %6611 = vmatprep.subr.mxu0 0.0
    %6612 = vmatpush1.msra.mxu0 0.0
    %6613 = vmatprep.subr.mxu0 0.0
    %6614 = vmatpush1.msra.mxu0 0.0
    %6615 = vmatprep.subr.mxu0 0.0
    %6616 = vmatpush1.msra.mxu0 0.0
    %6617 = vmatprep.subr.mxu0 0.0
    %6618 = vmatpush1.msra.mxu0 0.0
    %6619 = vmatprep.subr.mxu0 0.0
    %6620 = vmatpush1.msra.mxu0 0.0
    %6621 = vmatprep.subr.mxu0 0.0
    %6622 = vmatpush1.msra.mxu0 0.0
    %6623 = vmatprep.subr.mxu0 0.0
    %6624 = vmatpush1.msra.mxu0 0.0
    %6625 = vmatprep.subr.mxu0 0.0
    %6626 = vmatpush1.msra.mxu0 0.0
    %6627 = vmatprep.subr.mxu0 0.0
    %6628 = vmatpush1.msra.mxu0 0.0
    %6629 = vmatprep.subr.mxu0 0.0
    %6630 = vmatpush1.msra.mxu0 0.0
    %6631 = vmatprep.subr.mxu0 0.0
    %6632 = vmatpush1.msra.mxu0 0.0
    %6633 = vmatprep.mubr.f32.mxu0 0.0
    %6634 = vmatmul.mubr.f32.gmra.mrb[0].mxu0 %v6540
    %v6635 = vpop.f32.mrb[0].mxu0
    %v6636 = vadd.f32 0.0, %v6635
    %v6637 = vpop.f32.mrb[0].mxu0
    %v6638 = vadd.f32 0.0, %v6637
    %6639 = vdwg.mxu0
    %6640 = vmatprep.subr.mxu0 0.0
    %6641 = vmatpush1.msra.mxu0 %v4433
    %6642 = vmatprep.subr.mxu0 0.0
    %6643 = vmatpush1.msra.mxu0 %v4436
    %6644 = vmatprep.subr.mxu0 0.0
    %6645 = vmatpush1.msra.mxu0 %v4439
    %6646 = vmatprep.subr.mxu0 0.0
    %6647 = vmatpush1.msra.mxu0 %v4442
    %6648 = vmatprep.subr.mxu0 0.0
    %6649 = vmatpush1.msra.mxu0 %v4445
    %6650 = vmatprep.subr.mxu0 0.0
    %6651 = vmatpush1.msra.mxu0 %v4448
    %6652 = vmatprep.subr.mxu0 0.0
    %6653 = vmatpush1.msra.mxu0 %v4451
    %6654 = vmatprep.subr.mxu0 0.0
    %6655 = vmatpush1.msra.mxu0 %v4454
    %6656 = vmatprep.subr.mxu0 0.0
    %6657 = vmatpush1.msra.mxu0 %v4457
    %6658 = vmatprep.subr.mxu0 0.0
    %6659 = vmatpush1.msra.mxu0 %v4460
    %6660 = vmatprep.subr.mxu0 0.0
    %6661 = vmatpush1.msra.mxu0 %v4463
    %6662 = vmatprep.subr.mxu0 0.0
    %6663 = vmatpush1.msra.mxu0 %v4466
    %6664 = vmatprep.subr.mxu0 0.0
    %6665 = vmatpush1.msra.mxu0 %v4469
    %6666 = vmatprep.subr.mxu0 0.0
    %6667 = vmatpush1.msra.mxu0 %v4472
    %6668 = vmatprep.subr.mxu0 0.0
    %6669 = vmatpush1.msra.mxu0 %v4475
    %6670 = vmatprep.subr.mxu0 0.0
    %6671 = vmatpush1.msra.mxu0 %v4478
    %6672 = vmatprep.subr.mxu0 0.0
    %6673 = vmatpush1.msra.mxu0 0.0
    %6674 = vmatprep.subr.mxu0 0.0
    %6675 = vmatpush1.msra.mxu0 0.0
    %6676 = vmatprep.subr.mxu0 0.0
    %6677 = vmatpush1.msra.mxu0 0.0
    %6678 = vmatprep.subr.mxu0 0.0
    %6679 = vmatpush1.msra.mxu0 0.0
    %6680 = vmatprep.subr.mxu0 0.0
    %6681 = vmatpush1.msra.mxu0 0.0
    %6682 = vmatprep.subr.mxu0 0.0
    %6683 = vmatpush1.msra.mxu0 0.0
    %6684 = vmatprep.subr.mxu0 0.0
    %6685 = vmatpush1.msra.mxu0 0.0
    %6686 = vmatprep.subr.mxu0 0.0
    %6687 = vmatpush1.msra.mxu0 0.0
    %6688 = vmatprep.subr.mxu0 0.0
    %6689 = vmatpush1.msra.mxu0 0.0
    %6690 = vmatprep.subr.mxu0 0.0
    %6691 = vmatpush1.msra.mxu0 0.0
    %6692 = vmatprep.subr.mxu0 0.0
    %6693 = vmatpush1.msra.mxu0 0.0
    %6694 = vmatprep.subr.mxu0 0.0
    %6695 = vmatpush1.msra.mxu0 0.0
    %6696 = vmatprep.subr.mxu0 0.0
    %6697 = vmatpush1.msra.mxu0 0.0
    %6698 = vmatprep.subr.mxu0 0.0
    %6699 = vmatpush1.msra.mxu0 0.0
    %6700 = vmatprep.subr.mxu0 0.0
    %6701 = vmatpush1.msra.mxu0 0.0
    %6702 = vmatprep.subr.mxu0 0.0
    %6703 = vmatpush1.msra.mxu0 0.0
    %6704 = vmatprep.mubr.f32.mxu0 0.0
    %6705 = vmatmul.mubr.f32.gmra.mrb[0].mxu0 %v6540
    %v6706 = vpop.f32.mrb[0].mxu0
    %v6707 = vadd.f32 0.0, %v6706
    %v6708 = vpop.f32.mrb[0].mxu0
    %6709 = vdwg.mxu0
    %6710 = vmatprep.subr.mxu0 %v4480
    %6711 = vmatpush1.msra.mxu0 %v4479
    %6712 = vmatprep.subr.mxu0 %v4483
    %6713 = vmatpush1.msra.mxu0 %v4482
    %6714 = vmatprep.subr.mxu0 %v4486
    %6715 = vmatpush1.msra.mxu0 %v4485
    %6716 = vmatprep.subr.mxu0 %v4489
    %6717 = vmatpush1.msra.mxu0 %v4488
    %6718 = vmatprep.subr.mxu0 %v4492
    %6719 = vmatpush1.msra.mxu0 %v4491
    %6720 = vmatprep.subr.mxu0 %v4495
    %6721 = vmatpush1.msra.mxu0 %v4494
    %6722 = vmatprep.subr.mxu0 %v4498
    %6723 = vmatpush1.msra.mxu0 %v4497
    %6724 = vmatprep.subr.mxu0 %v4501
    %6725 = vmatpush1.msra.mxu0 %v4500
    %6726 = vmatprep.subr.mxu0 %v4504
    %6727 = vmatpush1.msra.mxu0 %v4503
    %6728 = vmatprep.subr.mxu0 %v4507
    %6729 = vmatpush1.msra.mxu0 %v4506
    %6730 = vmatprep.subr.mxu0 %v4510
    %6731 = vmatpush1.msra.mxu0 %v4509
    %6732 = vmatprep.subr.mxu0 %v4513
    %6733 = vmatpush1.msra.mxu0 %v4512
    %6734 = vmatprep.subr.mxu0 %v4516
    %6735 = vmatpush1.msra.mxu0 %v4515
    %6736 = vmatprep.subr.mxu0 %v4519
    %6737 = vmatpush1.msra.mxu0 %v4518
    %6738 = vmatprep.subr.mxu0 %v4522
    %6739 = vmatpush1.msra.mxu0 %v4521
    %6740 = vmatprep.subr.mxu0 %v4525
    %6741 = vmatpush1.msra.mxu0 %v4524
    %6742 = vmatprep.subr.mxu0 0.0
    %6743 = vmatpush1.msra.mxu0 0.0
    %6744 = vmatprep.subr.mxu0 0.0
    %6745 = vmatpush1.msra.mxu0 0.0
    %6746 = vmatprep.subr.mxu0 0.0
    %6747 = vmatpush1.msra.mxu0 0.0
    %6748 = vmatprep.subr.mxu0 0.0
    %6749 = vmatpush1.msra.mxu0 0.0
    %6750 = vmatprep.subr.mxu0 0.0
    %6751 = vmatpush1.msra.mxu0 0.0
    %6752 = vmatprep.subr.mxu0 0.0
    %6753 = vmatpush1.msra.mxu0 0.0
    %6754 = vmatprep.subr.mxu0 0.0
    %6755 = vmatpush1.msra.mxu0 0.0
    %6756 = vmatprep.subr.mxu0 0.0
    %6757 = vmatpush1.msra.mxu0 0.0
    %6758 = vmatprep.subr.mxu0 0.0
    %6759 = vmatpush1.msra.mxu0 0.0
    %6760 = vmatprep.subr.mxu0 0.0
    %6761 = vmatpush1.msra.mxu0 0.0
    %6762 = vmatprep.subr.mxu0 0.0
    %6763 = vmatpush1.msra.mxu0 0.0
    %6764 = vmatprep.subr.mxu0 0.0
    %6765 = vmatpush1.msra.mxu0 0.0
    %6766 = vmatprep.subr.mxu0 0.0
    %6767 = vmatpush1.msra.mxu0 0.0
    %6768 = vmatprep.subr.mxu0 0.0
    %6769 = vmatpush1.msra.mxu0 0.0
    %6770 = vmatprep.subr.mxu0 0.0
    %6771 = vmatpush1.msra.mxu0 0.0
    %6772 = vmatprep.subr.mxu0 0.0
    %6773 = vmatpush1.msra.mxu0 0.0
    %6774 = vmatprep.mubr.f32.mxu0 0.0
    %6775 = vmatmul.mubr.f32.gmra.mrb[0].mxu0 %v6568
    %v6776 = vpop.f32.mrb[0].mxu0
    %v6777 = vadd.f32 0.0, %v6776
    %v6778 = vpop.f32.mrb[0].mxu0
    %v6779 = vadd.f32 0.0, %v6778
    %6780 = vdwg.mxu0
    %6781 = vmatprep.subr.mxu0 0.0
    %6782 = vmatpush1.msra.mxu0 %v4481
    %6783 = vmatprep.subr.mxu0 0.0
    %6784 = vmatpush1.msra.mxu0 %v4484
    %6785 = vmatprep.subr.mxu0 0.0
    %6786 = vmatpush1.msra.mxu0 %v4487
    %6787 = vmatprep.subr.mxu0 0.0
    %6788 = vmatpush1.msra.mxu0 %v4490
    %6789 = vmatprep.subr.mxu0 0.0
    %6790 = vmatpush1.msra.mxu0 %v4493
    %6791 = vmatprep.subr.mxu0 0.0
    %6792 = vmatpush1.msra.mxu0 %v4496
    %6793 = vmatprep.subr.mxu0 0.0
    %6794 = vmatpush1.msra.mxu0 %v4499
    %6795 = vmatprep.subr.mxu0 0.0
    %6796 = vmatpush1.msra.mxu0 %v4502
    %6797 = vmatprep.subr.mxu0 0.0
    %6798 = vmatpush1.msra.mxu0 %v4505
    %6799 = vmatprep.subr.mxu0 0.0
    %6800 = vmatpush1.msra.mxu0 %v4508
    %6801 = vmatprep.subr.mxu0 0.0
    %6802 = vmatpush1.msra.mxu0 %v4511
    %6803 = vmatprep.subr.mxu0 0.0
    %6804 = vmatpush1.msra.mxu0 %v4514
    %6805 = vmatprep.subr.mxu0 0.0
    %6806 = vmatpush1.msra.mxu0 %v4517
    %6807 = vmatprep.subr.mxu0 0.0
    %6808 = vmatpush1.msra.mxu0 %v4520
    %6809 = vmatprep.subr.mxu0 0.0
    %6810 = vmatpush1.msra.mxu0 %v4523
    %6811 = vmatprep.subr.mxu0 0.0
    %6812 = vmatpush1.msra.mxu0 %v4526
    %6813 = vmatprep.subr.mxu0 0.0
    %6814 = vmatpush1.msra.mxu0 0.0
    %6815 = vmatprep.subr.mxu0 0.0
    %6816 = vmatpush1.msra.mxu0 0.0
    %6817 = vmatprep.subr.mxu0 0.0
    %6818 = vmatpush1.msra.mxu0 0.0
    %6819 = vmatprep.subr.mxu0 0.0
    %6820 = vmatpush1.msra.mxu0 0.0
    %6821 = vmatprep.subr.mxu0 0.0
    %6822 = vmatpush1.msra.mxu0 0.0
    %6823 = vmatprep.subr.mxu0 0.0
    %6824 = vmatpush1.msra.mxu0 0.0
    %6825 = vmatprep.subr.mxu0 0.0
    %6826 = vmatpush1.msra.mxu0 0.0
    %6827 = vmatprep.subr.mxu0 0.0
    %6828 = vmatpush1.msra.mxu0 0.0
    %6829 = vmatprep.subr.mxu0 0.0
    %6830 = vmatpush1.msra.mxu0 0.0
    %6831 = vmatprep.subr.mxu0 0.0
    %6832 = vmatpush1.msra.mxu0 0.0
    %6833 = vmatprep.subr.mxu0 0.0
    %6834 = vmatpush1.msra.mxu0 0.0
    %6835 = vmatprep.subr.mxu0 0.0
    %6836 = vmatpush1.msra.mxu0 0.0
    %6837 = vmatprep.subr.mxu0 0.0
    %6838 = vmatpush1.msra.mxu0 0.0
    %6839 = vmatprep.subr.mxu0 0.0
    %6840 = vmatpush1.msra.mxu0 0.0
    %6841 = vmatprep.subr.mxu0 0.0
    %6842 = vmatpush1.msra.mxu0 0.0
    %6843 = vmatprep.subr.mxu0 0.0
    %6844 = vmatpush1.msra.mxu0 0.0
    %6845 = vmatprep.mubr.f32.mxu0 0.0
    %6846 = vmatmul.mubr.f32.gmra.mrb[0].mxu0 %v6568
    %v6847 = vpop.f32.mrb[0].mxu0
    %v6848 = vadd.f32 0.0, %v6847
    %v6849 = vpop.f32.mrb[0].mxu0
    %6850 = vdwg.mxu0
    %v6851 = vld [vmem:[%s1403] sm:$0x3f]
    %v6852 = vadd.f32 %v6851, %v6636
    %v6853 = vxor.u32 %v6852, 2147483648
    %v6854 = vmul.f32 %v6853, 1.442695
    %v6855 = vpow.pop %v6854
    %v6856 = vadd.f32 %v6855, 1.0
    %v6857 = vrcp.pop %v6856
    %v6858 = vmul.f32 1.0, %v6857
    %v6860 = vrot.slane %v6851, 2
    %v6862 = vadd.f32 %v6860, %v6638
    %v6863 = vxor.u32 %v6862, 2147483648
    %v6864 = vmul.f32 %v6863, 1.442695
    %v6865 = vpow.pop %v6864
    %v6866 = vadd.f32 %v6865, 1.0
    %v6867 = vrcp.pop %v6866
    %v6868 = vmul.f32 1.0, %v6867
    %v6869 = vadd.f32 %v6707, %v4532
    %v6870 = vmul.f32 %v6858, %v6869
    %v6871 = vrot.slane %v6851, 4
    %v6873 = vadd.f32 %v6871, %v6870
    %v6874 = vtanh.pop %v6873
    %v6875 = vsub.f32 1.0, %v6868
    %v6876 = vmul.f32 %v6875, %v6874
    %v6877 = vmul.f32 %v6868, %v6540
    %v6878 = vadd.f32 %v6876, %v6877
    %v6879 = vld [vmem:[%s1374 + $0x6] sm:$0x3f]
    %v6880 = vadd.f32 %v6879, %v6777
    %v6881 = vxor.u32 %v6880, 2147483648
    %v6882 = vmul.f32 %v6881, 1.442695
    %v6883 = vpow.pop %v6882
    %v6884 = vadd.f32 %v6883, 1.0
    %v6885 = vrcp.pop %v6884
    %v6886 = vmul.f32 1.0, %v6885
    %v6888 = vrot.slane %v6879, 2
    %v6890 = vadd.f32 %v6888, %v6779
    %v6891 = vxor.u32 %v6890, 2147483648
    %v6892 = vmul.f32 %v6891, 1.442695
    %v6893 = vpow.pop %v6892
    %v6894 = vadd.f32 %v6893, 1.0
    %v6895 = vrcp.pop %v6894
    %v6896 = vmul.f32 1.0, %v6895
    %v6897 = vadd.f32 %v6848, %v4539
    %v6898 = vmul.f32 %v6886, %v6897
    %v6899 = vrot.slane %v6879, 4
    %v6901 = vadd.f32 %v6899, %v6898
    %v6902 = vtanh.pop %v6901
    %v6903 = vsub.f32 1.0, %v6896
    %v6904 = vmul.f32 %v6903, %v6902
    %v6905 = vmul.f32 %v6896, %v6568
    %v6906 = vadd.f32 %v6904, %v6905
    %6907 = vmatprep.subr.mxu0 %v4432
    %6908 = vmatpush1.msra.mxu0 %v4431
    %6909 = vmatprep.subr.mxu0 %v4435
    %6910 = vmatpush1.msra.mxu0 %v4434
    %6911 = vmatprep.subr.mxu0 %v4438
    %6912 = vmatpush1.msra.mxu0 %v4437
    %6913 = vmatprep.subr.mxu0 %v4441
    %6914 = vmatpush1.msra.mxu0 %v4440
    %6915 = vmatprep.subr.mxu0 %v4444
    %6916 = vmatpush1.msra.mxu0 %v4443
    %6917 = vmatprep.subr.mxu0 %v4447
    %6918 = vmatpush1.msra.mxu0 %v4446
    %6919 = vmatprep.subr.mxu0 %v4450
    %6920 = vmatpush1.msra.mxu0 %v4449
    %6921 = vmatprep.subr.mxu0 %v4453
    %6922 = vmatpush1.msra.mxu0 %v4452
    %6923 = vmatprep.subr.mxu0 %v4456
    %6924 = vmatpush1.msra.mxu0 %v4455
    %6925 = vmatprep.subr.mxu0 %v4459
    %6926 = vmatpush1.msra.mxu0 %v4458
    %6927 = vmatprep.subr.mxu0 %v4462
    %6928 = vmatpush1.msra.mxu0 %v4461
    %6929 = vmatprep.subr.mxu0 %v4465
    %6930 = vmatpush1.msra.mxu0 %v4464
    %6931 = vmatprep.subr.mxu0 %v4468
    %6932 = vmatpush1.msra.mxu0 %v4467
    %6933 = vmatprep.subr.mxu0 %v4471
    %6934 = vmatpush1.msra.mxu0 %v4470
    %6935 = vmatprep.subr.mxu0 %v4474
    %6936 = vmatpush1.msra.mxu0 %v4473
    %6937 = vmatprep.subr.mxu0 %v4477
    %6938 = vmatpush1.msra.mxu0 %v4476
    %6939 = vmatprep.subr.mxu0 0.0
    %6940 = vmatpush1.msra.mxu0 0.0
    %6941 = vmatprep.subr.mxu0 0.0
    %6942 = vmatpush1.msra.mxu0 0.0
    %6943 = vmatprep.subr.mxu0 0.0
    %6944 = vmatpush1.msra.mxu0 0.0
    %6945 = vmatprep.subr.mxu0 0.0
    %6946 = vmatpush1.msra.mxu0 0.0
    %6947 = vmatprep.subr.mxu0 0.0
    %6948 = vmatpush1.msra.mxu0 0.0
    %6949 = vmatprep.subr.mxu0 0.0
    %6950 = vmatpush1.msra.mxu0 0.0
    %6951 = vmatprep.subr.mxu0 0.0
    %6952 = vmatpush1.msra.mxu0 0.0
    %6953 = vmatprep.subr.mxu0 0.0
    %6954 = vmatpush1.msra.mxu0 0.0
    %6955 = vmatprep.subr.mxu0 0.0
    %6956 = vmatpush1.msra.mxu0 0.0
    %6957 = vmatprep.subr.mxu0 0.0
    %6958 = vmatpush1.msra.mxu0 0.0
    %6959 = vmatprep.subr.mxu0 0.0
    %6960 = vmatpush1.msra.mxu0 0.0
    %6961 = vmatprep.subr.mxu0 0.0
    %6962 = vmatpush1.msra.mxu0 0.0
    %6963 = vmatprep.subr.mxu0 0.0
    %6964 = vmatpush1.msra.mxu0 0.0
    %6965 = vmatprep.subr.mxu0 0.0
    %6966 = vmatpush1.msra.mxu0 0.0
    %6967 = vmatprep.subr.mxu0 0.0
    %6968 = vmatpush1.msra.mxu0 0.0
    %6969 = vmatprep.subr.mxu0 0.0
    %6970 = vmatpush1.msra.mxu0 0.0
    %6971 = vmatprep.mubr.f32.mxu0 0.0
    %6972 = vmatmul.mubr.f32.gmra.mrb[0].mxu0 %v6878
    %v6973 = vpop.f32.mrb[0].mxu0
    %v6974 = vadd.f32 0.0, %v6973
    %v6975 = vpop.f32.mrb[0].mxu0
    %v6976 = vadd.f32 0.0, %v6975
    %6977 = vdwg.mxu0
    %6978 = vmatprep.subr.mxu0 0.0
    %6979 = vmatpush1.msra.mxu0 %v4433
    %6980 = vmatprep.subr.mxu0 0.0
    %6981 = vmatpush1.msra.mxu0 %v4436
    %6982 = vmatprep.subr.mxu0 0.0
    %6983 = vmatpush1.msra.mxu0 %v4439
    %6984 = vmatprep.subr.mxu0 0.0
    %6985 = vmatpush1.msra.mxu0 %v4442
    %6986 = vmatprep.subr.mxu0 0.0
    %6987 = vmatpush1.msra.mxu0 %v4445
    %6988 = vmatprep.subr.mxu0 0.0
    %6989 = vmatpush1.msra.mxu0 %v4448
    %6990 = vmatprep.subr.mxu0 0.0
    %6991 = vmatpush1.msra.mxu0 %v4451
    %6992 = vmatprep.subr.mxu0 0.0
    %6993 = vmatpush1.msra.mxu0 %v4454
    %6994 = vmatprep.subr.mxu0 0.0
    %6995 = vmatpush1.msra.mxu0 %v4457
    %6996 = vmatprep.subr.mxu0 0.0
    %6997 = vmatpush1.msra.mxu0 %v4460
    %6998 = vmatprep.subr.mxu0 0.0
    %6999 = vmatpush1.msra.mxu0 %v4463
    %7000 = vmatprep.subr.mxu0 0.0
    %7001 = vmatpush1.msra.mxu0 %v4466
    %7002 = vmatprep.subr.mxu0 0.0
    %7003 = vmatpush1.msra.mxu0 %v4469
    %7004 = vmatprep.subr.mxu0 0.0
    %7005 = vmatpush1.msra.mxu0 %v4472
    %7006 = vmatprep.subr.mxu0 0.0
    %7007 = vmatpush1.msra.mxu0 %v4475
    %7008 = vmatprep.subr.mxu0 0.0
    %7009 = vmatpush1.msra.mxu0 %v4478
    %7010 = vmatprep.subr.mxu0 0.0
    %7011 = vmatpush1.msra.mxu0 0.0
    %7012 = vmatprep.subr.mxu0 0.0
    %7013 = vmatpush1.msra.mxu0 0.0
    %7014 = vmatprep.subr.mxu0 0.0
    %7015 = vmatpush1.msra.mxu0 0.0
    %7016 = vmatprep.subr.mxu0 0.0
    %7017 = vmatpush1.msra.mxu0 0.0
    %7018 = vmatprep.subr.mxu0 0.0
    %7019 = vmatpush1.msra.mxu0 0.0
    %7020 = vmatprep.subr.mxu0 0.0
    %7021 = vmatpush1.msra.mxu0 0.0
    %7022 = vmatprep.subr.mxu0 0.0
    %7023 = vmatpush1.msra.mxu0 0.0
    %7024 = vmatprep.subr.mxu0 0.0
    %7025 = vmatpush1.msra.mxu0 0.0
    %7026 = vmatprep.subr.mxu0 0.0
    %7027 = vmatpush1.msra.mxu0 0.0
    %7028 = vmatprep.subr.mxu0 0.0
    %7029 = vmatpush1.msra.mxu0 0.0
    %7030 = vmatprep.subr.mxu0 0.0
    %7031 = vmatpush1.msra.mxu0 0.0
    %7032 = vmatprep.subr.mxu0 0.0
    %7033 = vmatpush1.msra.mxu0 0.0
    %7034 = vmatprep.subr.mxu0 0.0
    %7035 = vmatpush1.msra.mxu0 0.0
    %7036 = vmatprep.subr.mxu0 0.0
    %7037 = vmatpush1.msra.mxu0 0.0
    %7038 = vmatprep.subr.mxu0 0.0
    %7039 = vmatpush1.msra.mxu0 0.0
    %7040 = vmatprep.subr.mxu0 0.0
    %7041 = vmatpush1.msra.mxu0 0.0
    %7042 = vmatprep.mubr.f32.mxu0 0.0
    %7043 = vmatmul.mubr.f32.gmra.mrb[0].mxu0 %v6878
    %v7044 = vpop.f32.mrb[0].mxu0
    %v7045 = vadd.f32 0.0, %v7044
    %v7046 = vpop.f32.mrb[0].mxu0
    %7047 = vdwg.mxu0
    %7048 = vmatprep.subr.mxu0 %v4480
    %7049 = vmatpush1.msra.mxu0 %v4479
    %7050 = vmatprep.subr.mxu0 %v4483
    %7051 = vmatpush1.msra.mxu0 %v4482
    %7052 = vmatprep.subr.mxu0 %v4486
    %7053 = vmatpush1.msra.mxu0 %v4485
    %7054 = vmatprep.subr.mxu0 %v4489
    %7055 = vmatpush1.msra.mxu0 %v4488
    %7056 = vmatprep.subr.mxu0 %v4492
    %7057 = vmatpush1.msra.mxu0 %v4491
    %7058 = vmatprep.subr.mxu0 %v4495
    %7059 = vmatpush1.msra.mxu0 %v4494
    %7060 = vmatprep.subr.mxu0 %v4498
    %7061 = vmatpush1.msra.mxu0 %v4497
    %7062 = vmatprep.subr.mxu0 %v4501
    %7063 = vmatpush1.msra.mxu0 %v4500
    %7064 = vmatprep.subr.mxu0 %v4504
    %7065 = vmatpush1.msra.mxu0 %v4503
    %7066 = vmatprep.subr.mxu0 %v4507
    %7067 = vmatpush1.msra.mxu0 %v4506
    %7068 = vmatprep.subr.mxu0 %v4510
    %7069 = vmatpush1.msra.mxu0 %v4509
    %7070 = vmatprep.subr.mxu0 %v4513
    %7071 = vmatpush1.msra.mxu0 %v4512
    %7072 = vmatprep.subr.mxu0 %v4516
    %7073 = vmatpush1.msra.mxu0 %v4515
    %7074 = vmatprep.subr.mxu0 %v4519
    %7075 = vmatpush1.msra.mxu0 %v4518
    %7076 = vmatprep.subr.mxu0 %v4522
    %7077 = vmatpush1.msra.mxu0 %v4521
    %7078 = vmatprep.subr.mxu0 %v4525
    %7079 = vmatpush1.msra.mxu0 %v4524
    %7080 = vmatprep.subr.mxu0 0.0
    %7081 = vmatpush1.msra.mxu0 0.0
    %7082 = vmatprep.subr.mxu0 0.0
    %7083 = vmatpush1.msra.mxu0 0.0
    %7084 = vmatprep.subr.mxu0 0.0
    %7085 = vmatpush1.msra.mxu0 0.0
    %7086 = vmatprep.subr.mxu0 0.0
    %7087 = vmatpush1.msra.mxu0 0.0
    %7088 = vmatprep.subr.mxu0 0.0
    %7089 = vmatpush1.msra.mxu0 0.0
    %7090 = vmatprep.subr.mxu0 0.0
    %7091 = vmatpush1.msra.mxu0 0.0
    %7092 = vmatprep.subr.mxu0 0.0
    %7093 = vmatpush1.msra.mxu0 0.0
    %7094 = vmatprep.subr.mxu0 0.0
    %7095 = vmatpush1.msra.mxu0 0.0
    %7096 = vmatprep.subr.mxu0 0.0
    %7097 = vmatpush1.msra.mxu0 0.0
    %7098 = vmatprep.subr.mxu0 0.0
    %7099 = vmatpush1.msra.mxu0 0.0
    %7100 = vmatprep.subr.mxu0 0.0
    %7101 = vmatpush1.msra.mxu0 0.0
    %7102 = vmatprep.subr.mxu0 0.0
    %7103 = vmatpush1.msra.mxu0 0.0
    %7104 = vmatprep.subr.mxu0 0.0
    %7105 = vmatpush1.msra.mxu0 0.0
    %7106 = vmatprep.subr.mxu0 0.0
    %7107 = vmatpush1.msra.mxu0 0.0
    %7108 = vmatprep.subr.mxu0 0.0
    %7109 = vmatpush1.msra.mxu0 0.0
    %7110 = vmatprep.subr.mxu0 0.0
    %7111 = vmatpush1.msra.mxu0 0.0
    %7112 = vmatprep.mubr.f32.mxu0 0.0
    %7113 = vmatmul.mubr.f32.gmra.mrb[0].mxu0 %v6906
    %v7114 = vpop.f32.mrb[0].mxu0
    %v7115 = vadd.f32 0.0, %v7114
    %v7116 = vpop.f32.mrb[0].mxu0
    %v7117 = vadd.f32 0.0, %v7116
    %7118 = vdwg.mxu0
    %7119 = vmatprep.subr.mxu0 0.0
    %7120 = vmatpush1.msra.mxu0 %v4481
    %7121 = vmatprep.subr.mxu0 0.0
    %7122 = vmatpush1.msra.mxu0 %v4484
    %7123 = vmatprep.subr.mxu0 0.0
    %7124 = vmatpush1.msra.mxu0 %v4487
    %7125 = vmatprep.subr.mxu0 0.0
    %7126 = vmatpush1.msra.mxu0 %v4490
    %7127 = vmatprep.subr.mxu0 0.0
    %7128 = vmatpush1.msra.mxu0 %v4493
    %7129 = vmatprep.subr.mxu0 0.0
    %7130 = vmatpush1.msra.mxu0 %v4496
    %7131 = vmatprep.subr.mxu0 0.0
    %7132 = vmatpush1.msra.mxu0 %v4499
    %7133 = vmatprep.subr.mxu0 0.0
    %7134 = vmatpush1.msra.mxu0 %v4502
    %7135 = vmatprep.subr.mxu0 0.0
    %7136 = vmatpush1.msra.mxu0 %v4505
    %7137 = vmatprep.subr.mxu0 0.0
    %7138 = vmatpush1.msra.mxu0 %v4508
    %7139 = vmatprep.subr.mxu0 0.0
    %7140 = vmatpush1.msra.mxu0 %v4511
    %7141 = vmatprep.subr.mxu0 0.0
    %7142 = vmatpush1.msra.mxu0 %v4514
    %7143 = vmatprep.subr.mxu0 0.0
    %7144 = vmatpush1.msra.mxu0 %v4517
    %7145 = vmatprep.subr.mxu0 0.0
    %7146 = vmatpush1.msra.mxu0 %v4520
    %7147 = vmatprep.subr.mxu0 0.0
    %7148 = vmatpush1.msra.mxu0 %v4523
    %7149 = vmatprep.subr.mxu0 0.0
    %7150 = vmatpush1.msra.mxu0 %v4526
    %7151 = vmatprep.subr.mxu0 0.0
    %7152 = vmatpush1.msra.mxu0 0.0
    %7153 = vmatprep.subr.mxu0 0.0
    %7154 = vmatpush1.msra.mxu0 0.0
    %7155 = vmatprep.subr.mxu0 0.0
    %7156 = vmatpush1.msra.mxu0 0.0
    %7157 = vmatprep.subr.mxu0 0.0
    %7158 = vmatpush1.msra.mxu0 0.0
    %7159 = vmatprep.subr.mxu0 0.0
    %7160 = vmatpush1.msra.mxu0 0.0
    %7161 = vmatprep.subr.mxu0 0.0
    %7162 = vmatpush1.msra.mxu0 0.0
    %7163 = vmatprep.subr.mxu0 0.0
    %7164 = vmatpush1.msra.mxu0 0.0
    %7165 = vmatprep.subr.mxu0 0.0
    %7166 = vmatpush1.msra.mxu0 0.0
    %7167 = vmatprep.subr.mxu0 0.0
    %7168 = vmatpush1.msra.mxu0 0.0
    %7169 = vmatprep.subr.mxu0 0.0
    %7170 = vmatpush1.msra.mxu0 0.0
    %7171 = vmatprep.subr.mxu0 0.0
    %7172 = vmatpush1.msra.mxu0 0.0
    %7173 = vmatprep.subr.mxu0 0.0
    %7174 = vmatpush1.msra.mxu0 0.0
    %7175 = vmatprep.subr.mxu0 0.0
    %7176 = vmatpush1.msra.mxu0 0.0
    %7177 = vmatprep.subr.mxu0 0.0
    %7178 = vmatpush1.msra.mxu0 0.0
    %7179 = vmatprep.subr.mxu0 0.0
    %7180 = vmatpush1.msra.mxu0 0.0
    %7181 = vmatprep.subr.mxu0 0.0
    %7182 = vmatpush1.msra.mxu0 0.0
    %7183 = vmatprep.mubr.f32.mxu0 0.0
    %7184 = vmatmul.mubr.f32.gmra.mrb[0].mxu0 %v6906
    %v7185 = vpop.f32.mrb[0].mxu0
    %v7186 = vadd.f32 0.0, %v7185
    %v7187 = vpop.f32.mrb[0].mxu0
    %7188 = vdwg.mxu0
    %v7189 = vld [vmem:[%s1060] sm:$0x3f]
    %v7190 = vadd.f32 %v7189, %v6974
    %v7191 = vxor.u32 %v7190, 2147483648
    %v7192 = vmul.f32 %v7191, 1.442695
    %v7193 = vpow.pop %v7192
    %v7194 = vadd.f32 %v7193, 1.0
    %v7195 = vrcp.pop %v7194
    %v7196 = vmul.f32 1.0, %v7195
    %v7198 = vrot.slane %v7189, 2
    %v7200 = vadd.f32 %v7198, %v6976
    %v7201 = vxor.u32 %v7200, 2147483648
    %v7202 = vmul.f32 %v7201, 1.442695
    %v7203 = vpow.pop %v7202
    %v7204 = vadd.f32 %v7203, 1.0
    %v7205 = vrcp.pop %v7204
    %v7206 = vmul.f32 1.0, %v7205
    %v7207 = vadd.f32 %v7045, %v4532
    %v7208 = vmul.f32 %v7196, %v7207
    %v7209 = vrot.slane %v7189, 4
    %v7211 = vadd.f32 %v7209, %v7208
    %v7212 = vtanh.pop %v7211
    %v7213 = vsub.f32 1.0, %v7206
    %v7214 = vmul.f32 %v7213, %v7212
    %v7215 = vmul.f32 %v7206, %v6878
    %v7216 = vadd.f32 %v7214, %v7215
    %v7217 = vld [vmem:[#allocation2 + $0x6] sm:$0x3f]
    %v7218 = vadd.f32 %v7217, %v7115
    %v7219 = vxor.u32 %v7218, 2147483648
    %v7220 = vmul.f32 %v7219, 1.442695
    %v7221 = vpow.pop %v7220
    %v7222 = vadd.f32 %v7221, 1.0
    %v7223 = vrcp.pop %v7222
    %v7224 = vmul.f32 1.0, %v7223
    %v7226 = vrot.slane %v7217, 2
    %v7228 = vadd.f32 %v7226, %v7117
    %v7229 = vxor.u32 %v7228, 2147483648
    %v7230 = vmul.f32 %v7229, 1.442695
    %v7231 = vpow.pop %v7230
    %v7232 = vadd.f32 %v7231, 1.0
    %v7233 = vrcp.pop %v7232
    %v7234 = vmul.f32 1.0, %v7233
    %v7235 = vadd.f32 %v7186, %v4539
    %v7236 = vmul.f32 %v7224, %v7235
    %v7237 = vrot.slane %v7217, 4
    %v7239 = vadd.f32 %v7237, %v7236
    %v7240 = vtanh.pop %v7239
    %v7241 = vsub.f32 1.0, %v7234
    %v7242 = vmul.f32 %v7241, %v7240
    %v7243 = vmul.f32 %v7234, %v6906
    %v7244 = vadd.f32 %v7242, %v7243
    %v7245 = vld [vmem:[%s11] sm:$0xff]
    %v7246 = vld [vmem:[%s11 + $0x8] sm:$0xff]
    %v7247 = vld [vmem:[%s11 + $0x10] sm:$0xff]
    %v7248 = vld [vmem:[%s11 + $0x18] sm:$0xff]
    %v7249 = vld [vmem:[%s11 + $0x20] sm:$0xff]
    %v7250 = vld [vmem:[%s11 + $0x28] sm:$0xff]
    %v7251 = vld [vmem:[%s11 + $0x30] sm:$0xff]
    %v7252 = vld [vmem:[%s11 + $0x38] sm:$0xff]
    %v7253 = vld [vmem:[%s11 + $0x40] sm:$0xff]
    %v7254 = vld [vmem:[%s11 + $0x48] sm:$0xff]
    %v7255 = vld [vmem:[%s11 + $0x50] sm:$0xff]
    %v7256 = vld [vmem:[%s11 + $0x58] sm:$0xff]
    %v7257 = vld [vmem:[%s11 + $0x60] sm:$0xff]
    %v7258 = vld [vmem:[%s11 + $0x68] sm:$0xff]
    %v7259 = vld [vmem:[%s11 + $0x70] sm:$0xff]
    %v7260 = vld [vmem:[%s11 + $0x78] sm:$0xff]
    %v7261 = vld [vmem:[%s11 + $0x80] sm:$0xff]
    %v7262 = vld [vmem:[%s11 + $0x88] sm:$0xff]
    %v7263 = vld [vmem:[%s11 + $0x90] sm:$0xff]
    %v7264 = vld [vmem:[%s11 + $0x98] sm:$0xff]
    %v7265 = vld [vmem:[%s11 + $0xa0] sm:$0xff]
    %v7266 = vld [vmem:[%s11 + $0xa8] sm:$0xff]
    %v7267 = vld [vmem:[%s11 + $0xb0] sm:$0xff]
    %v7268 = vld [vmem:[%s11 + $0xb8] sm:$0xff]
    %v7269 = vld [vmem:[%s11 + $0xc0] sm:$0xff]
    %v7270 = vld [vmem:[%s11 + $0xc8] sm:$0xff]
    %v7271 = vld [vmem:[%s11 + $0xd0] sm:$0xff]
    %v7272 = vld [vmem:[%s11 + $0xd8] sm:$0xff]
    %v7273 = vld [vmem:[%s11 + $0xe0] sm:$0xff]
    %v7274 = vld [vmem:[%s11 + $0xe8] sm:$0xff]
    %v7275 = vld [vmem:[%s11 + $0xf0] sm:$0xff]
    %v7276 = vld [vmem:[%s11 + $0xf8] sm:$0xff]
    %v7277 = vld [vmem:[%s12] sm:$0x1]
    %v7279 = vlaneseq
    %v7280 = vshrl.u32 %v7279, 7
    %v7281 = vsub.s32 0, %v7280
    %v7282 = vrot.slane %v7277, %v7281
    %7284 = vmatprep.subr.mxu0 0.0
    %7285 = vmatpush1.msra.mxu0 %v7245
    %7286 = vmatprep.subr.mxu0 0.0
    %7287 = vmatpush1.msra.mxu0 %v7246
    %7288 = vmatprep.subr.mxu0 0.0
    %7289 = vmatpush1.msra.mxu0 %v7247
    %7290 = vmatprep.subr.mxu0 0.0
    %7291 = vmatpush1.msra.mxu0 %v7248
    %7292 = vmatprep.subr.mxu0 0.0
    %7293 = vmatpush1.msra.mxu0 %v7249
    %7294 = vmatprep.subr.mxu0 0.0
    %7295 = vmatpush1.msra.mxu0 %v7250
    %7296 = vmatprep.subr.mxu0 0.0
    %7297 = vmatpush1.msra.mxu0 %v7251
    %7298 = vmatprep.subr.mxu0 0.0
    %7299 = vmatpush1.msra.mxu0 %v7252
    %7300 = vmatprep.subr.mxu0 0.0
    %7301 = vmatpush1.msra.mxu0 %v7253
    %7302 = vmatprep.subr.mxu0 0.0
    %7303 = vmatpush1.msra.mxu0 %v7254
    %7304 = vmatprep.subr.mxu0 0.0
    %7305 = vmatpush1.msra.mxu0 %v7255
    %7306 = vmatprep.subr.mxu0 0.0
    %7307 = vmatpush1.msra.mxu0 %v7256
    %7308 = vmatprep.subr.mxu0 0.0
    %7309 = vmatpush1.msra.mxu0 %v7257
    %7310 = vmatprep.subr.mxu0 0.0
    %7311 = vmatpush1.msra.mxu0 %v7258
    %7312 = vmatprep.subr.mxu0 0.0
    %7313 = vmatpush1.msra.mxu0 %v7259
    %7314 = vmatprep.subr.mxu0 0.0
    %7315 = vmatpush1.msra.mxu0 %v7260
    %7316 = vmatprep.subr.mxu0 0.0
    %7317 = vmatpush1.msra.mxu0 %v7261
    %7318 = vmatprep.subr.mxu0 0.0
    %7319 = vmatpush1.msra.mxu0 %v7262
    %7320 = vmatprep.subr.mxu0 0.0
    %7321 = vmatpush1.msra.mxu0 %v7263
    %7322 = vmatprep.subr.mxu0 0.0
    %7323 = vmatpush1.msra.mxu0 %v7264
    %7324 = vmatprep.subr.mxu0 0.0
    %7325 = vmatpush1.msra.mxu0 %v7265
    %7326 = vmatprep.subr.mxu0 0.0
    %7327 = vmatpush1.msra.mxu0 %v7266
    %7328 = vmatprep.subr.mxu0 0.0
    %7329 = vmatpush1.msra.mxu0 %v7267
    %7330 = vmatprep.subr.mxu0 0.0
    %7331 = vmatpush1.msra.mxu0 %v7268
    %7332 = vmatprep.subr.mxu0 0.0
    %7333 = vmatpush1.msra.mxu0 %v7269
    %7334 = vmatprep.subr.mxu0 0.0
    %7335 = vmatpush1.msra.mxu0 %v7270
    %7336 = vmatprep.subr.mxu0 0.0
    %7337 = vmatpush1.msra.mxu0 %v7271
    %7338 = vmatprep.subr.mxu0 0.0
    %7339 = vmatpush1.msra.mxu0 %v7272
    %7340 = vmatprep.subr.mxu0 0.0
    %7341 = vmatpush1.msra.mxu0 %v7273
    %7342 = vmatprep.subr.mxu0 0.0
    %7343 = vmatpush1.msra.mxu0 %v7274
    %7344 = vmatprep.subr.mxu0 0.0
    %7345 = vmatpush1.msra.mxu0 %v7275
    %7346 = vmatprep.subr.mxu0 0.0
    %7347 = vmatpush1.msra.mxu0 %v7276
    %7348 = vmatprep.mubr.f32.mxu0 %v7244
    %7349 = vmatmul.mubr.f32.gmra.mrb[0].mxu0 %v7216
    %v7350 = vpop.f32.mrb[0].mxu0
    %v7351 = vadd.f32 %v7282, %v7350
    %v7352 = vpop.f32.mrb[0].mxu0
    %7353 = vdwg.mxu0
    %vm7354 = vcmask 25600
    %v7355 = vsel %vm7354, %v7351, -inf
    %7356 = vmax.xlane.f32.xlu0 %v7355
    %v7357 = vpop.xlane.xlu0 %7356
    %v7358 = vsub.f32 %v7351, %v7357
    %v7359 = vmul.f32 %v7358, 1.442695
    %v7360 = vpow.pop %v7359
    %v7361 = vsel %vm7354, %v7360, 0.0
    %7362 = vadd.xlane.f32.xlu0 %v7361
    %v7363 = vpop.xlane.xlu0 %7362
    %v7364 = vlog2.pop %v7363
    %v7365 = vmul.f32 %v7364, 0.6931472
    %v7366 = vsub.f32 %v7358, %v7365
    %7367 = vst.msk [vmem:[#allocation13] sm:$0x3] %vm7354, %v7366
    // Predicated region
    $region74: #{tpu_custom_call.1} parent=1 // pred_check
      _
    $region75: #{tpu_custom_call.1} parent=1 // pred_check_branch
      %7369 = sbr.rel (0) target = $region77
    $region76: #{tpu_custom_call.1} parent=1 // pred_region
      %s7371 = ssub.s32 32, 32
      %7372 = vsyncadd [#allocation6], %s7371
      %s7374 = sshll.u32 [#allocation13], 4
      %s7375 = int_to_ptr.vmem [resolvable:$true] %s7374
      %7377 = dma.vmem_to_hbm [thread:$0]  %s7375, 32, %s13, [#allocation6]
    $region77: #{tpu_custom_call.1} parent=1 // pred_fallthru
      _
    // Predicated region
    $region78: #{tpu_custom_call.1} parent=1 // pred_check
      _
    $region79: #{tpu_custom_call.1} parent=1 // pred_check_branch
      %7379 = sbr.rel (0) target = $region81
    $region80: #{tpu_custom_call.1} parent=1 // pred_region
      %7380 = dma.done [#allocation6], 32
    $region81: #{tpu_custom_call.1} parent=1 // pred_fallthru
      _
    %7381 = vsyncpa [#allocation5], 1
    %7382 = vsyncpa [#allocation8], 1
    %7383 = vsyncpa [#allocation11], 1
    %7384 = vsyncpa [#allocation6], 1

</llo_original>
